<compile_context>
chip_gen: v6e
topology: v6e:2x2x1
jax: 0.10.0
libtpu: 0.0.40
codegen_flags: <defaults>
</compile_context>

<pallas_src>
import jax
import jax.numpy as jnp
from jax.experimental import pallas as pl
from jax.experimental.pallas import tpu as pltpu


# ------------------------- padded model dimensions -------------------------
def _round_up(x, m):
    return ((x + m - 1) // m) * m


INPUT_DIM = 784          # real
NH = 400                 # real
HIDDEN = 20              # real latent dim

D_PAD = _round_up(INPUT_DIM, 128)    # 896
NH_PAD = _round_up(NH, 128)          # 512
H_PAD = _round_up(HIDDEN, 128)       # 128  (per half of the encoder head)
TB = 128                             # batch tile (rows per grid step)


# --------------------------------- kernel ----------------------------------
def _vae_kernel(x_ref, eps_ref,
                w1_ref, b1_ref,
                w2_ref, b2_ref,
                w3_ref, b3_ref,
                w4_ref, b4_ref,
                enc_ref, out_ref):
    # ---- encoder: fc1 = relu(x @ W1 + b1) ----
    x = x_ref[...]                                           # (TB, D_PAD) f32
    fc1 = jnp.dot(x.astype(jnp.bfloat16), w1_ref[...],
                  preferred_element_type=jnp.float32) + b1_ref[...]
    fc1 = jnp.maximum(fc1, 0.0)                              # F.relu, f32

    # ---- merged encoder head: one [NH_PAD, 2*H_PAD] matmul ----
    # lanes [0, H_PAD)      -> log_var  (first HIDDEN lanes real)
    # lanes [H_PAD, 2*H_PAD) -> mean    (first HIDDEN lanes real)
    enc = jnp.dot(fc1.astype(jnp.bfloat16), w2_ref[...],
                  preferred_element_type=jnp.float32) + b2_ref[...]
    half = enc.shape[1] // 2                                 # = H_PAD (static)
    log_var = enc[:, :half]                                  # lane-block aligned
    mean = enc[:, half:]

    # ---- reparameterization: z = eps * exp(0.5*log_var) + mean (f32) ----
    # padded lanes: eps=0, log_var=0, mean=0  =>  z padding stays exactly 0.
    z = eps_ref[...] * jnp.exp(0.5 * log_var) + mean

    # ---- decoder ----
    dh = jnp.dot(z.astype(jnp.bfloat16), w3_ref[...],
                 preferred_element_type=jnp.float32) + b3_ref[...]
    dh = jnp.maximum(dh, 0.0)                                # F.relu, f32
    logits = jnp.dot(dh.astype(jnp.bfloat16), w4_ref[...],
                     preferred_element_type=jnp.float32) + b4_ref[...]

    out_ref[...] = jax.nn.sigmoid(logits)                    # F.sigmoid (discrete)
    enc_ref[...] = enc                                       # [log_var | mean], padded


# --------------------------------- wrapper ---------------------------------
def vae_forward(x, eps, padded_params, *, tb=TB):
    """Returns ((mean, log_var), output) matching the PyTorch VAE.forward.

    x:   (B, input_dim) f32 inputs (e.g. flattened pixels in [0, 1])
    eps: (B, hidden)    f32 reparameterization noise (randn_like equivalent)
    padded_params: bf16 weights / f32 biases in padded layout (see pad_params).
    """
    w1, b1, w2, b2, w3, b3, w4, b4 = padded_params
    B, D = x.shape
    H = eps.shape[1]
    d_pad, nh_pad = w1.shape
    h_pad = w3.shape[0]

    # pad batch to a multiple of the batch tile and features to lane multiples
    bp = _round_up(B, tb)
    x_p = jnp.zeros((bp, d_pad), jnp.float32).at[:B, :D].set(x)
    eps_p = jnp.zeros((bp, h_pad), jnp.float32).at[:B, :H].set(eps)

    grid = (bp // tb,)
    row_spec = lambda shape: pl.BlockSpec(shape, lambda i: (i, 0))   # streamed
    res_spec = lambda shape: pl.BlockSpec(shape, lambda i: (0, 0))   # VMEM-resident

    enc, out = pl.pallas_call(
        _vae_kernel,
        grid=grid,
        out_shape=(
            jax.ShapeDtypeStruct((bp, 2 * h_pad), jnp.float32),   # [log_var | mean]
            jax.ShapeDtypeStruct((bp, d_pad), jnp.float32),       # sigmoid(decode)
        ),
        in_specs=[
            row_spec((tb, d_pad)),            # x
            row_spec((tb, h_pad)),            # eps
            res_spec((d_pad, nh_pad)),        # w1 (bf16)
            res_spec((1, nh_pad)),            # b1
            res_spec((nh_pad, 2 * h_pad)),    # w2 (bf16, merged head)
            res_spec((1, 2 * h_pad)),         # b2
            res_spec((h_pad, nh_pad)),        # w3 (bf16)
            res_spec((1, nh_pad)),            # b3
            res_spec((nh_pad, d_pad)),        # w4 (bf16)
            res_spec((1, d_pad)),             # b4
        ],
        out_specs=(
            row_spec((tb, 2 * h_pad)),
            row_spec((tb, d_pad)),
        ),
        compiler_params=pltpu.CompilerParams(
            dimension_semantics=("parallel",)),   # shard batch across v7x TCs
    )(x_p, eps_p, w1, b1, w2, b2, w3, b3, w4, b4)

    log_var = enc[:B, :H]
    mean = enc[:B, h_pad:h_pad + H]
    output = out[:B, :D]
    return (mean, log_var), output


# ------------------------- parameter init / padding ------------------------
def init_raw_params(key, input_dim=INPUT_DIM, nh=NH, hidden_dim=HIDDEN):
    """Unpadded f32 params, PyTorch nn.Linear-style init.  Weights stored as
    [in_features, out_features] so every layer is x @ W + b."""
    ks = jax.random.split(key, 8)

    def lin(kw, kb, fan_in, fan_out):
        bound = 1.0 / jnp.sqrt(fan_in)
        w = jax.random.uniform(kw, (fan_in, fan_out), jnp.float32, -bound, bound)
        b = jax.random.uniform(kb, (1, fan_out), jnp.float32, -bound, bound)
        return w, b

    w1, b1 = lin(ks[0], ks[1], input_dim, nh)          # encode_fc
    w2, b2 = lin(ks[2], ks[3], nh, 2 * hidden_dim)     # encode_output  [logvar|mean]
    w3, b3 = lin(ks[4], ks[5], hidden_dim, nh)         # decode_fc
    w4, b4 = lin(ks[6], ks[7], nh, input_dim)          # decode_output (discrete)
    return (w1, b1, w2, b2, w3, b3, w4, b4)


def pad_params(raw_params, d_pad=D_PAD, nh_pad=NH_PAD, h_pad=H_PAD):
    """Zero-pad to lane multiples and cast weights to bf16 (biases stay f32).
    The encoder head is packed so log_var occupies lanes [0, h_pad) and mean
    occupies lanes [h_pad, 2*h_pad)."""
    w1, b1, w2, b2, w3, b3, w4, b4 = raw_params
    D, NHr = w1.shape
    H = w3.shape[0]

    w1p = jnp.zeros((d_pad, nh_pad), jnp.float32).at[:D, :NHr].set(w1)
    b1p = jnp.zeros((1, nh_pad), jnp.float32).at[:, :NHr].set(b1)

    w2p = jnp.zeros((nh_pad, 2 * h_pad), jnp.float32)
    w2p = w2p.at[:NHr, :H].set(w2[:, :H])                    # log_var columns
    w2p = w2p.at[:NHr, h_pad:h_pad + H].set(w2[:, H:])       # mean columns
    b2p = jnp.zeros((1, 2 * h_pad), jnp.float32)
    b2p = b2p.at[:, :H].set(b2[:, :H]).at[:, h_pad:h_pad + H].set(b2[:, H:])

    w3p = jnp.zeros((h_pad, nh_pad), jnp.float32).at[:H, :NHr].set(w3)
    b3p = jnp.zeros((1, nh_pad), jnp.float32).at[:, :NHr].set(b3)

    w4p = jnp.zeros((nh_pad, d_pad), jnp.float32).at[:NHr, :D].set(w4)
    b4p = jnp.zeros((1, d_pad), jnp.float32).at[:, :D].set(b4)

    bf = jnp.bfloat16
    return (w1p.astype(bf), b1p, w2p.astype(bf), b2p,
            w3p.astype(bf), b3p, w4p.astype(bf), b4p)


# ------------------------------ pure-JAX reference --------------------------
def vae_reference(x, eps, raw_params):
    w1, b1, w2, b2, w3, b3, w4, b4 = raw_params
    H = w3.shape[0]
    fc1 = jnp.maximum(x @ w1 + b1, 0.0)
    enc = fc1 @ w2 + b2
    log_var, mean = enc[:, :H], enc[:, H:]
    z = eps * jnp.exp(0.5 * log_var) + mean
    dh = jnp.maximum(z @ w3 + b3, 0.0)
    out = jax.nn.sigmoid(dh @ w4 + b4)
    return (mean, log_var), out


# ----------------------------------- main -----------------------------------
if __name__ == "__main__":
    key = jax.random.PRNGKey(0)
    k_param, k_x, k_eps = jax.random.split(key, 3)

    B = 256  # two 128-row batch tiles -> exercises the batch grid

    raw_params = init_raw_params(k_param)
    params = pad_params(raw_params)

    # inputs in [0, 1] like flattened MNIST pixels
    x = jax.random.uniform(k_x, (B, INPUT_DIM), jnp.float32)
    # reparameterization noise (torch.randn_like(log_var) equivalent)
    eps = jax.random.normal(k_eps, (B, HIDDEN), jnp.float32)

    (mean, log_var), output = jax.block_until_ready(vae_forward(x, eps, params))

    # sanity: shapes + finite values + sigmoid range
    assert mean.shape == (B, HIDDEN) and log_var.shape == (B, HIDDEN)
    assert output.shape == (B, INPUT_DIM)
    assert bool(jnp.all(jnp.isfinite(output)))
    assert bool(jnp.all((output >= 0.0) & (output <= 1.0)))

    # correctness vs f32 pure-JAX reference (bf16 matmul weights => loose tol)
    (mean_r, logvar_r), out_r = vae_reference(x, eps, raw_params)
    assert float(jnp.max(jnp.abs(mean - mean_r))) < 5e-2
    assert float(jnp.max(jnp.abs(log_var - logvar_r))) < 5e-2
    assert float(jnp.max(jnp.abs(output - out_r))) < 5e-2

    print("KERNEL_OK")
</pallas_src>

<mosaic_0001>
module attributes {stable_mosaic.version = 11 : i64} {
  func.func @_vae_kernel(%arg0: i32, %arg1: memref<128x896xf32, #tpu.memory_space<vmem>>, %arg2: memref<128x128xf32, #tpu.memory_space<vmem>>, %arg3: memref<896x512xbf16, #tpu.memory_space<vmem>>, %arg4: memref<1x512xf32, #tpu.memory_space<vmem>>, %arg5: memref<512x256xbf16, #tpu.memory_space<vmem>>, %arg6: memref<1x256xf32, #tpu.memory_space<vmem>>, %arg7: memref<128x512xbf16, #tpu.memory_space<vmem>>, %arg8: memref<1x512xf32, #tpu.memory_space<vmem>>, %arg9: memref<512x896xbf16, #tpu.memory_space<vmem>>, %arg10: memref<1x896xf32, #tpu.memory_space<vmem>>, %arg11: memref<128x256xf32, #tpu.memory_space<vmem>>, %arg12: memref<128x896xf32, #tpu.memory_space<vmem>>) attributes {dimension_semantics = [#tpu.dimension_semantics<parallel>], iteration_bounds = array<i64: 2>, scalar_prefetch = 0 : i64, scratch_operands = 0 : i64, tpu.core_type = #tpu.core_type<tc>, window_params = [{transform_indices = @transform_0, window_bounds = array<i64: 128, 896>}, {transform_indices = @transform_1, window_bounds = array<i64: 128, 128>}, {pipeline_mode = #tpu.pipeline_mode<synchronous>, transform_indices = @transform_2, window_bounds = array<i64: 896, 512>}, {pipeline_mode = #tpu.pipeline_mode<synchronous>, transform_indices = @transform_3, window_bounds = array<i64: 1, 512>}, {pipeline_mode = #tpu.pipeline_mode<synchronous>, transform_indices = @transform_4, window_bounds = array<i64: 512, 256>}, {pipeline_mode = #tpu.pipeline_mode<synchronous>, transform_indices = @transform_5, window_bounds = array<i64: 1, 256>}, {pipeline_mode = #tpu.pipeline_mode<synchronous>, transform_indices = @transform_6, window_bounds = array<i64: 128, 512>}, {pipeline_mode = #tpu.pipeline_mode<synchronous>, transform_indices = @transform_7, window_bounds = array<i64: 1, 512>}, {pipeline_mode = #tpu.pipeline_mode<synchronous>, transform_indices = @transform_8, window_bounds = array<i64: 512, 896>}, {pipeline_mode = #tpu.pipeline_mode<synchronous>, transform_indices = @transform_9, window_bounds = array<i64: 1, 896>}, {transform_indices = @transform_10, window_bounds = array<i64: 128, 256>}, {transform_indices = @transform_11, window_bounds = array<i64: 128, 896>}]} {
    %c0 = arith.constant 0 : index
    %c0_0 = arith.constant 0 : index
    %0 = vector.load %arg1[%c0, %c0_0] : memref<128x896xf32, #tpu.memory_space<vmem>>, vector<128x896xf32>
    %1 = arith.truncf %0 : vector<128x896xf32> to vector<128x896xbf16>
    %c0_1 = arith.constant 0 : index
    %c0_2 = arith.constant 0 : index
    %2 = vector.load %arg3[%c0_1, %c0_2] : memref<896x512xbf16, #tpu.memory_space<vmem>>, vector<896x512xbf16>
    %cst = arith.constant dense<0.000000e+00> : vector<128x512xf32>
    %3 = tpu.matmul %1, %2, %cst {dimension_numbers = #tpu.dot_dimension_numbers<[1], [0], [0], [1], [0, 0, 1, 1], [], []>} : vector<128x896xbf16>, vector<896x512xbf16>, vector<128x512xf32> -> vector<128x512xf32>
    %c0_3 = arith.constant 0 : index
    %c0_4 = arith.constant 0 : index
    %4 = vector.load %arg4[%c0_3, %c0_4] : memref<1x512xf32, #tpu.memory_space<vmem>>, vector<1x512xf32>
    %5 = vector.broadcast %4 : vector<1x512xf32> to vector<128x512xf32>
    %6 = arith.addf %3, %5 : vector<128x512xf32>
    %cst_5 = arith.constant 0.000000e+00 : f32
    %7 = vector.broadcast %cst_5 : f32 to vector<128x512xf32>
    %8 = arith.maximumf %6, %7 : vector<128x512xf32>
    %9 = arith.truncf %8 : vector<128x512xf32> to vector<128x512xbf16>
    %c0_6 = arith.constant 0 : index
    %c0_7 = arith.constant 0 : index
    %10 = vector.load %arg5[%c0_6, %c0_7] : memref<512x256xbf16, #tpu.memory_space<vmem>>, vector<512x256xbf16>
    %cst_8 = arith.constant dense<0.000000e+00> : vector<128x256xf32>
    %11 = tpu.matmul %9, %10, %cst_8 {dimension_numbers = #tpu.dot_dimension_numbers<[1], [0], [0], [1], [0, 0, 1, 1], [], []>} : vector<128x512xbf16>, vector<512x256xbf16>, vector<128x256xf32> -> vector<128x256xf32>
    %c0_9 = arith.constant 0 : index
    %c0_10 = arith.constant 0 : index
    %12 = vector.load %arg6[%c0_9, %c0_10] : memref<1x256xf32, #tpu.memory_space<vmem>>, vector<1x256xf32>
    %13 = vector.broadcast %12 : vector<1x256xf32> to vector<128x256xf32>
    %14 = arith.addf %11, %13 : vector<128x256xf32>
    %15 = vector.extract_strided_slice %14 {offsets = [0, 0], sizes = [128, 128], strides = [1, 1]} : vector<128x256xf32> to vector<128x128xf32>
    %16 = vector.extract_strided_slice %14 {offsets = [0, 128], sizes = [128, 128], strides = [1, 1]} : vector<128x256xf32> to vector<128x128xf32>
    %c0_11 = arith.constant 0 : index
    %c0_12 = arith.constant 0 : index
    %17 = vector.load %arg2[%c0_11, %c0_12] : memref<128x128xf32, #tpu.memory_space<vmem>>, vector<128x128xf32>
    %cst_13 = arith.constant 5.000000e-01 : f32
    %18 = vector.broadcast %cst_13 : f32 to vector<128x128xf32>
    %19 = arith.mulf %18, %15 : vector<128x128xf32>
    %20 = math.exp %19 : vector<128x128xf32>
    %21 = arith.mulf %17, %20 : vector<128x128xf32>
    %22 = arith.addf %21, %16 : vector<128x128xf32>
    %23 = arith.truncf %22 : vector<128x128xf32> to vector<128x128xbf16>
    %c0_14 = arith.constant 0 : index
    %c0_15 = arith.constant 0 : index
    %24 = vector.load %arg7[%c0_14, %c0_15] : memref<128x512xbf16, #tpu.memory_space<vmem>>, vector<128x512xbf16>
    %cst_16 = arith.constant dense<0.000000e+00> : vector<128x512xf32>
    %25 = tpu.matmul %23, %24, %cst_16 {dimension_numbers = #tpu.dot_dimension_numbers<[1], [0], [0], [1], [0, 0, 1, 1], [], []>} : vector<128x128xbf16>, vector<128x512xbf16>, vector<128x512xf32> -> vector<128x512xf32>
    %c0_17 = arith.constant 0 : index
    %c0_18 = arith.constant 0 : index
    %26 = vector.load %arg8[%c0_17, %c0_18] : memref<1x512xf32, #tpu.memory_space<vmem>>, vector<1x512xf32>
    %27 = vector.broadcast %26 : vector<1x512xf32> to vector<128x512xf32>
    %28 = arith.addf %25, %27 : vector<128x512xf32>
    %cst_19 = arith.constant 0.000000e+00 : f32
    %29 = vector.broadcast %cst_19 : f32 to vector<128x512xf32>
    %30 = arith.maximumf %28, %29 : vector<128x512xf32>
    %31 = arith.truncf %30 : vector<128x512xf32> to vector<128x512xbf16>
    %c0_20 = arith.constant 0 : index
    %c0_21 = arith.constant 0 : index
    %32 = vector.load %arg9[%c0_20, %c0_21] : memref<512x896xbf16, #tpu.memory_space<vmem>>, vector<512x896xbf16>
    %cst_22 = arith.constant dense<0.000000e+00> : vector<128x896xf32>
    %33 = tpu.matmul %31, %32, %cst_22 {dimension_numbers = #tpu.dot_dimension_numbers<[1], [0], [0], [1], [0, 0, 1, 1], [], []>} : vector<128x512xbf16>, vector<512x896xbf16>, vector<128x896xf32> -> vector<128x896xf32>
    %c0_23 = arith.constant 0 : index
    %c0_24 = arith.constant 0 : index
    %34 = vector.load %arg10[%c0_23, %c0_24] : memref<1x896xf32, #tpu.memory_space<vmem>>, vector<1x896xf32>
    %35 = vector.broadcast %34 : vector<1x896xf32> to vector<128x896xf32>
    %36 = arith.addf %33, %35 : vector<128x896xf32>
    %37 = arith.negf %36 : vector<128x896xf32>
    %38 = math.exp %37 : vector<128x896xf32>
    %cst_25 = arith.constant 1.000000e+00 : f32
    %39 = vector.broadcast %cst_25 : f32 to vector<128x896xf32>
    %40 = arith.addf %39, %38 : vector<128x896xf32>
    %41 = arith.divf %39, %40 : vector<128x896xf32>
    %c0_26 = arith.constant 0 : index
    %c0_27 = arith.constant 0 : index
    %42 = vector.load %arg12[%c0_26, %c0_27] : memref<128x896xf32, #tpu.memory_space<vmem>>, vector<128x896xf32>
    tpu.vector_store %arg12[%c0_26, %c0_27], %41 {strides = array<i32>} : memref<128x896xf32, #tpu.memory_space<vmem>>, vector<128x896xf32>,
    %c0_28 = arith.constant 0 : index
    %c0_29 = arith.constant 0 : index
    %43 = vector.load %arg11[%c0_28, %c0_29] : memref<128x256xf32, #tpu.memory_space<vmem>>, vector<128x256xf32>
    tpu.vector_store %arg11[%c0_28, %c0_29], %14 {strides = array<i32>} : memref<128x256xf32, #tpu.memory_space<vmem>>, vector<128x256xf32>,
    return
  }
  func.func @transform_0(%arg0: i32) -> (i32, i32) {
    %c0_i32 = arith.constant 0 : i32
    %c0_i32_0 = arith.constant 0 : i32
    return %arg0, %c0_i32 : i32, i32
  }
  func.func @transform_1(%arg0: i32) -> (i32, i32) {
    %c0_i32 = arith.constant 0 : i32
    %c0_i32_0 = arith.constant 0 : i32
    return %arg0, %c0_i32 : i32, i32
  }
  func.func @transform_2(%arg0: i32) -> (i32, i32) {
    %c0_i32 = arith.constant 0 : i32
    %c0_i32_0 = arith.constant 0 : i32
    %c0_i32_1 = arith.constant 0 : i32
    return %c0_i32, %c0_i32_0 : i32, i32
  }
  func.func @transform_3(%arg0: i32) -> (i32, i32) {
    %c0_i32 = arith.constant 0 : i32
    %c0_i32_0 = arith.constant 0 : i32
    %c0_i32_1 = arith.constant 0 : i32
    return %c0_i32, %c0_i32_0 : i32, i32
  }
  func.func @transform_4(%arg0: i32) -> (i32, i32) {
    %c0_i32 = arith.constant 0 : i32
    %c0_i32_0 = arith.constant 0 : i32
    %c0_i32_1 = arith.constant 0 : i32
    return %c0_i32, %c0_i32_0 : i32, i32
  }
  func.func @transform_5(%arg0: i32) -> (i32, i32) {
    %c0_i32 = arith.constant 0 : i32
    %c0_i32_0 = arith.constant 0 : i32
    %c0_i32_1 = arith.constant 0 : i32
    return %c0_i32, %c0_i32_0 : i32, i32
  }
  func.func @transform_6(%arg0: i32) -> (i32, i32) {
    %c0_i32 = arith.constant 0 : i32
    %c0_i32_0 = arith.constant 0 : i32
    %c0_i32_1 = arith.constant 0 : i32
    return %c0_i32, %c0_i32_0 : i32, i32
  }
  func.func @transform_7(%arg0: i32) -> (i32, i32) {
    %c0_i32 = arith.constant 0 : i32
    %c0_i32_0 = arith.constant 0 : i32
    %c0_i32_1 = arith.constant 0 : i32
    return %c0_i32, %c0_i32_0 : i32, i32
  }
  func.func @transform_8(%arg0: i32) -> (i32, i32) {
    %c0_i32 = arith.constant 0 : i32
    %c0_i32_0 = arith.constant 0 : i32
    %c0_i32_1 = arith.constant 0 : i32
    return %c0_i32, %c0_i32_0 : i32, i32
  }
  func.func @transform_9(%arg0: i32) -> (i32, i32) {
    %c0_i32 = arith.constant 0 : i32
    %c0_i32_0 = arith.constant 0 : i32
    %c0_i32_1 = arith.constant 0 : i32
    return %c0_i32, %c0_i32_0 : i32, i32
  }
  func.func @transform_10(%arg0: i32) -> (i32, i32) {
    %c0_i32 = arith.constant 0 : i32
    %c0_i32_0 = arith.constant 0 : i32
    return %arg0, %c0_i32 : i32, i32
  }
  func.func @transform_11(%arg0: i32) -> (i32, i32) {
    %c0_i32 = arith.constant 0 : i32
    %c0_i32_0 = arith.constant 0 : i32
    return %arg0, %c0_i32 : i32, i32
  }
}

</mosaic_0001>

<llo_original>
// kernel: tpu_custom_call.1
$region0: #{tpu_custom_call.1}
  #allocation0 [shape = 'u32[]', space=smem, size = 0x4, offset = 0x4, fixed_abs, tag = 'smem constant byte address 0x4 - core index']
  #allocation1 [shape = 'u32[144,128]{1,0:T(1,128)}', space=vmem, size = 0x12000, scoped, tag = 'internal scratch']
  %s0 = inlined_call_operand.hbm [shape: f32[256,896], index: 0, kind: input, shape index: {}]
  %s1 = inlined_call_operand.hbm [shape: f32[256,128], index: 1, kind: input, shape index: {}]
  %s2 = inlined_call_operand.hbm [shape: bf16[896,512], index: 2, kind: input, shape index: {}]
  %s3 = inlined_call_operand.vmem [shape: f32[1,512], index: 3, kind: input, shape index: {}]
  %s4 = inlined_call_operand.hbm [shape: bf16[512,256], index: 4, kind: input, shape index: {}]
  %s5 = inlined_call_operand.vmem [shape: f32[1,256], index: 5, kind: input, shape index: {}]
  %s6 = inlined_call_operand.hbm [shape: bf16[128,512], index: 6, kind: input, shape index: {}]
  %s7 = inlined_call_operand.hbm [shape: f32[1,512], index: 7, kind: input, shape index: {}]
  %s8 = inlined_call_operand.hbm [shape: bf16[512,896], index: 8, kind: input, shape index: {}]
  %s9 = inlined_call_operand.vmem [shape: f32[1,896], index: 9, kind: input, shape index: {}]
  %s10 = inlined_call_operand.hbm [shape: f32[256,256], index: 10, kind: output, shape index: {0}]
  %s11 = inlined_call_operand.hbm [shape: f32[256,896], index: 11, kind: output, shape index: {1}]
  %12 = xla_tuple %s10, %s11
  %s13 = sld [smem:[#allocation0]]
  $region109: #{tpu_custom_call.1} parent=0
    _
  %s15 = ssub.s32 1, %s13
  %s16 = scalar_select 0, %s15, %s13
  $region1: #{tpu_custom_call.1} parent=0
    #allocation2 [shape = 'u8[917504]{0}', space=vmem, size = 0xe0000, scoped, tag = 'input window, operand 0']
    #allocation3 [shape = 's32[2]{0}', space=sflag, size = 0x8, scoped, tag = 'scoped memory for tpu_custom_call.1']
    #allocation4 [shape = 's32[2]{0}', space=sflag, size = 0x8, scoped, tag = 'scoped memory for tpu_custom_call.1']
    #allocation5 [shape = 'u8[131072]{0}', space=vmem, size = 0x20000, scoped, tag = 'input window, operand 1']
    #allocation6 [shape = 's32[2]{0}', space=sflag, size = 0x8, scoped, tag = 'scoped memory for tpu_custom_call.1']
    #allocation7 [shape = 'u8[917504]{0}', space=vmem, size = 0xe0000, scoped, tag = 'input window, operand 2, single buffered']
    #allocation8 [shape = 'u8[262144]{0}', space=vmem, size = 0x40000, scoped, tag = 'input window, operand 4, single buffered']
    #allocation9 [shape = 's32[1]{0}', space=sflag, size = 0x4, scoped, tag = 'scoped memory for tpu_custom_call.1']
    #allocation10 [shape = 'u8[131072]{0}', space=vmem, size = 0x20000, scoped, tag = 'input window, operand 6, single buffered']
    #allocation11 [shape = 'u8[2048]{0}', space=vmem, size = 0x800, scoped, tag = 'input window, operand 7, single buffered']
    #allocation12 [shape = 's32[1]{0}', space=sflag, size = 0x4, scoped, tag = 'scoped memory for tpu_custom_call.1']
    #allocation13 [shape = 'u8[917504]{0}', space=vmem, size = 0xe0000, scoped, tag = 'input window, operand 8, single buffered']
    #allocation14 [shape = 'u8[262144]{0}', space=vmem, size = 0x40000, scoped, tag = 'output window, operand 0']
    #allocation15 [shape = 'u8[917504]{0}', space=vmem, size = 0xe0000, scoped, tag = 'output window, operand 1']
    #allocation16 [shape = 's32[2]{0}', space=sflag, size = 0x8, scoped, tag = 'scoped memory for tpu_custom_call.1']
    %17 = vsyncpa [#allocation3], 0
    %s18 = scalar_lea.sflag [#allocation3], 1
    %19 = vsyncpa %s18, 0
    %20 = vsyncpa [#allocation6], 0
    %s21 = scalar_lea.sflag [#allocation6], 1
    %22 = vsyncpa %s21, 0
    %23 = vsyncpa [#allocation9], 0
    %24 = vsyncpa [#allocation12], 0
    %25 = vsyncpa [#allocation4], 0
    %s26 = scalar_lea.sflag [#allocation4], 1
    %27 = vsyncpa %s26, 0
    %28 = vsyncpa [#allocation16], 0
    %s29 = scalar_lea.sflag [#allocation16], 1
    %30 = vsyncpa %s29, 0
    loop: start=0, step=1, limit=4
    $region2: #{tpu_custom_call.1} parent=1 // loop_pre_header
      _
    $region3: #{tpu_custom_call.1} parent=1 // loop_header
      %s32 = sphi 0, %s36
      %p33 = scmp.ge.s32.totalorder %s32, 4
      %s42 = sphi 0, %s44
      %s45 = sphi 0, %s42
      %s46 = sphi 0, %s45
      %s62 = sphi 0, %s46
      %s68 = sphi 0, %s70
      %s71 = sphi 0, %s68
      %s72 = sphi 0, %s71
      %s88 = sphi 0, %s72
      %s92 = sphi 0, %s92
      %s94 = sphi 0, %s92
      %s95 = sphi 0, %s94
      %s109 = sphi 0, %s95
      %s113 = sphi 0, %s113
      %s115 = sphi 0, %s113
      %s116 = sphi 0, %s115
      %s130 = sphi 0, %s116
      %s134 = sphi 0, %s134
      %s136 = sphi 0, %s134
      %s137 = sphi 0, %s136
      %s151 = sphi 0, %s137
      %s155 = sphi 0, %s155
      %s157 = sphi 0, %s155
      %s158 = sphi 0, %s157
      %s172 = sphi 0, %s158
      %s176 = sphi 0, %s176
      %s178 = sphi 0, %s176
      %s179 = sphi 0, %s178
      %s193 = sphi 0, %s179
      %s197 = sphi 0, %s197
      %s199 = sphi 0, %s197
      %s200 = sphi 0, %s199
      %s214 = sphi 0, %s200
      %s218 = sphi 0, %s218
      %s220 = sphi 0, %s218
      %s221 = sphi 0, %s220
      %s235 = sphi 0, %s221
      %s239 = sphi 0, %s239
      %s241 = sphi 0, %s239
      %s242 = sphi 0, %s241
      %s256 = sphi 0, %s242
      %s262 = sphi 0, %s264
      %s265 = sphi 0, %s262
      %s266 = sphi 0, %s265
      %s282 = sphi 0, %s266
      %s288 = sphi 0, %s290
      %s291 = sphi 0, %s288
      %s292 = sphi 0, %s291
      %s308 = sphi 0, %s292
    $region4: #{tpu_custom_call.1} parent=1 // loop_header_branch
      %35 = sbr.rel (%p33) target = $region8
    $region5: #{tpu_custom_call.1} parent=1 // loop_body
      %s37 = ssub.s32 %s32, 1
      %s38 = ssub.s32 %s32, 2
      %s39 = sadd.s32 %s32, 1
      %s40 = ssub.s32 %s32, %s39
      %p41 = scmp.eq.s32.totalorder %s40, 0
      %s43 = sadd.s32 %s42, 1
      %s44 = scalar_select %p41, %s42, %s43
      %p47 = pneg %p41
      %p48 = scmp.eq.s32.totalorder %s32, 1
      %p49 = por %p47, %p48
      %p50 = scmp.ne.s32.totalorder %s42, %s45
      %p51 = scmp.eq.s32.totalorder %s32, 0
      %p52 = por %p50, %p51
      %p53 = scmp.ne.s32.totalorder %s42, %s45
      %p54 = scmp.eq.s32.totalorder %s37, 1
      %p55 = por %p53, %p54
      %p56 = scmp.ne.s32.totalorder %s45, %s46
      %p57 = scmp.eq.s32.totalorder %s37, 0
      %p58 = por %p56, %p57
      %p59 = scmp.ne.s32.totalorder %s45, %s46
      %p60 = scmp.eq.s32.totalorder %s38, 1
      %p61 = por %p59, %p60
      %p63 = scmp.ne.s32.totalorder %s46, %s62
      %p64 = scmp.eq.s32.totalorder %s38, 0
      %p65 = por %p63, %p64
      %s66 = ssub.s32 %s32, %s39
      %p67 = scmp.eq.s32.totalorder %s66, 0
      %s69 = sadd.s32 %s68, 1
      %s70 = scalar_select %p67, %s68, %s69
      %p73 = pneg %p67
      %p74 = scmp.eq.s32.totalorder %s32, 1
      %p75 = por %p73, %p74
      %p76 = scmp.ne.s32.totalorder %s68, %s71
      %p77 = scmp.eq.s32.totalorder %s32, 0
      %p78 = por %p76, %p77
      %p79 = scmp.ne.s32.totalorder %s68, %s71
      %p80 = scmp.eq.s32.totalorder %s37, 1
      %p81 = por %p79, %p80
      %p82 = scmp.ne.s32.totalorder %s71, %s72
      %p83 = scmp.eq.s32.totalorder %s37, 0
      %p84 = por %p82, %p83
      %p85 = scmp.ne.s32.totalorder %s71, %s72
      %p86 = scmp.eq.s32.totalorder %s38, 1
      %p87 = por %p85, %p86
      %p89 = scmp.ne.s32.totalorder %s72, %s88
      %p90 = scmp.eq.s32.totalorder %s38, 0
      %p91 = por %p89, %p90
      %s93 = sadd.s32 %s92, 1
      %p96 = scmp.eq.s32.totalorder %s32, 1
      %p97 = scmp.ne.s32.totalorder %s92, %s94
      %p98 = scmp.eq.s32.totalorder %s32, 0
      %p99 = por %p97, %p98
      %p100 = scmp.ne.s32.totalorder %s92, %s94
      %p101 = scmp.eq.s32.totalorder %s37, 1
      %p102 = por %p100, %p101
      %p103 = scmp.ne.s32.totalorder %s94, %s95
      %p104 = scmp.eq.s32.totalorder %s37, 0
      %p105 = por %p103, %p104
      %p106 = scmp.ne.s32.totalorder %s94, %s95
      %p107 = scmp.eq.s32.totalorder %s38, 1
      %p108 = por %p106, %p107
      %p110 = scmp.ne.s32.totalorder %s95, %s109
      %p111 = scmp.eq.s32.totalorder %s38, 0
      %p112 = por %p110, %p111
      %s114 = sadd.s32 %s113, 1
      %p117 = scmp.eq.s32.totalorder %s32, 1
      %p118 = scmp.ne.s32.totalorder %s113, %s115
      %p119 = scmp.eq.s32.totalorder %s32, 0
      %p120 = por %p118, %p119
      %p121 = scmp.ne.s32.totalorder %s113, %s115
      %p122 = scmp.eq.s32.totalorder %s37, 1
      %p123 = por %p121, %p122
      %p124 = scmp.ne.s32.totalorder %s115, %s116
      %p125 = scmp.eq.s32.totalorder %s37, 0
      %p126 = por %p124, %p125
      %p127 = scmp.ne.s32.totalorder %s115, %s116
      %p128 = scmp.eq.s32.totalorder %s38, 1
      %p129 = por %p127, %p128
      %p131 = scmp.ne.s32.totalorder %s116, %s130
      %p132 = scmp.eq.s32.totalorder %s38, 0
      %p133 = por %p131, %p132
      %s135 = sadd.s32 %s134, 1
      %p138 = scmp.eq.s32.totalorder %s32, 1
      %p139 = scmp.ne.s32.totalorder %s134, %s136
      %p140 = scmp.eq.s32.totalorder %s32, 0
      %p141 = por %p139, %p140
      %p142 = scmp.ne.s32.totalorder %s134, %s136
      %p143 = scmp.eq.s32.totalorder %s37, 1
      %p144 = por %p142, %p143
      %p145 = scmp.ne.s32.totalorder %s136, %s137
      %p146 = scmp.eq.s32.totalorder %s37, 0
      %p147 = por %p145, %p146
      %p148 = scmp.ne.s32.totalorder %s136, %s137
      %p149 = scmp.eq.s32.totalorder %s38, 1
      %p150 = por %p148, %p149
      %p152 = scmp.ne.s32.totalorder %s137, %s151
      %p153 = scmp.eq.s32.totalorder %s38, 0
      %p154 = por %p152, %p153
      %s156 = sadd.s32 %s155, 1
      %p159 = scmp.eq.s32.totalorder %s32, 1
      %p160 = scmp.ne.s32.totalorder %s155, %s157
      %p161 = scmp.eq.s32.totalorder %s32, 0
      %p162 = por %p160, %p161
      %p163 = scmp.ne.s32.totalorder %s155, %s157
      %p164 = scmp.eq.s32.totalorder %s37, 1
      %p165 = por %p163, %p164
      %p166 = scmp.ne.s32.totalorder %s157, %s158
      %p167 = scmp.eq.s32.totalorder %s37, 0
      %p168 = por %p166, %p167
      %p169 = scmp.ne.s32.totalorder %s157, %s158
      %p170 = scmp.eq.s32.totalorder %s38, 1
      %p171 = por %p169, %p170
      %p173 = scmp.ne.s32.totalorder %s158, %s172
      %p174 = scmp.eq.s32.totalorder %s38, 0
      %p175 = por %p173, %p174
      %s177 = sadd.s32 %s176, 1
      %p180 = scmp.eq.s32.totalorder %s32, 1
      %p181 = scmp.ne.s32.totalorder %s176, %s178
      %p182 = scmp.eq.s32.totalorder %s32, 0
      %p183 = por %p181, %p182
      %p184 = scmp.ne.s32.totalorder %s176, %s178
      %p185 = scmp.eq.s32.totalorder %s37, 1
      %p186 = por %p184, %p185
      %p187 = scmp.ne.s32.totalorder %s178, %s179
      %p188 = scmp.eq.s32.totalorder %s37, 0
      %p189 = por %p187, %p188
      %p190 = scmp.ne.s32.totalorder %s178, %s179
      %p191 = scmp.eq.s32.totalorder %s38, 1
      %p192 = por %p190, %p191
      %p194 = scmp.ne.s32.totalorder %s179, %s193
      %p195 = scmp.eq.s32.totalorder %s38, 0
      %p196 = por %p194, %p195
      %s198 = sadd.s32 %s197, 1
      %p201 = scmp.eq.s32.totalorder %s32, 1
      %p202 = scmp.ne.s32.totalorder %s197, %s199
      %p203 = scmp.eq.s32.totalorder %s32, 0
      %p204 = por %p202, %p203
      %p205 = scmp.ne.s32.totalorder %s197, %s199
      %p206 = scmp.eq.s32.totalorder %s37, 1
      %p207 = por %p205, %p206
      %p208 = scmp.ne.s32.totalorder %s199, %s200
      %p209 = scmp.eq.s32.totalorder %s37, 0
      %p210 = por %p208, %p209
      %p211 = scmp.ne.s32.totalorder %s199, %s200
      %p212 = scmp.eq.s32.totalorder %s38, 1
      %p213 = por %p211, %p212
      %p215 = scmp.ne.s32.totalorder %s200, %s214
      %p216 = scmp.eq.s32.totalorder %s38, 0
      %p217 = por %p215, %p216
      %s219 = sadd.s32 %s218, 1
      %p222 = scmp.eq.s32.totalorder %s32, 1
      %p223 = scmp.ne.s32.totalorder %s218, %s220
      %p224 = scmp.eq.s32.totalorder %s32, 0
      %p225 = por %p223, %p224
      %p226 = scmp.ne.s32.totalorder %s218, %s220
      %p227 = scmp.eq.s32.totalorder %s37, 1
      %p228 = por %p226, %p227
      %p229 = scmp.ne.s32.totalorder %s220, %s221
      %p230 = scmp.eq.s32.totalorder %s37, 0
      %p231 = por %p229, %p230
      %p232 = scmp.ne.s32.totalorder %s220, %s221
      %p233 = scmp.eq.s32.totalorder %s38, 1
      %p234 = por %p232, %p233
      %p236 = scmp.ne.s32.totalorder %s221, %s235
      %p237 = scmp.eq.s32.totalorder %s38, 0
      %p238 = por %p236, %p237
      %s240 = sadd.s32 %s239, 1
      %p243 = scmp.eq.s32.totalorder %s32, 1
      %p244 = scmp.ne.s32.totalorder %s239, %s241
      %p245 = scmp.eq.s32.totalorder %s32, 0
      %p246 = por %p244, %p245
      %p247 = scmp.ne.s32.totalorder %s239, %s241
      %p248 = scmp.eq.s32.totalorder %s37, 1
      %p249 = por %p247, %p248
      %p250 = scmp.ne.s32.totalorder %s241, %s242
      %p251 = scmp.eq.s32.totalorder %s37, 0
      %p252 = por %p250, %p251
      %p253 = scmp.ne.s32.totalorder %s241, %s242
      %p254 = scmp.eq.s32.totalorder %s38, 1
      %p255 = por %p253, %p254
      %p257 = scmp.ne.s32.totalorder %s242, %s256
      %p258 = scmp.eq.s32.totalorder %s38, 0
      %p259 = por %p257, %p258
      %s260 = ssub.s32 %s32, %s39
      %p261 = scmp.eq.s32.totalorder %s260, 0
      %s263 = sadd.s32 %s262, 1
      %s264 = scalar_select %p261, %s262, %s263
      %p267 = pneg %p261
      %p268 = scmp.eq.s32.totalorder %s32, 1
      %p269 = por %p267, %p268
      %p270 = scmp.ne.s32.totalorder %s262, %s265
      %p271 = scmp.eq.s32.totalorder %s32, 0
      %p272 = por %p270, %p271
      %p273 = scmp.ne.s32.totalorder %s262, %s265
      %p274 = scmp.eq.s32.totalorder %s37, 1
      %p275 = por %p273, %p274
      %p276 = scmp.ne.s32.totalorder %s265, %s266
      %p277 = scmp.eq.s32.totalorder %s37, 0
      %p278 = por %p276, %p277
      %p279 = scmp.ne.s32.totalorder %s265, %s266
      %p280 = scmp.eq.s32.totalorder %s38, 1
      %p281 = por %p279, %p280
      %p283 = scmp.ne.s32.totalorder %s266, %s282
      %p284 = scmp.eq.s32.totalorder %s38, 0
      %p285 = por %p283, %p284
      %s286 = ssub.s32 %s32, %s39
      %p287 = scmp.eq.s32.totalorder %s286, 0
      %s289 = sadd.s32 %s288, 1
      %s290 = scalar_select %p287, %s288, %s289
      %p293 = pneg %p287
      %p294 = scmp.eq.s32.totalorder %s32, 1
      %p295 = por %p293, %p294
      %p296 = scmp.ne.s32.totalorder %s288, %s291
      %p297 = scmp.eq.s32.totalorder %s32, 0
      %p298 = por %p296, %p297
      %p299 = scmp.ne.s32.totalorder %s288, %s291
      %p300 = scmp.eq.s32.totalorder %s37, 1
      %p301 = por %p299, %p300
      %p302 = scmp.ne.s32.totalorder %s291, %s292
      %p303 = scmp.eq.s32.totalorder %s37, 0
      %p304 = por %p302, %p303
      %p305 = scmp.ne.s32.totalorder %s291, %s292
      %p306 = scmp.eq.s32.totalorder %s38, 1
      %p307 = por %p305, %p306
      %p309 = scmp.ne.s32.totalorder %s292, %s308
      %p310 = scmp.eq.s32.totalorder %s38, 0
      %p311 = por %p309, %p310
      %p312 = scmp.le.s32.totalorder 1, %s32
      %p313 = scmp.lt.s32.totalorder %s32, 3
      %p314 = pnand %p312, %p313
      %p315 = pneg %p314
      // Predicated region
      $region9: #{tpu_custom_call.1} parent=5 // pred_check
        _
      $region10: #{tpu_custom_call.1} parent=5 // pred_check_branch
        %317 = sbr.rel (%p314) target = $region12
      $region11: #{tpu_custom_call.1} parent=5 // pred_region
        %s318 = ssub.s32 %s32, 1
        // Predicated region
        $region13: #{tpu_custom_call.1} parent=11 // pred_check
          %p319 = pneg %p105
        $region14: #{tpu_custom_call.1} parent=11 // pred_check_branch
          %321 = sbr.rel (%p319) target = $region16
        $region15: #{tpu_custom_call.1} parent=11 // pred_region
          %s323 = ssub.s32 28672, 28672
          %324 = vsyncadd [#allocation6], %s323
          %s325 = sshll.u32 [#allocation7], 4
          %s326 = int_to_ptr.vmem [resolvable:$true] %s325
          %331 = dma.hbm_to_vmem [thread:$0]  %s2, 28672, %s326, [#allocation6], 256, 256, 16
        $region16: #{tpu_custom_call.1} parent=11 // pred_fallthru
          _
        // Predicated region
        $region17: #{tpu_custom_call.1} parent=11 // pred_check
          %p332 = pneg %p126
        $region18: #{tpu_custom_call.1} parent=11 // pred_check_branch
          %334 = sbr.rel (%p332) target = $region20
        $region19: #{tpu_custom_call.1} parent=11 // pred_region
          _
        $region20: #{tpu_custom_call.1} parent=11 // pred_fallthru
          _
        // Predicated region
        $region21: #{tpu_custom_call.1} parent=11 // pred_check
          %p335 = pneg %p147
        $region22: #{tpu_custom_call.1} parent=11 // pred_check_branch
          %337 = sbr.rel (%p335) target = $region24
        $region23: #{tpu_custom_call.1} parent=11 // pred_region
          %s339 = ssub.s32 8192, 8192
          %340 = vsyncadd [#allocation9], %s339
          %s341 = sshll.u32 [#allocation8], 4
          %s342 = int_to_ptr.vmem [resolvable:$true] %s341
          %347 = dma.hbm_to_vmem [thread:$0]  %s4, 8192, %s342, [#allocation9], 128, 128, 8
        $region24: #{tpu_custom_call.1} parent=11 // pred_fallthru
          _
        // Predicated region
        $region25: #{tpu_custom_call.1} parent=11 // pred_check
          %p348 = pneg %p168
        $region26: #{tpu_custom_call.1} parent=11 // pred_check_branch
          %350 = sbr.rel (%p348) target = $region28
        $region27: #{tpu_custom_call.1} parent=11 // pred_region
          _
        $region28: #{tpu_custom_call.1} parent=11 // pred_fallthru
          _
        // Predicated region
        $region29: #{tpu_custom_call.1} parent=11 // pred_check
          %p351 = pneg %p189
        $region30: #{tpu_custom_call.1} parent=11 // pred_check_branch
          %353 = sbr.rel (%p351) target = $region32
        $region31: #{tpu_custom_call.1} parent=11 // pred_region
          %s355 = ssub.s32 4096, 4096
          %356 = vsyncadd [#allocation9], %s355
          %s357 = sshll.u32 [#allocation10], 4
          %s358 = int_to_ptr.vmem [resolvable:$true] %s357
          %363 = dma.hbm_to_vmem [thread:$0]  %s6, 4096, %s358, [#allocation9], 256, 256, 16
        $region32: #{tpu_custom_call.1} parent=11 // pred_fallthru
          _
        // Predicated region
        $region33: #{tpu_custom_call.1} parent=11 // pred_check
          %p364 = pneg %p210
        $region34: #{tpu_custom_call.1} parent=11 // pred_check_branch
          %366 = sbr.rel (%p364) target = $region36
        $region35: #{tpu_custom_call.1} parent=11 // pred_region
          %s368 = ssub.s32 64, 64
          %369 = vsyncadd [#allocation12], %s368
          %s371 = sshll.u32 [#allocation11], 4
          %s372 = int_to_ptr.vmem [resolvable:$true] %s371
          %374 = dma.hbm_to_vmem [thread:$0]  %s7, 64, %s372, [#allocation12]
        $region36: #{tpu_custom_call.1} parent=11 // pred_fallthru
          _
        // Predicated region
        $region37: #{tpu_custom_call.1} parent=11 // pred_check
          %p375 = pneg %p231
        $region38: #{tpu_custom_call.1} parent=11 // pred_check_branch
          %377 = sbr.rel (%p375) target = $region40
        $region39: #{tpu_custom_call.1} parent=11 // pred_region
          %s379 = ssub.s32 28672, 28672
          %380 = vsyncadd [#allocation12], %s379
          %s381 = sshll.u32 [#allocation13], 4
          %s382 = int_to_ptr.vmem [resolvable:$true] %s381
          %387 = dma.hbm_to_vmem [thread:$0]  %s8, 28672, %s382, [#allocation12], 448, 448, 28
        $region40: #{tpu_custom_call.1} parent=11 // pred_fallthru
          _
        // Predicated region
        $region41: #{tpu_custom_call.1} parent=11 // pred_check
          %p388 = pneg %p252
        $region42: #{tpu_custom_call.1} parent=11 // pred_check_branch
          %390 = sbr.rel (%p388) target = $region44
        $region43: #{tpu_custom_call.1} parent=11 // pred_region
          _
        $region44: #{tpu_custom_call.1} parent=11 // pred_fallthru
          _
      $region12: #{tpu_custom_call.1} parent=5 // pred_fallthru
        _
      %p391 = scmp.lt.s32.totalorder %s32, 2
      // Predicated region
      $region45: #{tpu_custom_call.1} parent=5 // pred_check
        %p392 = pneg %p391
      $region46: #{tpu_custom_call.1} parent=5 // pred_check_branch
        %394 = sbr.rel (%p392) target = $region48
      $region47: #{tpu_custom_call.1} parent=5 // pred_region
        // Predicated region
        $region49: #{tpu_custom_call.1} parent=47 // pred_check
          %p395 = pneg %p52
        $region50: #{tpu_custom_call.1} parent=47 // pred_check_branch
          %397 = sbr.rel (%p395) target = $region52
        $region51: #{tpu_custom_call.1} parent=47 // pred_region
          %s398 = sand.u32 %s42, 1
          %s399 = scalar_lea.sflag [#allocation3], %s398
          %s400 = sand.u32 %s42, 1
          %s401 = smul.addr %s400, 896
          %s402 = scalar_lea.vmem [#allocation2], %s401
          %s403 = smul.u32 16, %s32
          %s405 = ssub.s32 14336, 14336
          %406 = vsyncadd %s399, %s405
          %s407 = smul.addr %s403, 7
          %s408 = smul.addr %s407, 128
          %s409 = scalar_lea.hbm %s0, %s408
          %s410 = sshll.u32 %s402, 4
          %s411 = int_to_ptr.vmem [resolvable:$true] %s410
          %416 = dma.hbm_to_vmem [thread:$0]  %s409, 14336, %s411, %s399, 896, 896, 56
        $region52: #{tpu_custom_call.1} parent=47 // pred_fallthru
          _
        // Predicated region
        $region53: #{tpu_custom_call.1} parent=47 // pred_check
          %p417 = pneg %p78
        $region54: #{tpu_custom_call.1} parent=47 // pred_check_branch
          %419 = sbr.rel (%p417) target = $region56
        $region55: #{tpu_custom_call.1} parent=47 // pred_region
          %s420 = sand.u32 %s32, 1
          %s421 = scalar_lea.sflag [#allocation6], %s420
          %s422 = sand.u32 %s68, 1
          %s423 = smul.addr %s422, 128
          %s424 = scalar_lea.vmem [#allocation5], %s423
          %s425 = smul.u32 16, %s32
          %s427 = ssub.s32 2048, 2048
          %428 = vsyncadd %s421, %s427
          %s429 = smul.addr %s425, 128
          %s430 = scalar_lea.hbm %s1, %s429
          %s431 = sshll.u32 %s424, 4
          %s432 = int_to_ptr.vmem [resolvable:$true] %s431
          %437 = dma.hbm_to_vmem [thread:$0]  %s430, 2048, %s432, %s421, 128, 128, 8
        $region56: #{tpu_custom_call.1} parent=47 // pred_fallthru
          _
      $region48: #{tpu_custom_call.1} parent=5 // pred_fallthru
        _
      %p438 = scmp.le.s32.totalorder 1, %s32
      %p439 = scmp.lt.s32.totalorder %s32, 3
      %p440 = pnand %p438, %p439
      %p441 = pneg %p440
      // Predicated region
      $region57: #{tpu_custom_call.1} parent=5 // pred_check
        _
      $region58: #{tpu_custom_call.1} parent=5 // pred_check_branch
        %443 = sbr.rel (%p440) target = $region60
      $region59: #{tpu_custom_call.1} parent=5 // pred_region
        %s444 = ssub.s32 %s32, 1
        %s445 = sand.u32 %s45, 1
        %s446 = scalar_lea.sflag [#allocation3], %s445
        %s447 = sand.u32 %s45, 1
        %s448 = smul.addr %s447, 896
        %s449 = scalar_lea.vmem [#allocation2], %s448
        // Predicated region
        $region61: #{tpu_custom_call.1} parent=59 // pred_check
          %p450 = pneg %p58
        $region62: #{tpu_custom_call.1} parent=59 // pred_check_branch
          %452 = sbr.rel (%p450) target = $region64
        $region63: #{tpu_custom_call.1} parent=59 // pred_region
          %453 = dma.done %s446, 14336
        $region64: #{tpu_custom_call.1} parent=59 // pred_fallthru
          _
        %s454 = sand.u32 %s37, 1
        %s455 = scalar_lea.sflag [#allocation6], %s454
        %s456 = sand.u32 %s71, 1
        %s457 = smul.addr %s456, 128
        %s458 = scalar_lea.vmem [#allocation5], %s457
        // Predicated region
        $region65: #{tpu_custom_call.1} parent=59 // pred_check
          %p459 = pneg %p84
        $region66: #{tpu_custom_call.1} parent=59 // pred_check_branch
          %461 = sbr.rel (%p459) target = $region68
        $region67: #{tpu_custom_call.1} parent=59 // pred_region
          %462 = dma.done %s455, 2048
        $region68: #{tpu_custom_call.1} parent=59 // pred_fallthru
          _
        // Predicated region
        $region69: #{tpu_custom_call.1} parent=59 // pred_check
          %p463 = pneg %p105
        $region70: #{tpu_custom_call.1} parent=59 // pred_check_branch
          %465 = sbr.rel (%p463) target = $region72
        $region71: #{tpu_custom_call.1} parent=59 // pred_region
          %466 = dma.done [#allocation6], 28672
        $region72: #{tpu_custom_call.1} parent=59 // pred_fallthru
          _
        // Predicated region
        $region73: #{tpu_custom_call.1} parent=59 // pred_check
          %p467 = pneg %p147
        $region74: #{tpu_custom_call.1} parent=59 // pred_check_branch
          %469 = sbr.rel (%p467) target = $region76
        $region75: #{tpu_custom_call.1} parent=59 // pred_region
          %470 = dma.done [#allocation9], 8192
        $region76: #{tpu_custom_call.1} parent=59 // pred_fallthru
          _
        // Predicated region
        $region77: #{tpu_custom_call.1} parent=59 // pred_check
          %p471 = pneg %p189
        $region78: #{tpu_custom_call.1} parent=59 // pred_check_branch
          %473 = sbr.rel (%p471) target = $region80
        $region79: #{tpu_custom_call.1} parent=59 // pred_region
          %474 = dma.done [#allocation9], 4096
        $region80: #{tpu_custom_call.1} parent=59 // pred_fallthru
          _
        // Predicated region
        $region81: #{tpu_custom_call.1} parent=59 // pred_check
          %p475 = pneg %p210
        $region82: #{tpu_custom_call.1} parent=59 // pred_check_branch
          %477 = sbr.rel (%p475) target = $region84
        $region83: #{tpu_custom_call.1} parent=59 // pred_region
          %478 = dma.done [#allocation12], 64
        $region84: #{tpu_custom_call.1} parent=59 // pred_fallthru
          _
        // Predicated region
        $region85: #{tpu_custom_call.1} parent=59 // pred_check
          %p479 = pneg %p231
        $region86: #{tpu_custom_call.1} parent=59 // pred_check_branch
          %481 = sbr.rel (%p479) target = $region88
        $region87: #{tpu_custom_call.1} parent=59 // pred_region
          %482 = dma.done [#allocation12], 28672
        $region88: #{tpu_custom_call.1} parent=59 // pred_fallthru
          _
        %s483 = sand.u32 %s45, 1
        %s484 = scalar_lea.sflag [#allocation3], %s483
        %s485 = sand.u32 %s45, 1
        %s486 = smul.addr %s485, 896
        %s487 = scalar_lea.vmem [#allocation2], %s486
        %p488 = pneg %p58
        %p489 = pneg %p55
        %s490 = sand.u32 %s37, 1
        %s491 = scalar_lea.sflag [#allocation6], %s490
        %s492 = sand.u32 %s71, 1
        %s493 = smul.addr %s492, 128
        %s494 = scalar_lea.vmem [#allocation5], %s493
        %p495 = pneg %p84
        %p496 = pneg %p81
        %p497 = pneg %p105
        %p498 = pneg %p102
        %p499 = pneg %p126
        %p500 = pneg %p123
        %p501 = pneg %p147
        %p502 = pneg %p144
        %p503 = pneg %p168
        %p504 = pneg %p165
        %p505 = pneg %p189
        %p506 = pneg %p186
        %p507 = pneg %p210
        %p508 = pneg %p207
        %p509 = pneg %p231
        %p510 = pneg %p228
        %p511 = pneg %p252
        %p512 = pneg %p249
        %p513 = pneg %p278
        %p514 = pneg %p275
        %s515 = sand.u32 %s265, 1
        %s516 = scalar_lea.sflag [#allocation4], %s515
        %s517 = sand.u32 %s265, 1
        %s518 = smul.addr %s517, 256
        %s519 = scalar_lea.vmem [#allocation14], %s518
        %p520 = pneg %p304
        %p521 = pneg %p301
        %s522 = sand.u32 %s291, 1
        %s523 = scalar_lea.sflag [#allocation16], %s522
        %s524 = sand.u32 %s291, 1
        %s525 = smul.addr %s524, 896
        %s526 = scalar_lea.vmem [#allocation15], %s525
        %s527 = smul.u32 16, %s37
        %s528 = smul.u32 16, %s37
        %s529 = smul.u32 16, %s37
        %s530 = smul.u32 16, %s37
        %v532 = vld [vmem:[%s449] sm:$0xff]
        %v533 = vld [vmem:[%s449 + $0x8] sm:$0xff]
        %v534 = vld [vmem:[%s449 + $0x10] sm:$0xff]
        %v535 = vld [vmem:[%s449 + $0x18] sm:$0xff]
        %v536 = vld [vmem:[%s449 + $0x20] sm:$0xff]
        %v537 = vld [vmem:[%s449 + $0x28] sm:$0xff]
        %v538 = vld [vmem:[%s449 + $0x30] sm:$0xff]
        %v539 = vld [vmem:[%s449 + $0x38] sm:$0xff]
        %v540 = vld [vmem:[%s449 + $0x40] sm:$0xff]
        %v541 = vld [vmem:[%s449 + $0x48] sm:$0xff]
        %v542 = vld [vmem:[%s449 + $0x50] sm:$0xff]
        %v543 = vld [vmem:[%s449 + $0x58] sm:$0xff]
        %v544 = vld [vmem:[%s449 + $0x60] sm:$0xff]
        %v545 = vld [vmem:[%s449 + $0x68] sm:$0xff]
        %v546 = vld [vmem:[%s449 + $0x70] sm:$0xff]
        %v547 = vld [vmem:[%s449 + $0x78] sm:$0xff]
        %v548 = vld [vmem:[%s449 + $0x80] sm:$0xff]
        %v549 = vld [vmem:[%s449 + $0x88] sm:$0xff]
        %v550 = vld [vmem:[%s449 + $0x90] sm:$0xff]
        %v551 = vld [vmem:[%s449 + $0x98] sm:$0xff]
        %v552 = vld [vmem:[%s449 + $0xa0] sm:$0xff]
        %v553 = vld [vmem:[%s449 + $0xa8] sm:$0xff]
        %v554 = vld [vmem:[%s449 + $0xb0] sm:$0xff]
        %v555 = vld [vmem:[%s449 + $0xb8] sm:$0xff]
        %v556 = vld [vmem:[%s449 + $0xc0] sm:$0xff]
        %v557 = vld [vmem:[%s449 + $0xc8] sm:$0xff]
        %v558 = vld [vmem:[%s449 + $0xd0] sm:$0xff]
        %v559 = vld [vmem:[%s449 + $0xd8] sm:$0xff]
        %v560 = vld [vmem:[%s449 + $0xe0] sm:$0xff]
        %v561 = vld [vmem:[%s449 + $0xe8] sm:$0xff]
        %v562 = vld [vmem:[%s449 + $0xf0] sm:$0xff]
        %v563 = vld [vmem:[%s449 + $0xf8] sm:$0xff]
        %v564 = vld [vmem:[%s449 + $0x100] sm:$0xff]
        %v565 = vld [vmem:[%s449 + $0x108] sm:$0xff]
        %v566 = vld [vmem:[%s449 + $0x110] sm:$0xff]
        %v567 = vld [vmem:[%s449 + $0x118] sm:$0xff]
        %v568 = vld [vmem:[%s449 + $0x120] sm:$0xff]
        %v569 = vld [vmem:[%s449 + $0x128] sm:$0xff]
        %v570 = vld [vmem:[%s449 + $0x130] sm:$0xff]
        %v571 = vld [vmem:[%s449 + $0x138] sm:$0xff]
        %v572 = vld [vmem:[%s449 + $0x140] sm:$0xff]
        %v573 = vld [vmem:[%s449 + $0x148] sm:$0xff]
        %v574 = vld [vmem:[%s449 + $0x150] sm:$0xff]
        %v575 = vld [vmem:[%s449 + $0x158] sm:$0xff]
        %v576 = vld [vmem:[%s449 + $0x160] sm:$0xff]
        %v577 = vld [vmem:[%s449 + $0x168] sm:$0xff]
        %v578 = vld [vmem:[%s449 + $0x170] sm:$0xff]
        %v579 = vld [vmem:[%s449 + $0x178] sm:$0xff]
        %v580 = vld [vmem:[%s449 + $0x180] sm:$0xff]
        %v581 = vld [vmem:[%s449 + $0x188] sm:$0xff]
        %v582 = vld [vmem:[%s449 + $0x190] sm:$0xff]
        %v583 = vld [vmem:[%s449 + $0x198] sm:$0xff]
        %v584 = vld [vmem:[%s449 + $0x1a0] sm:$0xff]
        %v585 = vld [vmem:[%s449 + $0x1a8] sm:$0xff]
        %v586 = vld [vmem:[%s449 + $0x1b0] sm:$0xff]
        %v587 = vld [vmem:[%s449 + $0x1b8] sm:$0xff]
        %v588 = vld [vmem:[%s449 + $0x1c0] sm:$0xff]
        %v589 = vld [vmem:[%s449 + $0x1c8] sm:$0xff]
        %v590 = vld [vmem:[%s449 + $0x1d0] sm:$0xff]
        %v591 = vld [vmem:[%s449 + $0x1d8] sm:$0xff]
        %v592 = vld [vmem:[%s449 + $0x1e0] sm:$0xff]
        %v593 = vld [vmem:[%s449 + $0x1e8] sm:$0xff]
        %v594 = vld [vmem:[%s449 + $0x1f0] sm:$0xff]
        %v595 = vld [vmem:[%s449 + $0x1f8] sm:$0xff]
        %v596 = vld [vmem:[%s449 + $0x200] sm:$0xff]
        %v597 = vld [vmem:[%s449 + $0x208] sm:$0xff]
        %v598 = vld [vmem:[%s449 + $0x210] sm:$0xff]
        %v599 = vld [vmem:[%s449 + $0x218] sm:$0xff]
        %v600 = vld [vmem:[%s449 + $0x220] sm:$0xff]
        %v601 = vld [vmem:[%s449 + $0x228] sm:$0xff]
        %v602 = vld [vmem:[%s449 + $0x230] sm:$0xff]
        %v603 = vld [vmem:[%s449 + $0x238] sm:$0xff]
        %v604 = vld [vmem:[%s449 + $0x240] sm:$0xff]
        %v605 = vld [vmem:[%s449 + $0x248] sm:$0xff]
        %v606 = vld [vmem:[%s449 + $0x250] sm:$0xff]
        %v607 = vld [vmem:[%s449 + $0x258] sm:$0xff]
        %v608 = vld [vmem:[%s449 + $0x260] sm:$0xff]
        %v609 = vld [vmem:[%s449 + $0x268] sm:$0xff]
        %v610 = vld [vmem:[%s449 + $0x270] sm:$0xff]
        %v611 = vld [vmem:[%s449 + $0x278] sm:$0xff]
        %v612 = vld [vmem:[%s449 + $0x280] sm:$0xff]
        %v613 = vld [vmem:[%s449 + $0x288] sm:$0xff]
        %v614 = vld [vmem:[%s449 + $0x290] sm:$0xff]
        %v615 = vld [vmem:[%s449 + $0x298] sm:$0xff]
        %v616 = vld [vmem:[%s449 + $0x2a0] sm:$0xff]
        %v617 = vld [vmem:[%s449 + $0x2a8] sm:$0xff]
        %v618 = vld [vmem:[%s449 + $0x2b0] sm:$0xff]
        %v619 = vld [vmem:[%s449 + $0x2b8] sm:$0xff]
        %v620 = vld [vmem:[%s449 + $0x2c0] sm:$0xff]
        %v621 = vld [vmem:[%s449 + $0x2c8] sm:$0xff]
        %v622 = vld [vmem:[%s449 + $0x2d0] sm:$0xff]
        %v623 = vld [vmem:[%s449 + $0x2d8] sm:$0xff]
        %v624 = vld [vmem:[%s449 + $0x2e0] sm:$0xff]
        %v625 = vld [vmem:[%s449 + $0x2e8] sm:$0xff]
        %v626 = vld [vmem:[%s449 + $0x2f0] sm:$0xff]
        %v627 = vld [vmem:[%s449 + $0x2f8] sm:$0xff]
        %v628 = vld [vmem:[%s449 + $0x300] sm:$0xff]
        %v629 = vld [vmem:[%s449 + $0x308] sm:$0xff]
        %v630 = vld [vmem:[%s449 + $0x310] sm:$0xff]
        %v631 = vld [vmem:[%s449 + $0x318] sm:$0xff]
        %v632 = vld [vmem:[%s449 + $0x320] sm:$0xff]
        %v633 = vld [vmem:[%s449 + $0x328] sm:$0xff]
        %v634 = vld [vmem:[%s449 + $0x330] sm:$0xff]
        %v635 = vld [vmem:[%s449 + $0x338] sm:$0xff]
        %v636 = vld [vmem:[%s449 + $0x340] sm:$0xff]
        %v637 = vld [vmem:[%s449 + $0x348] sm:$0xff]
        %v638 = vld [vmem:[%s449 + $0x350] sm:$0xff]
        %v639 = vld [vmem:[%s449 + $0x358] sm:$0xff]
        %v640 = vld [vmem:[%s449 + $0x360] sm:$0xff]
        %v641 = vld [vmem:[%s449 + $0x368] sm:$0xff]
        %v642 = vld [vmem:[%s449 + $0x370] sm:$0xff]
        %v643 = vld [vmem:[%s449 + $0x378] sm:$0xff]
        %v644 = vpack.c.bf16 %v539, %v532
        %v645 = vpack.c.bf16 %v540, %v533
        %v646 = vpack.c.bf16 %v541, %v534
        %v647 = vpack.c.bf16 %v542, %v535
        %v648 = vpack.c.bf16 %v543, %v536
        %v649 = vpack.c.bf16 %v544, %v537
        %v650 = vpack.c.bf16 %v545, %v538
        %v651 = vpack.c.bf16 %v553, %v546
        %v652 = vpack.c.bf16 %v554, %v547
        %v653 = vpack.c.bf16 %v555, %v548
        %v654 = vpack.c.bf16 %v556, %v549
        %v655 = vpack.c.bf16 %v557, %v550
        %v656 = vpack.c.bf16 %v558, %v551
        %v657 = vpack.c.bf16 %v559, %v552
        %v658 = vpack.c.bf16 %v567, %v560
        %v659 = vpack.c.bf16 %v568, %v561
        %v660 = vpack.c.bf16 %v569, %v562
        %v661 = vpack.c.bf16 %v570, %v563
        %v662 = vpack.c.bf16 %v571, %v564
        %v663 = vpack.c.bf16 %v572, %v565
        %v664 = vpack.c.bf16 %v573, %v566
        %v665 = vpack.c.bf16 %v581, %v574
        %v666 = vpack.c.bf16 %v582, %v575
        %v667 = vpack.c.bf16 %v583, %v576
        %v668 = vpack.c.bf16 %v584, %v577
        %v669 = vpack.c.bf16 %v585, %v578
        %v670 = vpack.c.bf16 %v586, %v579
        %v671 = vpack.c.bf16 %v587, %v580
        %v672 = vpack.c.bf16 %v595, %v588
        %v673 = vpack.c.bf16 %v596, %v589
        %v674 = vpack.c.bf16 %v597, %v590
        %v675 = vpack.c.bf16 %v598, %v591
        %v676 = vpack.c.bf16 %v599, %v592
        %v677 = vpack.c.bf16 %v600, %v593
        %v678 = vpack.c.bf16 %v601, %v594
        %v679 = vpack.c.bf16 %v609, %v602
        %v680 = vpack.c.bf16 %v610, %v603
        %v681 = vpack.c.bf16 %v611, %v604
        %v682 = vpack.c.bf16 %v612, %v605
        %v683 = vpack.c.bf16 %v613, %v606
        %v684 = vpack.c.bf16 %v614, %v607
        %v685 = vpack.c.bf16 %v615, %v608
        %v686 = vpack.c.bf16 %v623, %v616
        %v687 = vpack.c.bf16 %v624, %v617
        %v688 = vpack.c.bf16 %v625, %v618
        %v689 = vpack.c.bf16 %v626, %v619
        %v690 = vpack.c.bf16 %v627, %v620
        %v691 = vpack.c.bf16 %v628, %v621
        %v692 = vpack.c.bf16 %v629, %v622
        %v693 = vpack.c.bf16 %v637, %v630
        %v694 = vpack.c.bf16 %v638, %v631
        %v695 = vpack.c.bf16 %v639, %v632
        %v696 = vpack.c.bf16 %v640, %v633
        %v697 = vpack.c.bf16 %v641, %v634
        %v698 = vpack.c.bf16 %v642, %v635
        %v699 = vpack.c.bf16 %v643, %v636
        %v700 = vld [vmem:[#allocation7] sm:$0xff]
        %v701 = vld [vmem:[#allocation7 + $0x8] sm:$0xff]
        %v702 = vld [vmem:[#allocation7 + $0x10] sm:$0xff]
        %v703 = vld [vmem:[#allocation7 + $0x18] sm:$0xff]
        %v704 = vld [vmem:[#allocation7 + $0x20] sm:$0xff]
        %v705 = vld [vmem:[#allocation7 + $0x28] sm:$0xff]
        %v706 = vld [vmem:[#allocation7 + $0x30] sm:$0xff]
        %v707 = vld [vmem:[#allocation7 + $0x38] sm:$0xff]
        %v708 = vld [vmem:[#allocation7 + $0x40] sm:$0xff]
        %v709 = vld [vmem:[#allocation7 + $0x48] sm:$0xff]
        %v710 = vld [vmem:[#allocation7 + $0x50] sm:$0xff]
        %v711 = vld [vmem:[#allocation7 + $0x58] sm:$0xff]
        %v712 = vld [vmem:[#allocation7 + $0x60] sm:$0xff]
        %v713 = vld [vmem:[#allocation7 + $0x68] sm:$0xff]
        %v714 = vld [vmem:[#allocation7 + $0x70] sm:$0xff]
        %v715 = vld [vmem:[#allocation7 + $0x78] sm:$0xff]
        %v716 = vld [vmem:[#allocation7 + $0x80] sm:$0xff]
        %v717 = vld [vmem:[#allocation7 + $0x88] sm:$0xff]
        %v718 = vld [vmem:[#allocation7 + $0x90] sm:$0xff]
        %v719 = vld [vmem:[#allocation7 + $0x98] sm:$0xff]
        %v720 = vld [vmem:[#allocation7 + $0xa0] sm:$0xff]
        %v721 = vld [vmem:[#allocation7 + $0xa8] sm:$0xff]
        %v722 = vld [vmem:[#allocation7 + $0xb0] sm:$0xff]
        %v723 = vld [vmem:[#allocation7 + $0xb8] sm:$0xff]
        %v724 = vld [vmem:[#allocation7 + $0xc0] sm:$0xff]
        %v725 = vld [vmem:[#allocation7 + $0xc8] sm:$0xff]
        %v726 = vld [vmem:[#allocation7 + $0xd0] sm:$0xff]
        %v727 = vld [vmem:[#allocation7 + $0xd8] sm:$0xff]
        %v728 = vld [vmem:[#allocation7 + $0xe0] sm:$0xff]
        %v729 = vld [vmem:[#allocation7 + $0xe8] sm:$0xff]
        %v730 = vld [vmem:[#allocation7 + $0xf0] sm:$0xff]
        %v731 = vld [vmem:[#allocation7 + $0xf8] sm:$0xff]
        %v732 = vld [vmem:[#allocation7 + $0x100] sm:$0xff]
        %v733 = vld [vmem:[#allocation7 + $0x108] sm:$0xff]
        %v734 = vld [vmem:[#allocation7 + $0x110] sm:$0xff]
        %v735 = vld [vmem:[#allocation7 + $0x118] sm:$0xff]
        %v736 = vld [vmem:[#allocation7 + $0x120] sm:$0xff]
        %v737 = vld [vmem:[#allocation7 + $0x128] sm:$0xff]
        %v738 = vld [vmem:[#allocation7 + $0x130] sm:$0xff]
        %v739 = vld [vmem:[#allocation7 + $0x138] sm:$0xff]
        %v740 = vld [vmem:[#allocation7 + $0x140] sm:$0xff]
        %v741 = vld [vmem:[#allocation7 + $0x148] sm:$0xff]
        %v742 = vld [vmem:[#allocation7 + $0x150] sm:$0xff]
        %v743 = vld [vmem:[#allocation7 + $0x158] sm:$0xff]
        %v744 = vld [vmem:[#allocation7 + $0x160] sm:$0xff]
        %v745 = vld [vmem:[#allocation7 + $0x168] sm:$0xff]
        %v746 = vld [vmem:[#allocation7 + $0x170] sm:$0xff]
        %v747 = vld [vmem:[#allocation7 + $0x178] sm:$0xff]
        %v748 = vld [vmem:[#allocation7 + $0x180] sm:$0xff]
        %v749 = vld [vmem:[#allocation7 + $0x188] sm:$0xff]
        %v750 = vld [vmem:[#allocation7 + $0x190] sm:$0xff]
        %v751 = vld [vmem:[#allocation7 + $0x198] sm:$0xff]
        %v752 = vld [vmem:[#allocation7 + $0x1a0] sm:$0xff]
        %v753 = vld [vmem:[#allocation7 + $0x1a8] sm:$0xff]
        %v754 = vld [vmem:[#allocation7 + $0x1b0] sm:$0xff]
        %v755 = vld [vmem:[#allocation7 + $0x1b8] sm:$0xff]
        %v756 = vld [vmem:[#allocation7 + $0x1c0] sm:$0xff]
        %v757 = vld [vmem:[#allocation7 + $0x1c8] sm:$0xff]
        %v758 = vld [vmem:[#allocation7 + $0x1d0] sm:$0xff]
        %v759 = vld [vmem:[#allocation7 + $0x1d8] sm:$0xff]
        %v760 = vld [vmem:[#allocation7 + $0x1e0] sm:$0xff]
        %v761 = vld [vmem:[#allocation7 + $0x1e8] sm:$0xff]
        %v762 = vld [vmem:[#allocation7 + $0x1f0] sm:$0xff]
        %v763 = vld [vmem:[#allocation7 + $0x1f8] sm:$0xff]
        %v764 = vld [vmem:[#allocation7 + $0x200] sm:$0xff]
        %v765 = vld [vmem:[#allocation7 + $0x208] sm:$0xff]
        %v766 = vld [vmem:[#allocation7 + $0x210] sm:$0xff]
        %v767 = vld [vmem:[#allocation7 + $0x218] sm:$0xff]
        %v768 = vld [vmem:[#allocation7 + $0x220] sm:$0xff]
        %v769 = vld [vmem:[#allocation7 + $0x228] sm:$0xff]
        %v770 = vld [vmem:[#allocation7 + $0x230] sm:$0xff]
        %v771 = vld [vmem:[#allocation7 + $0x238] sm:$0xff]
        %v772 = vld [vmem:[#allocation7 + $0x240] sm:$0xff]
        %v773 = vld [vmem:[#allocation7 + $0x248] sm:$0xff]
        %v774 = vld [vmem:[#allocation7 + $0x250] sm:$0xff]
        %v775 = vld [vmem:[#allocation7 + $0x258] sm:$0xff]
        %v776 = vld [vmem:[#allocation7 + $0x260] sm:$0xff]
        %v777 = vld [vmem:[#allocation7 + $0x268] sm:$0xff]
        %v778 = vld [vmem:[#allocation7 + $0x270] sm:$0xff]
        %v779 = vld [vmem:[#allocation7 + $0x278] sm:$0xff]
        %v780 = vld [vmem:[#allocation7 + $0x280] sm:$0xff]
        %v781 = vld [vmem:[#allocation7 + $0x288] sm:$0xff]
        %v782 = vld [vmem:[#allocation7 + $0x290] sm:$0xff]
        %v783 = vld [vmem:[#allocation7 + $0x298] sm:$0xff]
        %v784 = vld [vmem:[#allocation7 + $0x2a0] sm:$0xff]
        %v785 = vld [vmem:[#allocation7 + $0x2a8] sm:$0xff]
        %v786 = vld [vmem:[#allocation7 + $0x2b0] sm:$0xff]
        %v787 = vld [vmem:[#allocation7 + $0x2b8] sm:$0xff]
        %v788 = vld [vmem:[#allocation7 + $0x2c0] sm:$0xff]
        %v789 = vld [vmem:[#allocation7 + $0x2c8] sm:$0xff]
        %v790 = vld [vmem:[#allocation7 + $0x2d0] sm:$0xff]
        %v791 = vld [vmem:[#allocation7 + $0x2d8] sm:$0xff]
        %v792 = vld [vmem:[#allocation7 + $0x2e0] sm:$0xff]
        %v793 = vld [vmem:[#allocation7 + $0x2e8] sm:$0xff]
        %v794 = vld [vmem:[#allocation7 + $0x2f0] sm:$0xff]
        %v795 = vld [vmem:[#allocation7 + $0x2f8] sm:$0xff]
        %v796 = vld [vmem:[#allocation7 + $0x300] sm:$0xff]
        %v797 = vld [vmem:[#allocation7 + $0x308] sm:$0xff]
        %v798 = vld [vmem:[#allocation7 + $0x310] sm:$0xff]
        %v799 = vld [vmem:[#allocation7 + $0x318] sm:$0xff]
        %v800 = vld [vmem:[#allocation7 + $0x320] sm:$0xff]
        %v801 = vld [vmem:[#allocation7 + $0x328] sm:$0xff]
        %v802 = vld [vmem:[#allocation7 + $0x330] sm:$0xff]
        %v803 = vld [vmem:[#allocation7 + $0x338] sm:$0xff]
        %v804 = vld [vmem:[#allocation7 + $0x340] sm:$0xff]
        %v805 = vld [vmem:[#allocation7 + $0x348] sm:$0xff]
        %v806 = vld [vmem:[#allocation7 + $0x350] sm:$0xff]
        %v807 = vld [vmem:[#allocation7 + $0x358] sm:$0xff]
        %v808 = vld [vmem:[#allocation7 + $0x360] sm:$0xff]
        %v809 = vld [vmem:[#allocation7 + $0x368] sm:$0xff]
        %v810 = vld [vmem:[#allocation7 + $0x370] sm:$0xff]
        %v811 = vld [vmem:[#allocation7 + $0x378] sm:$0xff]
        %v812 = vld [vmem:[#allocation7 + $0x380] sm:$0xff]
        %v813 = vld [vmem:[#allocation7 + $0x388] sm:$0xff]
        %v814 = vld [vmem:[#allocation7 + $0x390] sm:$0xff]
        %v815 = vld [vmem:[#allocation7 + $0x398] sm:$0xff]
        %v816 = vld [vmem:[#allocation7 + $0x3a0] sm:$0xff]
        %v817 = vld [vmem:[#allocation7 + $0x3a8] sm:$0xff]
        %v818 = vld [vmem:[#allocation7 + $0x3b0] sm:$0xff]
        %v819 = vld [vmem:[#allocation7 + $0x3b8] sm:$0xff]
        %v820 = vld [vmem:[#allocation7 + $0x3c0] sm:$0xff]
        %v821 = vld [vmem:[#allocation7 + $0x3c8] sm:$0xff]
        %v822 = vld [vmem:[#allocation7 + $0x3d0] sm:$0xff]
        %v823 = vld [vmem:[#allocation7 + $0x3d8] sm:$0xff]
        %v824 = vld [vmem:[#allocation7 + $0x3e0] sm:$0xff]
        %v825 = vld [vmem:[#allocation7 + $0x3e8] sm:$0xff]
        %v826 = vld [vmem:[#allocation7 + $0x3f0] sm:$0xff]
        %v827 = vld [vmem:[#allocation7 + $0x3f8] sm:$0xff]
        %v828 = vld [vmem:[#allocation7 + $0x400] sm:$0xff]
        %v829 = vld [vmem:[#allocation7 + $0x408] sm:$0xff]
        %v830 = vld [vmem:[#allocation7 + $0x410] sm:$0xff]
        %v831 = vld [vmem:[#allocation7 + $0x418] sm:$0xff]
        %v832 = vld [vmem:[#allocation7 + $0x420] sm:$0xff]
        %v833 = vld [vmem:[#allocation7 + $0x428] sm:$0xff]
        %v834 = vld [vmem:[#allocation7 + $0x430] sm:$0xff]
        %v835 = vld [vmem:[#allocation7 + $0x438] sm:$0xff]
        %v836 = vld [vmem:[#allocation7 + $0x440] sm:$0xff]
        %v837 = vld [vmem:[#allocation7 + $0x448] sm:$0xff]
        %v838 = vld [vmem:[#allocation7 + $0x450] sm:$0xff]
        %v839 = vld [vmem:[#allocation7 + $0x458] sm:$0xff]
        %v840 = vld [vmem:[#allocation7 + $0x460] sm:$0xff]
        %v841 = vld [vmem:[#allocation7 + $0x468] sm:$0xff]
        %v842 = vld [vmem:[#allocation7 + $0x470] sm:$0xff]
        %v843 = vld [vmem:[#allocation7 + $0x478] sm:$0xff]
        %v844 = vld [vmem:[#allocation7 + $0x480] sm:$0xff]
        %v845 = vld [vmem:[#allocation7 + $0x488] sm:$0xff]
        %v846 = vld [vmem:[#allocation7 + $0x490] sm:$0xff]
        %v847 = vld [vmem:[#allocation7 + $0x498] sm:$0xff]
        %v848 = vld [vmem:[#allocation7 + $0x4a0] sm:$0xff]
        %v849 = vld [vmem:[#allocation7 + $0x4a8] sm:$0xff]
        %v850 = vld [vmem:[#allocation7 + $0x4b0] sm:$0xff]
        %v851 = vld [vmem:[#allocation7 + $0x4b8] sm:$0xff]
        %v852 = vld [vmem:[#allocation7 + $0x4c0] sm:$0xff]
        %v853 = vld [vmem:[#allocation7 + $0x4c8] sm:$0xff]
        %v854 = vld [vmem:[#allocation7 + $0x4d0] sm:$0xff]
        %v855 = vld [vmem:[#allocation7 + $0x4d8] sm:$0xff]
        %v856 = vld [vmem:[#allocation7 + $0x4e0] sm:$0xff]
        %v857 = vld [vmem:[#allocation7 + $0x4e8] sm:$0xff]
        %v858 = vld [vmem:[#allocation7 + $0x4f0] sm:$0xff]
        %v859 = vld [vmem:[#allocation7 + $0x4f8] sm:$0xff]
        %v860 = vld [vmem:[#allocation7 + $0x500] sm:$0xff]
        %v861 = vld [vmem:[#allocation7 + $0x508] sm:$0xff]
        %v862 = vld [vmem:[#allocation7 + $0x510] sm:$0xff]
        %v863 = vld [vmem:[#allocation7 + $0x518] sm:$0xff]
        %v864 = vld [vmem:[#allocation7 + $0x520] sm:$0xff]
        %v865 = vld [vmem:[#allocation7 + $0x528] sm:$0xff]
        %v866 = vld [vmem:[#allocation7 + $0x530] sm:$0xff]
        %v867 = vld [vmem:[#allocation7 + $0x538] sm:$0xff]
        %v868 = vld [vmem:[#allocation7 + $0x540] sm:$0xff]
        %v869 = vld [vmem:[#allocation7 + $0x548] sm:$0xff]
        %v870 = vld [vmem:[#allocation7 + $0x550] sm:$0xff]
        %v871 = vld [vmem:[#allocation7 + $0x558] sm:$0xff]
        %v872 = vld [vmem:[#allocation7 + $0x560] sm:$0xff]
        %v873 = vld [vmem:[#allocation7 + $0x568] sm:$0xff]
        %v874 = vld [vmem:[#allocation7 + $0x570] sm:$0xff]
        %v875 = vld [vmem:[#allocation7 + $0x578] sm:$0xff]
        %v876 = vld [vmem:[#allocation7 + $0x580] sm:$0xff]
        %v877 = vld [vmem:[#allocation7 + $0x588] sm:$0xff]
        %v878 = vld [vmem:[#allocation7 + $0x590] sm:$0xff]
        %v879 = vld [vmem:[#allocation7 + $0x598] sm:$0xff]
        %v880 = vld [vmem:[#allocation7 + $0x5a0] sm:$0xff]
        %v881 = vld [vmem:[#allocation7 + $0x5a8] sm:$0xff]
        %v882 = vld [vmem:[#allocation7 + $0x5b0] sm:$0xff]
        %v883 = vld [vmem:[#allocation7 + $0x5b8] sm:$0xff]
        %v884 = vld [vmem:[#allocation7 + $0x5c0] sm:$0xff]
        %v885 = vld [vmem:[#allocation7 + $0x5c8] sm:$0xff]
        %v886 = vld [vmem:[#allocation7 + $0x5d0] sm:$0xff]
        %v887 = vld [vmem:[#allocation7 + $0x5d8] sm:$0xff]
        %v888 = vld [vmem:[#allocation7 + $0x5e0] sm:$0xff]
        %v889 = vld [vmem:[#allocation7 + $0x5e8] sm:$0xff]
        %v890 = vld [vmem:[#allocation7 + $0x5f0] sm:$0xff]
        %v891 = vld [vmem:[#allocation7 + $0x5f8] sm:$0xff]
        %v892 = vld [vmem:[#allocation7 + $0x600] sm:$0xff]
        %v893 = vld [vmem:[#allocation7 + $0x608] sm:$0xff]
        %v894 = vld [vmem:[#allocation7 + $0x610] sm:$0xff]
        %v895 = vld [vmem:[#allocation7 + $0x618] sm:$0xff]
        %v896 = vld [vmem:[#allocation7 + $0x620] sm:$0xff]
        %v897 = vld [vmem:[#allocation7 + $0x628] sm:$0xff]
        %v898 = vld [vmem:[#allocation7 + $0x630] sm:$0xff]
        %v899 = vld [vmem:[#allocation7 + $0x638] sm:$0xff]
        %v900 = vld [vmem:[#allocation7 + $0x640] sm:$0xff]
        %v901 = vld [vmem:[#allocation7 + $0x648] sm:$0xff]
        %v902 = vld [vmem:[#allocation7 + $0x650] sm:$0xff]
        %v903 = vld [vmem:[#allocation7 + $0x658] sm:$0xff]
        %v904 = vld [vmem:[#allocation7 + $0x660] sm:$0xff]
        %v905 = vld [vmem:[#allocation7 + $0x668] sm:$0xff]
        %v906 = vld [vmem:[#allocation7 + $0x670] sm:$0xff]
        %v907 = vld [vmem:[#allocation7 + $0x678] sm:$0xff]
        %v908 = vld [vmem:[#allocation7 + $0x680] sm:$0xff]
        %v909 = vld [vmem:[#allocation7 + $0x688] sm:$0xff]
        %v910 = vld [vmem:[#allocation7 + $0x690] sm:$0xff]
        %v911 = vld [vmem:[#allocation7 + $0x698] sm:$0xff]
        %v912 = vld [vmem:[#allocation7 + $0x6a0] sm:$0xff]
        %v913 = vld [vmem:[#allocation7 + $0x6a8] sm:$0xff]
        %v914 = vld [vmem:[#allocation7 + $0x6b0] sm:$0xff]
        %v915 = vld [vmem:[#allocation7 + $0x6b8] sm:$0xff]
        %v916 = vld [vmem:[#allocation7 + $0x6c0] sm:$0xff]
        %v917 = vld [vmem:[#allocation7 + $0x6c8] sm:$0xff]
        %v918 = vld [vmem:[#allocation7 + $0x6d0] sm:$0xff]
        %v919 = vld [vmem:[#allocation7 + $0x6d8] sm:$0xff]
        %v920 = vld [vmem:[#allocation7 + $0x6e0] sm:$0xff]
        %v921 = vld [vmem:[#allocation7 + $0x6e8] sm:$0xff]
        %v922 = vld [vmem:[#allocation7 + $0x6f0] sm:$0xff]
        %v923 = vld [vmem:[#allocation7 + $0x6f8] sm:$0xff]
        %v924 = vld [vmem:[%s3] sm:$0xf]
        %v926 = vlaneseq
        %v927 = vshrl.u32 %v926, 7
        %v928 = vsub.s32 0, %v927
        %v929 = vrot.slane %v924, %v928
        %v930 = vlaneseq
        %v931 = vshrl.u32 %v930, 7
        %v932 = vsub.s32 1, %v931
        %v933 = vrot.slane %v924, %v932
        %v934 = vlaneseq
        %v935 = vshrl.u32 %v934, 7
        %v936 = vsub.s32 2, %v935
        %v937 = vrot.slane %v924, %v936
        %v938 = vlaneseq
        %v939 = vshrl.u32 %v938, 7
        %v940 = vsub.s32 3, %v939
        %v941 = vrot.slane %v924, %v940
        %v1170 = vunpack.c.l.b16 %v700
        %v1171 = vunpack.c.h.b16 %v700
        %v1172 = vunpack.c.l.b16 %v701
        %v1173 = vunpack.c.h.b16 %v701
        %v1174 = vunpack.c.l.b16 %v702
        %v1175 = vunpack.c.h.b16 %v702
        %v1176 = vunpack.c.l.b16 %v703
        %v1177 = vunpack.c.h.b16 %v703
        %v1178 = vunpack.c.l.b16 %v704
        %v1179 = vunpack.c.h.b16 %v704
        %v1180 = vunpack.c.l.b16 %v705
        %v1181 = vunpack.c.h.b16 %v705
        %v1182 = vunpack.c.l.b16 %v706
        %v1183 = vunpack.c.h.b16 %v706
        %v1184 = vunpack.c.l.b16 %v707
        %v1185 = vunpack.c.h.b16 %v707
        %v1186 = vunpack.c.l.b16 %v708
        %v1187 = vunpack.c.h.b16 %v708
        %v1188 = vunpack.c.l.b16 %v709
        %v1189 = vunpack.c.h.b16 %v709
        %v1190 = vunpack.c.l.b16 %v710
        %v1191 = vunpack.c.h.b16 %v710
        %v1192 = vunpack.c.l.b16 %v711
        %v1193 = vunpack.c.h.b16 %v711
        %v1194 = vunpack.c.l.b16 %v712
        %v1195 = vunpack.c.h.b16 %v712
        %v1196 = vunpack.c.l.b16 %v713
        %v1197 = vunpack.c.h.b16 %v713
        %v1198 = vunpack.c.l.b16 %v714
        %v1199 = vunpack.c.h.b16 %v714
        %v1200 = vunpack.c.l.b16 %v715
        %v1201 = vunpack.c.h.b16 %v715
        %v1202 = vunpack.c.l.b16 %v716
        %v1203 = vunpack.c.h.b16 %v716
        %v1204 = vunpack.c.l.b16 %v717
        %v1205 = vunpack.c.h.b16 %v717
        %v1206 = vunpack.c.l.b16 %v718
        %v1207 = vunpack.c.h.b16 %v718
        %v1208 = vunpack.c.l.b16 %v719
        %v1209 = vunpack.c.h.b16 %v719
        %v1210 = vunpack.c.l.b16 %v720
        %v1211 = vunpack.c.h.b16 %v720
        %v1212 = vunpack.c.l.b16 %v721
        %v1213 = vunpack.c.h.b16 %v721
        %v1214 = vunpack.c.l.b16 %v722
        %v1215 = vunpack.c.h.b16 %v722
        %v1216 = vunpack.c.l.b16 %v723
        %v1217 = vunpack.c.h.b16 %v723
        %v1218 = vunpack.c.l.b16 %v724
        %v1219 = vunpack.c.h.b16 %v724
        %v1220 = vunpack.c.l.b16 %v725
        %v1221 = vunpack.c.h.b16 %v725
        %v1222 = vunpack.c.l.b16 %v726
        %v1223 = vunpack.c.h.b16 %v726
        %v1224 = vunpack.c.l.b16 %v727
        %v1225 = vunpack.c.h.b16 %v727
        %v1226 = vunpack.c.l.b16 %v728
        %v1227 = vunpack.c.h.b16 %v728
        %v1228 = vunpack.c.l.b16 %v729
        %v1229 = vunpack.c.h.b16 %v729
        %v1230 = vunpack.c.l.b16 %v730
        %v1231 = vunpack.c.h.b16 %v730
        %v1232 = vunpack.c.l.b16 %v731
        %v1233 = vunpack.c.h.b16 %v731
        %v1234 = vunpack.c.l.b16 %v732
        %v1235 = vunpack.c.h.b16 %v732
        %v1236 = vunpack.c.l.b16 %v733
        %v1237 = vunpack.c.h.b16 %v733
        %v1238 = vunpack.c.l.b16 %v734
        %v1239 = vunpack.c.h.b16 %v734
        %v1240 = vunpack.c.l.b16 %v735
        %v1241 = vunpack.c.h.b16 %v735
        %v1242 = vunpack.c.l.b16 %v736
        %v1243 = vunpack.c.h.b16 %v736
        %v1244 = vunpack.c.l.b16 %v737
        %v1245 = vunpack.c.h.b16 %v737
        %v1246 = vunpack.c.l.b16 %v738
        %v1247 = vunpack.c.h.b16 %v738
        %v1248 = vunpack.c.l.b16 %v739
        %v1249 = vunpack.c.h.b16 %v739
        %v1250 = vunpack.c.l.b16 %v740
        %v1251 = vunpack.c.h.b16 %v740
        %v1252 = vunpack.c.l.b16 %v741
        %v1253 = vunpack.c.h.b16 %v741
        %v1254 = vunpack.c.l.b16 %v742
        %v1255 = vunpack.c.h.b16 %v742
        %v1256 = vunpack.c.l.b16 %v743
        %v1257 = vunpack.c.h.b16 %v743
        %v1258 = vunpack.c.l.b16 %v744
        %v1259 = vunpack.c.h.b16 %v744
        %v1260 = vunpack.c.l.b16 %v745
        %v1261 = vunpack.c.h.b16 %v745
        %v1262 = vunpack.c.l.b16 %v746
        %v1263 = vunpack.c.h.b16 %v746
        %v1264 = vunpack.c.l.b16 %v747
        %v1265 = vunpack.c.h.b16 %v747
        %v1266 = vunpack.c.l.b16 %v748
        %v1267 = vunpack.c.h.b16 %v748
        %v1268 = vunpack.c.l.b16 %v749
        %v1269 = vunpack.c.h.b16 %v749
        %v1270 = vunpack.c.l.b16 %v750
        %v1271 = vunpack.c.h.b16 %v750
        %v1272 = vunpack.c.l.b16 %v751
        %v1273 = vunpack.c.h.b16 %v751
        %v1274 = vunpack.c.l.b16 %v752
        %v1275 = vunpack.c.h.b16 %v752
        %v1276 = vunpack.c.l.b16 %v753
        %v1277 = vunpack.c.h.b16 %v753
        %v1278 = vunpack.c.l.b16 %v754
        %v1279 = vunpack.c.h.b16 %v754
        %v1280 = vunpack.c.l.b16 %v755
        %v1281 = vunpack.c.h.b16 %v755
        %v1282 = vunpack.c.l.b16 %v756
        %v1283 = vunpack.c.h.b16 %v756
        %v1284 = vunpack.c.l.b16 %v757
        %v1285 = vunpack.c.h.b16 %v757
        %v1286 = vunpack.c.l.b16 %v758
        %v1287 = vunpack.c.h.b16 %v758
        %v1288 = vunpack.c.l.b16 %v759
        %v1289 = vunpack.c.h.b16 %v759
        %v1290 = vunpack.c.l.b16 %v760
        %v1291 = vunpack.c.h.b16 %v760
        %v1292 = vunpack.c.l.b16 %v761
        %v1293 = vunpack.c.h.b16 %v761
        %v1294 = vunpack.c.l.b16 %v762
        %v1295 = vunpack.c.h.b16 %v762
        %v1296 = vunpack.c.l.b16 %v763
        %v1297 = vunpack.c.h.b16 %v763
        %v1298 = vunpack.c.l.b16 %v764
        %v1299 = vunpack.c.h.b16 %v764
        %v1300 = vunpack.c.l.b16 %v765
        %v1301 = vunpack.c.h.b16 %v765
        %v1302 = vunpack.c.l.b16 %v766
        %v1303 = vunpack.c.h.b16 %v766
        %v1304 = vunpack.c.l.b16 %v767
        %v1305 = vunpack.c.h.b16 %v767
        %v1306 = vunpack.c.l.b16 %v768
        %v1307 = vunpack.c.h.b16 %v768
        %v1308 = vunpack.c.l.b16 %v769
        %v1309 = vunpack.c.h.b16 %v769
        %v1310 = vunpack.c.l.b16 %v770
        %v1311 = vunpack.c.h.b16 %v770
        %v1312 = vunpack.c.l.b16 %v771
        %v1313 = vunpack.c.h.b16 %v771
        %v1314 = vunpack.c.l.b16 %v772
        %v1315 = vunpack.c.h.b16 %v772
        %v1316 = vunpack.c.l.b16 %v773
        %v1317 = vunpack.c.h.b16 %v773
        %v1318 = vunpack.c.l.b16 %v774
        %v1319 = vunpack.c.h.b16 %v774
        %v1320 = vunpack.c.l.b16 %v775
        %v1321 = vunpack.c.h.b16 %v775
        %v1322 = vunpack.c.l.b16 %v776
        %v1323 = vunpack.c.h.b16 %v776
        %v1324 = vunpack.c.l.b16 %v777
        %v1325 = vunpack.c.h.b16 %v777
        %v1326 = vunpack.c.l.b16 %v778
        %v1327 = vunpack.c.h.b16 %v778
        %v1328 = vunpack.c.l.b16 %v779
        %v1329 = vunpack.c.h.b16 %v779
        %v1330 = vunpack.c.l.b16 %v780
        %v1331 = vunpack.c.h.b16 %v780
        %v1332 = vunpack.c.l.b16 %v781
        %v1333 = vunpack.c.h.b16 %v781
        %v1334 = vunpack.c.l.b16 %v782
        %v1335 = vunpack.c.h.b16 %v782
        %v1336 = vunpack.c.l.b16 %v783
        %v1337 = vunpack.c.h.b16 %v783
        %v1338 = vunpack.c.l.b16 %v784
        %v1339 = vunpack.c.h.b16 %v784
        %v1340 = vunpack.c.l.b16 %v785
        %v1341 = vunpack.c.h.b16 %v785
        %v1342 = vunpack.c.l.b16 %v786
        %v1343 = vunpack.c.h.b16 %v786
        %v1344 = vunpack.c.l.b16 %v787
        %v1345 = vunpack.c.h.b16 %v787
        %v1346 = vunpack.c.l.b16 %v788
        %v1347 = vunpack.c.h.b16 %v788
        %v1348 = vunpack.c.l.b16 %v789
        %v1349 = vunpack.c.h.b16 %v789
        %v1350 = vunpack.c.l.b16 %v790
        %v1351 = vunpack.c.h.b16 %v790
        %v1352 = vunpack.c.l.b16 %v791
        %v1353 = vunpack.c.h.b16 %v791
        %v1354 = vunpack.c.l.b16 %v792
        %v1355 = vunpack.c.h.b16 %v792
        %v1356 = vunpack.c.l.b16 %v793
        %v1357 = vunpack.c.h.b16 %v793
        %v1358 = vunpack.c.l.b16 %v794
        %v1359 = vunpack.c.h.b16 %v794
        %v1360 = vunpack.c.l.b16 %v795
        %v1361 = vunpack.c.h.b16 %v795
        %v1362 = vunpack.c.l.b16 %v796
        %v1363 = vunpack.c.h.b16 %v796
        %v1364 = vunpack.c.l.b16 %v797
        %v1365 = vunpack.c.h.b16 %v797
        %v1366 = vunpack.c.l.b16 %v798
        %v1367 = vunpack.c.h.b16 %v798
        %v1368 = vunpack.c.l.b16 %v799
        %v1369 = vunpack.c.h.b16 %v799
        %v1370 = vunpack.c.l.b16 %v800
        %v1371 = vunpack.c.h.b16 %v800
        %v1372 = vunpack.c.l.b16 %v801
        %v1373 = vunpack.c.h.b16 %v801
        %v1374 = vunpack.c.l.b16 %v802
        %v1375 = vunpack.c.h.b16 %v802
        %v1376 = vunpack.c.l.b16 %v803
        %v1377 = vunpack.c.h.b16 %v803
        %v1378 = vunpack.c.l.b16 %v804
        %v1379 = vunpack.c.h.b16 %v804
        %v1380 = vunpack.c.l.b16 %v805
        %v1381 = vunpack.c.h.b16 %v805
        %v1382 = vunpack.c.l.b16 %v806
        %v1383 = vunpack.c.h.b16 %v806
        %v1384 = vunpack.c.l.b16 %v807
        %v1385 = vunpack.c.h.b16 %v807
        %v1386 = vunpack.c.l.b16 %v808
        %v1387 = vunpack.c.h.b16 %v808
        %v1388 = vunpack.c.l.b16 %v809
        %v1389 = vunpack.c.h.b16 %v809
        %v1390 = vunpack.c.l.b16 %v810
        %v1391 = vunpack.c.h.b16 %v810
        %v1392 = vunpack.c.l.b16 %v811
        %v1393 = vunpack.c.h.b16 %v811
        %v1394 = vunpack.c.l.b16 %v812
        %v1395 = vunpack.c.h.b16 %v812
        %v1396 = vunpack.c.l.b16 %v813
        %v1397 = vunpack.c.h.b16 %v813
        %v1398 = vunpack.c.l.b16 %v814
        %v1399 = vunpack.c.h.b16 %v814
        %v1400 = vunpack.c.l.b16 %v815
        %v1401 = vunpack.c.h.b16 %v815
        %v1402 = vunpack.c.l.b16 %v816
        %v1403 = vunpack.c.h.b16 %v816
        %v1404 = vunpack.c.l.b16 %v817
        %v1405 = vunpack.c.h.b16 %v817
        %v1406 = vunpack.c.l.b16 %v818
        %v1407 = vunpack.c.h.b16 %v818
        %v1408 = vunpack.c.l.b16 %v819
        %v1409 = vunpack.c.h.b16 %v819
        %v1410 = vunpack.c.l.b16 %v820
        %v1411 = vunpack.c.h.b16 %v820
        %v1412 = vunpack.c.l.b16 %v821
        %v1413 = vunpack.c.h.b16 %v821
        %v1414 = vunpack.c.l.b16 %v822
        %v1415 = vunpack.c.h.b16 %v822
        %v1416 = vunpack.c.l.b16 %v823
        %v1417 = vunpack.c.h.b16 %v823
        %v1418 = vunpack.c.l.b16 %v824
        %v1419 = vunpack.c.h.b16 %v824
        %v1420 = vunpack.c.l.b16 %v825
        %v1421 = vunpack.c.h.b16 %v825
        %v1422 = vunpack.c.l.b16 %v826
        %v1423 = vunpack.c.h.b16 %v826
        %v1424 = vunpack.c.l.b16 %v827
        %v1425 = vunpack.c.h.b16 %v827
        %v1426 = vunpack.c.l.b16 %v828
        %v1427 = vunpack.c.h.b16 %v828
        %v1428 = vunpack.c.l.b16 %v829
        %v1429 = vunpack.c.h.b16 %v829
        %v1430 = vunpack.c.l.b16 %v830
        %v1431 = vunpack.c.h.b16 %v830
        %v1432 = vunpack.c.l.b16 %v831
        %v1433 = vunpack.c.h.b16 %v831
        %v1434 = vunpack.c.l.b16 %v832
        %v1435 = vunpack.c.h.b16 %v832
        %v1436 = vunpack.c.l.b16 %v833
        %v1437 = vunpack.c.h.b16 %v833
        %v1438 = vunpack.c.l.b16 %v834
        %v1439 = vunpack.c.h.b16 %v834
        %v1440 = vunpack.c.l.b16 %v835
        %v1441 = vunpack.c.h.b16 %v835
        %v1442 = vunpack.c.l.b16 %v836
        %v1443 = vunpack.c.h.b16 %v836
        %v1444 = vunpack.c.l.b16 %v837
        %v1445 = vunpack.c.h.b16 %v837
        %v1446 = vunpack.c.l.b16 %v838
        %v1447 = vunpack.c.h.b16 %v838
        %v1448 = vunpack.c.l.b16 %v839
        %v1449 = vunpack.c.h.b16 %v839
        %v1450 = vunpack.c.l.b16 %v840
        %v1451 = vunpack.c.h.b16 %v840
        %v1452 = vunpack.c.l.b16 %v841
        %v1453 = vunpack.c.h.b16 %v841
        %v1454 = vunpack.c.l.b16 %v842
        %v1455 = vunpack.c.h.b16 %v842
        %v1456 = vunpack.c.l.b16 %v843
        %v1457 = vunpack.c.h.b16 %v843
        %v1458 = vunpack.c.l.b16 %v844
        %v1459 = vunpack.c.h.b16 %v844
        %v1460 = vunpack.c.l.b16 %v845
        %v1461 = vunpack.c.h.b16 %v845
        %v1462 = vunpack.c.l.b16 %v846
        %v1463 = vunpack.c.h.b16 %v846
        %v1464 = vunpack.c.l.b16 %v847
        %v1465 = vunpack.c.h.b16 %v847
        %v1466 = vunpack.c.l.b16 %v848
        %v1467 = vunpack.c.h.b16 %v848
        %v1468 = vunpack.c.l.b16 %v849
        %v1469 = vunpack.c.h.b16 %v849
        %v1470 = vunpack.c.l.b16 %v850
        %v1471 = vunpack.c.h.b16 %v850
        %v1472 = vunpack.c.l.b16 %v851
        %v1473 = vunpack.c.h.b16 %v851
        %v1474 = vunpack.c.l.b16 %v852
        %v1475 = vunpack.c.h.b16 %v852
        %v1476 = vunpack.c.l.b16 %v853
        %v1477 = vunpack.c.h.b16 %v853
        %v1478 = vunpack.c.l.b16 %v854
        %v1479 = vunpack.c.h.b16 %v854
        %v1480 = vunpack.c.l.b16 %v855
        %v1481 = vunpack.c.h.b16 %v855
        %v1482 = vunpack.c.l.b16 %v856
        %v1483 = vunpack.c.h.b16 %v856
        %v1484 = vunpack.c.l.b16 %v857
        %v1485 = vunpack.c.h.b16 %v857
        %v1486 = vunpack.c.l.b16 %v858
        %v1487 = vunpack.c.h.b16 %v858
        %v1488 = vunpack.c.l.b16 %v859
        %v1489 = vunpack.c.h.b16 %v859
        %v1490 = vunpack.c.l.b16 %v860
        %v1491 = vunpack.c.h.b16 %v860
        %v1492 = vunpack.c.l.b16 %v861
        %v1493 = vunpack.c.h.b16 %v861
        %v1494 = vunpack.c.l.b16 %v862
        %v1495 = vunpack.c.h.b16 %v862
        %v1496 = vunpack.c.l.b16 %v863
        %v1497 = vunpack.c.h.b16 %v863
        %v1498 = vunpack.c.l.b16 %v864
        %v1499 = vunpack.c.h.b16 %v864
        %v1500 = vunpack.c.l.b16 %v865
        %v1501 = vunpack.c.h.b16 %v865
        %v1502 = vunpack.c.l.b16 %v866
        %v1503 = vunpack.c.h.b16 %v866
        %v1504 = vunpack.c.l.b16 %v867
        %v1505 = vunpack.c.h.b16 %v867
        %v1506 = vunpack.c.l.b16 %v868
        %v1507 = vunpack.c.h.b16 %v868
        %v1508 = vunpack.c.l.b16 %v869
        %v1509 = vunpack.c.h.b16 %v869
        %v1510 = vunpack.c.l.b16 %v870
        %v1511 = vunpack.c.h.b16 %v870
        %v1512 = vunpack.c.l.b16 %v871
        %v1513 = vunpack.c.h.b16 %v871
        %v1514 = vunpack.c.l.b16 %v872
        %v1515 = vunpack.c.h.b16 %v872
        %v1516 = vunpack.c.l.b16 %v873
        %v1517 = vunpack.c.h.b16 %v873
        %v1518 = vunpack.c.l.b16 %v874
        %v1519 = vunpack.c.h.b16 %v874
        %v1520 = vunpack.c.l.b16 %v875
        %v1521 = vunpack.c.h.b16 %v875
        %v1522 = vunpack.c.l.b16 %v876
        %v1523 = vunpack.c.h.b16 %v876
        %v1524 = vunpack.c.l.b16 %v877
        %v1525 = vunpack.c.h.b16 %v877
        %v1526 = vunpack.c.l.b16 %v878
        %v1527 = vunpack.c.h.b16 %v878
        %v1528 = vunpack.c.l.b16 %v879
        %v1529 = vunpack.c.h.b16 %v879
        %v1530 = vunpack.c.l.b16 %v880
        %v1531 = vunpack.c.h.b16 %v880
        %v1532 = vunpack.c.l.b16 %v881
        %v1533 = vunpack.c.h.b16 %v881
        %v1534 = vunpack.c.l.b16 %v882
        %v1535 = vunpack.c.h.b16 %v882
        %v1536 = vunpack.c.l.b16 %v883
        %v1537 = vunpack.c.h.b16 %v883
        %v1538 = vunpack.c.l.b16 %v884
        %v1539 = vunpack.c.h.b16 %v884
        %v1540 = vunpack.c.l.b16 %v885
        %v1541 = vunpack.c.h.b16 %v885
        %v1542 = vunpack.c.l.b16 %v886
        %v1543 = vunpack.c.h.b16 %v886
        %v1544 = vunpack.c.l.b16 %v887
        %v1545 = vunpack.c.h.b16 %v887
        %v1546 = vunpack.c.l.b16 %v888
        %v1547 = vunpack.c.h.b16 %v888
        %v1548 = vunpack.c.l.b16 %v889
        %v1549 = vunpack.c.h.b16 %v889
        %v1550 = vunpack.c.l.b16 %v890
        %v1551 = vunpack.c.h.b16 %v890
        %v1552 = vunpack.c.l.b16 %v891
        %v1553 = vunpack.c.h.b16 %v891
        %v1554 = vunpack.c.l.b16 %v892
        %v1555 = vunpack.c.h.b16 %v892
        %v1556 = vunpack.c.l.b16 %v893
        %v1557 = vunpack.c.h.b16 %v893
        %v1558 = vunpack.c.l.b16 %v894
        %v1559 = vunpack.c.h.b16 %v894
        %v1560 = vunpack.c.l.b16 %v895
        %v1561 = vunpack.c.h.b16 %v895
        %v1562 = vunpack.c.l.b16 %v896
        %v1563 = vunpack.c.h.b16 %v896
        %v1564 = vunpack.c.l.b16 %v897
        %v1565 = vunpack.c.h.b16 %v897
        %v1566 = vunpack.c.l.b16 %v898
        %v1567 = vunpack.c.h.b16 %v898
        %v1568 = vunpack.c.l.b16 %v899
        %v1569 = vunpack.c.h.b16 %v899
        %v1570 = vunpack.c.l.b16 %v900
        %v1571 = vunpack.c.h.b16 %v900
        %v1572 = vunpack.c.l.b16 %v901
        %v1573 = vunpack.c.h.b16 %v901
        %v1574 = vunpack.c.l.b16 %v902
        %v1575 = vunpack.c.h.b16 %v902
        %v1576 = vunpack.c.l.b16 %v903
        %v1577 = vunpack.c.h.b16 %v903
        %v1578 = vunpack.c.l.b16 %v904
        %v1579 = vunpack.c.h.b16 %v904
        %v1580 = vunpack.c.l.b16 %v905
        %v1581 = vunpack.c.h.b16 %v905
        %v1582 = vunpack.c.l.b16 %v906
        %v1583 = vunpack.c.h.b16 %v906
        %v1584 = vunpack.c.l.b16 %v907
        %v1585 = vunpack.c.h.b16 %v907
        %v1586 = vunpack.c.l.b16 %v908
        %v1587 = vunpack.c.h.b16 %v908
        %v1588 = vunpack.c.l.b16 %v909
        %v1589 = vunpack.c.h.b16 %v909
        %v1590 = vunpack.c.l.b16 %v910
        %v1591 = vunpack.c.h.b16 %v910
        %v1592 = vunpack.c.l.b16 %v911
        %v1593 = vunpack.c.h.b16 %v911
        %v1594 = vunpack.c.l.b16 %v912
        %v1595 = vunpack.c.h.b16 %v912
        %v1596 = vunpack.c.l.b16 %v913
        %v1597 = vunpack.c.h.b16 %v913
        %v1598 = vunpack.c.l.b16 %v914
        %v1599 = vunpack.c.h.b16 %v914
        %v1600 = vunpack.c.l.b16 %v915
        %v1601 = vunpack.c.h.b16 %v915
        %v1602 = vunpack.c.l.b16 %v916
        %v1603 = vunpack.c.h.b16 %v916
        %v1604 = vunpack.c.l.b16 %v917
        %v1605 = vunpack.c.h.b16 %v917
        %v1606 = vunpack.c.l.b16 %v918
        %v1607 = vunpack.c.h.b16 %v918
        %v1608 = vunpack.c.l.b16 %v919
        %v1609 = vunpack.c.h.b16 %v919
        %v1610 = vunpack.c.l.b16 %v920
        %v1611 = vunpack.c.h.b16 %v920
        %v1612 = vunpack.c.l.b16 %v921
        %v1613 = vunpack.c.h.b16 %v921
        %v1614 = vunpack.c.l.b16 %v922
        %v1615 = vunpack.c.h.b16 %v922
        %v1616 = vunpack.c.l.b16 %v923
        %v1617 = vunpack.c.h.b16 %v923
        %v1618 = vpack.c.b16 %v1174, %v1170
        %v1619 = vpack.c.b16 %v1175, %v1171
        %v1620 = vpack.c.b16 %v1176, %v1172
        %v1621 = vpack.c.b16 %v1177, %v1173
        %v1622 = vpack.c.b16 %v1182, %v1178
        %v1623 = vpack.c.b16 %v1183, %v1179
        %v1624 = vpack.c.b16 %v1184, %v1180
        %v1625 = vpack.c.b16 %v1185, %v1181
        %v1626 = vpack.c.b16 %v1190, %v1186
        %v1627 = vpack.c.b16 %v1191, %v1187
        %v1628 = vpack.c.b16 %v1192, %v1188
        %v1629 = vpack.c.b16 %v1193, %v1189
        %v1630 = vpack.c.b16 %v1198, %v1194
        %v1631 = vpack.c.b16 %v1199, %v1195
        %v1632 = vpack.c.b16 %v1200, %v1196
        %v1633 = vpack.c.b16 %v1201, %v1197
        %v1634 = vpack.c.b16 %v1206, %v1202
        %v1635 = vpack.c.b16 %v1207, %v1203
        %v1636 = vpack.c.b16 %v1208, %v1204
        %v1637 = vpack.c.b16 %v1209, %v1205
        %v1638 = vpack.c.b16 %v1214, %v1210
        %v1639 = vpack.c.b16 %v1215, %v1211
        %v1640 = vpack.c.b16 %v1216, %v1212
        %v1641 = vpack.c.b16 %v1217, %v1213
        %v1642 = vpack.c.b16 %v1222, %v1218
        %v1643 = vpack.c.b16 %v1223, %v1219
        %v1644 = vpack.c.b16 %v1224, %v1220
        %v1645 = vpack.c.b16 %v1225, %v1221
        %v1646 = vpack.c.b16 %v1230, %v1226
        %v1647 = vpack.c.b16 %v1231, %v1227
        %v1648 = vpack.c.b16 %v1232, %v1228
        %v1649 = vpack.c.b16 %v1233, %v1229
        %v1650 = vpack.c.b16 %v1238, %v1234
        %v1651 = vpack.c.b16 %v1239, %v1235
        %v1652 = vpack.c.b16 %v1240, %v1236
        %v1653 = vpack.c.b16 %v1241, %v1237
        %v1654 = vpack.c.b16 %v1246, %v1242
        %v1655 = vpack.c.b16 %v1247, %v1243
        %v1656 = vpack.c.b16 %v1248, %v1244
        %v1657 = vpack.c.b16 %v1249, %v1245
        %v1658 = vpack.c.b16 %v1254, %v1250
        %v1659 = vpack.c.b16 %v1255, %v1251
        %v1660 = vpack.c.b16 %v1256, %v1252
        %v1661 = vpack.c.b16 %v1257, %v1253
        %v1662 = vpack.c.b16 %v1262, %v1258
        %v1663 = vpack.c.b16 %v1263, %v1259
        %v1664 = vpack.c.b16 %v1264, %v1260
        %v1665 = vpack.c.b16 %v1265, %v1261
        %v1666 = vpack.c.b16 %v1270, %v1266
        %v1667 = vpack.c.b16 %v1271, %v1267
        %v1668 = vpack.c.b16 %v1272, %v1268
        %v1669 = vpack.c.b16 %v1273, %v1269
        %v1670 = vpack.c.b16 %v1278, %v1274
        %v1671 = vpack.c.b16 %v1279, %v1275
        %v1672 = vpack.c.b16 %v1280, %v1276
        %v1673 = vpack.c.b16 %v1281, %v1277
        %v1674 = vpack.c.b16 %v1286, %v1282
        %v1675 = vpack.c.b16 %v1287, %v1283
        %v1676 = vpack.c.b16 %v1288, %v1284
        %v1677 = vpack.c.b16 %v1289, %v1285
        %v1678 = vpack.c.b16 %v1294, %v1290
        %v1679 = vpack.c.b16 %v1295, %v1291
        %v1680 = vpack.c.b16 %v1296, %v1292
        %v1681 = vpack.c.b16 %v1297, %v1293
        %v1682 = vpack.c.b16 %v1302, %v1298
        %v1683 = vpack.c.b16 %v1303, %v1299
        %v1684 = vpack.c.b16 %v1304, %v1300
        %v1685 = vpack.c.b16 %v1305, %v1301
        %v1686 = vpack.c.b16 %v1310, %v1306
        %v1687 = vpack.c.b16 %v1311, %v1307
        %v1688 = vpack.c.b16 %v1312, %v1308
        %v1689 = vpack.c.b16 %v1313, %v1309
        %v1690 = vpack.c.b16 %v1318, %v1314
        %v1691 = vpack.c.b16 %v1319, %v1315
        %v1692 = vpack.c.b16 %v1320, %v1316
        %v1693 = vpack.c.b16 %v1321, %v1317
        %v1694 = vpack.c.b16 %v1326, %v1322
        %v1695 = vpack.c.b16 %v1327, %v1323
        %v1696 = vpack.c.b16 %v1328, %v1324
        %v1697 = vpack.c.b16 %v1329, %v1325
        %v1698 = vpack.c.b16 %v1334, %v1330
        %v1699 = vpack.c.b16 %v1335, %v1331
        %v1700 = vpack.c.b16 %v1336, %v1332
        %v1701 = vpack.c.b16 %v1337, %v1333
        %v1702 = vpack.c.b16 %v1342, %v1338
        %v1703 = vpack.c.b16 %v1343, %v1339
        %v1704 = vpack.c.b16 %v1344, %v1340
        %v1705 = vpack.c.b16 %v1345, %v1341
        %v1706 = vpack.c.b16 %v1350, %v1346
        %v1707 = vpack.c.b16 %v1351, %v1347
        %v1708 = vpack.c.b16 %v1352, %v1348
        %v1709 = vpack.c.b16 %v1353, %v1349
        %v1710 = vpack.c.b16 %v1358, %v1354
        %v1711 = vpack.c.b16 %v1359, %v1355
        %v1712 = vpack.c.b16 %v1360, %v1356
        %v1713 = vpack.c.b16 %v1361, %v1357
        %v1714 = vpack.c.b16 %v1366, %v1362
        %v1715 = vpack.c.b16 %v1367, %v1363
        %v1716 = vpack.c.b16 %v1368, %v1364
        %v1717 = vpack.c.b16 %v1369, %v1365
        %v1718 = vpack.c.b16 %v1374, %v1370
        %v1719 = vpack.c.b16 %v1375, %v1371
        %v1720 = vpack.c.b16 %v1376, %v1372
        %v1721 = vpack.c.b16 %v1377, %v1373
        %v1722 = vpack.c.b16 %v1382, %v1378
        %v1723 = vpack.c.b16 %v1383, %v1379
        %v1724 = vpack.c.b16 %v1384, %v1380
        %v1725 = vpack.c.b16 %v1385, %v1381
        %v1726 = vpack.c.b16 %v1390, %v1386
        %v1727 = vpack.c.b16 %v1391, %v1387
        %v1728 = vpack.c.b16 %v1392, %v1388
        %v1729 = vpack.c.b16 %v1393, %v1389
        %v1730 = vpack.c.b16 %v1398, %v1394
        %v1731 = vpack.c.b16 %v1399, %v1395
        %v1732 = vpack.c.b16 %v1400, %v1396
        %v1733 = vpack.c.b16 %v1401, %v1397
        %v1734 = vpack.c.b16 %v1406, %v1402
        %v1735 = vpack.c.b16 %v1407, %v1403
        %v1736 = vpack.c.b16 %v1408, %v1404
        %v1737 = vpack.c.b16 %v1409, %v1405
        %v1738 = vpack.c.b16 %v1414, %v1410
        %v1739 = vpack.c.b16 %v1415, %v1411
        %v1740 = vpack.c.b16 %v1416, %v1412
        %v1741 = vpack.c.b16 %v1417, %v1413
        %v1742 = vpack.c.b16 %v1422, %v1418
        %v1743 = vpack.c.b16 %v1423, %v1419
        %v1744 = vpack.c.b16 %v1424, %v1420
        %v1745 = vpack.c.b16 %v1425, %v1421
        %v1746 = vpack.c.b16 %v1430, %v1426
        %v1747 = vpack.c.b16 %v1431, %v1427
        %v1748 = vpack.c.b16 %v1432, %v1428
        %v1749 = vpack.c.b16 %v1433, %v1429
        %v1750 = vpack.c.b16 %v1438, %v1434
        %v1751 = vpack.c.b16 %v1439, %v1435
        %v1752 = vpack.c.b16 %v1440, %v1436
        %v1753 = vpack.c.b16 %v1441, %v1437
        %v1754 = vpack.c.b16 %v1446, %v1442
        %v1755 = vpack.c.b16 %v1447, %v1443
        %v1756 = vpack.c.b16 %v1448, %v1444
        %v1757 = vpack.c.b16 %v1449, %v1445
        %v1758 = vpack.c.b16 %v1454, %v1450
        %v1759 = vpack.c.b16 %v1455, %v1451
        %v1760 = vpack.c.b16 %v1456, %v1452
        %v1761 = vpack.c.b16 %v1457, %v1453
        %v1762 = vpack.c.b16 %v1462, %v1458
        %v1763 = vpack.c.b16 %v1463, %v1459
        %v1764 = vpack.c.b16 %v1464, %v1460
        %v1765 = vpack.c.b16 %v1465, %v1461
        %v1766 = vpack.c.b16 %v1470, %v1466
        %v1767 = vpack.c.b16 %v1471, %v1467
        %v1768 = vpack.c.b16 %v1472, %v1468
        %v1769 = vpack.c.b16 %v1473, %v1469
        %v1770 = vpack.c.b16 %v1478, %v1474
        %v1771 = vpack.c.b16 %v1479, %v1475
        %v1772 = vpack.c.b16 %v1480, %v1476
        %v1773 = vpack.c.b16 %v1481, %v1477
        %v1774 = vpack.c.b16 %v1486, %v1482
        %v1775 = vpack.c.b16 %v1487, %v1483
        %v1776 = vpack.c.b16 %v1488, %v1484
        %v1777 = vpack.c.b16 %v1489, %v1485
        %v1778 = vpack.c.b16 %v1494, %v1490
        %v1779 = vpack.c.b16 %v1495, %v1491
        %v1780 = vpack.c.b16 %v1496, %v1492
        %v1781 = vpack.c.b16 %v1497, %v1493
        %v1782 = vpack.c.b16 %v1502, %v1498
        %v1783 = vpack.c.b16 %v1503, %v1499
        %v1784 = vpack.c.b16 %v1504, %v1500
        %v1785 = vpack.c.b16 %v1505, %v1501
        %v1786 = vpack.c.b16 %v1510, %v1506
        %v1787 = vpack.c.b16 %v1511, %v1507
        %v1788 = vpack.c.b16 %v1512, %v1508
        %v1789 = vpack.c.b16 %v1513, %v1509
        %v1790 = vpack.c.b16 %v1518, %v1514
        %v1791 = vpack.c.b16 %v1519, %v1515
        %v1792 = vpack.c.b16 %v1520, %v1516
        %v1793 = vpack.c.b16 %v1521, %v1517
        %v1794 = vpack.c.b16 %v1526, %v1522
        %v1795 = vpack.c.b16 %v1527, %v1523
        %v1796 = vpack.c.b16 %v1528, %v1524
        %v1797 = vpack.c.b16 %v1529, %v1525
        %v1798 = vpack.c.b16 %v1534, %v1530
        %v1799 = vpack.c.b16 %v1535, %v1531
        %v1800 = vpack.c.b16 %v1536, %v1532
        %v1801 = vpack.c.b16 %v1537, %v1533
        %v1802 = vpack.c.b16 %v1542, %v1538
        %v1803 = vpack.c.b16 %v1543, %v1539
        %v1804 = vpack.c.b16 %v1544, %v1540
        %v1805 = vpack.c.b16 %v1545, %v1541
        %v1806 = vpack.c.b16 %v1550, %v1546
        %v1807 = vpack.c.b16 %v1551, %v1547
        %v1808 = vpack.c.b16 %v1552, %v1548
        %v1809 = vpack.c.b16 %v1553, %v1549
        %v1810 = vpack.c.b16 %v1558, %v1554
        %v1811 = vpack.c.b16 %v1559, %v1555
        %v1812 = vpack.c.b16 %v1560, %v1556
        %v1813 = vpack.c.b16 %v1561, %v1557
        %v1814 = vpack.c.b16 %v1566, %v1562
        %v1815 = vpack.c.b16 %v1567, %v1563
        %v1816 = vpack.c.b16 %v1568, %v1564
        %v1817 = vpack.c.b16 %v1569, %v1565
        %v1818 = vpack.c.b16 %v1574, %v1570
        %v1819 = vpack.c.b16 %v1575, %v1571
        %v1820 = vpack.c.b16 %v1576, %v1572
        %v1821 = vpack.c.b16 %v1577, %v1573
        %v1822 = vpack.c.b16 %v1582, %v1578
        %v1823 = vpack.c.b16 %v1583, %v1579
        %v1824 = vpack.c.b16 %v1584, %v1580
        %v1825 = vpack.c.b16 %v1585, %v1581
        %v1826 = vpack.c.b16 %v1590, %v1586
        %v1827 = vpack.c.b16 %v1591, %v1587
        %v1828 = vpack.c.b16 %v1592, %v1588
        %v1829 = vpack.c.b16 %v1593, %v1589
        %v1830 = vpack.c.b16 %v1598, %v1594
        %v1831 = vpack.c.b16 %v1599, %v1595
        %v1832 = vpack.c.b16 %v1600, %v1596
        %v1833 = vpack.c.b16 %v1601, %v1597
        %v1834 = vpack.c.b16 %v1606, %v1602
        %v1835 = vpack.c.b16 %v1607, %v1603
        %v1836 = vpack.c.b16 %v1608, %v1604
        %v1837 = vpack.c.b16 %v1609, %v1605
        %v1838 = vpack.c.b16 %v1614, %v1610
        %v1839 = vpack.c.b16 %v1615, %v1611
        %v1840 = vpack.c.b16 %v1616, %v1612
        %v1841 = vpack.c.b16 %v1617, %v1613
        %2066 = vmatprep.subr.bf16.mxu0 %v1647
        %2067 = vmatpush1.bf16.msra.mxu0 %v1646
        %2068 = vmatprep.subr.bf16.mxu0 %v1643
        %2069 = vmatpush1.bf16.msra.mxu0 %v1642
        %2070 = vmatprep.subr.bf16.mxu0 %v1639
        %2071 = vmatpush1.bf16.msra.mxu0 %v1638
        %2072 = vmatprep.subr.bf16.mxu0 %v1635
        %2073 = vmatpush1.bf16.msra.mxu0 %v1634
        %2074 = vmatprep.subr.bf16.mxu0 %v1631
        %2075 = vmatpush1.bf16.msra.mxu0 %v1630
        %2076 = vmatprep.subr.bf16.mxu0 %v1627
        %2077 = vmatpush1.bf16.msra.mxu0 %v1626
        %2078 = vmatprep.subr.bf16.mxu0 %v1623
        %2079 = vmatpush1.bf16.msra.mxu0 %v1622
        %2080 = vmatprep.subr.bf16.mxu0 %v1619
        %2081 = vmatpush1.bf16.msra.mxu0 %v1618
        %2082 = vmatprep.subr.bf16.mxu0 %v1679
        %2083 = vmatpush2.bf16.msra.mxu0 %v1678
        %2084 = vmatprep.subr.bf16.mxu0 %v1675
        %2085 = vmatpush2.bf16.msra.mxu0 %v1674
        %2086 = vmatprep.subr.bf16.mxu0 %v1671
        %2087 = vmatpush2.bf16.msra.mxu0 %v1670
        %2088 = vmatprep.subr.bf16.mxu0 %v1667
        %2089 = vmatpush2.bf16.msra.mxu0 %v1666
        %2090 = vmatprep.subr.bf16.mxu0 %v1663
        %2091 = vmatpush2.bf16.msra.mxu0 %v1662
        %2092 = vmatprep.subr.bf16.mxu0 %v1659
        %2093 = vmatpush2.bf16.msra.mxu0 %v1658
        %2094 = vmatprep.subr.bf16.mxu0 %v1655
        %2095 = vmatpush2.bf16.msra.mxu0 %v1654
        %2096 = vmatprep.subr.bf16.mxu0 %v1651
        %2097 = vmatpush2.bf16.msra.mxu0 %v1650
        %2098 = vmatprep.mubr.bf16.mxu0 %v645
        %2099 = vmatmul.mubr.bf16.gmra.mxu0 %v644
        %v2100 = vpop.f32.mrf.mxu0
        %v2101 = vadd.f32 %v929, %v2100
        %v2102 = vpop.f32.mrf.mxu0
        %v2103 = vadd.f32 %v933, %v2102
        %v2104 = vpop.f32.mrf.mxu0
        %v2105 = vadd.f32 %v929, %v2104
        %v2106 = vpop.f32.mrf.mxu0
        %v2107 = vadd.f32 %v933, %v2106
        %2108 = vmatprep.mubr.bf16.mxu0 %v652
        %2109 = vmatmul.mubr.bf16.gmra.mxu0 %v651
        %v2110 = vpop.f32.mrf.mxu0
        %v2111 = vadd.f32 %v929, %v2110
        %v2112 = vpop.f32.mrf.mxu0
        %v2113 = vadd.f32 %v933, %v2112
        %v2114 = vpop.f32.mrf.mxu0
        %v2115 = vadd.f32 %v929, %v2114
        %v2116 = vpop.f32.mrf.mxu0
        %v2117 = vadd.f32 %v933, %v2116
        %2118 = vmatprep.mubr.bf16.mxu0 %v659
        %2119 = vmatmul.mubr.bf16.gmra.mxu0 %v658
        %v2120 = vpop.f32.mrf.mxu0
        %v2121 = vadd.f32 %v929, %v2120
        %v2122 = vpop.f32.mrf.mxu0
        %v2123 = vadd.f32 %v933, %v2122
        %v2124 = vpop.f32.mrf.mxu0
        %v2125 = vadd.f32 %v929, %v2124
        %v2126 = vpop.f32.mrf.mxu0
        %v2127 = vadd.f32 %v933, %v2126
        %2128 = vmatprep.mubr.bf16.mxu0 %v666
        %2129 = vmatmul.mubr.bf16.gmra.mxu0 %v665
        %v2130 = vpop.f32.mrf.mxu0
        %v2131 = vadd.f32 %v929, %v2130
        %v2132 = vpop.f32.mrf.mxu0
        %v2133 = vadd.f32 %v933, %v2132
        %v2134 = vpop.f32.mrf.mxu0
        %v2135 = vadd.f32 %v929, %v2134
        %v2136 = vpop.f32.mrf.mxu0
        %v2137 = vadd.f32 %v933, %v2136
        %2138 = vmatprep.mubr.bf16.mxu0 %v673
        %2139 = vmatmul.mubr.bf16.gmra.mxu0 %v672
        %v2140 = vpop.f32.mrf.mxu0
        %v2141 = vadd.f32 %v929, %v2140
        %v2142 = vpop.f32.mrf.mxu0
        %v2143 = vadd.f32 %v933, %v2142
        %v2144 = vpop.f32.mrf.mxu0
        %v2145 = vadd.f32 %v929, %v2144
        %v2146 = vpop.f32.mrf.mxu0
        %v2147 = vadd.f32 %v933, %v2146
        %2148 = vmatprep.mubr.bf16.mxu0 %v680
        %2149 = vmatmul.mubr.bf16.gmra.mxu0 %v679
        %v2150 = vpop.f32.mrf.mxu0
        %v2151 = vadd.f32 %v929, %v2150
        %v2152 = vpop.f32.mrf.mxu0
        %v2153 = vadd.f32 %v933, %v2152
        %v2154 = vpop.f32.mrf.mxu0
        %v2155 = vadd.f32 %v929, %v2154
        %v2156 = vpop.f32.mrf.mxu0
        %v2157 = vadd.f32 %v933, %v2156
        %2158 = vmatprep.mubr.bf16.mxu0 %v687
        %2159 = vmatmul.mubr.bf16.gmra.mxu0 %v686
        %v2160 = vpop.f32.mrf.mxu0
        %v2161 = vadd.f32 %v929, %v2160
        %v2162 = vpop.f32.mrf.mxu0
        %v2163 = vadd.f32 %v933, %v2162
        %v2164 = vpop.f32.mrf.mxu0
        %v2165 = vadd.f32 %v929, %v2164
        %v2166 = vpop.f32.mrf.mxu0
        %v2167 = vadd.f32 %v933, %v2166
        %2168 = vmatprep.mubr.bf16.mxu0 %v694
        %2169 = vmatmul.mubr.bf16.gmra.mxu0 %v693
        %v2170 = vpop.f32.mrf.mxu0
        %v2171 = vadd.f32 %v929, %v2170
        %v2172 = vpop.f32.mrf.mxu0
        %v2173 = vadd.f32 %v933, %v2172
        %v2174 = vpop.f32.mrf.mxu0
        %v2175 = vadd.f32 %v929, %v2174
        %v2176 = vpop.f32.mrf.mxu0
        %v2177 = vadd.f32 %v933, %v2176
        %2178 = vdwg.mxu0
        %2179 = vmatprep.subr.bf16.mxu0 %v1711
        %2180 = vmatpush1.bf16.msra.mxu0 %v1710
        %2181 = vmatprep.subr.bf16.mxu0 %v1707
        %2182 = vmatpush1.bf16.msra.mxu0 %v1706
        %2183 = vmatprep.subr.bf16.mxu0 %v1703
        %2184 = vmatpush1.bf16.msra.mxu0 %v1702
        %2185 = vmatprep.subr.bf16.mxu0 %v1699
        %2186 = vmatpush1.bf16.msra.mxu0 %v1698
        %2187 = vmatprep.subr.bf16.mxu0 %v1695
        %2188 = vmatpush1.bf16.msra.mxu0 %v1694
        %2189 = vmatprep.subr.bf16.mxu0 %v1691
        %2190 = vmatpush1.bf16.msra.mxu0 %v1690
        %2191 = vmatprep.subr.bf16.mxu0 %v1687
        %2192 = vmatpush1.bf16.msra.mxu0 %v1686
        %2193 = vmatprep.subr.bf16.mxu0 %v1683
        %2194 = vmatpush1.bf16.msra.mxu0 %v1682
        %2195 = vmatprep.subr.bf16.mxu0 %v1743
        %2196 = vmatpush2.bf16.msra.mxu0 %v1742
        %2197 = vmatprep.subr.bf16.mxu0 %v1739
        %2198 = vmatpush2.bf16.msra.mxu0 %v1738
        %2199 = vmatprep.subr.bf16.mxu0 %v1735
        %2200 = vmatpush2.bf16.msra.mxu0 %v1734
        %2201 = vmatprep.subr.bf16.mxu0 %v1731
        %2202 = vmatpush2.bf16.msra.mxu0 %v1730
        %2203 = vmatprep.subr.bf16.mxu0 %v1727
        %2204 = vmatpush2.bf16.msra.mxu0 %v1726
        %2205 = vmatprep.subr.bf16.mxu0 %v1723
        %2206 = vmatpush2.bf16.msra.mxu0 %v1722
        %2207 = vmatprep.subr.bf16.mxu0 %v1719
        %2208 = vmatpush2.bf16.msra.mxu0 %v1718
        %2209 = vmatprep.subr.bf16.mxu0 %v1715
        %2210 = vmatpush2.bf16.msra.mxu0 %v1714
        %2211 = vmatprep.mubr.bf16.mxu0 %v647
        %2212 = vmatmul.mubr.bf16.gmra.mxu0 %v646
        %v2213 = vpop.f32.mrf.mxu0
        %v2214 = vadd.f32 %v2101, %v2213
        %v2215 = vpop.f32.mrf.mxu0
        %v2216 = vadd.f32 %v2103, %v2215
        %v2217 = vpop.f32.mrf.mxu0
        %v2218 = vadd.f32 %v2105, %v2217
        %v2219 = vpop.f32.mrf.mxu0
        %v2220 = vadd.f32 %v2107, %v2219
        %2221 = vmatprep.mubr.bf16.mxu0 %v654
        %2222 = vmatmul.mubr.bf16.gmra.mxu0 %v653
        %v2223 = vpop.f32.mrf.mxu0
        %v2224 = vadd.f32 %v2111, %v2223
        %v2225 = vpop.f32.mrf.mxu0
        %v2226 = vadd.f32 %v2113, %v2225
        %v2227 = vpop.f32.mrf.mxu0
        %v2228 = vadd.f32 %v2115, %v2227
        %v2229 = vpop.f32.mrf.mxu0
        %v2230 = vadd.f32 %v2117, %v2229
        %2231 = vmatprep.mubr.bf16.mxu0 %v661
        %2232 = vmatmul.mubr.bf16.gmra.mxu0 %v660
        %v2233 = vpop.f32.mrf.mxu0
        %v2234 = vadd.f32 %v2121, %v2233
        %v2235 = vpop.f32.mrf.mxu0
        %v2236 = vadd.f32 %v2123, %v2235
        %v2237 = vpop.f32.mrf.mxu0
        %v2238 = vadd.f32 %v2125, %v2237
        %v2239 = vpop.f32.mrf.mxu0
        %v2240 = vadd.f32 %v2127, %v2239
        %2241 = vmatprep.mubr.bf16.mxu0 %v668
        %2242 = vmatmul.mubr.bf16.gmra.mxu0 %v667
        %v2243 = vpop.f32.mrf.mxu0
        %v2244 = vadd.f32 %v2131, %v2243
        %v2245 = vpop.f32.mrf.mxu0
        %v2246 = vadd.f32 %v2133, %v2245
        %v2247 = vpop.f32.mrf.mxu0
        %v2248 = vadd.f32 %v2135, %v2247
        %v2249 = vpop.f32.mrf.mxu0
        %v2250 = vadd.f32 %v2137, %v2249
        %2251 = vmatprep.mubr.bf16.mxu0 %v675
        %2252 = vmatmul.mubr.bf16.gmra.mxu0 %v674
        %v2253 = vpop.f32.mrf.mxu0
        %v2254 = vadd.f32 %v2141, %v2253
        %v2255 = vpop.f32.mrf.mxu0
        %v2256 = vadd.f32 %v2143, %v2255
        %v2257 = vpop.f32.mrf.mxu0
        %v2258 = vadd.f32 %v2145, %v2257
        %v2259 = vpop.f32.mrf.mxu0
        %v2260 = vadd.f32 %v2147, %v2259
        %2261 = vmatprep.mubr.bf16.mxu0 %v682
        %2262 = vmatmul.mubr.bf16.gmra.mxu0 %v681
        %v2263 = vpop.f32.mrf.mxu0
        %v2264 = vadd.f32 %v2151, %v2263
        %v2265 = vpop.f32.mrf.mxu0
        %v2266 = vadd.f32 %v2153, %v2265
        %v2267 = vpop.f32.mrf.mxu0
        %v2268 = vadd.f32 %v2155, %v2267
        %v2269 = vpop.f32.mrf.mxu0
        %v2270 = vadd.f32 %v2157, %v2269
        %2271 = vmatprep.mubr.bf16.mxu0 %v689
        %2272 = vmatmul.mubr.bf16.gmra.mxu0 %v688
        %v2273 = vpop.f32.mrf.mxu0
        %v2274 = vadd.f32 %v2161, %v2273
        %v2275 = vpop.f32.mrf.mxu0
        %v2276 = vadd.f32 %v2163, %v2275
        %v2277 = vpop.f32.mrf.mxu0
        %v2278 = vadd.f32 %v2165, %v2277
        %v2279 = vpop.f32.mrf.mxu0
        %v2280 = vadd.f32 %v2167, %v2279
        %2281 = vmatprep.mubr.bf16.mxu0 %v696
        %2282 = vmatmul.mubr.bf16.gmra.mxu0 %v695
        %v2283 = vpop.f32.mrf.mxu0
        %v2284 = vadd.f32 %v2171, %v2283
        %v2285 = vpop.f32.mrf.mxu0
        %v2286 = vadd.f32 %v2173, %v2285
        %v2287 = vpop.f32.mrf.mxu0
        %v2288 = vadd.f32 %v2175, %v2287
        %v2289 = vpop.f32.mrf.mxu0
        %v2290 = vadd.f32 %v2177, %v2289
        %2291 = vdwg.mxu0
        %2292 = vmatprep.subr.bf16.mxu0 %v1775
        %2293 = vmatpush1.bf16.msra.mxu0 %v1774
        %2294 = vmatprep.subr.bf16.mxu0 %v1771
        %2295 = vmatpush1.bf16.msra.mxu0 %v1770
        %2296 = vmatprep.subr.bf16.mxu0 %v1767
        %2297 = vmatpush1.bf16.msra.mxu0 %v1766
        %2298 = vmatprep.subr.bf16.mxu0 %v1763
        %2299 = vmatpush1.bf16.msra.mxu0 %v1762
        %2300 = vmatprep.subr.bf16.mxu0 %v1759
        %2301 = vmatpush1.bf16.msra.mxu0 %v1758
        %2302 = vmatprep.subr.bf16.mxu0 %v1755
        %2303 = vmatpush1.bf16.msra.mxu0 %v1754
        %2304 = vmatprep.subr.bf16.mxu0 %v1751
        %2305 = vmatpush1.bf16.msra.mxu0 %v1750
        %2306 = vmatprep.subr.bf16.mxu0 %v1747
        %2307 = vmatpush1.bf16.msra.mxu0 %v1746
        %2308 = vmatprep.subr.bf16.mxu0 %v1807
        %2309 = vmatpush2.bf16.msra.mxu0 %v1806
        %2310 = vmatprep.subr.bf16.mxu0 %v1803
        %2311 = vmatpush2.bf16.msra.mxu0 %v1802
        %2312 = vmatprep.subr.bf16.mxu0 %v1799
        %2313 = vmatpush2.bf16.msra.mxu0 %v1798
        %2314 = vmatprep.subr.bf16.mxu0 %v1795
        %2315 = vmatpush2.bf16.msra.mxu0 %v1794
        %2316 = vmatprep.subr.bf16.mxu0 %v1791
        %2317 = vmatpush2.bf16.msra.mxu0 %v1790
        %2318 = vmatprep.subr.bf16.mxu0 %v1787
        %2319 = vmatpush2.bf16.msra.mxu0 %v1786
        %2320 = vmatprep.subr.bf16.mxu0 %v1783
        %2321 = vmatpush2.bf16.msra.mxu0 %v1782
        %2322 = vmatprep.subr.bf16.mxu0 %v1779
        %2323 = vmatpush2.bf16.msra.mxu0 %v1778
        %2324 = vmatprep.mubr.bf16.mxu0 %v649
        %2325 = vmatmul.mubr.bf16.gmra.mxu0 %v648
        %v2326 = vpop.f32.mrf.mxu0
        %v2327 = vadd.f32 %v2214, %v2326
        %v2328 = vpop.f32.mrf.mxu0
        %v2329 = vadd.f32 %v2216, %v2328
        %v2330 = vpop.f32.mrf.mxu0
        %v2331 = vadd.f32 %v2218, %v2330
        %v2332 = vpop.f32.mrf.mxu0
        %v2333 = vadd.f32 %v2220, %v2332
        %2334 = vmatprep.mubr.bf16.mxu0 %v656
        %2335 = vmatmul.mubr.bf16.gmra.mxu0 %v655
        %v2336 = vpop.f32.mrf.mxu0
        %v2337 = vadd.f32 %v2224, %v2336
        %v2338 = vpop.f32.mrf.mxu0
        %v2339 = vadd.f32 %v2226, %v2338
        %v2340 = vpop.f32.mrf.mxu0
        %v2341 = vadd.f32 %v2228, %v2340
        %v2342 = vpop.f32.mrf.mxu0
        %v2343 = vadd.f32 %v2230, %v2342
        %2344 = vmatprep.mubr.bf16.mxu0 %v663
        %2345 = vmatmul.mubr.bf16.gmra.mxu0 %v662
        %v2346 = vpop.f32.mrf.mxu0
        %v2347 = vadd.f32 %v2234, %v2346
        %v2348 = vpop.f32.mrf.mxu0
        %v2349 = vadd.f32 %v2236, %v2348
        %v2350 = vpop.f32.mrf.mxu0
        %v2351 = vadd.f32 %v2238, %v2350
        %v2352 = vpop.f32.mrf.mxu0
        %v2353 = vadd.f32 %v2240, %v2352
        %2354 = vmatprep.mubr.bf16.mxu0 %v670
        %2355 = vmatmul.mubr.bf16.gmra.mxu0 %v669
        %v2356 = vpop.f32.mrf.mxu0
        %v2357 = vadd.f32 %v2244, %v2356
        %v2358 = vpop.f32.mrf.mxu0
        %v2359 = vadd.f32 %v2246, %v2358
        %v2360 = vpop.f32.mrf.mxu0
        %v2361 = vadd.f32 %v2248, %v2360
        %v2362 = vpop.f32.mrf.mxu0
        %v2363 = vadd.f32 %v2250, %v2362
        %2364 = vmatprep.mubr.bf16.mxu0 %v677
        %2365 = vmatmul.mubr.bf16.gmra.mxu0 %v676
        %v2366 = vpop.f32.mrf.mxu0
        %v2367 = vadd.f32 %v2254, %v2366
        %v2368 = vpop.f32.mrf.mxu0
        %v2369 = vadd.f32 %v2256, %v2368
        %v2370 = vpop.f32.mrf.mxu0
        %v2371 = vadd.f32 %v2258, %v2370
        %v2372 = vpop.f32.mrf.mxu0
        %v2373 = vadd.f32 %v2260, %v2372
        %2374 = vmatprep.mubr.bf16.mxu0 %v684
        %2375 = vmatmul.mubr.bf16.gmra.mxu0 %v683
        %v2376 = vpop.f32.mrf.mxu0
        %v2377 = vadd.f32 %v2264, %v2376
        %v2378 = vpop.f32.mrf.mxu0
        %v2379 = vadd.f32 %v2266, %v2378
        %v2380 = vpop.f32.mrf.mxu0
        %v2381 = vadd.f32 %v2268, %v2380
        %v2382 = vpop.f32.mrf.mxu0
        %v2383 = vadd.f32 %v2270, %v2382
        %2384 = vmatprep.mubr.bf16.mxu0 %v691
        %2385 = vmatmul.mubr.bf16.gmra.mxu0 %v690
        %v2386 = vpop.f32.mrf.mxu0
        %v2387 = vadd.f32 %v2274, %v2386
        %v2388 = vpop.f32.mrf.mxu0
        %v2389 = vadd.f32 %v2276, %v2388
        %v2390 = vpop.f32.mrf.mxu0
        %v2391 = vadd.f32 %v2278, %v2390
        %v2392 = vpop.f32.mrf.mxu0
        %v2393 = vadd.f32 %v2280, %v2392
        %2394 = vmatprep.mubr.bf16.mxu0 %v698
        %2395 = vmatmul.mubr.bf16.gmra.mxu0 %v697
        %v2396 = vpop.f32.mrf.mxu0
        %v2397 = vadd.f32 %v2284, %v2396
        %v2398 = vpop.f32.mrf.mxu0
        %v2399 = vadd.f32 %v2286, %v2398
        %v2400 = vpop.f32.mrf.mxu0
        %v2401 = vadd.f32 %v2288, %v2400
        %v2402 = vpop.f32.mrf.mxu0
        %v2403 = vadd.f32 %v2290, %v2402
        %2404 = vdwg.mxu0
        %2405 = vmatprep.subr.bf16.mxu0 %v1839
        %2406 = vmatpush1.bf16.msra.mxu0 %v1838
        %2407 = vmatprep.subr.bf16.mxu0 %v1835
        %2408 = vmatpush1.bf16.msra.mxu0 %v1834
        %2409 = vmatprep.subr.bf16.mxu0 %v1831
        %2410 = vmatpush1.bf16.msra.mxu0 %v1830
        %2411 = vmatprep.subr.bf16.mxu0 %v1827
        %2412 = vmatpush1.bf16.msra.mxu0 %v1826
        %2413 = vmatprep.subr.bf16.mxu0 %v1823
        %2414 = vmatpush1.bf16.msra.mxu0 %v1822
        %2415 = vmatprep.subr.bf16.mxu0 %v1819
        %2416 = vmatpush1.bf16.msra.mxu0 %v1818
        %2417 = vmatprep.subr.bf16.mxu0 %v1815
        %2418 = vmatpush1.bf16.msra.mxu0 %v1814
        %2419 = vmatprep.subr.bf16.mxu0 %v1811
        %2420 = vmatpush1.bf16.msra.mxu0 %v1810
        %2421 = vmatprep.subr.bf16.mxu0 0
        %2422 = vmatpush2.bf16.msra.mxu0 0
        %2423 = vmatprep.subr.bf16.mxu0 0
        %2424 = vmatpush2.bf16.msra.mxu0 0
        %2425 = vmatprep.subr.bf16.mxu0 0
        %2426 = vmatpush2.bf16.msra.mxu0 0
        %2427 = vmatprep.subr.bf16.mxu0 0
        %2428 = vmatpush2.bf16.msra.mxu0 0
        %2429 = vmatprep.subr.bf16.mxu0 0
        %2430 = vmatpush2.bf16.msra.mxu0 0
        %2431 = vmatprep.subr.bf16.mxu0 0
        %2432 = vmatpush2.bf16.msra.mxu0 0
        %2433 = vmatprep.subr.bf16.mxu0 0
        %2434 = vmatpush2.bf16.msra.mxu0 0
        %2435 = vmatprep.subr.bf16.mxu0 0
        %2436 = vmatpush2.bf16.msra.mxu0 0
        %2437 = vmatprep.mubr.bf16.mxu0 0
        %2438 = vmatmul.mubr.bf16.gmra.mxu0 %v650
        %v2439 = vpop.f32.mrf.mxu0
        %v2440 = vadd.f32 %v2327, %v2439
        %v2441 = vpop.f32.mrf.mxu0
        %v2442 = vadd.f32 %v2329, %v2441
        %v2443 = vpop.f32.mrf.mxu0
        %v2444 = vadd.f32 %v2331, %v2443
        %v2445 = vpop.f32.mrf.mxu0
        %v2446 = vadd.f32 %v2333, %v2445
        %2447 = vmatprep.mubr.bf16.mxu0 0
        %2448 = vmatmul.mubr.bf16.gmra.mxu0 %v657
        %v2449 = vpop.f32.mrf.mxu0
        %v2450 = vadd.f32 %v2337, %v2449
        %v2451 = vpop.f32.mrf.mxu0
        %v2452 = vadd.f32 %v2339, %v2451
        %v2453 = vpop.f32.mrf.mxu0
        %v2454 = vadd.f32 %v2341, %v2453
        %v2455 = vpop.f32.mrf.mxu0
        %v2456 = vadd.f32 %v2343, %v2455
        %2457 = vmatprep.mubr.bf16.mxu0 0
        %2458 = vmatmul.mubr.bf16.gmra.mxu0 %v664
        %v2459 = vpop.f32.mrf.mxu0
        %v2460 = vadd.f32 %v2347, %v2459
        %v2461 = vpop.f32.mrf.mxu0
        %v2462 = vadd.f32 %v2349, %v2461
        %v2463 = vpop.f32.mrf.mxu0
        %v2464 = vadd.f32 %v2351, %v2463
        %v2465 = vpop.f32.mrf.mxu0
        %v2466 = vadd.f32 %v2353, %v2465
        %2467 = vmatprep.mubr.bf16.mxu0 0
        %2468 = vmatmul.mubr.bf16.gmra.mxu0 %v671
        %v2469 = vpop.f32.mrf.mxu0
        %v2470 = vadd.f32 %v2357, %v2469
        %v2471 = vpop.f32.mrf.mxu0
        %v2472 = vadd.f32 %v2359, %v2471
        %v2473 = vpop.f32.mrf.mxu0
        %v2474 = vadd.f32 %v2361, %v2473
        %v2475 = vpop.f32.mrf.mxu0
        %v2476 = vadd.f32 %v2363, %v2475
        %2477 = vmatprep.mubr.bf16.mxu0 0
        %2478 = vmatmul.mubr.bf16.gmra.mxu0 %v678
        %v2479 = vpop.f32.mrf.mxu0
        %v2480 = vadd.f32 %v2367, %v2479
        %v2481 = vpop.f32.mrf.mxu0
        %v2482 = vadd.f32 %v2369, %v2481
        %v2483 = vpop.f32.mrf.mxu0
        %v2484 = vadd.f32 %v2371, %v2483
        %v2485 = vpop.f32.mrf.mxu0
        %v2486 = vadd.f32 %v2373, %v2485
        %2487 = vmatprep.mubr.bf16.mxu0 0
        %2488 = vmatmul.mubr.bf16.gmra.mxu0 %v685
        %v2489 = vpop.f32.mrf.mxu0
        %v2490 = vadd.f32 %v2377, %v2489
        %v2491 = vpop.f32.mrf.mxu0
        %v2492 = vadd.f32 %v2379, %v2491
        %v2493 = vpop.f32.mrf.mxu0
        %v2494 = vadd.f32 %v2381, %v2493
        %v2495 = vpop.f32.mrf.mxu0
        %v2496 = vadd.f32 %v2383, %v2495
        %2497 = vmatprep.mubr.bf16.mxu0 0
        %2498 = vmatmul.mubr.bf16.gmra.mxu0 %v692
        %v2499 = vpop.f32.mrf.mxu0
        %v2500 = vadd.f32 %v2387, %v2499
        %v2501 = vpop.f32.mrf.mxu0
        %v2502 = vadd.f32 %v2389, %v2501
        %v2503 = vpop.f32.mrf.mxu0
        %v2504 = vadd.f32 %v2391, %v2503
        %v2505 = vpop.f32.mrf.mxu0
        %v2506 = vadd.f32 %v2393, %v2505
        %2507 = vmatprep.mubr.bf16.mxu0 0
        %2508 = vmatmul.mubr.bf16.gmra.mxu0 %v699
        %v2509 = vpop.f32.mrf.mxu0
        %v2510 = vadd.f32 %v2397, %v2509
        %v2511 = vpop.f32.mrf.mxu0
        %v2512 = vadd.f32 %v2399, %v2511
        %v2513 = vpop.f32.mrf.mxu0
        %v2514 = vadd.f32 %v2401, %v2513
        %v2515 = vpop.f32.mrf.mxu0
        %v2516 = vadd.f32 %v2403, %v2515
        %2517 = vdwg.mxu0
        %2518 = vmatprep.subr.bf16.mxu0 %v1649
        %2519 = vmatpush1.bf16.msra.mxu0 %v1648
        %2520 = vmatprep.subr.bf16.mxu0 %v1645
        %2521 = vmatpush1.bf16.msra.mxu0 %v1644
        %2522 = vmatprep.subr.bf16.mxu0 %v1641
        %2523 = vmatpush1.bf16.msra.mxu0 %v1640
        %2524 = vmatprep.subr.bf16.mxu0 %v1637
        %2525 = vmatpush1.bf16.msra.mxu0 %v1636
        %2526 = vmatprep.subr.bf16.mxu0 %v1633
        %2527 = vmatpush1.bf16.msra.mxu0 %v1632
        %2528 = vmatprep.subr.bf16.mxu0 %v1629
        %2529 = vmatpush1.bf16.msra.mxu0 %v1628
        %2530 = vmatprep.subr.bf16.mxu0 %v1625
        %2531 = vmatpush1.bf16.msra.mxu0 %v1624
        %2532 = vmatprep.subr.bf16.mxu0 %v1621
        %2533 = vmatpush1.bf16.msra.mxu0 %v1620
        %2534 = vmatprep.subr.bf16.mxu0 %v1681
        %2535 = vmatpush2.bf16.msra.mxu0 %v1680
        %2536 = vmatprep.subr.bf16.mxu0 %v1677
        %2537 = vmatpush2.bf16.msra.mxu0 %v1676
        %2538 = vmatprep.subr.bf16.mxu0 %v1673
        %2539 = vmatpush2.bf16.msra.mxu0 %v1672
        %2540 = vmatprep.subr.bf16.mxu0 %v1669
        %2541 = vmatpush2.bf16.msra.mxu0 %v1668
        %2542 = vmatprep.subr.bf16.mxu0 %v1665
        %2543 = vmatpush2.bf16.msra.mxu0 %v1664
        %2544 = vmatprep.subr.bf16.mxu0 %v1661
        %2545 = vmatpush2.bf16.msra.mxu0 %v1660
        %2546 = vmatprep.subr.bf16.mxu0 %v1657
        %2547 = vmatpush2.bf16.msra.mxu0 %v1656
        %2548 = vmatprep.subr.bf16.mxu0 %v1653
        %2549 = vmatpush2.bf16.msra.mxu0 %v1652
        %2550 = vmatprep.mubr.bf16.mxu0 %v645
        %2551 = vmatmul.mubr.bf16.gmra.mxu0 %v644
        %v2552 = vpop.f32.mrf.mxu0
        %v2553 = vadd.f32 %v937, %v2552
        %v2554 = vpop.f32.mrf.mxu0
        %v2555 = vadd.f32 %v941, %v2554
        %v2556 = vpop.f32.mrf.mxu0
        %v2557 = vadd.f32 %v937, %v2556
        %v2558 = vpop.f32.mrf.mxu0
        %v2559 = vadd.f32 %v941, %v2558
        %2560 = vmatprep.mubr.bf16.mxu0 %v652
        %2561 = vmatmul.mubr.bf16.gmra.mxu0 %v651
        %v2562 = vpop.f32.mrf.mxu0
        %v2563 = vadd.f32 %v937, %v2562
        %v2564 = vpop.f32.mrf.mxu0
        %v2565 = vadd.f32 %v941, %v2564
        %v2566 = vpop.f32.mrf.mxu0
        %v2567 = vadd.f32 %v937, %v2566
        %v2568 = vpop.f32.mrf.mxu0
        %v2569 = vadd.f32 %v941, %v2568
        %2570 = vmatprep.mubr.bf16.mxu0 %v659
        %2571 = vmatmul.mubr.bf16.gmra.mxu0 %v658
        %v2572 = vpop.f32.mrf.mxu0
        %v2573 = vadd.f32 %v937, %v2572
        %v2574 = vpop.f32.mrf.mxu0
        %v2575 = vadd.f32 %v941, %v2574
        %v2576 = vpop.f32.mrf.mxu0
        %v2577 = vadd.f32 %v937, %v2576
        %v2578 = vpop.f32.mrf.mxu0
        %v2579 = vadd.f32 %v941, %v2578
        %2580 = vmatprep.mubr.bf16.mxu0 %v666
        %2581 = vmatmul.mubr.bf16.gmra.mxu0 %v665
        %v2582 = vpop.f32.mrf.mxu0
        %v2583 = vadd.f32 %v937, %v2582
        %v2584 = vpop.f32.mrf.mxu0
        %v2585 = vadd.f32 %v941, %v2584
        %v2586 = vpop.f32.mrf.mxu0
        %v2587 = vadd.f32 %v937, %v2586
        %v2588 = vpop.f32.mrf.mxu0
        %v2589 = vadd.f32 %v941, %v2588
        %2590 = vmatprep.mubr.bf16.mxu0 %v673
        %2591 = vmatmul.mubr.bf16.gmra.mxu0 %v672
        %v2592 = vpop.f32.mrf.mxu0
        %v2593 = vadd.f32 %v937, %v2592
        %v2594 = vpop.f32.mrf.mxu0
        %v2595 = vadd.f32 %v941, %v2594
        %v2596 = vpop.f32.mrf.mxu0
        %v2597 = vadd.f32 %v937, %v2596
        %v2598 = vpop.f32.mrf.mxu0
        %v2599 = vadd.f32 %v941, %v2598
        %2600 = vmatprep.mubr.bf16.mxu0 %v680
        %2601 = vmatmul.mubr.bf16.gmra.mxu0 %v679
        %v2602 = vpop.f32.mrf.mxu0
        %v2603 = vadd.f32 %v937, %v2602
        %v2604 = vpop.f32.mrf.mxu0
        %v2605 = vadd.f32 %v941, %v2604
        %v2606 = vpop.f32.mrf.mxu0
        %v2607 = vadd.f32 %v937, %v2606
        %v2608 = vpop.f32.mrf.mxu0
        %v2609 = vadd.f32 %v941, %v2608
        %2610 = vmatprep.mubr.bf16.mxu0 %v687
        %2611 = vmatmul.mubr.bf16.gmra.mxu0 %v686
        %v2612 = vpop.f32.mrf.mxu0
        %v2613 = vadd.f32 %v937, %v2612
        %v2614 = vpop.f32.mrf.mxu0
        %v2615 = vadd.f32 %v941, %v2614
        %v2616 = vpop.f32.mrf.mxu0
        %v2617 = vadd.f32 %v937, %v2616
        %v2618 = vpop.f32.mrf.mxu0
        %v2619 = vadd.f32 %v941, %v2618
        %2620 = vmatprep.mubr.bf16.mxu0 %v694
        %2621 = vmatmul.mubr.bf16.gmra.mxu0 %v693
        %v2622 = vpop.f32.mrf.mxu0
        %v2623 = vadd.f32 %v937, %v2622
        %v2624 = vpop.f32.mrf.mxu0
        %v2625 = vadd.f32 %v941, %v2624
        %v2626 = vpop.f32.mrf.mxu0
        %v2627 = vadd.f32 %v937, %v2626
        %v2628 = vpop.f32.mrf.mxu0
        %v2629 = vadd.f32 %v941, %v2628
        %2630 = vdwg.mxu0
        %2631 = vmatprep.subr.bf16.mxu0 %v1713
        %2632 = vmatpush1.bf16.msra.mxu0 %v1712
        %2633 = vmatprep.subr.bf16.mxu0 %v1709
        %2634 = vmatpush1.bf16.msra.mxu0 %v1708
        %2635 = vmatprep.subr.bf16.mxu0 %v1705
        %2636 = vmatpush1.bf16.msra.mxu0 %v1704
        %2637 = vmatprep.subr.bf16.mxu0 %v1701
        %2638 = vmatpush1.bf16.msra.mxu0 %v1700
        %2639 = vmatprep.subr.bf16.mxu0 %v1697
        %2640 = vmatpush1.bf16.msra.mxu0 %v1696
        %2641 = vmatprep.subr.bf16.mxu0 %v1693
        %2642 = vmatpush1.bf16.msra.mxu0 %v1692
        %2643 = vmatprep.subr.bf16.mxu0 %v1689
        %2644 = vmatpush1.bf16.msra.mxu0 %v1688
        %2645 = vmatprep.subr.bf16.mxu0 %v1685
        %2646 = vmatpush1.bf16.msra.mxu0 %v1684
        %2647 = vmatprep.subr.bf16.mxu0 %v1745
        %2648 = vmatpush2.bf16.msra.mxu0 %v1744
        %2649 = vmatprep.subr.bf16.mxu0 %v1741
        %2650 = vmatpush2.bf16.msra.mxu0 %v1740
        %2651 = vmatprep.subr.bf16.mxu0 %v1737
        %2652 = vmatpush2.bf16.msra.mxu0 %v1736
        %2653 = vmatprep.subr.bf16.mxu0 %v1733
        %2654 = vmatpush2.bf16.msra.mxu0 %v1732
        %2655 = vmatprep.subr.bf16.mxu0 %v1729
        %2656 = vmatpush2.bf16.msra.mxu0 %v1728
        %2657 = vmatprep.subr.bf16.mxu0 %v1725
        %2658 = vmatpush2.bf16.msra.mxu0 %v1724
        %2659 = vmatprep.subr.bf16.mxu0 %v1721
        %2660 = vmatpush2.bf16.msra.mxu0 %v1720
        %2661 = vmatprep.subr.bf16.mxu0 %v1717
        %2662 = vmatpush2.bf16.msra.mxu0 %v1716
        %2663 = vmatprep.mubr.bf16.mxu0 %v647
        %2664 = vmatmul.mubr.bf16.gmra.mxu0 %v646
        %v2665 = vpop.f32.mrf.mxu0
        %v2666 = vadd.f32 %v2553, %v2665
        %v2667 = vpop.f32.mrf.mxu0
        %v2668 = vadd.f32 %v2555, %v2667
        %v2669 = vpop.f32.mrf.mxu0
        %v2670 = vadd.f32 %v2557, %v2669
        %v2671 = vpop.f32.mrf.mxu0
        %v2672 = vadd.f32 %v2559, %v2671
        %2673 = vmatprep.mubr.bf16.mxu0 %v654
        %2674 = vmatmul.mubr.bf16.gmra.mxu0 %v653
        %v2675 = vpop.f32.mrf.mxu0
        %v2676 = vadd.f32 %v2563, %v2675
        %v2677 = vpop.f32.mrf.mxu0
        %v2678 = vadd.f32 %v2565, %v2677
        %v2679 = vpop.f32.mrf.mxu0
        %v2680 = vadd.f32 %v2567, %v2679
        %v2681 = vpop.f32.mrf.mxu0
        %v2682 = vadd.f32 %v2569, %v2681
        %2683 = vmatprep.mubr.bf16.mxu0 %v661
        %2684 = vmatmul.mubr.bf16.gmra.mxu0 %v660
        %v2685 = vpop.f32.mrf.mxu0
        %v2686 = vadd.f32 %v2573, %v2685
        %v2687 = vpop.f32.mrf.mxu0
        %v2688 = vadd.f32 %v2575, %v2687
        %v2689 = vpop.f32.mrf.mxu0
        %v2690 = vadd.f32 %v2577, %v2689
        %v2691 = vpop.f32.mrf.mxu0
        %v2692 = vadd.f32 %v2579, %v2691
        %2693 = vmatprep.mubr.bf16.mxu0 %v668
        %2694 = vmatmul.mubr.bf16.gmra.mxu0 %v667
        %v2695 = vpop.f32.mrf.mxu0
        %v2696 = vadd.f32 %v2583, %v2695
        %v2697 = vpop.f32.mrf.mxu0
        %v2698 = vadd.f32 %v2585, %v2697
        %v2699 = vpop.f32.mrf.mxu0
        %v2700 = vadd.f32 %v2587, %v2699
        %v2701 = vpop.f32.mrf.mxu0
        %v2702 = vadd.f32 %v2589, %v2701
        %2703 = vmatprep.mubr.bf16.mxu0 %v675
        %2704 = vmatmul.mubr.bf16.gmra.mxu0 %v674
        %v2705 = vpop.f32.mrf.mxu0
        %v2706 = vadd.f32 %v2593, %v2705
        %v2707 = vpop.f32.mrf.mxu0
        %v2708 = vadd.f32 %v2595, %v2707
        %v2709 = vpop.f32.mrf.mxu0
        %v2710 = vadd.f32 %v2597, %v2709
        %v2711 = vpop.f32.mrf.mxu0
        %v2712 = vadd.f32 %v2599, %v2711
        %2713 = vmatprep.mubr.bf16.mxu0 %v682
        %2714 = vmatmul.mubr.bf16.gmra.mxu0 %v681
        %v2715 = vpop.f32.mrf.mxu0
        %v2716 = vadd.f32 %v2603, %v2715
        %v2717 = vpop.f32.mrf.mxu0
        %v2718 = vadd.f32 %v2605, %v2717
        %v2719 = vpop.f32.mrf.mxu0
        %v2720 = vadd.f32 %v2607, %v2719
        %v2721 = vpop.f32.mrf.mxu0
        %v2722 = vadd.f32 %v2609, %v2721
        %2723 = vmatprep.mubr.bf16.mxu0 %v689
        %2724 = vmatmul.mubr.bf16.gmra.mxu0 %v688
        %v2725 = vpop.f32.mrf.mxu0
        %v2726 = vadd.f32 %v2613, %v2725
        %v2727 = vpop.f32.mrf.mxu0
        %v2728 = vadd.f32 %v2615, %v2727
        %v2729 = vpop.f32.mrf.mxu0
        %v2730 = vadd.f32 %v2617, %v2729
        %v2731 = vpop.f32.mrf.mxu0
        %v2732 = vadd.f32 %v2619, %v2731
        %2733 = vmatprep.mubr.bf16.mxu0 %v696
        %2734 = vmatmul.mubr.bf16.gmra.mxu0 %v695
        %v2735 = vpop.f32.mrf.mxu0
        %v2736 = vadd.f32 %v2623, %v2735
        %v2737 = vpop.f32.mrf.mxu0
        %v2738 = vadd.f32 %v2625, %v2737
        %v2739 = vpop.f32.mrf.mxu0
        %v2740 = vadd.f32 %v2627, %v2739
        %v2741 = vpop.f32.mrf.mxu0
        %v2742 = vadd.f32 %v2629, %v2741
        %2743 = vdwg.mxu0
        %2744 = vmatprep.subr.bf16.mxu0 %v1777
        %2745 = vmatpush1.bf16.msra.mxu0 %v1776
        %2746 = vmatprep.subr.bf16.mxu0 %v1773
        %2747 = vmatpush1.bf16.msra.mxu0 %v1772
        %2748 = vmatprep.subr.bf16.mxu0 %v1769
        %2749 = vmatpush1.bf16.msra.mxu0 %v1768
        %2750 = vmatprep.subr.bf16.mxu0 %v1765
        %2751 = vmatpush1.bf16.msra.mxu0 %v1764
        %2752 = vmatprep.subr.bf16.mxu0 %v1761
        %2753 = vmatpush1.bf16.msra.mxu0 %v1760
        %2754 = vmatprep.subr.bf16.mxu0 %v1757
        %2755 = vmatpush1.bf16.msra.mxu0 %v1756
        %2756 = vmatprep.subr.bf16.mxu0 %v1753
        %2757 = vmatpush1.bf16.msra.mxu0 %v1752
        %2758 = vmatprep.subr.bf16.mxu0 %v1749
        %2759 = vmatpush1.bf16.msra.mxu0 %v1748
        %2760 = vmatprep.subr.bf16.mxu0 %v1809
        %2761 = vmatpush2.bf16.msra.mxu0 %v1808
        %2762 = vmatprep.subr.bf16.mxu0 %v1805
        %2763 = vmatpush2.bf16.msra.mxu0 %v1804
        %2764 = vmatprep.subr.bf16.mxu0 %v1801
        %2765 = vmatpush2.bf16.msra.mxu0 %v1800
        %2766 = vmatprep.subr.bf16.mxu0 %v1797
        %2767 = vmatpush2.bf16.msra.mxu0 %v1796
        %2768 = vmatprep.subr.bf16.mxu0 %v1793
        %2769 = vmatpush2.bf16.msra.mxu0 %v1792
        %2770 = vmatprep.subr.bf16.mxu0 %v1789
        %2771 = vmatpush2.bf16.msra.mxu0 %v1788
        %2772 = vmatprep.subr.bf16.mxu0 %v1785
        %2773 = vmatpush2.bf16.msra.mxu0 %v1784
        %2774 = vmatprep.subr.bf16.mxu0 %v1781
        %2775 = vmatpush2.bf16.msra.mxu0 %v1780
        %2776 = vmatprep.mubr.bf16.mxu0 %v649
        %2777 = vmatmul.mubr.bf16.gmra.mxu0 %v648
        %v2778 = vpop.f32.mrf.mxu0
        %v2779 = vadd.f32 %v2666, %v2778
        %v2780 = vpop.f32.mrf.mxu0
        %v2781 = vadd.f32 %v2668, %v2780
        %v2782 = vpop.f32.mrf.mxu0
        %v2783 = vadd.f32 %v2670, %v2782
        %v2784 = vpop.f32.mrf.mxu0
        %v2785 = vadd.f32 %v2672, %v2784
        %2786 = vmatprep.mubr.bf16.mxu0 %v656
        %2787 = vmatmul.mubr.bf16.gmra.mxu0 %v655
        %v2788 = vpop.f32.mrf.mxu0
        %v2789 = vadd.f32 %v2676, %v2788
        %v2790 = vpop.f32.mrf.mxu0
        %v2791 = vadd.f32 %v2678, %v2790
        %v2792 = vpop.f32.mrf.mxu0
        %v2793 = vadd.f32 %v2680, %v2792
        %v2794 = vpop.f32.mrf.mxu0
        %v2795 = vadd.f32 %v2682, %v2794
        %2796 = vmatprep.mubr.bf16.mxu0 %v663
        %2797 = vmatmul.mubr.bf16.gmra.mxu0 %v662
        %v2798 = vpop.f32.mrf.mxu0
        %v2799 = vadd.f32 %v2686, %v2798
        %v2800 = vpop.f32.mrf.mxu0
        %v2801 = vadd.f32 %v2688, %v2800
        %v2802 = vpop.f32.mrf.mxu0
        %v2803 = vadd.f32 %v2690, %v2802
        %v2804 = vpop.f32.mrf.mxu0
        %v2805 = vadd.f32 %v2692, %v2804
        %2806 = vmatprep.mubr.bf16.mxu0 %v670
        %2807 = vmatmul.mubr.bf16.gmra.mxu0 %v669
        %v2808 = vpop.f32.mrf.mxu0
        %v2809 = vadd.f32 %v2696, %v2808
        %v2810 = vpop.f32.mrf.mxu0
        %v2811 = vadd.f32 %v2698, %v2810
        %v2812 = vpop.f32.mrf.mxu0
        %v2813 = vadd.f32 %v2700, %v2812
        %v2814 = vpop.f32.mrf.mxu0
        %v2815 = vadd.f32 %v2702, %v2814
        %2816 = vmatprep.mubr.bf16.mxu0 %v677
        %2817 = vmatmul.mubr.bf16.gmra.mxu0 %v676
        %v2818 = vpop.f32.mrf.mxu0
        %v2819 = vadd.f32 %v2706, %v2818
        %v2820 = vpop.f32.mrf.mxu0
        %v2821 = vadd.f32 %v2708, %v2820
        %v2822 = vpop.f32.mrf.mxu0
        %v2823 = vadd.f32 %v2710, %v2822
        %v2824 = vpop.f32.mrf.mxu0
        %v2825 = vadd.f32 %v2712, %v2824
        %2826 = vmatprep.mubr.bf16.mxu0 %v684
        %2827 = vmatmul.mubr.bf16.gmra.mxu0 %v683
        %v2828 = vpop.f32.mrf.mxu0
        %v2829 = vadd.f32 %v2716, %v2828
        %v2830 = vpop.f32.mrf.mxu0
        %v2831 = vadd.f32 %v2718, %v2830
        %v2832 = vpop.f32.mrf.mxu0
        %v2833 = vadd.f32 %v2720, %v2832
        %v2834 = vpop.f32.mrf.mxu0
        %v2835 = vadd.f32 %v2722, %v2834
        %2836 = vmatprep.mubr.bf16.mxu0 %v691
        %2837 = vmatmul.mubr.bf16.gmra.mxu0 %v690
        %v2838 = vpop.f32.mrf.mxu0
        %v2839 = vadd.f32 %v2726, %v2838
        %v2840 = vpop.f32.mrf.mxu0
        %v2841 = vadd.f32 %v2728, %v2840
        %v2842 = vpop.f32.mrf.mxu0
        %v2843 = vadd.f32 %v2730, %v2842
        %v2844 = vpop.f32.mrf.mxu0
        %v2845 = vadd.f32 %v2732, %v2844
        %2846 = vmatprep.mubr.bf16.mxu0 %v698
        %2847 = vmatmul.mubr.bf16.gmra.mxu0 %v697
        %v2848 = vpop.f32.mrf.mxu0
        %v2849 = vadd.f32 %v2736, %v2848
        %v2850 = vpop.f32.mrf.mxu0
        %v2851 = vadd.f32 %v2738, %v2850
        %v2852 = vpop.f32.mrf.mxu0
        %v2853 = vadd.f32 %v2740, %v2852
        %v2854 = vpop.f32.mrf.mxu0
        %v2855 = vadd.f32 %v2742, %v2854
        %2856 = vdwg.mxu0
        %2857 = vmatprep.subr.bf16.mxu0 %v1841
        %2858 = vmatpush1.bf16.msra.mxu0 %v1840
        %2859 = vmatprep.subr.bf16.mxu0 %v1837
        %2860 = vmatpush1.bf16.msra.mxu0 %v1836
        %2861 = vmatprep.subr.bf16.mxu0 %v1833
        %2862 = vmatpush1.bf16.msra.mxu0 %v1832
        %2863 = vmatprep.subr.bf16.mxu0 %v1829
        %2864 = vmatpush1.bf16.msra.mxu0 %v1828
        %2865 = vmatprep.subr.bf16.mxu0 %v1825
        %2866 = vmatpush1.bf16.msra.mxu0 %v1824
        %2867 = vmatprep.subr.bf16.mxu0 %v1821
        %2868 = vmatpush1.bf16.msra.mxu0 %v1820
        %2869 = vmatprep.subr.bf16.mxu0 %v1817
        %2870 = vmatpush1.bf16.msra.mxu0 %v1816
        %2871 = vmatprep.subr.bf16.mxu0 %v1813
        %2872 = vmatpush1.bf16.msra.mxu0 %v1812
        %2873 = vmatprep.subr.bf16.mxu0 0
        %2874 = vmatpush2.bf16.msra.mxu0 0
        %2875 = vmatprep.subr.bf16.mxu0 0
        %2876 = vmatpush2.bf16.msra.mxu0 0
        %2877 = vmatprep.subr.bf16.mxu0 0
        %2878 = vmatpush2.bf16.msra.mxu0 0
        %2879 = vmatprep.subr.bf16.mxu0 0
        %2880 = vmatpush2.bf16.msra.mxu0 0
        %2881 = vmatprep.subr.bf16.mxu0 0
        %2882 = vmatpush2.bf16.msra.mxu0 0
        %2883 = vmatprep.subr.bf16.mxu0 0
        %2884 = vmatpush2.bf16.msra.mxu0 0
        %2885 = vmatprep.subr.bf16.mxu0 0
        %2886 = vmatpush2.bf16.msra.mxu0 0
        %2887 = vmatprep.subr.bf16.mxu0 0
        %2888 = vmatpush2.bf16.msra.mxu0 0
        %2889 = vmatprep.mubr.bf16.mxu0 0
        %2890 = vmatmul.mubr.bf16.gmra.mxu0 %v650
        %v2891 = vpop.f32.mrf.mxu0
        %v2892 = vadd.f32 %v2779, %v2891
        %v2893 = vpop.f32.mrf.mxu0
        %v2894 = vadd.f32 %v2781, %v2893
        %v2895 = vpop.f32.mrf.mxu0
        %v2896 = vadd.f32 %v2783, %v2895
        %v2897 = vpop.f32.mrf.mxu0
        %v2898 = vadd.f32 %v2785, %v2897
        %2899 = vmatprep.mubr.bf16.mxu0 0
        %2900 = vmatmul.mubr.bf16.gmra.mxu0 %v657
        %v2901 = vpop.f32.mrf.mxu0
        %v2902 = vadd.f32 %v2789, %v2901
        %v2903 = vpop.f32.mrf.mxu0
        %v2904 = vadd.f32 %v2791, %v2903
        %v2905 = vpop.f32.mrf.mxu0
        %v2906 = vadd.f32 %v2793, %v2905
        %v2907 = vpop.f32.mrf.mxu0
        %v2908 = vadd.f32 %v2795, %v2907
        %2909 = vmatprep.mubr.bf16.mxu0 0
        %2910 = vmatmul.mubr.bf16.gmra.mxu0 %v664
        %v2911 = vpop.f32.mrf.mxu0
        %v2912 = vadd.f32 %v2799, %v2911
        %v2913 = vpop.f32.mrf.mxu0
        %v2914 = vadd.f32 %v2801, %v2913
        %v2915 = vpop.f32.mrf.mxu0
        %v2916 = vadd.f32 %v2803, %v2915
        %v2917 = vpop.f32.mrf.mxu0
        %v2918 = vadd.f32 %v2805, %v2917
        %2919 = vmatprep.mubr.bf16.mxu0 0
        %2920 = vmatmul.mubr.bf16.gmra.mxu0 %v671
        %v2921 = vpop.f32.mrf.mxu0
        %v2922 = vadd.f32 %v2809, %v2921
        %v2923 = vpop.f32.mrf.mxu0
        %v2924 = vadd.f32 %v2811, %v2923
        %v2925 = vpop.f32.mrf.mxu0
        %v2926 = vadd.f32 %v2813, %v2925
        %v2927 = vpop.f32.mrf.mxu0
        %v2928 = vadd.f32 %v2815, %v2927
        %2929 = vmatprep.mubr.bf16.mxu0 0
        %2930 = vmatmul.mubr.bf16.gmra.mxu0 %v678
        %v2931 = vpop.f32.mrf.mxu0
        %v2932 = vadd.f32 %v2819, %v2931
        %v2933 = vpop.f32.mrf.mxu0
        %v2934 = vadd.f32 %v2821, %v2933
        %v2935 = vpop.f32.mrf.mxu0
        %v2936 = vadd.f32 %v2823, %v2935
        %v2937 = vpop.f32.mrf.mxu0
        %v2938 = vadd.f32 %v2825, %v2937
        %2939 = vmatprep.mubr.bf16.mxu0 0
        %2940 = vmatmul.mubr.bf16.gmra.mxu0 %v685
        %v2941 = vpop.f32.mrf.mxu0
        %v2942 = vadd.f32 %v2829, %v2941
        %v2943 = vpop.f32.mrf.mxu0
        %v2944 = vadd.f32 %v2831, %v2943
        %v2945 = vpop.f32.mrf.mxu0
        %v2946 = vadd.f32 %v2833, %v2945
        %v2947 = vpop.f32.mrf.mxu0
        %v2948 = vadd.f32 %v2835, %v2947
        %2949 = vmatprep.mubr.bf16.mxu0 0
        %2950 = vmatmul.mubr.bf16.gmra.mxu0 %v692
        %v2951 = vpop.f32.mrf.mxu0
        %v2952 = vadd.f32 %v2839, %v2951
        %v2953 = vpop.f32.mrf.mxu0
        %v2954 = vadd.f32 %v2841, %v2953
        %v2955 = vpop.f32.mrf.mxu0
        %v2956 = vadd.f32 %v2843, %v2955
        %v2957 = vpop.f32.mrf.mxu0
        %v2958 = vadd.f32 %v2845, %v2957
        %2959 = vmatprep.mubr.bf16.mxu0 0
        %2960 = vmatmul.mubr.bf16.gmra.mxu0 %v699
        %v2961 = vpop.f32.mrf.mxu0
        %v2962 = vadd.f32 %v2849, %v2961
        %v2963 = vpop.f32.mrf.mxu0
        %v2964 = vadd.f32 %v2851, %v2963
        %v2965 = vpop.f32.mrf.mxu0
        %v2966 = vadd.f32 %v2853, %v2965
        %v2967 = vpop.f32.mrf.mxu0
        %v2968 = vadd.f32 %v2855, %v2967
        %2969 = vdwg.mxu0
        %v2970 = vmax.f32 %v2440, 0.0
        %v2971 = vmax.f32 %v2442, 0.0
        %v2972 = vmax.f32 %v2892, 0.0
        %v2973 = vmax.f32 %v2894, 0.0
        %v2974 = vmax.f32 %v2444, 0.0
        %v2975 = vmax.f32 %v2446, 0.0
        %v2976 = vmax.f32 %v2896, 0.0
        %v2977 = vmax.f32 %v2898, 0.0
        %v2978 = vmax.f32 %v2450, 0.0
        %v2979 = vmax.f32 %v2452, 0.0
        %v2980 = vmax.f32 %v2902, 0.0
        %v2981 = vmax.f32 %v2904, 0.0
        %v2982 = vmax.f32 %v2454, 0.0
        %v2983 = vmax.f32 %v2456, 0.0
        %v2984 = vmax.f32 %v2906, 0.0
        %v2985 = vmax.f32 %v2908, 0.0
        %v2986 = vmax.f32 %v2460, 0.0
        %v2987 = vmax.f32 %v2462, 0.0
        %v2988 = vmax.f32 %v2912, 0.0
        %v2989 = vmax.f32 %v2914, 0.0
        %v2990 = vmax.f32 %v2464, 0.0
        %v2991 = vmax.f32 %v2466, 0.0
        %v2992 = vmax.f32 %v2916, 0.0
        %v2993 = vmax.f32 %v2918, 0.0
        %v2994 = vmax.f32 %v2470, 0.0
        %v2995 = vmax.f32 %v2472, 0.0
        %v2996 = vmax.f32 %v2922, 0.0
        %v2997 = vmax.f32 %v2924, 0.0
        %v2998 = vmax.f32 %v2474, 0.0
        %v2999 = vmax.f32 %v2476, 0.0
        %v3000 = vmax.f32 %v2926, 0.0
        %v3001 = vmax.f32 %v2928, 0.0
        %v3002 = vmax.f32 %v2480, 0.0
        %v3003 = vmax.f32 %v2482, 0.0
        %v3004 = vmax.f32 %v2932, 0.0
        %v3005 = vmax.f32 %v2934, 0.0
        %v3006 = vmax.f32 %v2484, 0.0
        %v3007 = vmax.f32 %v2486, 0.0
        %v3008 = vmax.f32 %v2936, 0.0
        %v3009 = vmax.f32 %v2938, 0.0
        %v3010 = vmax.f32 %v2490, 0.0
        %v3011 = vmax.f32 %v2492, 0.0
        %v3012 = vmax.f32 %v2942, 0.0
        %v3013 = vmax.f32 %v2944, 0.0
        %v3014 = vmax.f32 %v2494, 0.0
        %v3015 = vmax.f32 %v2496, 0.0
        %v3016 = vmax.f32 %v2946, 0.0
        %v3017 = vmax.f32 %v2948, 0.0
        %v3018 = vmax.f32 %v2500, 0.0
        %v3019 = vmax.f32 %v2502, 0.0
        %v3020 = vmax.f32 %v2952, 0.0
        %v3021 = vmax.f32 %v2954, 0.0
        %v3022 = vmax.f32 %v2504, 0.0
        %v3023 = vmax.f32 %v2506, 0.0
        %v3024 = vmax.f32 %v2956, 0.0
        %v3025 = vmax.f32 %v2958, 0.0
        %v3026 = vmax.f32 %v2510, 0.0
        %v3027 = vmax.f32 %v2512, 0.0
        %v3028 = vmax.f32 %v2962, 0.0
        %v3029 = vmax.f32 %v2964, 0.0
        %v3030 = vmax.f32 %v2514, 0.0
        %v3031 = vmax.f32 %v2516, 0.0
        %v3032 = vmax.f32 %v2966, 0.0
        %v3033 = vmax.f32 %v2968, 0.0
        %v3034 = vpack.c.bf16 %v2974, %v2970
        %v3035 = vpack.c.bf16 %v2975, %v2971
        %v3036 = vpack.c.bf16 %v2976, %v2972
        %v3037 = vpack.c.bf16 %v2977, %v2973
        %v3038 = vpack.c.bf16 %v2982, %v2978
        %v3039 = vpack.c.bf16 %v2983, %v2979
        %v3040 = vpack.c.bf16 %v2984, %v2980
        %v3041 = vpack.c.bf16 %v2985, %v2981
        %v3042 = vpack.c.bf16 %v2990, %v2986
        %v3043 = vpack.c.bf16 %v2991, %v2987
        %v3044 = vpack.c.bf16 %v2992, %v2988
        %v3045 = vpack.c.bf16 %v2993, %v2989
        %v3046 = vpack.c.bf16 %v2998, %v2994
        %v3047 = vpack.c.bf16 %v2999, %v2995
        %v3048 = vpack.c.bf16 %v3000, %v2996
        %v3049 = vpack.c.bf16 %v3001, %v2997
        %v3050 = vpack.c.bf16 %v3006, %v3002
        %v3051 = vpack.c.bf16 %v3007, %v3003
        %v3052 = vpack.c.bf16 %v3008, %v3004
        %v3053 = vpack.c.bf16 %v3009, %v3005
        %v3054 = vpack.c.bf16 %v3014, %v3010
        %v3055 = vpack.c.bf16 %v3015, %v3011
        %v3056 = vpack.c.bf16 %v3016, %v3012
        %v3057 = vpack.c.bf16 %v3017, %v3013
        %v3058 = vpack.c.bf16 %v3022, %v3018
        %v3059 = vpack.c.bf16 %v3023, %v3019
        %v3060 = vpack.c.bf16 %v3024, %v3020
        %v3061 = vpack.c.bf16 %v3025, %v3021
        %v3062 = vpack.c.bf16 %v3030, %v3026
        %v3063 = vpack.c.bf16 %v3031, %v3027
        %v3064 = vpack.c.bf16 %v3032, %v3028
        %v3065 = vpack.c.bf16 %v3033, %v3029
        %v3066 = vld [vmem:[#allocation8] sm:$0xff]
        %v3067 = vld [vmem:[#allocation8 + $0x8] sm:$0xff]
        %v3068 = vld [vmem:[#allocation8 + $0x10] sm:$0xff]
        %v3069 = vld [vmem:[#allocation8 + $0x18] sm:$0xff]
        %v3070 = vld [vmem:[#allocation8 + $0x20] sm:$0xff]
        %v3071 = vld [vmem:[#allocation8 + $0x28] sm:$0xff]
        %v3072 = vld [vmem:[#allocation8 + $0x30] sm:$0xff]
        %v3073 = vld [vmem:[#allocation8 + $0x38] sm:$0xff]
        %v3074 = vld [vmem:[#allocation8 + $0x40] sm:$0xff]
        %v3075 = vld [vmem:[#allocation8 + $0x48] sm:$0xff]
        %v3076 = vld [vmem:[#allocation8 + $0x50] sm:$0xff]
        %v3077 = vld [vmem:[#allocation8 + $0x58] sm:$0xff]
        %v3078 = vld [vmem:[#allocation8 + $0x60] sm:$0xff]
        %v3079 = vld [vmem:[#allocation8 + $0x68] sm:$0xff]
        %v3080 = vld [vmem:[#allocation8 + $0x70] sm:$0xff]
        %v3081 = vld [vmem:[#allocation8 + $0x78] sm:$0xff]
        %v3082 = vld [vmem:[#allocation8 + $0x80] sm:$0xff]
        %v3083 = vld [vmem:[#allocation8 + $0x88] sm:$0xff]
        %v3084 = vld [vmem:[#allocation8 + $0x90] sm:$0xff]
        %v3085 = vld [vmem:[#allocation8 + $0x98] sm:$0xff]
        %v3086 = vld [vmem:[#allocation8 + $0xa0] sm:$0xff]
        %v3087 = vld [vmem:[#allocation8 + $0xa8] sm:$0xff]
        %v3088 = vld [vmem:[#allocation8 + $0xb0] sm:$0xff]
        %v3089 = vld [vmem:[#allocation8 + $0xb8] sm:$0xff]
        %v3090 = vld [vmem:[#allocation8 + $0xc0] sm:$0xff]
        %v3091 = vld [vmem:[#allocation8 + $0xc8] sm:$0xff]
        %v3092 = vld [vmem:[#allocation8 + $0xd0] sm:$0xff]
        %v3093 = vld [vmem:[#allocation8 + $0xd8] sm:$0xff]
        %v3094 = vld [vmem:[#allocation8 + $0xe0] sm:$0xff]
        %v3095 = vld [vmem:[#allocation8 + $0xe8] sm:$0xff]
        %v3096 = vld [vmem:[#allocation8 + $0xf0] sm:$0xff]
        %v3097 = vld [vmem:[#allocation8 + $0xf8] sm:$0xff]
        %v3098 = vld [vmem:[#allocation8 + $0x100] sm:$0xff]
        %v3099 = vld [vmem:[#allocation8 + $0x108] sm:$0xff]
        %v3100 = vld [vmem:[#allocation8 + $0x110] sm:$0xff]
        %v3101 = vld [vmem:[#allocation8 + $0x118] sm:$0xff]
        %v3102 = vld [vmem:[#allocation8 + $0x120] sm:$0xff]
        %v3103 = vld [vmem:[#allocation8 + $0x128] sm:$0xff]
        %v3104 = vld [vmem:[#allocation8 + $0x130] sm:$0xff]
        %v3105 = vld [vmem:[#allocation8 + $0x138] sm:$0xff]
        %v3106 = vld [vmem:[#allocation8 + $0x140] sm:$0xff]
        %v3107 = vld [vmem:[#allocation8 + $0x148] sm:$0xff]
        %v3108 = vld [vmem:[#allocation8 + $0x150] sm:$0xff]
        %v3109 = vld [vmem:[#allocation8 + $0x158] sm:$0xff]
        %v3110 = vld [vmem:[#allocation8 + $0x160] sm:$0xff]
        %v3111 = vld [vmem:[#allocation8 + $0x168] sm:$0xff]
        %v3112 = vld [vmem:[#allocation8 + $0x170] sm:$0xff]
        %v3113 = vld [vmem:[#allocation8 + $0x178] sm:$0xff]
        %v3114 = vld [vmem:[#allocation8 + $0x180] sm:$0xff]
        %v3115 = vld [vmem:[#allocation8 + $0x188] sm:$0xff]
        %v3116 = vld [vmem:[#allocation8 + $0x190] sm:$0xff]
        %v3117 = vld [vmem:[#allocation8 + $0x198] sm:$0xff]
        %v3118 = vld [vmem:[#allocation8 + $0x1a0] sm:$0xff]
        %v3119 = vld [vmem:[#allocation8 + $0x1a8] sm:$0xff]
        %v3120 = vld [vmem:[#allocation8 + $0x1b0] sm:$0xff]
        %v3121 = vld [vmem:[#allocation8 + $0x1b8] sm:$0xff]
        %v3122 = vld [vmem:[#allocation8 + $0x1c0] sm:$0xff]
        %v3123 = vld [vmem:[#allocation8 + $0x1c8] sm:$0xff]
        %v3124 = vld [vmem:[#allocation8 + $0x1d0] sm:$0xff]
        %v3125 = vld [vmem:[#allocation8 + $0x1d8] sm:$0xff]
        %v3126 = vld [vmem:[#allocation8 + $0x1e0] sm:$0xff]
        %v3127 = vld [vmem:[#allocation8 + $0x1e8] sm:$0xff]
        %v3128 = vld [vmem:[#allocation8 + $0x1f0] sm:$0xff]
        %v3129 = vld [vmem:[#allocation8 + $0x1f8] sm:$0xff]
        %v3130 = vld [vmem:[%s5] sm:$0x3]
        %v3132 = vlaneseq
        %v3133 = vshrl.u32 %v3132, 7
        %v3134 = vsub.s32 0, %v3133
        %v3135 = vrot.slane %v3130, %v3134
        %v3136 = vlaneseq
        %v3137 = vshrl.u32 %v3136, 7
        %v3138 = vsub.s32 1, %v3137
        %v3139 = vrot.slane %v3130, %v3138
        %v3206 = vunpack.c.l.b16 %v3066
        %v3207 = vunpack.c.h.b16 %v3066
        %v3208 = vunpack.c.l.b16 %v3067
        %v3209 = vunpack.c.h.b16 %v3067
        %v3210 = vunpack.c.l.b16 %v3068
        %v3211 = vunpack.c.h.b16 %v3068
        %v3212 = vunpack.c.l.b16 %v3069
        %v3213 = vunpack.c.h.b16 %v3069
        %v3214 = vunpack.c.l.b16 %v3070
        %v3215 = vunpack.c.h.b16 %v3070
        %v3216 = vunpack.c.l.b16 %v3071
        %v3217 = vunpack.c.h.b16 %v3071
        %v3218 = vunpack.c.l.b16 %v3072
        %v3219 = vunpack.c.h.b16 %v3072
        %v3220 = vunpack.c.l.b16 %v3073
        %v3221 = vunpack.c.h.b16 %v3073
        %v3222 = vunpack.c.l.b16 %v3074
        %v3223 = vunpack.c.h.b16 %v3074
        %v3224 = vunpack.c.l.b16 %v3075
        %v3225 = vunpack.c.h.b16 %v3075
        %v3226 = vunpack.c.l.b16 %v3076
        %v3227 = vunpack.c.h.b16 %v3076
        %v3228 = vunpack.c.l.b16 %v3077
        %v3229 = vunpack.c.h.b16 %v3077
        %v3230 = vunpack.c.l.b16 %v3078
        %v3231 = vunpack.c.h.b16 %v3078
        %v3232 = vunpack.c.l.b16 %v3079
        %v3233 = vunpack.c.h.b16 %v3079
        %v3234 = vunpack.c.l.b16 %v3080
        %v3235 = vunpack.c.h.b16 %v3080
        %v3236 = vunpack.c.l.b16 %v3081
        %v3237 = vunpack.c.h.b16 %v3081
        %v3238 = vunpack.c.l.b16 %v3082
        %v3239 = vunpack.c.h.b16 %v3082
        %v3240 = vunpack.c.l.b16 %v3083
        %v3241 = vunpack.c.h.b16 %v3083
        %v3242 = vunpack.c.l.b16 %v3084
        %v3243 = vunpack.c.h.b16 %v3084
        %v3244 = vunpack.c.l.b16 %v3085
        %v3245 = vunpack.c.h.b16 %v3085
        %v3246 = vunpack.c.l.b16 %v3086
        %v3247 = vunpack.c.h.b16 %v3086
        %v3248 = vunpack.c.l.b16 %v3087
        %v3249 = vunpack.c.h.b16 %v3087
        %v3250 = vunpack.c.l.b16 %v3088
        %v3251 = vunpack.c.h.b16 %v3088
        %v3252 = vunpack.c.l.b16 %v3089
        %v3253 = vunpack.c.h.b16 %v3089
        %v3254 = vunpack.c.l.b16 %v3090
        %v3255 = vunpack.c.h.b16 %v3090
        %v3256 = vunpack.c.l.b16 %v3091
        %v3257 = vunpack.c.h.b16 %v3091
        %v3258 = vunpack.c.l.b16 %v3092
        %v3259 = vunpack.c.h.b16 %v3092
        %v3260 = vunpack.c.l.b16 %v3093
        %v3261 = vunpack.c.h.b16 %v3093
        %v3262 = vunpack.c.l.b16 %v3094
        %v3263 = vunpack.c.h.b16 %v3094
        %v3264 = vunpack.c.l.b16 %v3095
        %v3265 = vunpack.c.h.b16 %v3095
        %v3266 = vunpack.c.l.b16 %v3096
        %v3267 = vunpack.c.h.b16 %v3096
        %v3268 = vunpack.c.l.b16 %v3097
        %v3269 = vunpack.c.h.b16 %v3097
        %v3270 = vunpack.c.l.b16 %v3098
        %v3271 = vunpack.c.h.b16 %v3098
        %v3272 = vunpack.c.l.b16 %v3099
        %v3273 = vunpack.c.h.b16 %v3099
        %v3274 = vunpack.c.l.b16 %v3100
        %v3275 = vunpack.c.h.b16 %v3100
        %v3276 = vunpack.c.l.b16 %v3101
        %v3277 = vunpack.c.h.b16 %v3101
        %v3278 = vunpack.c.l.b16 %v3102
        %v3279 = vunpack.c.h.b16 %v3102
        %v3280 = vunpack.c.l.b16 %v3103
        %v3281 = vunpack.c.h.b16 %v3103
        %v3282 = vunpack.c.l.b16 %v3104
        %v3283 = vunpack.c.h.b16 %v3104
        %v3284 = vunpack.c.l.b16 %v3105
        %v3285 = vunpack.c.h.b16 %v3105
        %v3286 = vunpack.c.l.b16 %v3106
        %v3287 = vunpack.c.h.b16 %v3106
        %v3288 = vunpack.c.l.b16 %v3107
        %v3289 = vunpack.c.h.b16 %v3107
        %v3290 = vunpack.c.l.b16 %v3108
        %v3291 = vunpack.c.h.b16 %v3108
        %v3292 = vunpack.c.l.b16 %v3109
        %v3293 = vunpack.c.h.b16 %v3109
        %v3294 = vunpack.c.l.b16 %v3110
        %v3295 = vunpack.c.h.b16 %v3110
        %v3296 = vunpack.c.l.b16 %v3111
        %v3297 = vunpack.c.h.b16 %v3111
        %v3298 = vunpack.c.l.b16 %v3112
        %v3299 = vunpack.c.h.b16 %v3112
        %v3300 = vunpack.c.l.b16 %v3113
        %v3301 = vunpack.c.h.b16 %v3113
        %v3302 = vunpack.c.l.b16 %v3114
        %v3303 = vunpack.c.h.b16 %v3114
        %v3304 = vunpack.c.l.b16 %v3115
        %v3305 = vunpack.c.h.b16 %v3115
        %v3306 = vunpack.c.l.b16 %v3116
        %v3307 = vunpack.c.h.b16 %v3116
        %v3308 = vunpack.c.l.b16 %v3117
        %v3309 = vunpack.c.h.b16 %v3117
        %v3310 = vunpack.c.l.b16 %v3118
        %v3311 = vunpack.c.h.b16 %v3118
        %v3312 = vunpack.c.l.b16 %v3119
        %v3313 = vunpack.c.h.b16 %v3119
        %v3314 = vunpack.c.l.b16 %v3120
        %v3315 = vunpack.c.h.b16 %v3120
        %v3316 = vunpack.c.l.b16 %v3121
        %v3317 = vunpack.c.h.b16 %v3121
        %v3318 = vunpack.c.l.b16 %v3122
        %v3319 = vunpack.c.h.b16 %v3122
        %v3320 = vunpack.c.l.b16 %v3123
        %v3321 = vunpack.c.h.b16 %v3123
        %v3322 = vunpack.c.l.b16 %v3124
        %v3323 = vunpack.c.h.b16 %v3124
        %v3324 = vunpack.c.l.b16 %v3125
        %v3325 = vunpack.c.h.b16 %v3125
        %v3326 = vunpack.c.l.b16 %v3126
        %v3327 = vunpack.c.h.b16 %v3126
        %v3328 = vunpack.c.l.b16 %v3127
        %v3329 = vunpack.c.h.b16 %v3127
        %v3330 = vunpack.c.l.b16 %v3128
        %v3331 = vunpack.c.h.b16 %v3128
        %v3332 = vunpack.c.l.b16 %v3129
        %v3333 = vunpack.c.h.b16 %v3129
        %v3334 = vpack.c.b16 %v3208, %v3206
        %v3335 = vpack.c.b16 %v3209, %v3207
        %v3336 = vpack.c.b16 %v3212, %v3210
        %v3337 = vpack.c.b16 %v3213, %v3211
        %v3338 = vpack.c.b16 %v3216, %v3214
        %v3339 = vpack.c.b16 %v3217, %v3215
        %v3340 = vpack.c.b16 %v3220, %v3218
        %v3341 = vpack.c.b16 %v3221, %v3219
        %v3342 = vpack.c.b16 %v3224, %v3222
        %v3343 = vpack.c.b16 %v3225, %v3223
        %v3344 = vpack.c.b16 %v3228, %v3226
        %v3345 = vpack.c.b16 %v3229, %v3227
        %v3346 = vpack.c.b16 %v3232, %v3230
        %v3347 = vpack.c.b16 %v3233, %v3231
        %v3348 = vpack.c.b16 %v3236, %v3234
        %v3349 = vpack.c.b16 %v3237, %v3235
        %v3350 = vpack.c.b16 %v3240, %v3238
        %v3351 = vpack.c.b16 %v3241, %v3239
        %v3352 = vpack.c.b16 %v3244, %v3242
        %v3353 = vpack.c.b16 %v3245, %v3243
        %v3354 = vpack.c.b16 %v3248, %v3246
        %v3355 = vpack.c.b16 %v3249, %v3247
        %v3356 = vpack.c.b16 %v3252, %v3250
        %v3357 = vpack.c.b16 %v3253, %v3251
        %v3358 = vpack.c.b16 %v3256, %v3254
        %v3359 = vpack.c.b16 %v3257, %v3255
        %v3360 = vpack.c.b16 %v3260, %v3258
        %v3361 = vpack.c.b16 %v3261, %v3259
        %v3362 = vpack.c.b16 %v3264, %v3262
        %v3363 = vpack.c.b16 %v3265, %v3263
        %v3364 = vpack.c.b16 %v3268, %v3266
        %v3365 = vpack.c.b16 %v3269, %v3267
        %v3366 = vpack.c.b16 %v3272, %v3270
        %v3367 = vpack.c.b16 %v3273, %v3271
        %v3368 = vpack.c.b16 %v3276, %v3274
        %v3369 = vpack.c.b16 %v3277, %v3275
        %v3370 = vpack.c.b16 %v3280, %v3278
        %v3371 = vpack.c.b16 %v3281, %v3279
        %v3372 = vpack.c.b16 %v3284, %v3282
        %v3373 = vpack.c.b16 %v3285, %v3283
        %v3374 = vpack.c.b16 %v3288, %v3286
        %v3375 = vpack.c.b16 %v3289, %v3287
        %v3376 = vpack.c.b16 %v3292, %v3290
        %v3377 = vpack.c.b16 %v3293, %v3291
        %v3378 = vpack.c.b16 %v3296, %v3294
        %v3379 = vpack.c.b16 %v3297, %v3295
        %v3380 = vpack.c.b16 %v3300, %v3298
        %v3381 = vpack.c.b16 %v3301, %v3299
        %v3382 = vpack.c.b16 %v3304, %v3302
        %v3383 = vpack.c.b16 %v3305, %v3303
        %v3384 = vpack.c.b16 %v3308, %v3306
        %v3385 = vpack.c.b16 %v3309, %v3307
        %v3386 = vpack.c.b16 %v3312, %v3310
        %v3387 = vpack.c.b16 %v3313, %v3311
        %v3388 = vpack.c.b16 %v3316, %v3314
        %v3389 = vpack.c.b16 %v3317, %v3315
        %v3390 = vpack.c.b16 %v3320, %v3318
        %v3391 = vpack.c.b16 %v3321, %v3319
        %v3392 = vpack.c.b16 %v3324, %v3322
        %v3393 = vpack.c.b16 %v3325, %v3323
        %v3394 = vpack.c.b16 %v3328, %v3326
        %v3395 = vpack.c.b16 %v3329, %v3327
        %v3396 = vpack.c.b16 %v3332, %v3330
        %v3397 = vpack.c.b16 %v3333, %v3331
        %3462 = vmatprep.subr.bf16.mxu0 %v3349
        %3463 = vmatpush1.bf16.msra.mxu0 %v3348
        %3464 = vmatprep.subr.bf16.mxu0 %v3347
        %3465 = vmatpush1.bf16.msra.mxu0 %v3346
        %3466 = vmatprep.subr.bf16.mxu0 %v3345
        %3467 = vmatpush1.bf16.msra.mxu0 %v3344
        %3468 = vmatprep.subr.bf16.mxu0 %v3343
        %3469 = vmatpush1.bf16.msra.mxu0 %v3342
        %3470 = vmatprep.subr.bf16.mxu0 %v3341
        %3471 = vmatpush1.bf16.msra.mxu0 %v3340
        %3472 = vmatprep.subr.bf16.mxu0 %v3339
        %3473 = vmatpush1.bf16.msra.mxu0 %v3338
        %3474 = vmatprep.subr.bf16.mxu0 %v3337
        %3475 = vmatpush1.bf16.msra.mxu0 %v3336
        %3476 = vmatprep.subr.bf16.mxu0 %v3335
        %3477 = vmatpush1.bf16.msra.mxu0 %v3334
        %3478 = vmatprep.subr.bf16.mxu0 %v3365
        %3479 = vmatpush2.bf16.msra.mxu0 %v3364
        %3480 = vmatprep.subr.bf16.mxu0 %v3363
        %3481 = vmatpush2.bf16.msra.mxu0 %v3362
        %3482 = vmatprep.subr.bf16.mxu0 %v3361
        %3483 = vmatpush2.bf16.msra.mxu0 %v3360
        %3484 = vmatprep.subr.bf16.mxu0 %v3359
        %3485 = vmatpush2.bf16.msra.mxu0 %v3358
        %3486 = vmatprep.subr.bf16.mxu0 %v3357
        %3487 = vmatpush2.bf16.msra.mxu0 %v3356
        %3488 = vmatprep.subr.bf16.mxu0 %v3355
        %3489 = vmatpush2.bf16.msra.mxu0 %v3354
        %3490 = vmatprep.subr.bf16.mxu0 %v3353
        %3491 = vmatpush2.bf16.msra.mxu0 %v3352
        %3492 = vmatprep.subr.bf16.mxu0 %v3351
        %3493 = vmatpush2.bf16.msra.mxu0 %v3350
        %3494 = vmatprep.mubr.bf16.mxu0 %v3035
        %3495 = vmatmul.mubr.bf16.gmra.mxu0 %v3034
        %v3496 = vpop.f32.mrf.mxu0
        %v3497 = vadd.f32 %v3135, %v3496
        %v3498 = vpop.f32.mrf.mxu0
        %v3499 = vadd.f32 %v3139, %v3498
        %v3500 = vpop.f32.mrf.mxu0
        %v3501 = vadd.f32 %v3135, %v3500
        %v3502 = vpop.f32.mrf.mxu0
        %v3503 = vadd.f32 %v3139, %v3502
        %3504 = vmatprep.mubr.bf16.mxu0 %v3039
        %3505 = vmatmul.mubr.bf16.gmra.mxu0 %v3038
        %v3506 = vpop.f32.mrf.mxu0
        %v3507 = vadd.f32 %v3135, %v3506
        %v3508 = vpop.f32.mrf.mxu0
        %v3509 = vadd.f32 %v3139, %v3508
        %v3510 = vpop.f32.mrf.mxu0
        %v3511 = vadd.f32 %v3135, %v3510
        %v3512 = vpop.f32.mrf.mxu0
        %v3513 = vadd.f32 %v3139, %v3512
        %3514 = vmatprep.mubr.bf16.mxu0 %v3043
        %3515 = vmatmul.mubr.bf16.gmra.mxu0 %v3042
        %v3516 = vpop.f32.mrf.mxu0
        %v3517 = vadd.f32 %v3135, %v3516
        %v3518 = vpop.f32.mrf.mxu0
        %v3519 = vadd.f32 %v3139, %v3518
        %v3520 = vpop.f32.mrf.mxu0
        %v3521 = vadd.f32 %v3135, %v3520
        %v3522 = vpop.f32.mrf.mxu0
        %v3523 = vadd.f32 %v3139, %v3522
        %3524 = vmatprep.mubr.bf16.mxu0 %v3047
        %3525 = vmatmul.mubr.bf16.gmra.mxu0 %v3046
        %v3526 = vpop.f32.mrf.mxu0
        %v3527 = vadd.f32 %v3135, %v3526
        %v3528 = vpop.f32.mrf.mxu0
        %v3529 = vadd.f32 %v3139, %v3528
        %v3530 = vpop.f32.mrf.mxu0
        %v3531 = vadd.f32 %v3135, %v3530
        %v3532 = vpop.f32.mrf.mxu0
        %v3533 = vadd.f32 %v3139, %v3532
        %3534 = vmatprep.mubr.bf16.mxu0 %v3051
        %3535 = vmatmul.mubr.bf16.gmra.mxu0 %v3050
        %v3536 = vpop.f32.mrf.mxu0
        %v3537 = vadd.f32 %v3135, %v3536
        %v3538 = vpop.f32.mrf.mxu0
        %v3539 = vadd.f32 %v3139, %v3538
        %v3540 = vpop.f32.mrf.mxu0
        %v3541 = vadd.f32 %v3135, %v3540
        %v3542 = vpop.f32.mrf.mxu0
        %v3543 = vadd.f32 %v3139, %v3542
        %3544 = vmatprep.mubr.bf16.mxu0 %v3055
        %3545 = vmatmul.mubr.bf16.gmra.mxu0 %v3054
        %v3546 = vpop.f32.mrf.mxu0
        %v3547 = vadd.f32 %v3135, %v3546
        %v3548 = vpop.f32.mrf.mxu0
        %v3549 = vadd.f32 %v3139, %v3548
        %v3550 = vpop.f32.mrf.mxu0
        %v3551 = vadd.f32 %v3135, %v3550
        %v3552 = vpop.f32.mrf.mxu0
        %v3553 = vadd.f32 %v3139, %v3552
        %3554 = vmatprep.mubr.bf16.mxu0 %v3059
        %3555 = vmatmul.mubr.bf16.gmra.mxu0 %v3058
        %v3556 = vpop.f32.mrf.mxu0
        %v3557 = vadd.f32 %v3135, %v3556
        %v3558 = vpop.f32.mrf.mxu0
        %v3559 = vadd.f32 %v3139, %v3558
        %v3560 = vpop.f32.mrf.mxu0
        %v3561 = vadd.f32 %v3135, %v3560
        %v3562 = vpop.f32.mrf.mxu0
        %v3563 = vadd.f32 %v3139, %v3562
        %3564 = vmatprep.mubr.bf16.mxu0 %v3063
        %3565 = vmatmul.mubr.bf16.gmra.mxu0 %v3062
        %v3566 = vpop.f32.mrf.mxu0
        %v3567 = vadd.f32 %v3135, %v3566
        %v3568 = vpop.f32.mrf.mxu0
        %v3569 = vadd.f32 %v3139, %v3568
        %v3570 = vpop.f32.mrf.mxu0
        %v3571 = vadd.f32 %v3135, %v3570
        %v3572 = vpop.f32.mrf.mxu0
        %v3573 = vadd.f32 %v3139, %v3572
        %3574 = vdwg.mxu0
        %3575 = vmatprep.subr.bf16.mxu0 %v3381
        %3576 = vmatpush1.bf16.msra.mxu0 %v3380
        %3577 = vmatprep.subr.bf16.mxu0 %v3379
        %3578 = vmatpush1.bf16.msra.mxu0 %v3378
        %3579 = vmatprep.subr.bf16.mxu0 %v3377
        %3580 = vmatpush1.bf16.msra.mxu0 %v3376
        %3581 = vmatprep.subr.bf16.mxu0 %v3375
        %3582 = vmatpush1.bf16.msra.mxu0 %v3374
        %3583 = vmatprep.subr.bf16.mxu0 %v3373
        %3584 = vmatpush1.bf16.msra.mxu0 %v3372
        %3585 = vmatprep.subr.bf16.mxu0 %v3371
        %3586 = vmatpush1.bf16.msra.mxu0 %v3370
        %3587 = vmatprep.subr.bf16.mxu0 %v3369
        %3588 = vmatpush1.bf16.msra.mxu0 %v3368
        %3589 = vmatprep.subr.bf16.mxu0 %v3367
        %3590 = vmatpush1.bf16.msra.mxu0 %v3366
        %3591 = vmatprep.subr.bf16.mxu0 %v3397
        %3592 = vmatpush2.bf16.msra.mxu0 %v3396
        %3593 = vmatprep.subr.bf16.mxu0 %v3395
        %3594 = vmatpush2.bf16.msra.mxu0 %v3394
        %3595 = vmatprep.subr.bf16.mxu0 %v3393
        %3596 = vmatpush2.bf16.msra.mxu0 %v3392
        %3597 = vmatprep.subr.bf16.mxu0 %v3391
        %3598 = vmatpush2.bf16.msra.mxu0 %v3390
        %3599 = vmatprep.subr.bf16.mxu0 %v3389
        %3600 = vmatpush2.bf16.msra.mxu0 %v3388
        %3601 = vmatprep.subr.bf16.mxu0 %v3387
        %3602 = vmatpush2.bf16.msra.mxu0 %v3386
        %3603 = vmatprep.subr.bf16.mxu0 %v3385
        %3604 = vmatpush2.bf16.msra.mxu0 %v3384
        %3605 = vmatprep.subr.bf16.mxu0 %v3383
        %3606 = vmatpush2.bf16.msra.mxu0 %v3382
        %3607 = vmatprep.mubr.bf16.mxu0 %v3037
        %3608 = vmatmul.mubr.bf16.gmra.mxu0 %v3036
        %v3609 = vpop.f32.mrf.mxu0
        %v3610 = vadd.f32 %v3497, %v3609
        %v3611 = vpop.f32.mrf.mxu0
        %v3612 = vadd.f32 %v3499, %v3611
        %v3613 = vpop.f32.mrf.mxu0
        %v3614 = vadd.f32 %v3501, %v3613
        %v3615 = vpop.f32.mrf.mxu0
        %v3616 = vadd.f32 %v3503, %v3615
        %3617 = vmatprep.mubr.bf16.mxu0 %v3041
        %3618 = vmatmul.mubr.bf16.gmra.mxu0 %v3040
        %v3619 = vpop.f32.mrf.mxu0
        %v3620 = vadd.f32 %v3507, %v3619
        %v3621 = vpop.f32.mrf.mxu0
        %v3622 = vadd.f32 %v3509, %v3621
        %v3623 = vpop.f32.mrf.mxu0
        %v3624 = vadd.f32 %v3511, %v3623
        %v3625 = vpop.f32.mrf.mxu0
        %v3626 = vadd.f32 %v3513, %v3625
        %3627 = vmatprep.mubr.bf16.mxu0 %v3045
        %3628 = vmatmul.mubr.bf16.gmra.mxu0 %v3044
        %v3629 = vpop.f32.mrf.mxu0
        %v3630 = vadd.f32 %v3517, %v3629
        %v3631 = vpop.f32.mrf.mxu0
        %v3632 = vadd.f32 %v3519, %v3631
        %v3633 = vpop.f32.mrf.mxu0
        %v3634 = vadd.f32 %v3521, %v3633
        %v3635 = vpop.f32.mrf.mxu0
        %v3636 = vadd.f32 %v3523, %v3635
        %3637 = vmatprep.mubr.bf16.mxu0 %v3049
        %3638 = vmatmul.mubr.bf16.gmra.mxu0 %v3048
        %v3639 = vpop.f32.mrf.mxu0
        %v3640 = vadd.f32 %v3527, %v3639
        %v3641 = vpop.f32.mrf.mxu0
        %v3642 = vadd.f32 %v3529, %v3641
        %v3643 = vpop.f32.mrf.mxu0
        %v3644 = vadd.f32 %v3531, %v3643
        %v3645 = vpop.f32.mrf.mxu0
        %v3646 = vadd.f32 %v3533, %v3645
        %3647 = vmatprep.mubr.bf16.mxu0 %v3053
        %3648 = vmatmul.mubr.bf16.gmra.mxu0 %v3052
        %v3649 = vpop.f32.mrf.mxu0
        %v3650 = vadd.f32 %v3537, %v3649
        %v3651 = vpop.f32.mrf.mxu0
        %v3652 = vadd.f32 %v3539, %v3651
        %v3653 = vpop.f32.mrf.mxu0
        %v3654 = vadd.f32 %v3541, %v3653
        %v3655 = vpop.f32.mrf.mxu0
        %v3656 = vadd.f32 %v3543, %v3655
        %3657 = vmatprep.mubr.bf16.mxu0 %v3057
        %3658 = vmatmul.mubr.bf16.gmra.mxu0 %v3056
        %v3659 = vpop.f32.mrf.mxu0
        %v3660 = vadd.f32 %v3547, %v3659
        %v3661 = vpop.f32.mrf.mxu0
        %v3662 = vadd.f32 %v3549, %v3661
        %v3663 = vpop.f32.mrf.mxu0
        %v3664 = vadd.f32 %v3551, %v3663
        %v3665 = vpop.f32.mrf.mxu0
        %v3666 = vadd.f32 %v3553, %v3665
        %3667 = vmatprep.mubr.bf16.mxu0 %v3061
        %3668 = vmatmul.mubr.bf16.gmra.mxu0 %v3060
        %v3669 = vpop.f32.mrf.mxu0
        %v3670 = vadd.f32 %v3557, %v3669
        %v3671 = vpop.f32.mrf.mxu0
        %v3672 = vadd.f32 %v3559, %v3671
        %v3673 = vpop.f32.mrf.mxu0
        %v3674 = vadd.f32 %v3561, %v3673
        %v3675 = vpop.f32.mrf.mxu0
        %v3676 = vadd.f32 %v3563, %v3675
        %3677 = vmatprep.mubr.bf16.mxu0 %v3065
        %3678 = vmatmul.mubr.bf16.gmra.mxu0 %v3064
        %v3679 = vpop.f32.mrf.mxu0
        %v3680 = vadd.f32 %v3567, %v3679
        %v3681 = vpop.f32.mrf.mxu0
        %v3682 = vadd.f32 %v3569, %v3681
        %v3683 = vpop.f32.mrf.mxu0
        %v3684 = vadd.f32 %v3571, %v3683
        %v3685 = vpop.f32.mrf.mxu0
        %v3686 = vadd.f32 %v3573, %v3685
        %3687 = vdwg.mxu0
        %v3688 = vld [vmem:[%s458] sm:$0xff]
        %v3689 = vld [vmem:[%s458 + $0x8] sm:$0xff]
        %v3690 = vld [vmem:[%s458 + $0x10] sm:$0xff]
        %v3691 = vld [vmem:[%s458 + $0x18] sm:$0xff]
        %v3692 = vld [vmem:[%s458 + $0x20] sm:$0xff]
        %v3693 = vld [vmem:[%s458 + $0x28] sm:$0xff]
        %v3694 = vld [vmem:[%s458 + $0x30] sm:$0xff]
        %v3695 = vld [vmem:[%s458 + $0x38] sm:$0xff]
        %v3696 = vld [vmem:[%s458 + $0x40] sm:$0xff]
        %v3697 = vld [vmem:[%s458 + $0x48] sm:$0xff]
        %v3698 = vld [vmem:[%s458 + $0x50] sm:$0xff]
        %v3699 = vld [vmem:[%s458 + $0x58] sm:$0xff]
        %v3700 = vld [vmem:[%s458 + $0x60] sm:$0xff]
        %v3701 = vld [vmem:[%s458 + $0x68] sm:$0xff]
        %v3702 = vld [vmem:[%s458 + $0x70] sm:$0xff]
        %v3703 = vld [vmem:[%s458 + $0x78] sm:$0xff]
        %v3704 = vmul.f32 %v3610, 0.5
        %v3705 = vmul.f32 %v3614, 0.5
        %v3706 = vmul.f32 %v3620, 0.5
        %v3707 = vmul.f32 %v3624, 0.5
        %v3708 = vmul.f32 %v3630, 0.5
        %v3709 = vmul.f32 %v3634, 0.5
        %v3710 = vmul.f32 %v3640, 0.5
        %v3711 = vmul.f32 %v3644, 0.5
        %v3712 = vmul.f32 %v3650, 0.5
        %v3713 = vmul.f32 %v3654, 0.5
        %v3714 = vmul.f32 %v3660, 0.5
        %v3715 = vmul.f32 %v3664, 0.5
        %v3716 = vmul.f32 %v3670, 0.5
        %v3717 = vmul.f32 %v3674, 0.5
        %v3718 = vmul.f32 %v3680, 0.5
        %v3719 = vmul.f32 %v3684, 0.5
        %v3720 = vmul.f32 %v3704, 1.442695
        %v3721 = vpow.pop %v3720
        %v3722 = vmul.f32 %v3705, 1.442695
        %v3723 = vpow.pop %v3722
        %v3724 = vmul.f32 %v3706, 1.442695
        %v3725 = vpow.pop %v3724
        %v3726 = vmul.f32 %v3707, 1.442695
        %v3727 = vpow.pop %v3726
        %v3728 = vmul.f32 %v3708, 1.442695
        %v3729 = vpow.pop %v3728
        %v3730 = vmul.f32 %v3709, 1.442695
        %v3731 = vpow.pop %v3730
        %v3732 = vmul.f32 %v3710, 1.442695
        %v3733 = vpow.pop %v3732
        %v3734 = vmul.f32 %v3711, 1.442695
        %v3735 = vpow.pop %v3734
        %v3736 = vmul.f32 %v3712, 1.442695
        %v3737 = vpow.pop %v3736
        %v3738 = vmul.f32 %v3713, 1.442695
        %v3739 = vpow.pop %v3738
        %v3740 = vmul.f32 %v3714, 1.442695
        %v3741 = vpow.pop %v3740
        %v3742 = vmul.f32 %v3715, 1.442695
        %v3743 = vpow.pop %v3742
        %v3744 = vmul.f32 %v3716, 1.442695
        %v3745 = vpow.pop %v3744
        %v3746 = vmul.f32 %v3717, 1.442695
        %v3747 = vpow.pop %v3746
        %v3748 = vmul.f32 %v3718, 1.442695
        %v3749 = vpow.pop %v3748
        %v3750 = vmul.f32 %v3719, 1.442695
        %v3751 = vpow.pop %v3750
        %v3752 = vmul.f32 %v3688, %v3721
        %v3753 = vmul.f32 %v3689, %v3723
        %v3754 = vmul.f32 %v3690, %v3725
        %v3755 = vmul.f32 %v3691, %v3727
        %v3756 = vmul.f32 %v3692, %v3729
        %v3757 = vmul.f32 %v3693, %v3731
        %v3758 = vmul.f32 %v3694, %v3733
        %v3759 = vmul.f32 %v3695, %v3735
        %v3760 = vmul.f32 %v3696, %v3737
        %v3761 = vmul.f32 %v3697, %v3739
        %v3762 = vmul.f32 %v3698, %v3741
        %v3763 = vmul.f32 %v3699, %v3743
        %v3764 = vmul.f32 %v3700, %v3745
        %v3765 = vmul.f32 %v3701, %v3747
        %v3766 = vmul.f32 %v3702, %v3749
        %v3767 = vmul.f32 %v3703, %v3751
        %v3768 = vadd.f32 %v3752, %v3612
        %v3769 = vadd.f32 %v3753, %v3616
        %v3770 = vadd.f32 %v3754, %v3622
        %v3771 = vadd.f32 %v3755, %v3626
        %v3772 = vadd.f32 %v3756, %v3632
        %v3773 = vadd.f32 %v3757, %v3636
        %v3774 = vadd.f32 %v3758, %v3642
        %v3775 = vadd.f32 %v3759, %v3646
        %v3776 = vadd.f32 %v3760, %v3652
        %v3777 = vadd.f32 %v3761, %v3656
        %v3778 = vadd.f32 %v3762, %v3662
        %v3779 = vadd.f32 %v3763, %v3666
        %v3780 = vadd.f32 %v3764, %v3672
        %v3781 = vadd.f32 %v3765, %v3676
        %v3782 = vadd.f32 %v3766, %v3682
        %v3783 = vadd.f32 %v3767, %v3686
        %v3784 = vpack.c.bf16 %v3769, %v3768
        %v3785 = vpack.c.bf16 %v3771, %v3770
        %v3786 = vpack.c.bf16 %v3773, %v3772
        %v3787 = vpack.c.bf16 %v3775, %v3774
        %v3788 = vpack.c.bf16 %v3777, %v3776
        %v3789 = vpack.c.bf16 %v3779, %v3778
        %v3790 = vpack.c.bf16 %v3781, %v3780
        %v3791 = vpack.c.bf16 %v3783, %v3782
        %v3792 = vld [vmem:[#allocation10] sm:$0xff]
        %v3793 = vld [vmem:[#allocation10 + $0x8] sm:$0xff]
        %v3794 = vld [vmem:[#allocation10 + $0x10] sm:$0xff]
        %v3795 = vld [vmem:[#allocation10 + $0x18] sm:$0xff]
        %v3796 = vld [vmem:[#allocation10 + $0x20] sm:$0xff]
        %v3797 = vld [vmem:[#allocation10 + $0x28] sm:$0xff]
        %v3798 = vld [vmem:[#allocation10 + $0x30] sm:$0xff]
        %v3799 = vld [vmem:[#allocation10 + $0x38] sm:$0xff]
        %v3800 = vld [vmem:[#allocation10 + $0x40] sm:$0xff]
        %v3801 = vld [vmem:[#allocation10 + $0x48] sm:$0xff]
        %v3802 = vld [vmem:[#allocation10 + $0x50] sm:$0xff]
        %v3803 = vld [vmem:[#allocation10 + $0x58] sm:$0xff]
        %v3804 = vld [vmem:[#allocation10 + $0x60] sm:$0xff]
        %v3805 = vld [vmem:[#allocation10 + $0x68] sm:$0xff]
        %v3806 = vld [vmem:[#allocation10 + $0x70] sm:$0xff]
        %v3807 = vld [vmem:[#allocation10 + $0x78] sm:$0xff]
        %v3808 = vld [vmem:[#allocation10 + $0x80] sm:$0xff]
        %v3809 = vld [vmem:[#allocation10 + $0x88] sm:$0xff]
        %v3810 = vld [vmem:[#allocation10 + $0x90] sm:$0xff]
        %v3811 = vld [vmem:[#allocation10 + $0x98] sm:$0xff]
        %v3812 = vld [vmem:[#allocation10 + $0xa0] sm:$0xff]
        %v3813 = vld [vmem:[#allocation10 + $0xa8] sm:$0xff]
        %v3814 = vld [vmem:[#allocation10 + $0xb0] sm:$0xff]
        %v3815 = vld [vmem:[#allocation10 + $0xb8] sm:$0xff]
        %v3816 = vld [vmem:[#allocation10 + $0xc0] sm:$0xff]
        %v3817 = vld [vmem:[#allocation10 + $0xc8] sm:$0xff]
        %v3818 = vld [vmem:[#allocation10 + $0xd0] sm:$0xff]
        %v3819 = vld [vmem:[#allocation10 + $0xd8] sm:$0xff]
        %v3820 = vld [vmem:[#allocation10 + $0xe0] sm:$0xff]
        %v3821 = vld [vmem:[#allocation10 + $0xe8] sm:$0xff]
        %v3822 = vld [vmem:[#allocation10 + $0xf0] sm:$0xff]
        %v3823 = vld [vmem:[#allocation10 + $0xf8] sm:$0xff]
        %v3824 = vld [vmem:[#allocation11] sm:$0xf]
        %v3826 = vlaneseq
        %v3827 = vshrl.u32 %v3826, 7
        %v3828 = vsub.s32 0, %v3827
        %v3829 = vrot.slane %v3824, %v3828
        %v3830 = vlaneseq
        %v3831 = vshrl.u32 %v3830, 7
        %v3832 = vsub.s32 1, %v3831
        %v3833 = vrot.slane %v3824, %v3832
        %v3834 = vlaneseq
        %v3835 = vshrl.u32 %v3834, 7
        %v3836 = vsub.s32 2, %v3835
        %v3837 = vrot.slane %v3824, %v3836
        %v3838 = vlaneseq
        %v3839 = vshrl.u32 %v3838, 7
        %v3840 = vsub.s32 3, %v3839
        %v3841 = vrot.slane %v3824, %v3840
        %v3878 = vunpack.c.l.b16 %v3792
        %v3879 = vunpack.c.h.b16 %v3792
        %v3880 = vunpack.c.l.b16 %v3793
        %v3881 = vunpack.c.h.b16 %v3793
        %v3882 = vunpack.c.l.b16 %v3794
        %v3883 = vunpack.c.h.b16 %v3794
        %v3884 = vunpack.c.l.b16 %v3795
        %v3885 = vunpack.c.h.b16 %v3795
        %v3886 = vunpack.c.l.b16 %v3796
        %v3887 = vunpack.c.h.b16 %v3796
        %v3888 = vunpack.c.l.b16 %v3797
        %v3889 = vunpack.c.h.b16 %v3797
        %v3890 = vunpack.c.l.b16 %v3798
        %v3891 = vunpack.c.h.b16 %v3798
        %v3892 = vunpack.c.l.b16 %v3799
        %v3893 = vunpack.c.h.b16 %v3799
        %v3894 = vunpack.c.l.b16 %v3800
        %v3895 = vunpack.c.h.b16 %v3800
        %v3896 = vunpack.c.l.b16 %v3801
        %v3897 = vunpack.c.h.b16 %v3801
        %v3898 = vunpack.c.l.b16 %v3802
        %v3899 = vunpack.c.h.b16 %v3802
        %v3900 = vunpack.c.l.b16 %v3803
        %v3901 = vunpack.c.h.b16 %v3803
        %v3902 = vunpack.c.l.b16 %v3804
        %v3903 = vunpack.c.h.b16 %v3804
        %v3904 = vunpack.c.l.b16 %v3805
        %v3905 = vunpack.c.h.b16 %v3805
        %v3906 = vunpack.c.l.b16 %v3806
        %v3907 = vunpack.c.h.b16 %v3806
        %v3908 = vunpack.c.l.b16 %v3807
        %v3909 = vunpack.c.h.b16 %v3807
        %v3910 = vunpack.c.l.b16 %v3808
        %v3911 = vunpack.c.h.b16 %v3808
        %v3912 = vunpack.c.l.b16 %v3809
        %v3913 = vunpack.c.h.b16 %v3809
        %v3914 = vunpack.c.l.b16 %v3810
        %v3915 = vunpack.c.h.b16 %v3810
        %v3916 = vunpack.c.l.b16 %v3811
        %v3917 = vunpack.c.h.b16 %v3811
        %v3918 = vunpack.c.l.b16 %v3812
        %v3919 = vunpack.c.h.b16 %v3812
        %v3920 = vunpack.c.l.b16 %v3813
        %v3921 = vunpack.c.h.b16 %v3813
        %v3922 = vunpack.c.l.b16 %v3814
        %v3923 = vunpack.c.h.b16 %v3814
        %v3924 = vunpack.c.l.b16 %v3815
        %v3925 = vunpack.c.h.b16 %v3815
        %v3926 = vunpack.c.l.b16 %v3816
        %v3927 = vunpack.c.h.b16 %v3816
        %v3928 = vunpack.c.l.b16 %v3817
        %v3929 = vunpack.c.h.b16 %v3817
        %v3930 = vunpack.c.l.b16 %v3818
        %v3931 = vunpack.c.h.b16 %v3818
        %v3932 = vunpack.c.l.b16 %v3819
        %v3933 = vunpack.c.h.b16 %v3819
        %v3934 = vunpack.c.l.b16 %v3820
        %v3935 = vunpack.c.h.b16 %v3820
        %v3936 = vunpack.c.l.b16 %v3821
        %v3937 = vunpack.c.h.b16 %v3821
        %v3938 = vunpack.c.l.b16 %v3822
        %v3939 = vunpack.c.h.b16 %v3822
        %v3940 = vunpack.c.l.b16 %v3823
        %v3941 = vunpack.c.h.b16 %v3823
        %v3942 = vpack.c.b16 %v3882, %v3878
        %v3943 = vpack.c.b16 %v3883, %v3879
        %v3944 = vpack.c.b16 %v3884, %v3880
        %v3945 = vpack.c.b16 %v3885, %v3881
        %v3946 = vpack.c.b16 %v3890, %v3886
        %v3947 = vpack.c.b16 %v3891, %v3887
        %v3948 = vpack.c.b16 %v3892, %v3888
        %v3949 = vpack.c.b16 %v3893, %v3889
        %v3950 = vpack.c.b16 %v3898, %v3894
        %v3951 = vpack.c.b16 %v3899, %v3895
        %v3952 = vpack.c.b16 %v3900, %v3896
        %v3953 = vpack.c.b16 %v3901, %v3897
        %v3954 = vpack.c.b16 %v3906, %v3902
        %v3955 = vpack.c.b16 %v3907, %v3903
        %v3956 = vpack.c.b16 %v3908, %v3904
        %v3957 = vpack.c.b16 %v3909, %v3905
        %v3958 = vpack.c.b16 %v3914, %v3910
        %v3959 = vpack.c.b16 %v3915, %v3911
        %v3960 = vpack.c.b16 %v3916, %v3912
        %v3961 = vpack.c.b16 %v3917, %v3913
        %v3962 = vpack.c.b16 %v3922, %v3918
        %v3963 = vpack.c.b16 %v3923, %v3919
        %v3964 = vpack.c.b16 %v3924, %v3920
        %v3965 = vpack.c.b16 %v3925, %v3921
        %v3966 = vpack.c.b16 %v3930, %v3926
        %v3967 = vpack.c.b16 %v3931, %v3927
        %v3968 = vpack.c.b16 %v3932, %v3928
        %v3969 = vpack.c.b16 %v3933, %v3929
        %v3970 = vpack.c.b16 %v3938, %v3934
        %v3971 = vpack.c.b16 %v3939, %v3935
        %v3972 = vpack.c.b16 %v3940, %v3936
        %v3973 = vpack.c.b16 %v3941, %v3937
        %4006 = vmatprep.subr.bf16.mxu0 %v3971
        %4007 = vmatpush1.bf16.msra.mxu0 %v3970
        %4008 = vmatprep.subr.bf16.mxu0 %v3967
        %4009 = vmatpush1.bf16.msra.mxu0 %v3966
        %4010 = vmatprep.subr.bf16.mxu0 %v3963
        %4011 = vmatpush1.bf16.msra.mxu0 %v3962
        %4012 = vmatprep.subr.bf16.mxu0 %v3959
        %4013 = vmatpush1.bf16.msra.mxu0 %v3958
        %4014 = vmatprep.subr.bf16.mxu0 %v3955
        %4015 = vmatpush1.bf16.msra.mxu0 %v3954
        %4016 = vmatprep.subr.bf16.mxu0 %v3951
        %4017 = vmatpush1.bf16.msra.mxu0 %v3950
        %4018 = vmatprep.subr.bf16.mxu0 %v3947
        %4019 = vmatpush1.bf16.msra.mxu0 %v3946
        %4020 = vmatprep.subr.bf16.mxu0 %v3943
        %4021 = vmatpush1.bf16.msra.mxu0 %v3942
        %4022 = vmatprep.subr.bf16.mxu0 0
        %4023 = vmatpush2.bf16.msra.mxu0 0
        %4024 = vmatprep.subr.bf16.mxu0 0
        %4025 = vmatpush2.bf16.msra.mxu0 0
        %4026 = vmatprep.subr.bf16.mxu0 0
        %4027 = vmatpush2.bf16.msra.mxu0 0
        %4028 = vmatprep.subr.bf16.mxu0 0
        %4029 = vmatpush2.bf16.msra.mxu0 0
        %4030 = vmatprep.subr.bf16.mxu0 0
        %4031 = vmatpush2.bf16.msra.mxu0 0
        %4032 = vmatprep.subr.bf16.mxu0 0
        %4033 = vmatpush2.bf16.msra.mxu0 0
        %4034 = vmatprep.subr.bf16.mxu0 0
        %4035 = vmatpush2.bf16.msra.mxu0 0
        %4036 = vmatprep.subr.bf16.mxu0 0
        %4037 = vmatpush2.bf16.msra.mxu0 0
        %4038 = vmatprep.mubr.bf16.mxu0 0
        %4039 = vmatmul.mubr.bf16.gmra.mxu0 %v3784
        %v4040 = vpop.f32.mrf.mxu0
        %v4041 = vadd.f32 %v3829, %v4040
        %v4042 = vpop.f32.mrf.mxu0
        %v4043 = vadd.f32 %v3833, %v4042
        %v4044 = vpop.f32.mrf.mxu0
        %v4045 = vadd.f32 %v3829, %v4044
        %v4046 = vpop.f32.mrf.mxu0
        %v4047 = vadd.f32 %v3833, %v4046
        %4048 = vmatprep.mubr.bf16.mxu0 0
        %4049 = vmatmul.mubr.bf16.gmra.mxu0 %v3785
        %v4050 = vpop.f32.mrf.mxu0
        %v4051 = vadd.f32 %v3829, %v4050
        %v4052 = vpop.f32.mrf.mxu0
        %v4053 = vadd.f32 %v3833, %v4052
        %v4054 = vpop.f32.mrf.mxu0
        %v4055 = vadd.f32 %v3829, %v4054
        %v4056 = vpop.f32.mrf.mxu0
        %v4057 = vadd.f32 %v3833, %v4056
        %4058 = vmatprep.mubr.bf16.mxu0 0
        %4059 = vmatmul.mubr.bf16.gmra.mxu0 %v3786
        %v4060 = vpop.f32.mrf.mxu0
        %v4061 = vadd.f32 %v3829, %v4060
        %v4062 = vpop.f32.mrf.mxu0
        %v4063 = vadd.f32 %v3833, %v4062
        %v4064 = vpop.f32.mrf.mxu0
        %v4065 = vadd.f32 %v3829, %v4064
        %v4066 = vpop.f32.mrf.mxu0
        %v4067 = vadd.f32 %v3833, %v4066
        %4068 = vmatprep.mubr.bf16.mxu0 0
        %4069 = vmatmul.mubr.bf16.gmra.mxu0 %v3787
        %v4070 = vpop.f32.mrf.mxu0
        %v4071 = vadd.f32 %v3829, %v4070
        %v4072 = vpop.f32.mrf.mxu0
        %v4073 = vadd.f32 %v3833, %v4072
        %v4074 = vpop.f32.mrf.mxu0
        %v4075 = vadd.f32 %v3829, %v4074
        %v4076 = vpop.f32.mrf.mxu0
        %v4077 = vadd.f32 %v3833, %v4076
        %4078 = vmatprep.mubr.bf16.mxu0 0
        %4079 = vmatmul.mubr.bf16.gmra.mxu0 %v3788
        %v4080 = vpop.f32.mrf.mxu0
        %v4081 = vadd.f32 %v3829, %v4080
        %v4082 = vpop.f32.mrf.mxu0
        %v4083 = vadd.f32 %v3833, %v4082
        %v4084 = vpop.f32.mrf.mxu0
        %v4085 = vadd.f32 %v3829, %v4084
        %v4086 = vpop.f32.mrf.mxu0
        %v4087 = vadd.f32 %v3833, %v4086
        %4088 = vmatprep.mubr.bf16.mxu0 0
        %4089 = vmatmul.mubr.bf16.gmra.mxu0 %v3789
        %v4090 = vpop.f32.mrf.mxu0
        %v4091 = vadd.f32 %v3829, %v4090
        %v4092 = vpop.f32.mrf.mxu0
        %v4093 = vadd.f32 %v3833, %v4092
        %v4094 = vpop.f32.mrf.mxu0
        %v4095 = vadd.f32 %v3829, %v4094
        %v4096 = vpop.f32.mrf.mxu0
        %v4097 = vadd.f32 %v3833, %v4096
        %4098 = vmatprep.mubr.bf16.mxu0 0
        %4099 = vmatmul.mubr.bf16.gmra.mxu0 %v3790
        %v4100 = vpop.f32.mrf.mxu0
        %v4101 = vadd.f32 %v3829, %v4100
        %v4102 = vpop.f32.mrf.mxu0
        %v4103 = vadd.f32 %v3833, %v4102
        %v4104 = vpop.f32.mrf.mxu0
        %v4105 = vadd.f32 %v3829, %v4104
        %v4106 = vpop.f32.mrf.mxu0
        %v4107 = vadd.f32 %v3833, %v4106
        %4108 = vmatprep.mubr.bf16.mxu0 0
        %4109 = vmatmul.mubr.bf16.gmra.mxu0 %v3791
        %v4110 = vpop.f32.mrf.mxu0
        %v4111 = vadd.f32 %v3829, %v4110
        %v4112 = vpop.f32.mrf.mxu0
        %v4113 = vadd.f32 %v3833, %v4112
        %v4114 = vpop.f32.mrf.mxu0
        %v4115 = vadd.f32 %v3829, %v4114
        %v4116 = vpop.f32.mrf.mxu0
        %v4117 = vadd.f32 %v3833, %v4116
        %4118 = vdwg.mxu0
        %4119 = vmatprep.subr.bf16.mxu0 %v3973
        %4120 = vmatpush1.bf16.msra.mxu0 %v3972
        %4121 = vmatprep.subr.bf16.mxu0 %v3969
        %4122 = vmatpush1.bf16.msra.mxu0 %v3968
        %4123 = vmatprep.subr.bf16.mxu0 %v3965
        %4124 = vmatpush1.bf16.msra.mxu0 %v3964
        %4125 = vmatprep.subr.bf16.mxu0 %v3961
        %4126 = vmatpush1.bf16.msra.mxu0 %v3960
        %4127 = vmatprep.subr.bf16.mxu0 %v3957
        %4128 = vmatpush1.bf16.msra.mxu0 %v3956
        %4129 = vmatprep.subr.bf16.mxu0 %v3953
        %4130 = vmatpush1.bf16.msra.mxu0 %v3952
        %4131 = vmatprep.subr.bf16.mxu0 %v3949
        %4132 = vmatpush1.bf16.msra.mxu0 %v3948
        %4133 = vmatprep.subr.bf16.mxu0 %v3945
        %4134 = vmatpush1.bf16.msra.mxu0 %v3944
        %4135 = vmatprep.subr.bf16.mxu0 0
        %4136 = vmatpush2.bf16.msra.mxu0 0
        %4137 = vmatprep.subr.bf16.mxu0 0
        %4138 = vmatpush2.bf16.msra.mxu0 0
        %4139 = vmatprep.subr.bf16.mxu0 0
        %4140 = vmatpush2.bf16.msra.mxu0 0
        %4141 = vmatprep.subr.bf16.mxu0 0
        %4142 = vmatpush2.bf16.msra.mxu0 0
        %4143 = vmatprep.subr.bf16.mxu0 0
        %4144 = vmatpush2.bf16.msra.mxu0 0
        %4145 = vmatprep.subr.bf16.mxu0 0
        %4146 = vmatpush2.bf16.msra.mxu0 0
        %4147 = vmatprep.subr.bf16.mxu0 0
        %4148 = vmatpush2.bf16.msra.mxu0 0
        %4149 = vmatprep.subr.bf16.mxu0 0
        %4150 = vmatpush2.bf16.msra.mxu0 0
        %4151 = vmatprep.mubr.bf16.mxu0 0
        %4152 = vmatmul.mubr.bf16.gmra.mxu0 %v3784
        %v4153 = vpop.f32.mrf.mxu0
        %v4154 = vadd.f32 %v3837, %v4153
        %v4155 = vpop.f32.mrf.mxu0
        %v4156 = vadd.f32 %v3841, %v4155
        %v4157 = vpop.f32.mrf.mxu0
        %v4158 = vadd.f32 %v3837, %v4157
        %v4159 = vpop.f32.mrf.mxu0
        %v4160 = vadd.f32 %v3841, %v4159
        %4161 = vmatprep.mubr.bf16.mxu0 0
        %4162 = vmatmul.mubr.bf16.gmra.mxu0 %v3785
        %v4163 = vpop.f32.mrf.mxu0
        %v4164 = vadd.f32 %v3837, %v4163
        %v4165 = vpop.f32.mrf.mxu0
        %v4166 = vadd.f32 %v3841, %v4165
        %v4167 = vpop.f32.mrf.mxu0
        %v4168 = vadd.f32 %v3837, %v4167
        %v4169 = vpop.f32.mrf.mxu0
        %v4170 = vadd.f32 %v3841, %v4169
        %4171 = vmatprep.mubr.bf16.mxu0 0
        %4172 = vmatmul.mubr.bf16.gmra.mxu0 %v3786
        %v4173 = vpop.f32.mrf.mxu0
        %v4174 = vadd.f32 %v3837, %v4173
        %v4175 = vpop.f32.mrf.mxu0
        %v4176 = vadd.f32 %v3841, %v4175
        %v4177 = vpop.f32.mrf.mxu0
        %v4178 = vadd.f32 %v3837, %v4177
        %v4179 = vpop.f32.mrf.mxu0
        %v4180 = vadd.f32 %v3841, %v4179
        %4181 = vmatprep.mubr.bf16.mxu0 0
        %4182 = vmatmul.mubr.bf16.gmra.mxu0 %v3787
        %v4183 = vpop.f32.mrf.mxu0
        %v4184 = vadd.f32 %v3837, %v4183
        %v4185 = vpop.f32.mrf.mxu0
        %v4186 = vadd.f32 %v3841, %v4185
        %v4187 = vpop.f32.mrf.mxu0
        %v4188 = vadd.f32 %v3837, %v4187
        %v4189 = vpop.f32.mrf.mxu0
        %v4190 = vadd.f32 %v3841, %v4189
        %4191 = vmatprep.mubr.bf16.mxu0 0
        %4192 = vmatmul.mubr.bf16.gmra.mxu0 %v3788
        %v4193 = vpop.f32.mrf.mxu0
        %v4194 = vadd.f32 %v3837, %v4193
        %v4195 = vpop.f32.mrf.mxu0
        %v4196 = vadd.f32 %v3841, %v4195
        %v4197 = vpop.f32.mrf.mxu0
        %v4198 = vadd.f32 %v3837, %v4197
        %v4199 = vpop.f32.mrf.mxu0
        %v4200 = vadd.f32 %v3841, %v4199
        %4201 = vmatprep.mubr.bf16.mxu0 0
        %4202 = vmatmul.mubr.bf16.gmra.mxu0 %v3789
        %v4203 = vpop.f32.mrf.mxu0
        %v4204 = vadd.f32 %v3837, %v4203
        %v4205 = vpop.f32.mrf.mxu0
        %v4206 = vadd.f32 %v3841, %v4205
        %v4207 = vpop.f32.mrf.mxu0
        %v4208 = vadd.f32 %v3837, %v4207
        %v4209 = vpop.f32.mrf.mxu0
        %v4210 = vadd.f32 %v3841, %v4209
        %4211 = vmatprep.mubr.bf16.mxu0 0
        %4212 = vmatmul.mubr.bf16.gmra.mxu0 %v3790
        %v4213 = vpop.f32.mrf.mxu0
        %v4214 = vadd.f32 %v3837, %v4213
        %v4215 = vpop.f32.mrf.mxu0
        %v4216 = vadd.f32 %v3841, %v4215
        %v4217 = vpop.f32.mrf.mxu0
        %v4218 = vadd.f32 %v3837, %v4217
        %v4219 = vpop.f32.mrf.mxu0
        %v4220 = vadd.f32 %v3841, %v4219
        %4221 = vmatprep.mubr.bf16.mxu0 0
        %4222 = vmatmul.mubr.bf16.gmra.mxu0 %v3791
        %v4223 = vpop.f32.mrf.mxu0
        %v4224 = vadd.f32 %v3837, %v4223
        %v4225 = vpop.f32.mrf.mxu0
        %v4226 = vadd.f32 %v3841, %v4225
        %v4227 = vpop.f32.mrf.mxu0
        %v4228 = vadd.f32 %v3837, %v4227
        %v4229 = vpop.f32.mrf.mxu0
        %v4230 = vadd.f32 %v3841, %v4229
        %4231 = vdwg.mxu0
        %v4232 = vmax.f32 %v4041, 0.0
        %v4233 = vmax.f32 %v4043, 0.0
        %v4234 = vmax.f32 %v4154, 0.0
        %v4235 = vmax.f32 %v4156, 0.0
        %v4236 = vmax.f32 %v4045, 0.0
        %v4237 = vmax.f32 %v4047, 0.0
        %v4238 = vmax.f32 %v4158, 0.0
        %v4239 = vmax.f32 %v4160, 0.0
        %v4240 = vmax.f32 %v4051, 0.0
        %v4241 = vmax.f32 %v4053, 0.0
        %v4242 = vmax.f32 %v4164, 0.0
        %v4243 = vmax.f32 %v4166, 0.0
        %v4244 = vmax.f32 %v4055, 0.0
        %v4245 = vmax.f32 %v4057, 0.0
        %v4246 = vmax.f32 %v4168, 0.0
        %v4247 = vmax.f32 %v4170, 0.0
        %v4248 = vmax.f32 %v4061, 0.0
        %v4249 = vmax.f32 %v4063, 0.0
        %v4250 = vmax.f32 %v4174, 0.0
        %v4251 = vmax.f32 %v4176, 0.0
        %v4252 = vmax.f32 %v4065, 0.0
        %v4253 = vmax.f32 %v4067, 0.0
        %v4254 = vmax.f32 %v4178, 0.0
        %v4255 = vmax.f32 %v4180, 0.0
        %v4256 = vmax.f32 %v4071, 0.0
        %v4257 = vmax.f32 %v4073, 0.0
        %v4258 = vmax.f32 %v4184, 0.0
        %v4259 = vmax.f32 %v4186, 0.0
        %v4260 = vmax.f32 %v4075, 0.0
        %v4261 = vmax.f32 %v4077, 0.0
        %v4262 = vmax.f32 %v4188, 0.0
        %v4263 = vmax.f32 %v4190, 0.0
        %v4264 = vmax.f32 %v4081, 0.0
        %v4265 = vmax.f32 %v4083, 0.0
        %v4266 = vmax.f32 %v4194, 0.0
        %v4267 = vmax.f32 %v4196, 0.0
        %v4268 = vmax.f32 %v4085, 0.0
        %v4269 = vmax.f32 %v4087, 0.0
        %v4270 = vmax.f32 %v4198, 0.0
        %v4271 = vmax.f32 %v4200, 0.0
        %v4272 = vmax.f32 %v4091, 0.0
        %v4273 = vmax.f32 %v4093, 0.0
        %v4274 = vmax.f32 %v4204, 0.0
        %v4275 = vmax.f32 %v4206, 0.0
        %v4276 = vmax.f32 %v4095, 0.0
        %v4277 = vmax.f32 %v4097, 0.0
        %v4278 = vmax.f32 %v4208, 0.0
        %v4279 = vmax.f32 %v4210, 0.0
        %v4280 = vmax.f32 %v4101, 0.0
        %v4281 = vmax.f32 %v4103, 0.0
        %v4282 = vmax.f32 %v4214, 0.0
        %v4283 = vmax.f32 %v4216, 0.0
        %v4284 = vmax.f32 %v4105, 0.0
        %v4285 = vmax.f32 %v4107, 0.0
        %v4286 = vmax.f32 %v4218, 0.0
        %v4287 = vmax.f32 %v4220, 0.0
        %v4288 = vmax.f32 %v4111, 0.0
        %v4289 = vmax.f32 %v4113, 0.0
        %v4290 = vmax.f32 %v4224, 0.0
        %v4291 = vmax.f32 %v4226, 0.0
        %v4292 = vmax.f32 %v4115, 0.0
        %v4293 = vmax.f32 %v4117, 0.0
        %v4294 = vmax.f32 %v4228, 0.0
        %v4295 = vmax.f32 %v4230, 0.0
        %v4296 = vpack.c.bf16 %v4236, %v4232
        %v4297 = vpack.c.bf16 %v4237, %v4233
        %v4298 = vpack.c.bf16 %v4238, %v4234
        %v4299 = vpack.c.bf16 %v4239, %v4235
        %v4300 = vpack.c.bf16 %v4244, %v4240
        %v4301 = vpack.c.bf16 %v4245, %v4241
        %v4302 = vpack.c.bf16 %v4246, %v4242
        %v4303 = vpack.c.bf16 %v4247, %v4243
        %v4304 = vpack.c.bf16 %v4252, %v4248
        %v4305 = vpack.c.bf16 %v4253, %v4249
        %v4306 = vpack.c.bf16 %v4254, %v4250
        %v4307 = vpack.c.bf16 %v4255, %v4251
        %v4308 = vpack.c.bf16 %v4260, %v4256
        %v4309 = vpack.c.bf16 %v4261, %v4257
        %v4310 = vpack.c.bf16 %v4262, %v4258
        %v4311 = vpack.c.bf16 %v4263, %v4259
        %v4312 = vpack.c.bf16 %v4268, %v4264
        %v4313 = vpack.c.bf16 %v4269, %v4265
        %v4314 = vpack.c.bf16 %v4270, %v4266
        %v4315 = vpack.c.bf16 %v4271, %v4267
        %v4316 = vpack.c.bf16 %v4276, %v4272
        %v4317 = vpack.c.bf16 %v4277, %v4273
        %v4318 = vpack.c.bf16 %v4278, %v4274
        %v4319 = vpack.c.bf16 %v4279, %v4275
        %v4320 = vpack.c.bf16 %v4284, %v4280
        %v4321 = vpack.c.bf16 %v4285, %v4281
        %v4322 = vpack.c.bf16 %v4286, %v4282
        %v4323 = vpack.c.bf16 %v4287, %v4283
        %v4324 = vpack.c.bf16 %v4292, %v4288
        %v4325 = vpack.c.bf16 %v4293, %v4289
        %v4326 = vpack.c.bf16 %v4294, %v4290
        %v4327 = vpack.c.bf16 %v4295, %v4291
        %v4328 = vld [vmem:[#allocation13] sm:$0xff]
        %v4329 = vld [vmem:[#allocation13 + $0x8] sm:$0xff]
        %v4330 = vld [vmem:[#allocation13 + $0x10] sm:$0xff]
        %v4331 = vld [vmem:[#allocation13 + $0x18] sm:$0xf]
        %v4332 = vld [vmem:[#allocation13 + $0x1c] sm:$0xff]
        %v4333 = vld [vmem:[#allocation13 + $0x24] sm:$0xff]
        %v4334 = vld [vmem:[#allocation13 + $0x2c] sm:$0xff]
        %v4335 = vld [vmem:[#allocation13 + $0x34] sm:$0xf]
        %v4336 = vld [vmem:[#allocation13 + $0x38] sm:$0xff]
        %v4337 = vld [vmem:[#allocation13 + $0x40] sm:$0xff]
        %v4338 = vld [vmem:[#allocation13 + $0x48] sm:$0xff]
        %v4339 = vld [vmem:[#allocation13 + $0x50] sm:$0xf]
        %v4340 = vld [vmem:[#allocation13 + $0x54] sm:$0xff]
        %v4341 = vld [vmem:[#allocation13 + $0x5c] sm:$0xff]
        %v4342 = vld [vmem:[#allocation13 + $0x64] sm:$0xff]
        %v4343 = vld [vmem:[#allocation13 + $0x6c] sm:$0xf]
        %v4344 = vld [vmem:[#allocation13 + $0x70] sm:$0xff]
        %v4345 = vld [vmem:[#allocation13 + $0x78] sm:$0xff]
        %v4346 = vld [vmem:[#allocation13 + $0x80] sm:$0xff]
        %v4347 = vld [vmem:[#allocation13 + $0x88] sm:$0xf]
        %v4348 = vld [vmem:[#allocation13 + $0x8c] sm:$0xff]
        %v4349 = vld [vmem:[#allocation13 + $0x94] sm:$0xff]
        %v4350 = vld [vmem:[#allocation13 + $0x9c] sm:$0xff]
        %v4351 = vld [vmem:[#allocation13 + $0xa4] sm:$0xf]
        %v4352 = vld [vmem:[#allocation13 + $0xa8] sm:$0xff]
        %v4353 = vld [vmem:[#allocation13 + $0xb0] sm:$0xff]
        %v4354 = vld [vmem:[#allocation13 + $0xb8] sm:$0xff]
        %v4355 = vld [vmem:[#allocation13 + $0xc0] sm:$0xf]
        %v4356 = vld [vmem:[#allocation13 + $0xc4] sm:$0xff]
        %v4357 = vld [vmem:[#allocation13 + $0xcc] sm:$0xff]
        %v4358 = vld [vmem:[#allocation13 + $0xd4] sm:$0xff]
        %v4359 = vld [vmem:[#allocation13 + $0xdc] sm:$0xf]
        %v4360 = vld [vmem:[#allocation13 + $0xe0] sm:$0xff]
        %v4361 = vld [vmem:[#allocation13 + $0xe8] sm:$0xff]
        %v4362 = vld [vmem:[#allocation13 + $0xf0] sm:$0xff]
        %v4363 = vld [vmem:[#allocation13 + $0xf8] sm:$0xf]
        %v4364 = vld [vmem:[#allocation13 + $0xfc] sm:$0xff]
        %v4365 = vld [vmem:[#allocation13 + $0x104] sm:$0xff]
        %v4366 = vld [vmem:[#allocation13 + $0x10c] sm:$0xff]
        %v4367 = vld [vmem:[#allocation13 + $0x114] sm:$0xf]
        %v4368 = vld [vmem:[#allocation13 + $0x118] sm:$0xff]
        %v4369 = vld [vmem:[#allocation13 + $0x120] sm:$0xff]
        %v4370 = vld [vmem:[#allocation13 + $0x128] sm:$0xff]
        %v4371 = vld [vmem:[#allocation13 + $0x130] sm:$0xf]
        %v4372 = vld [vmem:[#allocation13 + $0x134] sm:$0xff]
        %v4373 = vld [vmem:[#allocation13 + $0x13c] sm:$0xff]
        %v4374 = vld [vmem:[#allocation13 + $0x144] sm:$0xff]
        %v4375 = vld [vmem:[#allocation13 + $0x14c] sm:$0xf]
        %v4376 = vld [vmem:[#allocation13 + $0x150] sm:$0xff]
        %v4377 = vld [vmem:[#allocation13 + $0x158] sm:$0xff]
        %v4378 = vld [vmem:[#allocation13 + $0x160] sm:$0xff]
        %v4379 = vld [vmem:[#allocation13 + $0x168] sm:$0xf]
        %v4380 = vld [vmem:[#allocation13 + $0x16c] sm:$0xff]
        %v4381 = vld [vmem:[#allocation13 + $0x174] sm:$0xff]
        %v4382 = vld [vmem:[#allocation13 + $0x17c] sm:$0xff]
        %v4383 = vld [vmem:[#allocation13 + $0x184] sm:$0xf]
        %v4384 = vld [vmem:[#allocation13 + $0x188] sm:$0xff]
        %v4385 = vld [vmem:[#allocation13 + $0x190] sm:$0xff]
        %v4386 = vld [vmem:[#allocation13 + $0x198] sm:$0xff]
        %v4387 = vld [vmem:[#allocation13 + $0x1a0] sm:$0xf]
        %v4388 = vld [vmem:[#allocation13 + $0x1a4] sm:$0xff]
        %v4389 = vld [vmem:[#allocation13 + $0x1ac] sm:$0xff]
        %v4390 = vld [vmem:[#allocation13 + $0x1b4] sm:$0xff]
        %v4391 = vld [vmem:[#allocation13 + $0x1bc] sm:$0xf]
        %v4392 = vld [vmem:[#allocation13 + $0x1c0] sm:$0xff]
        %v4393 = vld [vmem:[#allocation13 + $0x1c8] sm:$0xff]
        %v4394 = vld [vmem:[#allocation13 + $0x1d0] sm:$0xff]
        %v4395 = vld [vmem:[#allocation13 + $0x1d8] sm:$0xf]
        %v4396 = vld [vmem:[#allocation13 + $0x1dc] sm:$0xff]
        %v4397 = vld [vmem:[#allocation13 + $0x1e4] sm:$0xff]
        %v4398 = vld [vmem:[#allocation13 + $0x1ec] sm:$0xff]
        %v4399 = vld [vmem:[#allocation13 + $0x1f4] sm:$0xf]
        %v4400 = vld [vmem:[#allocation13 + $0x1f8] sm:$0xff]
        %v4401 = vld [vmem:[#allocation13 + $0x200] sm:$0xff]
        %v4402 = vld [vmem:[#allocation13 + $0x208] sm:$0xff]
        %v4403 = vld [vmem:[#allocation13 + $0x210] sm:$0xf]
        %v4404 = vld [vmem:[#allocation13 + $0x214] sm:$0xff]
        %v4405 = vld [vmem:[#allocation13 + $0x21c] sm:$0xff]
        %v4406 = vld [vmem:[#allocation13 + $0x224] sm:$0xff]
        %v4407 = vld [vmem:[#allocation13 + $0x22c] sm:$0xf]
        %v4408 = vld [vmem:[#allocation13 + $0x230] sm:$0xff]
        %v4409 = vld [vmem:[#allocation13 + $0x238] sm:$0xff]
        %v4410 = vld [vmem:[#allocation13 + $0x240] sm:$0xff]
        %v4411 = vld [vmem:[#allocation13 + $0x248] sm:$0xf]
        %v4412 = vld [vmem:[#allocation13 + $0x24c] sm:$0xff]
        %v4413 = vld [vmem:[#allocation13 + $0x254] sm:$0xff]
        %v4414 = vld [vmem:[#allocation13 + $0x25c] sm:$0xff]
        %v4415 = vld [vmem:[#allocation13 + $0x264] sm:$0xf]
        %v4416 = vld [vmem:[#allocation13 + $0x268] sm:$0xff]
        %v4417 = vld [vmem:[#allocation13 + $0x270] sm:$0xff]
        %v4418 = vld [vmem:[#allocation13 + $0x278] sm:$0xff]
        %v4419 = vld [vmem:[#allocation13 + $0x280] sm:$0xf]
        %v4420 = vld [vmem:[#allocation13 + $0x284] sm:$0xff]
        %v4421 = vld [vmem:[#allocation13 + $0x28c] sm:$0xff]
        %v4422 = vld [vmem:[#allocation13 + $0x294] sm:$0xff]
        %v4423 = vld [vmem:[#allocation13 + $0x29c] sm:$0xf]
        %v4424 = vld [vmem:[#allocation13 + $0x2a0] sm:$0xff]
        %v4425 = vld [vmem:[#allocation13 + $0x2a8] sm:$0xff]
        %v4426 = vld [vmem:[#allocation13 + $0x2b0] sm:$0xff]
        %v4427 = vld [vmem:[#allocation13 + $0x2b8] sm:$0xf]
        %v4428 = vld [vmem:[#allocation13 + $0x2bc] sm:$0xff]
        %v4429 = vld [vmem:[#allocation13 + $0x2c4] sm:$0xff]
        %v4430 = vld [vmem:[#allocation13 + $0x2cc] sm:$0xff]
        %v4431 = vld [vmem:[#allocation13 + $0x2d4] sm:$0xf]
        %v4432 = vld [vmem:[#allocation13 + $0x2d8] sm:$0xff]
        %v4433 = vld [vmem:[#allocation13 + $0x2e0] sm:$0xff]
        %v4434 = vld [vmem:[#allocation13 + $0x2e8] sm:$0xff]
        %v4435 = vld [vmem:[#allocation13 + $0x2f0] sm:$0xf]
        %v4436 = vld [vmem:[#allocation13 + $0x2f4] sm:$0xff]
        %v4437 = vld [vmem:[#allocation13 + $0x2fc] sm:$0xff]
        %v4438 = vld [vmem:[#allocation13 + $0x304] sm:$0xff]
        %v4439 = vld [vmem:[#allocation13 + $0x30c] sm:$0xf]
        %v4440 = vld [vmem:[#allocation13 + $0x310] sm:$0xff]
        %v4441 = vld [vmem:[#allocation13 + $0x318] sm:$0xff]
        %v4442 = vld [vmem:[#allocation13 + $0x320] sm:$0xff]
        %v4443 = vld [vmem:[#allocation13 + $0x328] sm:$0xf]
        %v4444 = vld [vmem:[#allocation13 + $0x32c] sm:$0xff]
        %v4445 = vld [vmem:[#allocation13 + $0x334] sm:$0xff]
        %v4446 = vld [vmem:[#allocation13 + $0x33c] sm:$0xff]
        %v4447 = vld [vmem:[#allocation13 + $0x344] sm:$0xf]
        %v4448 = vld [vmem:[#allocation13 + $0x348] sm:$0xff]
        %v4449 = vld [vmem:[#allocation13 + $0x350] sm:$0xff]
        %v4450 = vld [vmem:[#allocation13 + $0x358] sm:$0xff]
        %v4451 = vld [vmem:[#allocation13 + $0x360] sm:$0xf]
        %v4452 = vld [vmem:[#allocation13 + $0x364] sm:$0xff]
        %v4453 = vld [vmem:[#allocation13 + $0x36c] sm:$0xff]
        %v4454 = vld [vmem:[#allocation13 + $0x374] sm:$0xff]
        %v4455 = vld [vmem:[#allocation13 + $0x37c] sm:$0xf]
        %v4456 = vld [vmem:[#allocation13 + $0x380] sm:$0xff]
        %v4457 = vld [vmem:[#allocation13 + $0x388] sm:$0xff]
        %v4458 = vld [vmem:[#allocation13 + $0x390] sm:$0xff]
        %v4459 = vld [vmem:[#allocation13 + $0x398] sm:$0xf]
        %v4460 = vld [vmem:[#allocation13 + $0x39c] sm:$0xff]
        %v4461 = vld [vmem:[#allocation13 + $0x3a4] sm:$0xff]
        %v4462 = vld [vmem:[#allocation13 + $0x3ac] sm:$0xff]
        %v4463 = vld [vmem:[#allocation13 + $0x3b4] sm:$0xf]
        %v4464 = vld [vmem:[#allocation13 + $0x3b8] sm:$0xff]
        %v4465 = vld [vmem:[#allocation13 + $0x3c0] sm:$0xff]
        %v4466 = vld [vmem:[#allocation13 + $0x3c8] sm:$0xff]
        %v4467 = vld [vmem:[#allocation13 + $0x3d0] sm:$0xf]
        %v4468 = vld [vmem:[#allocation13 + $0x3d4] sm:$0xff]
        %v4469 = vld [vmem:[#allocation13 + $0x3dc] sm:$0xff]
        %v4470 = vld [vmem:[#allocation13 + $0x3e4] sm:$0xff]
        %v4471 = vld [vmem:[#allocation13 + $0x3ec] sm:$0xf]
        %v4472 = vld [vmem:[#allocation13 + $0x3f0] sm:$0xff]
        %v4473 = vld [vmem:[#allocation13 + $0x3f8] sm:$0xff]
        %v4474 = vld [vmem:[#allocation13 + $0x400] sm:$0xff]
        %v4475 = vld [vmem:[#allocation13 + $0x408] sm:$0xf]
        %v4476 = vld [vmem:[#allocation13 + $0x40c] sm:$0xff]
        %v4477 = vld [vmem:[#allocation13 + $0x414] sm:$0xff]
        %v4478 = vld [vmem:[#allocation13 + $0x41c] sm:$0xff]
        %v4479 = vld [vmem:[#allocation13 + $0x424] sm:$0xf]
        %v4480 = vld [vmem:[#allocation13 + $0x428] sm:$0xff]
        %v4481 = vld [vmem:[#allocation13 + $0x430] sm:$0xff]
        %v4482 = vld [vmem:[#allocation13 + $0x438] sm:$0xff]
        %v4483 = vld [vmem:[#allocation13 + $0x440] sm:$0xf]
        %v4484 = vld [vmem:[#allocation13 + $0x444] sm:$0xff]
        %v4485 = vld [vmem:[#allocation13 + $0x44c] sm:$0xff]
        %v4486 = vld [vmem:[#allocation13 + $0x454] sm:$0xff]
        %v4487 = vld [vmem:[#allocation13 + $0x45c] sm:$0xf]
        %v4488 = vld [vmem:[#allocation13 + $0x460] sm:$0xff]
        %v4489 = vld [vmem:[#allocation13 + $0x468] sm:$0xff]
        %v4490 = vld [vmem:[#allocation13 + $0x470] sm:$0xff]
        %v4491 = vld [vmem:[#allocation13 + $0x478] sm:$0xf]
        %v4492 = vld [vmem:[#allocation13 + $0x47c] sm:$0xff]
        %v4493 = vld [vmem:[#allocation13 + $0x484] sm:$0xff]
        %v4494 = vld [vmem:[#allocation13 + $0x48c] sm:$0xff]
        %v4495 = vld [vmem:[#allocation13 + $0x494] sm:$0xf]
        %v4496 = vld [vmem:[#allocation13 + $0x498] sm:$0xff]
        %v4497 = vld [vmem:[#allocation13 + $0x4a0] sm:$0xff]
        %v4498 = vld [vmem:[#allocation13 + $0x4a8] sm:$0xff]
        %v4499 = vld [vmem:[#allocation13 + $0x4b0] sm:$0xf]
        %v4500 = vld [vmem:[#allocation13 + $0x4b4] sm:$0xff]
        %v4501 = vld [vmem:[#allocation13 + $0x4bc] sm:$0xff]
        %v4502 = vld [vmem:[#allocation13 + $0x4c4] sm:$0xff]
        %v4503 = vld [vmem:[#allocation13 + $0x4cc] sm:$0xf]
        %v4504 = vld [vmem:[#allocation13 + $0x4d0] sm:$0xff]
        %v4505 = vld [vmem:[#allocation13 + $0x4d8] sm:$0xff]
        %v4506 = vld [vmem:[#allocation13 + $0x4e0] sm:$0xff]
        %v4507 = vld [vmem:[#allocation13 + $0x4e8] sm:$0xf]
        %v4508 = vld [vmem:[#allocation13 + $0x4ec] sm:$0xff]
        %v4509 = vld [vmem:[#allocation13 + $0x4f4] sm:$0xff]
        %v4510 = vld [vmem:[#allocation13 + $0x4fc] sm:$0xff]
        %v4511 = vld [vmem:[#allocation13 + $0x504] sm:$0xf]
        %v4512 = vld [vmem:[#allocation13 + $0x508] sm:$0xff]
        %v4513 = vld [vmem:[#allocation13 + $0x510] sm:$0xff]
        %v4514 = vld [vmem:[#allocation13 + $0x518] sm:$0xff]
        %v4515 = vld [vmem:[#allocation13 + $0x520] sm:$0xf]
        %v4516 = vld [vmem:[#allocation13 + $0x524] sm:$0xff]
        %v4517 = vld [vmem:[#allocation13 + $0x52c] sm:$0xff]
        %v4518 = vld [vmem:[#allocation13 + $0x534] sm:$0xff]
        %v4519 = vld [vmem:[#allocation13 + $0x53c] sm:$0xf]
        %v4520 = vld [vmem:[#allocation13 + $0x540] sm:$0xff]
        %v4521 = vld [vmem:[#allocation13 + $0x548] sm:$0xff]
        %v4522 = vld [vmem:[#allocation13 + $0x550] sm:$0xff]
        %v4523 = vld [vmem:[#allocation13 + $0x558] sm:$0xf]
        %v4524 = vld [vmem:[#allocation13 + $0x55c] sm:$0xff]
        %v4525 = vld [vmem:[#allocation13 + $0x564] sm:$0xff]
        %v4526 = vld [vmem:[#allocation13 + $0x56c] sm:$0xff]
        %v4527 = vld [vmem:[#allocation13 + $0x574] sm:$0xf]
        %v4528 = vld [vmem:[#allocation13 + $0x578] sm:$0xff]
        %v4529 = vld [vmem:[#allocation13 + $0x580] sm:$0xff]
        %v4530 = vld [vmem:[#allocation13 + $0x588] sm:$0xff]
        %v4531 = vld [vmem:[#allocation13 + $0x590] sm:$0xf]
        %v4532 = vld [vmem:[#allocation13 + $0x594] sm:$0xff]
        %v4533 = vld [vmem:[#allocation13 + $0x59c] sm:$0xff]
        %v4534 = vld [vmem:[#allocation13 + $0x5a4] sm:$0xff]
        %v4535 = vld [vmem:[#allocation13 + $0x5ac] sm:$0xf]
        %v4536 = vld [vmem:[#allocation13 + $0x5b0] sm:$0xff]
        %v4537 = vld [vmem:[#allocation13 + $0x5b8] sm:$0xff]
        %v4538 = vld [vmem:[#allocation13 + $0x5c0] sm:$0xff]
        %v4539 = vld [vmem:[#allocation13 + $0x5c8] sm:$0xf]
        %v4540 = vld [vmem:[#allocation13 + $0x5cc] sm:$0xff]
        %v4541 = vld [vmem:[#allocation13 + $0x5d4] sm:$0xff]
        %v4542 = vld [vmem:[#allocation13 + $0x5dc] sm:$0xff]
        %v4543 = vld [vmem:[#allocation13 + $0x5e4] sm:$0xf]
        %v4544 = vld [vmem:[#allocation13 + $0x5e8] sm:$0xff]
        %v4545 = vld [vmem:[#allocation13 + $0x5f0] sm:$0xff]
        %v4546 = vld [vmem:[#allocation13 + $0x5f8] sm:$0xff]
        %v4547 = vld [vmem:[#allocation13 + $0x600] sm:$0xf]
        %v4548 = vld [vmem:[#allocation13 + $0x604] sm:$0xff]
        %v4549 = vld [vmem:[#allocation13 + $0x60c] sm:$0xff]
        %v4550 = vld [vmem:[#allocation13 + $0x614] sm:$0xff]
        %v4551 = vld [vmem:[#allocation13 + $0x61c] sm:$0xf]
        %v4552 = vld [vmem:[#allocation13 + $0x620] sm:$0xff]
        %v4553 = vld [vmem:[#allocation13 + $0x628] sm:$0xff]
        %v4554 = vld [vmem:[#allocation13 + $0x630] sm:$0xff]
        %v4555 = vld [vmem:[#allocation13 + $0x638] sm:$0xf]
        %v4556 = vld [vmem:[#allocation13 + $0x63c] sm:$0xff]
        %v4557 = vld [vmem:[#allocation13 + $0x644] sm:$0xff]
        %v4558 = vld [vmem:[#allocation13 + $0x64c] sm:$0xff]
        %v4559 = vld [vmem:[#allocation13 + $0x654] sm:$0xf]
        %v4560 = vld [vmem:[#allocation13 + $0x658] sm:$0xff]
        %v4561 = vld [vmem:[#allocation13 + $0x660] sm:$0xff]
        %v4562 = vld [vmem:[#allocation13 + $0x668] sm:$0xff]
        %v4563 = vld [vmem:[#allocation13 + $0x670] sm:$0xf]
        %v4564 = vld [vmem:[#allocation13 + $0x674] sm:$0xff]
        %v4565 = vld [vmem:[#allocation13 + $0x67c] sm:$0xff]
        %v4566 = vld [vmem:[#allocation13 + $0x684] sm:$0xff]
        %v4567 = vld [vmem:[#allocation13 + $0x68c] sm:$0xf]
        %v4568 = vld [vmem:[#allocation13 + $0x690] sm:$0xff]
        %v4569 = vld [vmem:[#allocation13 + $0x698] sm:$0xff]
        %v4570 = vld [vmem:[#allocation13 + $0x6a0] sm:$0xff]
        %v4571 = vld [vmem:[#allocation13 + $0x6a8] sm:$0xf]
        %v4572 = vld [vmem:[#allocation13 + $0x6ac] sm:$0xff]
        %v4573 = vld [vmem:[#allocation13 + $0x6b4] sm:$0xff]
        %v4574 = vld [vmem:[#allocation13 + $0x6bc] sm:$0xff]
        %v4575 = vld [vmem:[#allocation13 + $0x6c4] sm:$0xf]
        %v4576 = vld [vmem:[#allocation13 + $0x6c8] sm:$0xff]
        %v4577 = vld [vmem:[#allocation13 + $0x6d0] sm:$0xff]
        %v4578 = vld [vmem:[#allocation13 + $0x6d8] sm:$0xff]
        %v4579 = vld [vmem:[#allocation13 + $0x6e0] sm:$0xf]
        %v4580 = vld [vmem:[#allocation13 + $0x6e4] sm:$0xff]
        %v4581 = vld [vmem:[#allocation13 + $0x6ec] sm:$0xff]
        %v4582 = vld [vmem:[#allocation13 + $0x6f4] sm:$0xff]
        %v4583 = vld [vmem:[#allocation13 + $0x6fc] sm:$0xf]
        %v4584 = vld [vmem:[%s9] sm:$0xff]
        %v4586 = vlaneseq
        %v4587 = vshrl.u32 %v4586, 7
        %v4588 = vsub.s32 0, %v4587
        %v4589 = vrot.slane %v4584, %v4588
        %v4590 = vlaneseq
        %v4591 = vshrl.u32 %v4590, 7
        %v4592 = vsub.s32 1, %v4591
        %v4593 = vrot.slane %v4584, %v4592
        %v4594 = vlaneseq
        %v4595 = vshrl.u32 %v4594, 7
        %v4596 = vsub.s32 2, %v4595
        %v4597 = vrot.slane %v4584, %v4596
        %v4598 = vlaneseq
        %v4599 = vshrl.u32 %v4598, 7
        %v4600 = vsub.s32 3, %v4599
        %v4601 = vrot.slane %v4584, %v4600
        %v4602 = vlaneseq
        %v4603 = vshrl.u32 %v4602, 7
        %v4604 = vsub.s32 4, %v4603
        %v4605 = vrot.slane %v4584, %v4604
        %v4606 = vlaneseq
        %v4607 = vshrl.u32 %v4606, 7
        %v4608 = vsub.s32 5, %v4607
        %v4609 = vrot.slane %v4584, %v4608
        %v4610 = vlaneseq
        %v4611 = vshrl.u32 %v4610, 7
        %v4612 = vsub.s32 6, %v4611
        %v4613 = vrot.slane %v4584, %v4612
        %v4877 = vunpack.c.l.b16 %v4328
        %v4878 = vunpack.c.h.b16 %v4328
        %v4879 = vunpack.c.l.b16 %v4329
        %v4880 = vunpack.c.h.b16 %v4329
        %v4881 = vunpack.c.l.b16 %v4330
        %v4882 = vunpack.c.h.b16 %v4330
        %v4883 = vunpack.c.l.b16 %v4331
        %v4884 = vunpack.c.l.b16 %v4332
        %v4885 = vunpack.c.h.b16 %v4332
        %v4886 = vunpack.c.l.b16 %v4333
        %v4887 = vunpack.c.h.b16 %v4333
        %v4888 = vunpack.c.l.b16 %v4334
        %v4889 = vunpack.c.h.b16 %v4334
        %v4890 = vunpack.c.l.b16 %v4335
        %v4891 = vunpack.c.l.b16 %v4336
        %v4892 = vunpack.c.h.b16 %v4336
        %v4893 = vunpack.c.l.b16 %v4337
        %v4894 = vunpack.c.h.b16 %v4337
        %v4895 = vunpack.c.l.b16 %v4338
        %v4896 = vunpack.c.h.b16 %v4338
        %v4897 = vunpack.c.l.b16 %v4339
        %v4898 = vunpack.c.l.b16 %v4340
        %v4899 = vunpack.c.h.b16 %v4340
        %v4900 = vunpack.c.l.b16 %v4341
        %v4901 = vunpack.c.h.b16 %v4341
        %v4902 = vunpack.c.l.b16 %v4342
        %v4903 = vunpack.c.h.b16 %v4342
        %v4904 = vunpack.c.l.b16 %v4343
        %v4905 = vunpack.c.l.b16 %v4344
        %v4906 = vunpack.c.h.b16 %v4344
        %v4907 = vunpack.c.l.b16 %v4345
        %v4908 = vunpack.c.h.b16 %v4345
        %v4909 = vunpack.c.l.b16 %v4346
        %v4910 = vunpack.c.h.b16 %v4346
        %v4911 = vunpack.c.l.b16 %v4347
        %v4912 = vunpack.c.l.b16 %v4348
        %v4913 = vunpack.c.h.b16 %v4348
        %v4914 = vunpack.c.l.b16 %v4349
        %v4915 = vunpack.c.h.b16 %v4349
        %v4916 = vunpack.c.l.b16 %v4350
        %v4917 = vunpack.c.h.b16 %v4350
        %v4918 = vunpack.c.l.b16 %v4351
        %v4919 = vunpack.c.l.b16 %v4352
        %v4920 = vunpack.c.h.b16 %v4352
        %v4921 = vunpack.c.l.b16 %v4353
        %v4922 = vunpack.c.h.b16 %v4353
        %v4923 = vunpack.c.l.b16 %v4354
        %v4924 = vunpack.c.h.b16 %v4354
        %v4925 = vunpack.c.l.b16 %v4355
        %v4926 = vunpack.c.l.b16 %v4356
        %v4927 = vunpack.c.h.b16 %v4356
        %v4928 = vunpack.c.l.b16 %v4357
        %v4929 = vunpack.c.h.b16 %v4357
        %v4930 = vunpack.c.l.b16 %v4358
        %v4931 = vunpack.c.h.b16 %v4358
        %v4932 = vunpack.c.l.b16 %v4359
        %v4933 = vunpack.c.l.b16 %v4360
        %v4934 = vunpack.c.h.b16 %v4360
        %v4935 = vunpack.c.l.b16 %v4361
        %v4936 = vunpack.c.h.b16 %v4361
        %v4937 = vunpack.c.l.b16 %v4362
        %v4938 = vunpack.c.h.b16 %v4362
        %v4939 = vunpack.c.l.b16 %v4363
        %v4940 = vunpack.c.l.b16 %v4364
        %v4941 = vunpack.c.h.b16 %v4364
        %v4942 = vunpack.c.l.b16 %v4365
        %v4943 = vunpack.c.h.b16 %v4365
        %v4944 = vunpack.c.l.b16 %v4366
        %v4945 = vunpack.c.h.b16 %v4366
        %v4946 = vunpack.c.l.b16 %v4367
        %v4947 = vunpack.c.l.b16 %v4368
        %v4948 = vunpack.c.h.b16 %v4368
        %v4949 = vunpack.c.l.b16 %v4369
        %v4950 = vunpack.c.h.b16 %v4369
        %v4951 = vunpack.c.l.b16 %v4370
        %v4952 = vunpack.c.h.b16 %v4370
        %v4953 = vunpack.c.l.b16 %v4371
        %v4954 = vunpack.c.l.b16 %v4372
        %v4955 = vunpack.c.h.b16 %v4372
        %v4956 = vunpack.c.l.b16 %v4373
        %v4957 = vunpack.c.h.b16 %v4373
        %v4958 = vunpack.c.l.b16 %v4374
        %v4959 = vunpack.c.h.b16 %v4374
        %v4960 = vunpack.c.l.b16 %v4375
        %v4961 = vunpack.c.l.b16 %v4376
        %v4962 = vunpack.c.h.b16 %v4376
        %v4963 = vunpack.c.l.b16 %v4377
        %v4964 = vunpack.c.h.b16 %v4377
        %v4965 = vunpack.c.l.b16 %v4378
        %v4966 = vunpack.c.h.b16 %v4378
        %v4967 = vunpack.c.l.b16 %v4379
        %v4968 = vunpack.c.l.b16 %v4380
        %v4969 = vunpack.c.h.b16 %v4380
        %v4970 = vunpack.c.l.b16 %v4381
        %v4971 = vunpack.c.h.b16 %v4381
        %v4972 = vunpack.c.l.b16 %v4382
        %v4973 = vunpack.c.h.b16 %v4382
        %v4974 = vunpack.c.l.b16 %v4383
        %v4975 = vunpack.c.l.b16 %v4384
        %v4976 = vunpack.c.h.b16 %v4384
        %v4977 = vunpack.c.l.b16 %v4385
        %v4978 = vunpack.c.h.b16 %v4385
        %v4979 = vunpack.c.l.b16 %v4386
        %v4980 = vunpack.c.h.b16 %v4386
        %v4981 = vunpack.c.l.b16 %v4387
        %v4982 = vunpack.c.l.b16 %v4388
        %v4983 = vunpack.c.h.b16 %v4388
        %v4984 = vunpack.c.l.b16 %v4389
        %v4985 = vunpack.c.h.b16 %v4389
        %v4986 = vunpack.c.l.b16 %v4390
        %v4987 = vunpack.c.h.b16 %v4390
        %v4988 = vunpack.c.l.b16 %v4391
        %v4989 = vunpack.c.l.b16 %v4392
        %v4990 = vunpack.c.h.b16 %v4392
        %v4991 = vunpack.c.l.b16 %v4393
        %v4992 = vunpack.c.h.b16 %v4393
        %v4993 = vunpack.c.l.b16 %v4394
        %v4994 = vunpack.c.h.b16 %v4394
        %v4995 = vunpack.c.l.b16 %v4395
        %v4996 = vunpack.c.l.b16 %v4396
        %v4997 = vunpack.c.h.b16 %v4396
        %v4998 = vunpack.c.l.b16 %v4397
        %v4999 = vunpack.c.h.b16 %v4397
        %v5000 = vunpack.c.l.b16 %v4398
        %v5001 = vunpack.c.h.b16 %v4398
        %v5002 = vunpack.c.l.b16 %v4399
        %v5003 = vunpack.c.l.b16 %v4400
        %v5004 = vunpack.c.h.b16 %v4400
        %v5005 = vunpack.c.l.b16 %v4401
        %v5006 = vunpack.c.h.b16 %v4401
        %v5007 = vunpack.c.l.b16 %v4402
        %v5008 = vunpack.c.h.b16 %v4402
        %v5009 = vunpack.c.l.b16 %v4403
        %v5010 = vunpack.c.l.b16 %v4404
        %v5011 = vunpack.c.h.b16 %v4404
        %v5012 = vunpack.c.l.b16 %v4405
        %v5013 = vunpack.c.h.b16 %v4405
        %v5014 = vunpack.c.l.b16 %v4406
        %v5015 = vunpack.c.h.b16 %v4406
        %v5016 = vunpack.c.l.b16 %v4407
        %v5017 = vunpack.c.l.b16 %v4408
        %v5018 = vunpack.c.h.b16 %v4408
        %v5019 = vunpack.c.l.b16 %v4409
        %v5020 = vunpack.c.h.b16 %v4409
        %v5021 = vunpack.c.l.b16 %v4410
        %v5022 = vunpack.c.h.b16 %v4410
        %v5023 = vunpack.c.l.b16 %v4411
        %v5024 = vunpack.c.l.b16 %v4412
        %v5025 = vunpack.c.h.b16 %v4412
        %v5026 = vunpack.c.l.b16 %v4413
        %v5027 = vunpack.c.h.b16 %v4413
        %v5028 = vunpack.c.l.b16 %v4414
        %v5029 = vunpack.c.h.b16 %v4414
        %v5030 = vunpack.c.l.b16 %v4415
        %v5031 = vunpack.c.l.b16 %v4416
        %v5032 = vunpack.c.h.b16 %v4416
        %v5033 = vunpack.c.l.b16 %v4417
        %v5034 = vunpack.c.h.b16 %v4417
        %v5035 = vunpack.c.l.b16 %v4418
        %v5036 = vunpack.c.h.b16 %v4418
        %v5037 = vunpack.c.l.b16 %v4419
        %v5038 = vunpack.c.l.b16 %v4420
        %v5039 = vunpack.c.h.b16 %v4420
        %v5040 = vunpack.c.l.b16 %v4421
        %v5041 = vunpack.c.h.b16 %v4421
        %v5042 = vunpack.c.l.b16 %v4422
        %v5043 = vunpack.c.h.b16 %v4422
        %v5044 = vunpack.c.l.b16 %v4423
        %v5045 = vunpack.c.l.b16 %v4424
        %v5046 = vunpack.c.h.b16 %v4424
        %v5047 = vunpack.c.l.b16 %v4425
        %v5048 = vunpack.c.h.b16 %v4425
        %v5049 = vunpack.c.l.b16 %v4426
        %v5050 = vunpack.c.h.b16 %v4426
        %v5051 = vunpack.c.l.b16 %v4427
        %v5052 = vunpack.c.l.b16 %v4428
        %v5053 = vunpack.c.h.b16 %v4428
        %v5054 = vunpack.c.l.b16 %v4429
        %v5055 = vunpack.c.h.b16 %v4429
        %v5056 = vunpack.c.l.b16 %v4430
        %v5057 = vunpack.c.h.b16 %v4430
        %v5058 = vunpack.c.l.b16 %v4431
        %v5059 = vunpack.c.l.b16 %v4432
        %v5060 = vunpack.c.h.b16 %v4432
        %v5061 = vunpack.c.l.b16 %v4433
        %v5062 = vunpack.c.h.b16 %v4433
        %v5063 = vunpack.c.l.b16 %v4434
        %v5064 = vunpack.c.h.b16 %v4434
        %v5065 = vunpack.c.l.b16 %v4435
        %v5066 = vunpack.c.l.b16 %v4436
        %v5067 = vunpack.c.h.b16 %v4436
        %v5068 = vunpack.c.l.b16 %v4437
        %v5069 = vunpack.c.h.b16 %v4437
        %v5070 = vunpack.c.l.b16 %v4438
        %v5071 = vunpack.c.h.b16 %v4438
        %v5072 = vunpack.c.l.b16 %v4439
        %v5073 = vunpack.c.l.b16 %v4440
        %v5074 = vunpack.c.h.b16 %v4440
        %v5075 = vunpack.c.l.b16 %v4441
        %v5076 = vunpack.c.h.b16 %v4441
        %v5077 = vunpack.c.l.b16 %v4442
        %v5078 = vunpack.c.h.b16 %v4442
        %v5079 = vunpack.c.l.b16 %v4443
        %v5080 = vunpack.c.l.b16 %v4444
        %v5081 = vunpack.c.h.b16 %v4444
        %v5082 = vunpack.c.l.b16 %v4445
        %v5083 = vunpack.c.h.b16 %v4445
        %v5084 = vunpack.c.l.b16 %v4446
        %v5085 = vunpack.c.h.b16 %v4446
        %v5086 = vunpack.c.l.b16 %v4447
        %v5087 = vunpack.c.l.b16 %v4448
        %v5088 = vunpack.c.h.b16 %v4448
        %v5089 = vunpack.c.l.b16 %v4449
        %v5090 = vunpack.c.h.b16 %v4449
        %v5091 = vunpack.c.l.b16 %v4450
        %v5092 = vunpack.c.h.b16 %v4450
        %v5093 = vunpack.c.l.b16 %v4451
        %v5094 = vunpack.c.l.b16 %v4452
        %v5095 = vunpack.c.h.b16 %v4452
        %v5096 = vunpack.c.l.b16 %v4453
        %v5097 = vunpack.c.h.b16 %v4453
        %v5098 = vunpack.c.l.b16 %v4454
        %v5099 = vunpack.c.h.b16 %v4454
        %v5100 = vunpack.c.l.b16 %v4455
        %v5101 = vunpack.c.l.b16 %v4456
        %v5102 = vunpack.c.h.b16 %v4456
        %v5103 = vunpack.c.l.b16 %v4457
        %v5104 = vunpack.c.h.b16 %v4457
        %v5105 = vunpack.c.l.b16 %v4458
        %v5106 = vunpack.c.h.b16 %v4458
        %v5107 = vunpack.c.l.b16 %v4459
        %v5108 = vunpack.c.l.b16 %v4460
        %v5109 = vunpack.c.h.b16 %v4460
        %v5110 = vunpack.c.l.b16 %v4461
        %v5111 = vunpack.c.h.b16 %v4461
        %v5112 = vunpack.c.l.b16 %v4462
        %v5113 = vunpack.c.h.b16 %v4462
        %v5114 = vunpack.c.l.b16 %v4463
        %v5115 = vunpack.c.l.b16 %v4464
        %v5116 = vunpack.c.h.b16 %v4464
        %v5117 = vunpack.c.l.b16 %v4465
        %v5118 = vunpack.c.h.b16 %v4465
        %v5119 = vunpack.c.l.b16 %v4466
        %v5120 = vunpack.c.h.b16 %v4466
        %v5121 = vunpack.c.l.b16 %v4467
        %v5122 = vunpack.c.l.b16 %v4468
        %v5123 = vunpack.c.h.b16 %v4468
        %v5124 = vunpack.c.l.b16 %v4469
        %v5125 = vunpack.c.h.b16 %v4469
        %v5126 = vunpack.c.l.b16 %v4470
        %v5127 = vunpack.c.h.b16 %v4470
        %v5128 = vunpack.c.l.b16 %v4471
        %v5129 = vunpack.c.l.b16 %v4472
        %v5130 = vunpack.c.h.b16 %v4472
        %v5131 = vunpack.c.l.b16 %v4473
        %v5132 = vunpack.c.h.b16 %v4473
        %v5133 = vunpack.c.l.b16 %v4474
        %v5134 = vunpack.c.h.b16 %v4474
        %v5135 = vunpack.c.l.b16 %v4475
        %v5136 = vunpack.c.l.b16 %v4476
        %v5137 = vunpack.c.h.b16 %v4476
        %v5138 = vunpack.c.l.b16 %v4477
        %v5139 = vunpack.c.h.b16 %v4477
        %v5140 = vunpack.c.l.b16 %v4478
        %v5141 = vunpack.c.h.b16 %v4478
        %v5142 = vunpack.c.l.b16 %v4479
        %v5143 = vunpack.c.l.b16 %v4480
        %v5144 = vunpack.c.h.b16 %v4480
        %v5145 = vunpack.c.l.b16 %v4481
        %v5146 = vunpack.c.h.b16 %v4481
        %v5147 = vunpack.c.l.b16 %v4482
        %v5148 = vunpack.c.h.b16 %v4482
        %v5149 = vunpack.c.l.b16 %v4483
        %v5150 = vunpack.c.l.b16 %v4484
        %v5151 = vunpack.c.h.b16 %v4484
        %v5152 = vunpack.c.l.b16 %v4485
        %v5153 = vunpack.c.h.b16 %v4485
        %v5154 = vunpack.c.l.b16 %v4486
        %v5155 = vunpack.c.h.b16 %v4486
        %v5156 = vunpack.c.l.b16 %v4487
        %v5157 = vunpack.c.l.b16 %v4488
        %v5158 = vunpack.c.h.b16 %v4488
        %v5159 = vunpack.c.l.b16 %v4489
        %v5160 = vunpack.c.h.b16 %v4489
        %v5161 = vunpack.c.l.b16 %v4490
        %v5162 = vunpack.c.h.b16 %v4490
        %v5163 = vunpack.c.l.b16 %v4491
        %v5164 = vunpack.c.l.b16 %v4492
        %v5165 = vunpack.c.h.b16 %v4492
        %v5166 = vunpack.c.l.b16 %v4493
        %v5167 = vunpack.c.h.b16 %v4493
        %v5168 = vunpack.c.l.b16 %v4494
        %v5169 = vunpack.c.h.b16 %v4494
        %v5170 = vunpack.c.l.b16 %v4495
        %v5171 = vunpack.c.l.b16 %v4496
        %v5172 = vunpack.c.h.b16 %v4496
        %v5173 = vunpack.c.l.b16 %v4497
        %v5174 = vunpack.c.h.b16 %v4497
        %v5175 = vunpack.c.l.b16 %v4498
        %v5176 = vunpack.c.h.b16 %v4498
        %v5177 = vunpack.c.l.b16 %v4499
        %v5178 = vunpack.c.l.b16 %v4500
        %v5179 = vunpack.c.h.b16 %v4500
        %v5180 = vunpack.c.l.b16 %v4501
        %v5181 = vunpack.c.h.b16 %v4501
        %v5182 = vunpack.c.l.b16 %v4502
        %v5183 = vunpack.c.h.b16 %v4502
        %v5184 = vunpack.c.l.b16 %v4503
        %v5185 = vunpack.c.l.b16 %v4504
        %v5186 = vunpack.c.h.b16 %v4504
        %v5187 = vunpack.c.l.b16 %v4505
        %v5188 = vunpack.c.h.b16 %v4505
        %v5189 = vunpack.c.l.b16 %v4506
        %v5190 = vunpack.c.h.b16 %v4506
        %v5191 = vunpack.c.l.b16 %v4507
        %v5192 = vunpack.c.l.b16 %v4508
        %v5193 = vunpack.c.h.b16 %v4508
        %v5194 = vunpack.c.l.b16 %v4509
        %v5195 = vunpack.c.h.b16 %v4509
        %v5196 = vunpack.c.l.b16 %v4510
        %v5197 = vunpack.c.h.b16 %v4510
        %v5198 = vunpack.c.l.b16 %v4511
        %v5199 = vunpack.c.l.b16 %v4512
        %v5200 = vunpack.c.h.b16 %v4512
        %v5201 = vunpack.c.l.b16 %v4513
        %v5202 = vunpack.c.h.b16 %v4513
        %v5203 = vunpack.c.l.b16 %v4514
        %v5204 = vunpack.c.h.b16 %v4514
        %v5205 = vunpack.c.l.b16 %v4515
        %v5206 = vunpack.c.l.b16 %v4516
        %v5207 = vunpack.c.h.b16 %v4516
        %v5208 = vunpack.c.l.b16 %v4517
        %v5209 = vunpack.c.h.b16 %v4517
        %v5210 = vunpack.c.l.b16 %v4518
        %v5211 = vunpack.c.h.b16 %v4518
        %v5212 = vunpack.c.l.b16 %v4519
        %v5213 = vunpack.c.l.b16 %v4520
        %v5214 = vunpack.c.h.b16 %v4520
        %v5215 = vunpack.c.l.b16 %v4521
        %v5216 = vunpack.c.h.b16 %v4521
        %v5217 = vunpack.c.l.b16 %v4522
        %v5218 = vunpack.c.h.b16 %v4522
        %v5219 = vunpack.c.l.b16 %v4523
        %v5220 = vunpack.c.l.b16 %v4524
        %v5221 = vunpack.c.h.b16 %v4524
        %v5222 = vunpack.c.l.b16 %v4525
        %v5223 = vunpack.c.h.b16 %v4525
        %v5224 = vunpack.c.l.b16 %v4526
        %v5225 = vunpack.c.h.b16 %v4526
        %v5226 = vunpack.c.l.b16 %v4527
        %v5227 = vunpack.c.l.b16 %v4528
        %v5228 = vunpack.c.h.b16 %v4528
        %v5229 = vunpack.c.l.b16 %v4529
        %v5230 = vunpack.c.h.b16 %v4529
        %v5231 = vunpack.c.l.b16 %v4530
        %v5232 = vunpack.c.h.b16 %v4530
        %v5233 = vunpack.c.l.b16 %v4531
        %v5234 = vunpack.c.l.b16 %v4532
        %v5235 = vunpack.c.h.b16 %v4532
        %v5236 = vunpack.c.l.b16 %v4533
        %v5237 = vunpack.c.h.b16 %v4533
        %v5238 = vunpack.c.l.b16 %v4534
        %v5239 = vunpack.c.h.b16 %v4534
        %v5240 = vunpack.c.l.b16 %v4535
        %v5241 = vunpack.c.l.b16 %v4536
        %v5242 = vunpack.c.h.b16 %v4536
        %v5243 = vunpack.c.l.b16 %v4537
        %v5244 = vunpack.c.h.b16 %v4537
        %v5245 = vunpack.c.l.b16 %v4538
        %v5246 = vunpack.c.h.b16 %v4538
        %v5247 = vunpack.c.l.b16 %v4539
        %v5248 = vunpack.c.l.b16 %v4540
        %v5249 = vunpack.c.h.b16 %v4540
        %v5250 = vunpack.c.l.b16 %v4541
        %v5251 = vunpack.c.h.b16 %v4541
        %v5252 = vunpack.c.l.b16 %v4542
        %v5253 = vunpack.c.h.b16 %v4542
        %v5254 = vunpack.c.l.b16 %v4543
        %v5255 = vunpack.c.l.b16 %v4544
        %v5256 = vunpack.c.h.b16 %v4544
        %v5257 = vunpack.c.l.b16 %v4545
        %v5258 = vunpack.c.h.b16 %v4545
        %v5259 = vunpack.c.l.b16 %v4546
        %v5260 = vunpack.c.h.b16 %v4546
        %v5261 = vunpack.c.l.b16 %v4547
        %v5262 = vunpack.c.l.b16 %v4548
        %v5263 = vunpack.c.h.b16 %v4548
        %v5264 = vunpack.c.l.b16 %v4549
        %v5265 = vunpack.c.h.b16 %v4549
        %v5266 = vunpack.c.l.b16 %v4550
        %v5267 = vunpack.c.h.b16 %v4550
        %v5268 = vunpack.c.l.b16 %v4551
        %v5269 = vunpack.c.l.b16 %v4552
        %v5270 = vunpack.c.h.b16 %v4552
        %v5271 = vunpack.c.l.b16 %v4553
        %v5272 = vunpack.c.h.b16 %v4553
        %v5273 = vunpack.c.l.b16 %v4554
        %v5274 = vunpack.c.h.b16 %v4554
        %v5275 = vunpack.c.l.b16 %v4555
        %v5276 = vunpack.c.l.b16 %v4556
        %v5277 = vunpack.c.h.b16 %v4556
        %v5278 = vunpack.c.l.b16 %v4557
        %v5279 = vunpack.c.h.b16 %v4557
        %v5280 = vunpack.c.l.b16 %v4558
        %v5281 = vunpack.c.h.b16 %v4558
        %v5282 = vunpack.c.l.b16 %v4559
        %v5283 = vunpack.c.l.b16 %v4560
        %v5284 = vunpack.c.h.b16 %v4560
        %v5285 = vunpack.c.l.b16 %v4561
        %v5286 = vunpack.c.h.b16 %v4561
        %v5287 = vunpack.c.l.b16 %v4562
        %v5288 = vunpack.c.h.b16 %v4562
        %v5289 = vunpack.c.l.b16 %v4563
        %v5290 = vunpack.c.l.b16 %v4564
        %v5291 = vunpack.c.h.b16 %v4564
        %v5292 = vunpack.c.l.b16 %v4565
        %v5293 = vunpack.c.h.b16 %v4565
        %v5294 = vunpack.c.l.b16 %v4566
        %v5295 = vunpack.c.h.b16 %v4566
        %v5296 = vunpack.c.l.b16 %v4567
        %v5297 = vunpack.c.l.b16 %v4568
        %v5298 = vunpack.c.h.b16 %v4568
        %v5299 = vunpack.c.l.b16 %v4569
        %v5300 = vunpack.c.h.b16 %v4569
        %v5301 = vunpack.c.l.b16 %v4570
        %v5302 = vunpack.c.h.b16 %v4570
        %v5303 = vunpack.c.l.b16 %v4571
        %v5304 = vunpack.c.l.b16 %v4572
        %v5305 = vunpack.c.h.b16 %v4572
        %v5306 = vunpack.c.l.b16 %v4573
        %v5307 = vunpack.c.h.b16 %v4573
        %v5308 = vunpack.c.l.b16 %v4574
        %v5309 = vunpack.c.h.b16 %v4574
        %v5310 = vunpack.c.l.b16 %v4575
        %v5311 = vunpack.c.l.b16 %v4576
        %v5312 = vunpack.c.h.b16 %v4576
        %v5313 = vunpack.c.l.b16 %v4577
        %v5314 = vunpack.c.h.b16 %v4577
        %v5315 = vunpack.c.l.b16 %v4578
        %v5316 = vunpack.c.h.b16 %v4578
        %v5317 = vunpack.c.l.b16 %v4579
        %v5318 = vunpack.c.l.b16 %v4580
        %v5319 = vunpack.c.h.b16 %v4580
        %v5320 = vunpack.c.l.b16 %v4581
        %v5321 = vunpack.c.h.b16 %v4581
        %v5322 = vunpack.c.l.b16 %v4582
        %v5323 = vunpack.c.h.b16 %v4582
        %v5324 = vunpack.c.l.b16 %v4583
        %v5325 = vpack.c.b16 %v4884, %v4877
        %v5326 = vpack.c.b16 %v4885, %v4878
        %v5327 = vpack.c.b16 %v4886, %v4879
        %v5328 = vpack.c.b16 %v4887, %v4880
        %v5329 = vpack.c.b16 %v4888, %v4881
        %v5330 = vpack.c.b16 %v4889, %v4882
        %v5331 = vpack.c.b16 %v4890, %v4883
        %v5332 = vpack.c.b16 %v4898, %v4891
        %v5333 = vpack.c.b16 %v4899, %v4892
        %v5334 = vpack.c.b16 %v4900, %v4893
        %v5335 = vpack.c.b16 %v4901, %v4894
        %v5336 = vpack.c.b16 %v4902, %v4895
        %v5337 = vpack.c.b16 %v4903, %v4896
        %v5338 = vpack.c.b16 %v4904, %v4897
        %v5339 = vpack.c.b16 %v4912, %v4905
        %v5340 = vpack.c.b16 %v4913, %v4906
        %v5341 = vpack.c.b16 %v4914, %v4907
        %v5342 = vpack.c.b16 %v4915, %v4908
        %v5343 = vpack.c.b16 %v4916, %v4909
        %v5344 = vpack.c.b16 %v4917, %v4910
        %v5345 = vpack.c.b16 %v4918, %v4911
        %v5346 = vpack.c.b16 %v4926, %v4919
        %v5347 = vpack.c.b16 %v4927, %v4920
        %v5348 = vpack.c.b16 %v4928, %v4921
        %v5349 = vpack.c.b16 %v4929, %v4922
        %v5350 = vpack.c.b16 %v4930, %v4923
        %v5351 = vpack.c.b16 %v4931, %v4924
        %v5352 = vpack.c.b16 %v4932, %v4925
        %v5353 = vpack.c.b16 %v4940, %v4933
        %v5354 = vpack.c.b16 %v4941, %v4934
        %v5355 = vpack.c.b16 %v4942, %v4935
        %v5356 = vpack.c.b16 %v4943, %v4936
        %v5357 = vpack.c.b16 %v4944, %v4937
        %v5358 = vpack.c.b16 %v4945, %v4938
        %v5359 = vpack.c.b16 %v4946, %v4939
        %v5360 = vpack.c.b16 %v4954, %v4947
        %v5361 = vpack.c.b16 %v4955, %v4948
        %v5362 = vpack.c.b16 %v4956, %v4949
        %v5363 = vpack.c.b16 %v4957, %v4950
        %v5364 = vpack.c.b16 %v4958, %v4951
        %v5365 = vpack.c.b16 %v4959, %v4952
        %v5366 = vpack.c.b16 %v4960, %v4953
        %v5367 = vpack.c.b16 %v4968, %v4961
        %v5368 = vpack.c.b16 %v4969, %v4962
        %v5369 = vpack.c.b16 %v4970, %v4963
        %v5370 = vpack.c.b16 %v4971, %v4964
        %v5371 = vpack.c.b16 %v4972, %v4965
        %v5372 = vpack.c.b16 %v4973, %v4966
        %v5373 = vpack.c.b16 %v4974, %v4967
        %v5374 = vpack.c.b16 %v4982, %v4975
        %v5375 = vpack.c.b16 %v4983, %v4976
        %v5376 = vpack.c.b16 %v4984, %v4977
        %v5377 = vpack.c.b16 %v4985, %v4978
        %v5378 = vpack.c.b16 %v4986, %v4979
        %v5379 = vpack.c.b16 %v4987, %v4980
        %v5380 = vpack.c.b16 %v4988, %v4981
        %v5381 = vpack.c.b16 %v4996, %v4989
        %v5382 = vpack.c.b16 %v4997, %v4990
        %v5383 = vpack.c.b16 %v4998, %v4991
        %v5384 = vpack.c.b16 %v4999, %v4992
        %v5385 = vpack.c.b16 %v5000, %v4993
        %v5386 = vpack.c.b16 %v5001, %v4994
        %v5387 = vpack.c.b16 %v5002, %v4995
        %v5388 = vpack.c.b16 %v5010, %v5003
        %v5389 = vpack.c.b16 %v5011, %v5004
        %v5390 = vpack.c.b16 %v5012, %v5005
        %v5391 = vpack.c.b16 %v5013, %v5006
        %v5392 = vpack.c.b16 %v5014, %v5007
        %v5393 = vpack.c.b16 %v5015, %v5008
        %v5394 = vpack.c.b16 %v5016, %v5009
        %v5395 = vpack.c.b16 %v5024, %v5017
        %v5396 = vpack.c.b16 %v5025, %v5018
        %v5397 = vpack.c.b16 %v5026, %v5019
        %v5398 = vpack.c.b16 %v5027, %v5020
        %v5399 = vpack.c.b16 %v5028, %v5021
        %v5400 = vpack.c.b16 %v5029, %v5022
        %v5401 = vpack.c.b16 %v5030, %v5023
        %v5402 = vpack.c.b16 %v5038, %v5031
        %v5403 = vpack.c.b16 %v5039, %v5032
        %v5404 = vpack.c.b16 %v5040, %v5033
        %v5405 = vpack.c.b16 %v5041, %v5034
        %v5406 = vpack.c.b16 %v5042, %v5035
        %v5407 = vpack.c.b16 %v5043, %v5036
        %v5408 = vpack.c.b16 %v5044, %v5037
        %v5409 = vpack.c.b16 %v5052, %v5045
        %v5410 = vpack.c.b16 %v5053, %v5046
        %v5411 = vpack.c.b16 %v5054, %v5047
        %v5412 = vpack.c.b16 %v5055, %v5048
        %v5413 = vpack.c.b16 %v5056, %v5049
        %v5414 = vpack.c.b16 %v5057, %v5050
        %v5415 = vpack.c.b16 %v5058, %v5051
        %v5416 = vpack.c.b16 %v5066, %v5059
        %v5417 = vpack.c.b16 %v5067, %v5060
        %v5418 = vpack.c.b16 %v5068, %v5061
        %v5419 = vpack.c.b16 %v5069, %v5062
        %v5420 = vpack.c.b16 %v5070, %v5063
        %v5421 = vpack.c.b16 %v5071, %v5064
        %v5422 = vpack.c.b16 %v5072, %v5065
        %v5423 = vpack.c.b16 %v5080, %v5073
        %v5424 = vpack.c.b16 %v5081, %v5074
        %v5425 = vpack.c.b16 %v5082, %v5075
        %v5426 = vpack.c.b16 %v5083, %v5076
        %v5427 = vpack.c.b16 %v5084, %v5077
        %v5428 = vpack.c.b16 %v5085, %v5078
        %v5429 = vpack.c.b16 %v5086, %v5079
        %v5430 = vpack.c.b16 %v5094, %v5087
        %v5431 = vpack.c.b16 %v5095, %v5088
        %v5432 = vpack.c.b16 %v5096, %v5089
        %v5433 = vpack.c.b16 %v5097, %v5090
        %v5434 = vpack.c.b16 %v5098, %v5091
        %v5435 = vpack.c.b16 %v5099, %v5092
        %v5436 = vpack.c.b16 %v5100, %v5093
        %v5437 = vpack.c.b16 %v5108, %v5101
        %v5438 = vpack.c.b16 %v5109, %v5102
        %v5439 = vpack.c.b16 %v5110, %v5103
        %v5440 = vpack.c.b16 %v5111, %v5104
        %v5441 = vpack.c.b16 %v5112, %v5105
        %v5442 = vpack.c.b16 %v5113, %v5106
        %v5443 = vpack.c.b16 %v5114, %v5107
        %v5444 = vpack.c.b16 %v5122, %v5115
        %v5445 = vpack.c.b16 %v5123, %v5116
        %v5446 = vpack.c.b16 %v5124, %v5117
        %v5447 = vpack.c.b16 %v5125, %v5118
        %v5448 = vpack.c.b16 %v5126, %v5119
        %v5449 = vpack.c.b16 %v5127, %v5120
        %v5450 = vpack.c.b16 %v5128, %v5121
        %v5451 = vpack.c.b16 %v5136, %v5129
        %v5452 = vpack.c.b16 %v5137, %v5130
        %v5453 = vpack.c.b16 %v5138, %v5131
        %v5454 = vpack.c.b16 %v5139, %v5132
        %v5455 = vpack.c.b16 %v5140, %v5133
        %v5456 = vpack.c.b16 %v5141, %v5134
        %v5457 = vpack.c.b16 %v5142, %v5135
        %v5458 = vpack.c.b16 %v5150, %v5143
        %v5459 = vpack.c.b16 %v5151, %v5144
        %v5460 = vpack.c.b16 %v5152, %v5145
        %v5461 = vpack.c.b16 %v5153, %v5146
        %v5462 = vpack.c.b16 %v5154, %v5147
        %v5463 = vpack.c.b16 %v5155, %v5148
        %v5464 = vpack.c.b16 %v5156, %v5149
        %v5465 = vpack.c.b16 %v5164, %v5157
        %v5466 = vpack.c.b16 %v5165, %v5158
        %v5467 = vpack.c.b16 %v5166, %v5159
        %v5468 = vpack.c.b16 %v5167, %v5160
        %v5469 = vpack.c.b16 %v5168, %v5161
        %v5470 = vpack.c.b16 %v5169, %v5162
        %v5471 = vpack.c.b16 %v5170, %v5163
        %v5472 = vpack.c.b16 %v5178, %v5171
        %v5473 = vpack.c.b16 %v5179, %v5172
        %v5474 = vpack.c.b16 %v5180, %v5173
        %v5475 = vpack.c.b16 %v5181, %v5174
        %v5476 = vpack.c.b16 %v5182, %v5175
        %v5477 = vpack.c.b16 %v5183, %v5176
        %v5478 = vpack.c.b16 %v5184, %v5177
        %v5479 = vpack.c.b16 %v5192, %v5185
        %v5480 = vpack.c.b16 %v5193, %v5186
        %v5481 = vpack.c.b16 %v5194, %v5187
        %v5482 = vpack.c.b16 %v5195, %v5188
        %v5483 = vpack.c.b16 %v5196, %v5189
        %v5484 = vpack.c.b16 %v5197, %v5190
        %v5485 = vpack.c.b16 %v5198, %v5191
        %v5486 = vpack.c.b16 %v5206, %v5199
        %v5487 = vpack.c.b16 %v5207, %v5200
        %v5488 = vpack.c.b16 %v5208, %v5201
        %v5489 = vpack.c.b16 %v5209, %v5202
        %v5490 = vpack.c.b16 %v5210, %v5203
        %v5491 = vpack.c.b16 %v5211, %v5204
        %v5492 = vpack.c.b16 %v5212, %v5205
        %v5493 = vpack.c.b16 %v5220, %v5213
        %v5494 = vpack.c.b16 %v5221, %v5214
        %v5495 = vpack.c.b16 %v5222, %v5215
        %v5496 = vpack.c.b16 %v5223, %v5216
        %v5497 = vpack.c.b16 %v5224, %v5217
        %v5498 = vpack.c.b16 %v5225, %v5218
        %v5499 = vpack.c.b16 %v5226, %v5219
        %v5500 = vpack.c.b16 %v5234, %v5227
        %v5501 = vpack.c.b16 %v5235, %v5228
        %v5502 = vpack.c.b16 %v5236, %v5229
        %v5503 = vpack.c.b16 %v5237, %v5230
        %v5504 = vpack.c.b16 %v5238, %v5231
        %v5505 = vpack.c.b16 %v5239, %v5232
        %v5506 = vpack.c.b16 %v5240, %v5233
        %v5507 = vpack.c.b16 %v5248, %v5241
        %v5508 = vpack.c.b16 %v5249, %v5242
        %v5509 = vpack.c.b16 %v5250, %v5243
        %v5510 = vpack.c.b16 %v5251, %v5244
        %v5511 = vpack.c.b16 %v5252, %v5245
        %v5512 = vpack.c.b16 %v5253, %v5246
        %v5513 = vpack.c.b16 %v5254, %v5247
        %v5514 = vpack.c.b16 %v5262, %v5255
        %v5515 = vpack.c.b16 %v5263, %v5256
        %v5516 = vpack.c.b16 %v5264, %v5257
        %v5517 = vpack.c.b16 %v5265, %v5258
        %v5518 = vpack.c.b16 %v5266, %v5259
        %v5519 = vpack.c.b16 %v5267, %v5260
        %v5520 = vpack.c.b16 %v5268, %v5261
        %v5521 = vpack.c.b16 %v5276, %v5269
        %v5522 = vpack.c.b16 %v5277, %v5270
        %v5523 = vpack.c.b16 %v5278, %v5271
        %v5524 = vpack.c.b16 %v5279, %v5272
        %v5525 = vpack.c.b16 %v5280, %v5273
        %v5526 = vpack.c.b16 %v5281, %v5274
        %v5527 = vpack.c.b16 %v5282, %v5275
        %v5528 = vpack.c.b16 %v5290, %v5283
        %v5529 = vpack.c.b16 %v5291, %v5284
        %v5530 = vpack.c.b16 %v5292, %v5285
        %v5531 = vpack.c.b16 %v5293, %v5286
        %v5532 = vpack.c.b16 %v5294, %v5287
        %v5533 = vpack.c.b16 %v5295, %v5288
        %v5534 = vpack.c.b16 %v5296, %v5289
        %v5535 = vpack.c.b16 %v5304, %v5297
        %v5536 = vpack.c.b16 %v5305, %v5298
        %v5537 = vpack.c.b16 %v5306, %v5299
        %v5538 = vpack.c.b16 %v5307, %v5300
        %v5539 = vpack.c.b16 %v5308, %v5301
        %v5540 = vpack.c.b16 %v5309, %v5302
        %v5541 = vpack.c.b16 %v5310, %v5303
        %v5542 = vpack.c.b16 %v5318, %v5311
        %v5543 = vpack.c.b16 %v5319, %v5312
        %v5544 = vpack.c.b16 %v5320, %v5313
        %v5545 = vpack.c.b16 %v5321, %v5314
        %v5546 = vpack.c.b16 %v5322, %v5315
        %v5547 = vpack.c.b16 %v5323, %v5316
        %v5548 = vpack.c.b16 %v5324, %v5317
        %5773 = vmatprep.subr.bf16.mxu0 %v5375
        %5774 = vmatpush1.bf16.msra.mxu0 %v5374
        %5775 = vmatprep.subr.bf16.mxu0 %v5368
        %5776 = vmatpush1.bf16.msra.mxu0 %v5367
        %5777 = vmatprep.subr.bf16.mxu0 %v5361
        %5778 = vmatpush1.bf16.msra.mxu0 %v5360
        %5779 = vmatprep.subr.bf16.mxu0 %v5354
        %5780 = vmatpush1.bf16.msra.mxu0 %v5353
        %5781 = vmatprep.subr.bf16.mxu0 %v5347
        %5782 = vmatpush1.bf16.msra.mxu0 %v5346
        %5783 = vmatprep.subr.bf16.mxu0 %v5340
        %5784 = vmatpush1.bf16.msra.mxu0 %v5339
        %5785 = vmatprep.subr.bf16.mxu0 %v5333
        %5786 = vmatpush1.bf16.msra.mxu0 %v5332
        %5787 = vmatprep.subr.bf16.mxu0 %v5326
        %5788 = vmatpush1.bf16.msra.mxu0 %v5325
        %5789 = vmatprep.subr.bf16.mxu0 %v5431
        %5790 = vmatpush2.bf16.msra.mxu0 %v5430
        %5791 = vmatprep.subr.bf16.mxu0 %v5424
        %5792 = vmatpush2.bf16.msra.mxu0 %v5423
        %5793 = vmatprep.subr.bf16.mxu0 %v5417
        %5794 = vmatpush2.bf16.msra.mxu0 %v5416
        %5795 = vmatprep.subr.bf16.mxu0 %v5410
        %5796 = vmatpush2.bf16.msra.mxu0 %v5409
        %5797 = vmatprep.subr.bf16.mxu0 %v5403
        %5798 = vmatpush2.bf16.msra.mxu0 %v5402
        %5799 = vmatprep.subr.bf16.mxu0 %v5396
        %5800 = vmatpush2.bf16.msra.mxu0 %v5395
        %5801 = vmatprep.subr.bf16.mxu0 %v5389
        %5802 = vmatpush2.bf16.msra.mxu0 %v5388
        %5803 = vmatprep.subr.bf16.mxu0 %v5382
        %5804 = vmatpush2.bf16.msra.mxu0 %v5381
        %5805 = vmatprep.mubr.bf16.mxu0 %v4297
        %5806 = vmatmul.mubr.bf16.gmra.mxu0 %v4296
        %v5807 = vpop.f32.mrf.mxu0
        %v5808 = vadd.f32 %v4589, %v5807
        %v5809 = vpop.f32.mrf.mxu0
        %v5810 = vadd.f32 %v4593, %v5809
        %v5811 = vpop.f32.mrf.mxu0
        %v5812 = vadd.f32 %v4589, %v5811
        %v5813 = vpop.f32.mrf.mxu0
        %v5814 = vadd.f32 %v4593, %v5813
        %5815 = vmatprep.mubr.bf16.mxu0 %v4301
        %5816 = vmatmul.mubr.bf16.gmra.mxu0 %v4300
        %v5817 = vpop.f32.mrf.mxu0
        %v5818 = vadd.f32 %v4589, %v5817
        %v5819 = vpop.f32.mrf.mxu0
        %v5820 = vadd.f32 %v4593, %v5819
        %v5821 = vpop.f32.mrf.mxu0
        %v5822 = vadd.f32 %v4589, %v5821
        %v5823 = vpop.f32.mrf.mxu0
        %v5824 = vadd.f32 %v4593, %v5823
        %5825 = vmatprep.mubr.bf16.mxu0 %v4305
        %5826 = vmatmul.mubr.bf16.gmra.mxu0 %v4304
        %v5827 = vpop.f32.mrf.mxu0
        %v5828 = vadd.f32 %v4589, %v5827
        %v5829 = vpop.f32.mrf.mxu0
        %v5830 = vadd.f32 %v4593, %v5829
        %v5831 = vpop.f32.mrf.mxu0
        %v5832 = vadd.f32 %v4589, %v5831
        %v5833 = vpop.f32.mrf.mxu0
        %v5834 = vadd.f32 %v4593, %v5833
        %5835 = vmatprep.mubr.bf16.mxu0 %v4309
        %5836 = vmatmul.mubr.bf16.gmra.mxu0 %v4308
        %v5837 = vpop.f32.mrf.mxu0
        %v5838 = vadd.f32 %v4589, %v5837
        %v5839 = vpop.f32.mrf.mxu0
        %v5840 = vadd.f32 %v4593, %v5839
        %v5841 = vpop.f32.mrf.mxu0
        %v5842 = vadd.f32 %v4589, %v5841
        %v5843 = vpop.f32.mrf.mxu0
        %v5844 = vadd.f32 %v4593, %v5843
        %5845 = vmatprep.mubr.bf16.mxu0 %v4313
        %5846 = vmatmul.mubr.bf16.gmra.mxu0 %v4312
        %v5847 = vpop.f32.mrf.mxu0
        %v5848 = vadd.f32 %v4589, %v5847
        %v5849 = vpop.f32.mrf.mxu0
        %v5850 = vadd.f32 %v4593, %v5849
        %v5851 = vpop.f32.mrf.mxu0
        %v5852 = vadd.f32 %v4589, %v5851
        %v5853 = vpop.f32.mrf.mxu0
        %v5854 = vadd.f32 %v4593, %v5853
        %5855 = vmatprep.mubr.bf16.mxu0 %v4317
        %5856 = vmatmul.mubr.bf16.gmra.mxu0 %v4316
        %v5857 = vpop.f32.mrf.mxu0
        %v5858 = vadd.f32 %v4589, %v5857
        %v5859 = vpop.f32.mrf.mxu0
        %v5860 = vadd.f32 %v4593, %v5859
        %v5861 = vpop.f32.mrf.mxu0
        %v5862 = vadd.f32 %v4589, %v5861
        %v5863 = vpop.f32.mrf.mxu0
        %v5864 = vadd.f32 %v4593, %v5863
        %5865 = vmatprep.mubr.bf16.mxu0 %v4321
        %5866 = vmatmul.mubr.bf16.gmra.mxu0 %v4320
        %v5867 = vpop.f32.mrf.mxu0
        %v5868 = vadd.f32 %v4589, %v5867
        %v5869 = vpop.f32.mrf.mxu0
        %v5870 = vadd.f32 %v4593, %v5869
        %v5871 = vpop.f32.mrf.mxu0
        %v5872 = vadd.f32 %v4589, %v5871
        %v5873 = vpop.f32.mrf.mxu0
        %v5874 = vadd.f32 %v4593, %v5873
        %5875 = vmatprep.mubr.bf16.mxu0 %v4325
        %5876 = vmatmul.mubr.bf16.gmra.mxu0 %v4324
        %v5877 = vpop.f32.mrf.mxu0
        %v5878 = vadd.f32 %v4589, %v5877
        %v5879 = vpop.f32.mrf.mxu0
        %v5880 = vadd.f32 %v4593, %v5879
        %v5881 = vpop.f32.mrf.mxu0
        %v5882 = vadd.f32 %v4589, %v5881
        %v5883 = vpop.f32.mrf.mxu0
        %v5884 = vadd.f32 %v4593, %v5883
        %5885 = vdwg.mxu0
        %5886 = vmatprep.subr.bf16.mxu0 %v5487
        %5887 = vmatpush1.bf16.msra.mxu0 %v5486
        %5888 = vmatprep.subr.bf16.mxu0 %v5480
        %5889 = vmatpush1.bf16.msra.mxu0 %v5479
        %5890 = vmatprep.subr.bf16.mxu0 %v5473
        %5891 = vmatpush1.bf16.msra.mxu0 %v5472
        %5892 = vmatprep.subr.bf16.mxu0 %v5466
        %5893 = vmatpush1.bf16.msra.mxu0 %v5465
        %5894 = vmatprep.subr.bf16.mxu0 %v5459
        %5895 = vmatpush1.bf16.msra.mxu0 %v5458
        %5896 = vmatprep.subr.bf16.mxu0 %v5452
        %5897 = vmatpush1.bf16.msra.mxu0 %v5451
        %5898 = vmatprep.subr.bf16.mxu0 %v5445
        %5899 = vmatpush1.bf16.msra.mxu0 %v5444
        %5900 = vmatprep.subr.bf16.mxu0 %v5438
        %5901 = vmatpush1.bf16.msra.mxu0 %v5437
        %5902 = vmatprep.subr.bf16.mxu0 %v5543
        %5903 = vmatpush2.bf16.msra.mxu0 %v5542
        %5904 = vmatprep.subr.bf16.mxu0 %v5536
        %5905 = vmatpush2.bf16.msra.mxu0 %v5535
        %5906 = vmatprep.subr.bf16.mxu0 %v5529
        %5907 = vmatpush2.bf16.msra.mxu0 %v5528
        %5908 = vmatprep.subr.bf16.mxu0 %v5522
        %5909 = vmatpush2.bf16.msra.mxu0 %v5521
        %5910 = vmatprep.subr.bf16.mxu0 %v5515
        %5911 = vmatpush2.bf16.msra.mxu0 %v5514
        %5912 = vmatprep.subr.bf16.mxu0 %v5508
        %5913 = vmatpush2.bf16.msra.mxu0 %v5507
        %5914 = vmatprep.subr.bf16.mxu0 %v5501
        %5915 = vmatpush2.bf16.msra.mxu0 %v5500
        %5916 = vmatprep.subr.bf16.mxu0 %v5494
        %5917 = vmatpush2.bf16.msra.mxu0 %v5493
        %5918 = vmatprep.mubr.bf16.mxu0 %v4299
        %5919 = vmatmul.mubr.bf16.gmra.mxu0 %v4298
        %v5920 = vpop.f32.mrf.mxu0
        %v5921 = vadd.f32 %v5808, %v5920
        %v5922 = vpop.f32.mrf.mxu0
        %v5923 = vadd.f32 %v5810, %v5922
        %v5924 = vpop.f32.mrf.mxu0
        %v5925 = vadd.f32 %v5812, %v5924
        %v5926 = vpop.f32.mrf.mxu0
        %v5927 = vadd.f32 %v5814, %v5926
        %5928 = vmatprep.mubr.bf16.mxu0 %v4303
        %5929 = vmatmul.mubr.bf16.gmra.mxu0 %v4302
        %v5930 = vpop.f32.mrf.mxu0
        %v5931 = vadd.f32 %v5818, %v5930
        %v5932 = vpop.f32.mrf.mxu0
        %v5933 = vadd.f32 %v5820, %v5932
        %v5934 = vpop.f32.mrf.mxu0
        %v5935 = vadd.f32 %v5822, %v5934
        %v5936 = vpop.f32.mrf.mxu0
        %v5937 = vadd.f32 %v5824, %v5936
        %5938 = vmatprep.mubr.bf16.mxu0 %v4307
        %5939 = vmatmul.mubr.bf16.gmra.mxu0 %v4306
        %v5940 = vpop.f32.mrf.mxu0
        %v5941 = vadd.f32 %v5828, %v5940
        %v5942 = vpop.f32.mrf.mxu0
        %v5943 = vadd.f32 %v5830, %v5942
        %v5944 = vpop.f32.mrf.mxu0
        %v5945 = vadd.f32 %v5832, %v5944
        %v5946 = vpop.f32.mrf.mxu0
        %v5947 = vadd.f32 %v5834, %v5946
        %5948 = vmatprep.mubr.bf16.mxu0 %v4311
        %5949 = vmatmul.mubr.bf16.gmra.mxu0 %v4310
        %v5950 = vpop.f32.mrf.mxu0
        %v5951 = vadd.f32 %v5838, %v5950
        %v5952 = vpop.f32.mrf.mxu0
        %v5953 = vadd.f32 %v5840, %v5952
        %v5954 = vpop.f32.mrf.mxu0
        %v5955 = vadd.f32 %v5842, %v5954
        %v5956 = vpop.f32.mrf.mxu0
        %v5957 = vadd.f32 %v5844, %v5956
        %5958 = vmatprep.mubr.bf16.mxu0 %v4315
        %5959 = vmatmul.mubr.bf16.gmra.mxu0 %v4314
        %v5960 = vpop.f32.mrf.mxu0
        %v5961 = vadd.f32 %v5848, %v5960
        %v5962 = vpop.f32.mrf.mxu0
        %v5963 = vadd.f32 %v5850, %v5962
        %v5964 = vpop.f32.mrf.mxu0
        %v5965 = vadd.f32 %v5852, %v5964
        %v5966 = vpop.f32.mrf.mxu0
        %v5967 = vadd.f32 %v5854, %v5966
        %5968 = vmatprep.mubr.bf16.mxu0 %v4319
        %5969 = vmatmul.mubr.bf16.gmra.mxu0 %v4318
        %v5970 = vpop.f32.mrf.mxu0
        %v5971 = vadd.f32 %v5858, %v5970
        %v5972 = vpop.f32.mrf.mxu0
        %v5973 = vadd.f32 %v5860, %v5972
        %v5974 = vpop.f32.mrf.mxu0
        %v5975 = vadd.f32 %v5862, %v5974
        %v5976 = vpop.f32.mrf.mxu0
        %v5977 = vadd.f32 %v5864, %v5976
        %5978 = vmatprep.mubr.bf16.mxu0 %v4323
        %5979 = vmatmul.mubr.bf16.gmra.mxu0 %v4322
        %v5980 = vpop.f32.mrf.mxu0
        %v5981 = vadd.f32 %v5868, %v5980
        %v5982 = vpop.f32.mrf.mxu0
        %v5983 = vadd.f32 %v5870, %v5982
        %v5984 = vpop.f32.mrf.mxu0
        %v5985 = vadd.f32 %v5872, %v5984
        %v5986 = vpop.f32.mrf.mxu0
        %v5987 = vadd.f32 %v5874, %v5986
        %5988 = vmatprep.mubr.bf16.mxu0 %v4327
        %5989 = vmatmul.mubr.bf16.gmra.mxu0 %v4326
        %v5990 = vpop.f32.mrf.mxu0
        %v5991 = vadd.f32 %v5878, %v5990
        %v5992 = vpop.f32.mrf.mxu0
        %v5993 = vadd.f32 %v5880, %v5992
        %v5994 = vpop.f32.mrf.mxu0
        %v5995 = vadd.f32 %v5882, %v5994
        %v5996 = vpop.f32.mrf.mxu0
        %v5997 = vadd.f32 %v5884, %v5996
        %5998 = vdwg.mxu0
        %5999 = vmatprep.subr.bf16.mxu0 %v5377
        %6000 = vmatpush1.bf16.msra.mxu0 %v5376
        %6001 = vmatprep.subr.bf16.mxu0 %v5370
        %6002 = vmatpush1.bf16.msra.mxu0 %v5369
        %6003 = vmatprep.subr.bf16.mxu0 %v5363
        %6004 = vmatpush1.bf16.msra.mxu0 %v5362
        %6005 = vmatprep.subr.bf16.mxu0 %v5356
        %6006 = vmatpush1.bf16.msra.mxu0 %v5355
        %6007 = vmatprep.subr.bf16.mxu0 %v5349
        %6008 = vmatpush1.bf16.msra.mxu0 %v5348
        %6009 = vmatprep.subr.bf16.mxu0 %v5342
        %6010 = vmatpush1.bf16.msra.mxu0 %v5341
        %6011 = vmatprep.subr.bf16.mxu0 %v5335
        %6012 = vmatpush1.bf16.msra.mxu0 %v5334
        %6013 = vmatprep.subr.bf16.mxu0 %v5328
        %6014 = vmatpush1.bf16.msra.mxu0 %v5327
        %6015 = vmatprep.subr.bf16.mxu0 %v5433
        %6016 = vmatpush2.bf16.msra.mxu0 %v5432
        %6017 = vmatprep.subr.bf16.mxu0 %v5426
        %6018 = vmatpush2.bf16.msra.mxu0 %v5425
        %6019 = vmatprep.subr.bf16.mxu0 %v5419
        %6020 = vmatpush2.bf16.msra.mxu0 %v5418
        %6021 = vmatprep.subr.bf16.mxu0 %v5412
        %6022 = vmatpush2.bf16.msra.mxu0 %v5411
        %6023 = vmatprep.subr.bf16.mxu0 %v5405
        %6024 = vmatpush2.bf16.msra.mxu0 %v5404
        %6025 = vmatprep.subr.bf16.mxu0 %v5398
        %6026 = vmatpush2.bf16.msra.mxu0 %v5397
        %6027 = vmatprep.subr.bf16.mxu0 %v5391
        %6028 = vmatpush2.bf16.msra.mxu0 %v5390
        %6029 = vmatprep.subr.bf16.mxu0 %v5384
        %6030 = vmatpush2.bf16.msra.mxu0 %v5383
        %6031 = vmatprep.mubr.bf16.mxu0 %v4297
        %6032 = vmatmul.mubr.bf16.gmra.mxu0 %v4296
        %v6033 = vpop.f32.mrf.mxu0
        %v6034 = vadd.f32 %v4597, %v6033
        %v6035 = vpop.f32.mrf.mxu0
        %v6036 = vadd.f32 %v4601, %v6035
        %v6037 = vpop.f32.mrf.mxu0
        %v6038 = vadd.f32 %v4597, %v6037
        %v6039 = vpop.f32.mrf.mxu0
        %v6040 = vadd.f32 %v4601, %v6039
        %6041 = vmatprep.mubr.bf16.mxu0 %v4301
        %6042 = vmatmul.mubr.bf16.gmra.mxu0 %v4300
        %v6043 = vpop.f32.mrf.mxu0
        %v6044 = vadd.f32 %v4597, %v6043
        %v6045 = vpop.f32.mrf.mxu0
        %v6046 = vadd.f32 %v4601, %v6045
        %v6047 = vpop.f32.mrf.mxu0
        %v6048 = vadd.f32 %v4597, %v6047
        %v6049 = vpop.f32.mrf.mxu0
        %v6050 = vadd.f32 %v4601, %v6049
        %6051 = vmatprep.mubr.bf16.mxu0 %v4305
        %6052 = vmatmul.mubr.bf16.gmra.mxu0 %v4304
        %v6053 = vpop.f32.mrf.mxu0
        %v6054 = vadd.f32 %v4597, %v6053
        %v6055 = vpop.f32.mrf.mxu0
        %v6056 = vadd.f32 %v4601, %v6055
        %v6057 = vpop.f32.mrf.mxu0
        %v6058 = vadd.f32 %v4597, %v6057
        %v6059 = vpop.f32.mrf.mxu0
        %v6060 = vadd.f32 %v4601, %v6059
        %6061 = vmatprep.mubr.bf16.mxu0 %v4309
        %6062 = vmatmul.mubr.bf16.gmra.mxu0 %v4308
        %v6063 = vpop.f32.mrf.mxu0
        %v6064 = vadd.f32 %v4597, %v6063
        %v6065 = vpop.f32.mrf.mxu0
        %v6066 = vadd.f32 %v4601, %v6065
        %v6067 = vpop.f32.mrf.mxu0
        %v6068 = vadd.f32 %v4597, %v6067
        %v6069 = vpop.f32.mrf.mxu0
        %v6070 = vadd.f32 %v4601, %v6069
        %6071 = vmatprep.mubr.bf16.mxu0 %v4313
        %6072 = vmatmul.mubr.bf16.gmra.mxu0 %v4312
        %v6073 = vpop.f32.mrf.mxu0
        %v6074 = vadd.f32 %v4597, %v6073
        %v6075 = vpop.f32.mrf.mxu0
        %v6076 = vadd.f32 %v4601, %v6075
        %v6077 = vpop.f32.mrf.mxu0
        %v6078 = vadd.f32 %v4597, %v6077
        %v6079 = vpop.f32.mrf.mxu0
        %v6080 = vadd.f32 %v4601, %v6079
        %6081 = vmatprep.mubr.bf16.mxu0 %v4317
        %6082 = vmatmul.mubr.bf16.gmra.mxu0 %v4316
        %v6083 = vpop.f32.mrf.mxu0
        %v6084 = vadd.f32 %v4597, %v6083
        %v6085 = vpop.f32.mrf.mxu0
        %v6086 = vadd.f32 %v4601, %v6085
        %v6087 = vpop.f32.mrf.mxu0
        %v6088 = vadd.f32 %v4597, %v6087
        %v6089 = vpop.f32.mrf.mxu0
        %v6090 = vadd.f32 %v4601, %v6089
        %6091 = vmatprep.mubr.bf16.mxu0 %v4321
        %6092 = vmatmul.mubr.bf16.gmra.mxu0 %v4320
        %v6093 = vpop.f32.mrf.mxu0
        %v6094 = vadd.f32 %v4597, %v6093
        %v6095 = vpop.f32.mrf.mxu0
        %v6096 = vadd.f32 %v4601, %v6095
        %v6097 = vpop.f32.mrf.mxu0
        %v6098 = vadd.f32 %v4597, %v6097
        %v6099 = vpop.f32.mrf.mxu0
        %v6100 = vadd.f32 %v4601, %v6099
        %6101 = vmatprep.mubr.bf16.mxu0 %v4325
        %6102 = vmatmul.mubr.bf16.gmra.mxu0 %v4324
        %v6103 = vpop.f32.mrf.mxu0
        %v6104 = vadd.f32 %v4597, %v6103
        %v6105 = vpop.f32.mrf.mxu0
        %v6106 = vadd.f32 %v4601, %v6105
        %v6107 = vpop.f32.mrf.mxu0
        %v6108 = vadd.f32 %v4597, %v6107
        %v6109 = vpop.f32.mrf.mxu0
        %v6110 = vadd.f32 %v4601, %v6109
        %6111 = vdwg.mxu0
        %6112 = vmatprep.subr.bf16.mxu0 %v5489
        %6113 = vmatpush1.bf16.msra.mxu0 %v5488
        %6114 = vmatprep.subr.bf16.mxu0 %v5482
        %6115 = vmatpush1.bf16.msra.mxu0 %v5481
        %6116 = vmatprep.subr.bf16.mxu0 %v5475
        %6117 = vmatpush1.bf16.msra.mxu0 %v5474
        %6118 = vmatprep.subr.bf16.mxu0 %v5468
        %6119 = vmatpush1.bf16.msra.mxu0 %v5467
        %6120 = vmatprep.subr.bf16.mxu0 %v5461
        %6121 = vmatpush1.bf16.msra.mxu0 %v5460
        %6122 = vmatprep.subr.bf16.mxu0 %v5454
        %6123 = vmatpush1.bf16.msra.mxu0 %v5453
        %6124 = vmatprep.subr.bf16.mxu0 %v5447
        %6125 = vmatpush1.bf16.msra.mxu0 %v5446
        %6126 = vmatprep.subr.bf16.mxu0 %v5440
        %6127 = vmatpush1.bf16.msra.mxu0 %v5439
        %6128 = vmatprep.subr.bf16.mxu0 %v5545
        %6129 = vmatpush2.bf16.msra.mxu0 %v5544
        %6130 = vmatprep.subr.bf16.mxu0 %v5538
        %6131 = vmatpush2.bf16.msra.mxu0 %v5537
        %6132 = vmatprep.subr.bf16.mxu0 %v5531
        %6133 = vmatpush2.bf16.msra.mxu0 %v5530
        %6134 = vmatprep.subr.bf16.mxu0 %v5524
        %6135 = vmatpush2.bf16.msra.mxu0 %v5523
        %6136 = vmatprep.subr.bf16.mxu0 %v5517
        %6137 = vmatpush2.bf16.msra.mxu0 %v5516
        %6138 = vmatprep.subr.bf16.mxu0 %v5510
        %6139 = vmatpush2.bf16.msra.mxu0 %v5509
        %6140 = vmatprep.subr.bf16.mxu0 %v5503
        %6141 = vmatpush2.bf16.msra.mxu0 %v5502
        %6142 = vmatprep.subr.bf16.mxu0 %v5496
        %6143 = vmatpush2.bf16.msra.mxu0 %v5495
        %6144 = vmatprep.mubr.bf16.mxu0 %v4299
        %6145 = vmatmul.mubr.bf16.gmra.mxu0 %v4298
        %v6146 = vpop.f32.mrf.mxu0
        %v6147 = vadd.f32 %v6034, %v6146
        %v6148 = vpop.f32.mrf.mxu0
        %v6149 = vadd.f32 %v6036, %v6148
        %v6150 = vpop.f32.mrf.mxu0
        %v6151 = vadd.f32 %v6038, %v6150
        %v6152 = vpop.f32.mrf.mxu0
        %v6153 = vadd.f32 %v6040, %v6152
        %6154 = vmatprep.mubr.bf16.mxu0 %v4303
        %6155 = vmatmul.mubr.bf16.gmra.mxu0 %v4302
        %v6156 = vpop.f32.mrf.mxu0
        %v6157 = vadd.f32 %v6044, %v6156
        %v6158 = vpop.f32.mrf.mxu0
        %v6159 = vadd.f32 %v6046, %v6158
        %v6160 = vpop.f32.mrf.mxu0
        %v6161 = vadd.f32 %v6048, %v6160
        %v6162 = vpop.f32.mrf.mxu0
        %v6163 = vadd.f32 %v6050, %v6162
        %6164 = vmatprep.mubr.bf16.mxu0 %v4307
        %6165 = vmatmul.mubr.bf16.gmra.mxu0 %v4306
        %v6166 = vpop.f32.mrf.mxu0
        %v6167 = vadd.f32 %v6054, %v6166
        %v6168 = vpop.f32.mrf.mxu0
        %v6169 = vadd.f32 %v6056, %v6168
        %v6170 = vpop.f32.mrf.mxu0
        %v6171 = vadd.f32 %v6058, %v6170
        %v6172 = vpop.f32.mrf.mxu0
        %v6173 = vadd.f32 %v6060, %v6172
        %6174 = vmatprep.mubr.bf16.mxu0 %v4311
        %6175 = vmatmul.mubr.bf16.gmra.mxu0 %v4310
        %v6176 = vpop.f32.mrf.mxu0
        %v6177 = vadd.f32 %v6064, %v6176
        %v6178 = vpop.f32.mrf.mxu0
        %v6179 = vadd.f32 %v6066, %v6178
        %v6180 = vpop.f32.mrf.mxu0
        %v6181 = vadd.f32 %v6068, %v6180
        %v6182 = vpop.f32.mrf.mxu0
        %v6183 = vadd.f32 %v6070, %v6182
        %6184 = vmatprep.mubr.bf16.mxu0 %v4315
        %6185 = vmatmul.mubr.bf16.gmra.mxu0 %v4314
        %v6186 = vpop.f32.mrf.mxu0
        %v6187 = vadd.f32 %v6074, %v6186
        %v6188 = vpop.f32.mrf.mxu0
        %v6189 = vadd.f32 %v6076, %v6188
        %v6190 = vpop.f32.mrf.mxu0
        %v6191 = vadd.f32 %v6078, %v6190
        %v6192 = vpop.f32.mrf.mxu0
        %v6193 = vadd.f32 %v6080, %v6192
        %6194 = vmatprep.mubr.bf16.mxu0 %v4319
        %6195 = vmatmul.mubr.bf16.gmra.mxu0 %v4318
        %v6196 = vpop.f32.mrf.mxu0
        %v6197 = vadd.f32 %v6084, %v6196
        %v6198 = vpop.f32.mrf.mxu0
        %v6199 = vadd.f32 %v6086, %v6198
        %v6200 = vpop.f32.mrf.mxu0
        %v6201 = vadd.f32 %v6088, %v6200
        %v6202 = vpop.f32.mrf.mxu0
        %v6203 = vadd.f32 %v6090, %v6202
        %6204 = vmatprep.mubr.bf16.mxu0 %v4323
        %6205 = vmatmul.mubr.bf16.gmra.mxu0 %v4322
        %v6206 = vpop.f32.mrf.mxu0
        %v6207 = vadd.f32 %v6094, %v6206
        %v6208 = vpop.f32.mrf.mxu0
        %v6209 = vadd.f32 %v6096, %v6208
        %v6210 = vpop.f32.mrf.mxu0
        %v6211 = vadd.f32 %v6098, %v6210
        %v6212 = vpop.f32.mrf.mxu0
        %v6213 = vadd.f32 %v6100, %v6212
        %6214 = vmatprep.mubr.bf16.mxu0 %v4327
        %6215 = vmatmul.mubr.bf16.gmra.mxu0 %v4326
        %v6216 = vpop.f32.mrf.mxu0
        %v6217 = vadd.f32 %v6104, %v6216
        %v6218 = vpop.f32.mrf.mxu0
        %v6219 = vadd.f32 %v6106, %v6218
        %v6220 = vpop.f32.mrf.mxu0
        %v6221 = vadd.f32 %v6108, %v6220
        %v6222 = vpop.f32.mrf.mxu0
        %v6223 = vadd.f32 %v6110, %v6222
        %6224 = vdwg.mxu0
        %6225 = vmatprep.subr.bf16.mxu0 %v5379
        %6226 = vmatpush1.bf16.msra.mxu0 %v5378
        %6227 = vmatprep.subr.bf16.mxu0 %v5372
        %6228 = vmatpush1.bf16.msra.mxu0 %v5371
        %6229 = vmatprep.subr.bf16.mxu0 %v5365
        %6230 = vmatpush1.bf16.msra.mxu0 %v5364
        %6231 = vmatprep.subr.bf16.mxu0 %v5358
        %6232 = vmatpush1.bf16.msra.mxu0 %v5357
        %6233 = vmatprep.subr.bf16.mxu0 %v5351
        %6234 = vmatpush1.bf16.msra.mxu0 %v5350
        %6235 = vmatprep.subr.bf16.mxu0 %v5344
        %6236 = vmatpush1.bf16.msra.mxu0 %v5343
        %6237 = vmatprep.subr.bf16.mxu0 %v5337
        %6238 = vmatpush1.bf16.msra.mxu0 %v5336
        %6239 = vmatprep.subr.bf16.mxu0 %v5330
        %6240 = vmatpush1.bf16.msra.mxu0 %v5329
        %6241 = vmatprep.subr.bf16.mxu0 %v5435
        %6242 = vmatpush2.bf16.msra.mxu0 %v5434
        %6243 = vmatprep.subr.bf16.mxu0 %v5428
        %6244 = vmatpush2.bf16.msra.mxu0 %v5427
        %6245 = vmatprep.subr.bf16.mxu0 %v5421
        %6246 = vmatpush2.bf16.msra.mxu0 %v5420
        %6247 = vmatprep.subr.bf16.mxu0 %v5414
        %6248 = vmatpush2.bf16.msra.mxu0 %v5413
        %6249 = vmatprep.subr.bf16.mxu0 %v5407
        %6250 = vmatpush2.bf16.msra.mxu0 %v5406
        %6251 = vmatprep.subr.bf16.mxu0 %v5400
        %6252 = vmatpush2.bf16.msra.mxu0 %v5399
        %6253 = vmatprep.subr.bf16.mxu0 %v5393
        %6254 = vmatpush2.bf16.msra.mxu0 %v5392
        %6255 = vmatprep.subr.bf16.mxu0 %v5386
        %6256 = vmatpush2.bf16.msra.mxu0 %v5385
        %6257 = vmatprep.mubr.bf16.mxu0 %v4297
        %6258 = vmatmul.mubr.bf16.gmra.mxu0 %v4296
        %v6259 = vpop.f32.mrf.mxu0
        %v6260 = vadd.f32 %v4605, %v6259
        %v6261 = vpop.f32.mrf.mxu0
        %v6262 = vadd.f32 %v4609, %v6261
        %v6263 = vpop.f32.mrf.mxu0
        %v6264 = vadd.f32 %v4605, %v6263
        %v6265 = vpop.f32.mrf.mxu0
        %v6266 = vadd.f32 %v4609, %v6265
        %6267 = vmatprep.mubr.bf16.mxu0 %v4301
        %6268 = vmatmul.mubr.bf16.gmra.mxu0 %v4300
        %v6269 = vpop.f32.mrf.mxu0
        %v6270 = vadd.f32 %v4605, %v6269
        %v6271 = vpop.f32.mrf.mxu0
        %v6272 = vadd.f32 %v4609, %v6271
        %v6273 = vpop.f32.mrf.mxu0
        %v6274 = vadd.f32 %v4605, %v6273
        %v6275 = vpop.f32.mrf.mxu0
        %v6276 = vadd.f32 %v4609, %v6275
        %6277 = vmatprep.mubr.bf16.mxu0 %v4305
        %6278 = vmatmul.mubr.bf16.gmra.mxu0 %v4304
        %v6279 = vpop.f32.mrf.mxu0
        %v6280 = vadd.f32 %v4605, %v6279
        %v6281 = vpop.f32.mrf.mxu0
        %v6282 = vadd.f32 %v4609, %v6281
        %v6283 = vpop.f32.mrf.mxu0
        %v6284 = vadd.f32 %v4605, %v6283
        %v6285 = vpop.f32.mrf.mxu0
        %v6286 = vadd.f32 %v4609, %v6285
        %6287 = vmatprep.mubr.bf16.mxu0 %v4309
        %6288 = vmatmul.mubr.bf16.gmra.mxu0 %v4308
        %v6289 = vpop.f32.mrf.mxu0
        %v6290 = vadd.f32 %v4605, %v6289
        %v6291 = vpop.f32.mrf.mxu0
        %v6292 = vadd.f32 %v4609, %v6291
        %v6293 = vpop.f32.mrf.mxu0
        %v6294 = vadd.f32 %v4605, %v6293
        %v6295 = vpop.f32.mrf.mxu0
        %v6296 = vadd.f32 %v4609, %v6295
        %6297 = vmatprep.mubr.bf16.mxu0 %v4313
        %6298 = vmatmul.mubr.bf16.gmra.mxu0 %v4312
        %v6299 = vpop.f32.mrf.mxu0
        %v6300 = vadd.f32 %v4605, %v6299
        %v6301 = vpop.f32.mrf.mxu0
        %v6302 = vadd.f32 %v4609, %v6301
        %v6303 = vpop.f32.mrf.mxu0
        %v6304 = vadd.f32 %v4605, %v6303
        %v6305 = vpop.f32.mrf.mxu0
        %v6306 = vadd.f32 %v4609, %v6305
        %6307 = vmatprep.mubr.bf16.mxu0 %v4317
        %6308 = vmatmul.mubr.bf16.gmra.mxu0 %v4316
        %v6309 = vpop.f32.mrf.mxu0
        %v6310 = vadd.f32 %v4605, %v6309
        %v6311 = vpop.f32.mrf.mxu0
        %v6312 = vadd.f32 %v4609, %v6311
        %v6313 = vpop.f32.mrf.mxu0
        %v6314 = vadd.f32 %v4605, %v6313
        %v6315 = vpop.f32.mrf.mxu0
        %v6316 = vadd.f32 %v4609, %v6315
        %6317 = vmatprep.mubr.bf16.mxu0 %v4321
        %6318 = vmatmul.mubr.bf16.gmra.mxu0 %v4320
        %v6319 = vpop.f32.mrf.mxu0
        %v6320 = vadd.f32 %v4605, %v6319
        %v6321 = vpop.f32.mrf.mxu0
        %v6322 = vadd.f32 %v4609, %v6321
        %v6323 = vpop.f32.mrf.mxu0
        %v6324 = vadd.f32 %v4605, %v6323
        %v6325 = vpop.f32.mrf.mxu0
        %v6326 = vadd.f32 %v4609, %v6325
        %6327 = vmatprep.mubr.bf16.mxu0 %v4325
        %6328 = vmatmul.mubr.bf16.gmra.mxu0 %v4324
        %v6329 = vpop.f32.mrf.mxu0
        %v6330 = vadd.f32 %v4605, %v6329
        %v6331 = vpop.f32.mrf.mxu0
        %v6332 = vadd.f32 %v4609, %v6331
        %v6333 = vpop.f32.mrf.mxu0
        %v6334 = vadd.f32 %v4605, %v6333
        %v6335 = vpop.f32.mrf.mxu0
        %v6336 = vadd.f32 %v4609, %v6335
        %6337 = vdwg.mxu0
        %6338 = vmatprep.subr.bf16.mxu0 %v5491
        %6339 = vmatpush1.bf16.msra.mxu0 %v5490
        %6340 = vmatprep.subr.bf16.mxu0 %v5484
        %6341 = vmatpush1.bf16.msra.mxu0 %v5483
        %6342 = vmatprep.subr.bf16.mxu0 %v5477
        %6343 = vmatpush1.bf16.msra.mxu0 %v5476
        %6344 = vmatprep.subr.bf16.mxu0 %v5470
        %6345 = vmatpush1.bf16.msra.mxu0 %v5469
        %6346 = vmatprep.subr.bf16.mxu0 %v5463
        %6347 = vmatpush1.bf16.msra.mxu0 %v5462
        %6348 = vmatprep.subr.bf16.mxu0 %v5456
        %6349 = vmatpush1.bf16.msra.mxu0 %v5455
        %6350 = vmatprep.subr.bf16.mxu0 %v5449
        %6351 = vmatpush1.bf16.msra.mxu0 %v5448
        %6352 = vmatprep.subr.bf16.mxu0 %v5442
        %6353 = vmatpush1.bf16.msra.mxu0 %v5441
        %6354 = vmatprep.subr.bf16.mxu0 %v5547
        %6355 = vmatpush2.bf16.msra.mxu0 %v5546
        %6356 = vmatprep.subr.bf16.mxu0 %v5540
        %6357 = vmatpush2.bf16.msra.mxu0 %v5539
        %6358 = vmatprep.subr.bf16.mxu0 %v5533
        %6359 = vmatpush2.bf16.msra.mxu0 %v5532
        %6360 = vmatprep.subr.bf16.mxu0 %v5526
        %6361 = vmatpush2.bf16.msra.mxu0 %v5525
        %6362 = vmatprep.subr.bf16.mxu0 %v5519
        %6363 = vmatpush2.bf16.msra.mxu0 %v5518
        %6364 = vmatprep.subr.bf16.mxu0 %v5512
        %6365 = vmatpush2.bf16.msra.mxu0 %v5511
        %6366 = vmatprep.subr.bf16.mxu0 %v5505
        %6367 = vmatpush2.bf16.msra.mxu0 %v5504
        %6368 = vmatprep.subr.bf16.mxu0 %v5498
        %6369 = vmatpush2.bf16.msra.mxu0 %v5497
        %6370 = vmatprep.mubr.bf16.mxu0 %v4299
        %6371 = vmatmul.mubr.bf16.gmra.mxu0 %v4298
        %v6372 = vpop.f32.mrf.mxu0
        %v6373 = vadd.f32 %v6260, %v6372
        %v6374 = vpop.f32.mrf.mxu0
        %v6375 = vadd.f32 %v6262, %v6374
        %v6376 = vpop.f32.mrf.mxu0
        %v6377 = vadd.f32 %v6264, %v6376
        %v6378 = vpop.f32.mrf.mxu0
        %v6379 = vadd.f32 %v6266, %v6378
        %6380 = vmatprep.mubr.bf16.mxu0 %v4303
        %6381 = vmatmul.mubr.bf16.gmra.mxu0 %v4302
        %v6382 = vpop.f32.mrf.mxu0
        %v6383 = vadd.f32 %v6270, %v6382
        %v6384 = vpop.f32.mrf.mxu0
        %v6385 = vadd.f32 %v6272, %v6384
        %v6386 = vpop.f32.mrf.mxu0
        %v6387 = vadd.f32 %v6274, %v6386
        %v6388 = vpop.f32.mrf.mxu0
        %v6389 = vadd.f32 %v6276, %v6388
        %6390 = vmatprep.mubr.bf16.mxu0 %v4307
        %6391 = vmatmul.mubr.bf16.gmra.mxu0 %v4306
        %v6392 = vpop.f32.mrf.mxu0
        %v6393 = vadd.f32 %v6280, %v6392
        %v6394 = vpop.f32.mrf.mxu0
        %v6395 = vadd.f32 %v6282, %v6394
        %v6396 = vpop.f32.mrf.mxu0
        %v6397 = vadd.f32 %v6284, %v6396
        %v6398 = vpop.f32.mrf.mxu0
        %v6399 = vadd.f32 %v6286, %v6398
        %6400 = vmatprep.mubr.bf16.mxu0 %v4311
        %6401 = vmatmul.mubr.bf16.gmra.mxu0 %v4310
        %v6402 = vpop.f32.mrf.mxu0
        %v6403 = vadd.f32 %v6290, %v6402
        %v6404 = vpop.f32.mrf.mxu0
        %v6405 = vadd.f32 %v6292, %v6404
        %v6406 = vpop.f32.mrf.mxu0
        %v6407 = vadd.f32 %v6294, %v6406
        %v6408 = vpop.f32.mrf.mxu0
        %v6409 = vadd.f32 %v6296, %v6408
        %6410 = vmatprep.mubr.bf16.mxu0 %v4315
        %6411 = vmatmul.mubr.bf16.gmra.mxu0 %v4314
        %v6412 = vpop.f32.mrf.mxu0
        %v6413 = vadd.f32 %v6300, %v6412
        %v6414 = vpop.f32.mrf.mxu0
        %v6415 = vadd.f32 %v6302, %v6414
        %v6416 = vpop.f32.mrf.mxu0
        %v6417 = vadd.f32 %v6304, %v6416
        %v6418 = vpop.f32.mrf.mxu0
        %v6419 = vadd.f32 %v6306, %v6418
        %6420 = vmatprep.mubr.bf16.mxu0 %v4319
        %6421 = vmatmul.mubr.bf16.gmra.mxu0 %v4318
        %v6422 = vpop.f32.mrf.mxu0
        %v6423 = vadd.f32 %v6310, %v6422
        %v6424 = vpop.f32.mrf.mxu0
        %v6425 = vadd.f32 %v6312, %v6424
        %v6426 = vpop.f32.mrf.mxu0
        %v6427 = vadd.f32 %v6314, %v6426
        %v6428 = vpop.f32.mrf.mxu0
        %v6429 = vadd.f32 %v6316, %v6428
        %6430 = vmatprep.mubr.bf16.mxu0 %v4323
        %6431 = vmatmul.mubr.bf16.gmra.mxu0 %v4322
        %v6432 = vpop.f32.mrf.mxu0
        %v6433 = vadd.f32 %v6320, %v6432
        %v6434 = vpop.f32.mrf.mxu0
        %v6435 = vadd.f32 %v6322, %v6434
        %v6436 = vpop.f32.mrf.mxu0
        %v6437 = vadd.f32 %v6324, %v6436
        %v6438 = vpop.f32.mrf.mxu0
        %v6439 = vadd.f32 %v6326, %v6438
        %6440 = vmatprep.mubr.bf16.mxu0 %v4327
        %6441 = vmatmul.mubr.bf16.gmra.mxu0 %v4326
        %v6442 = vpop.f32.mrf.mxu0
        %v6443 = vadd.f32 %v6330, %v6442
        %v6444 = vpop.f32.mrf.mxu0
        %v6445 = vadd.f32 %v6332, %v6444
        %v6446 = vpop.f32.mrf.mxu0
        %v6447 = vadd.f32 %v6334, %v6446
        %v6448 = vpop.f32.mrf.mxu0
        %v6449 = vadd.f32 %v6336, %v6448
        %6450 = vdwg.mxu0
        %6451 = vmatprep.subr.bf16.mxu0 0
        %6452 = vmatpush1.bf16.msra.mxu0 %v5380
        %6453 = vmatprep.subr.bf16.mxu0 0
        %6454 = vmatpush1.bf16.msra.mxu0 %v5373
        %6455 = vmatprep.subr.bf16.mxu0 0
        %6456 = vmatpush1.bf16.msra.mxu0 %v5366
        %6457 = vmatprep.subr.bf16.mxu0 0
        %6458 = vmatpush1.bf16.msra.mxu0 %v5359
        %6459 = vmatprep.subr.bf16.mxu0 0
        %6460 = vmatpush1.bf16.msra.mxu0 %v5352
        %6461 = vmatprep.subr.bf16.mxu0 0
        %6462 = vmatpush1.bf16.msra.mxu0 %v5345
        %6463 = vmatprep.subr.bf16.mxu0 0
        %6464 = vmatpush1.bf16.msra.mxu0 %v5338
        %6465 = vmatprep.subr.bf16.mxu0 0
        %6466 = vmatpush1.bf16.msra.mxu0 %v5331
        %6467 = vmatprep.subr.bf16.mxu0 0
        %6468 = vmatpush2.bf16.msra.mxu0 %v5436
        %6469 = vmatprep.subr.bf16.mxu0 0
        %6470 = vmatpush2.bf16.msra.mxu0 %v5429
        %6471 = vmatprep.subr.bf16.mxu0 0
        %6472 = vmatpush2.bf16.msra.mxu0 %v5422
        %6473 = vmatprep.subr.bf16.mxu0 0
        %6474 = vmatpush2.bf16.msra.mxu0 %v5415
        %6475 = vmatprep.subr.bf16.mxu0 0
        %6476 = vmatpush2.bf16.msra.mxu0 %v5408
        %6477 = vmatprep.subr.bf16.mxu0 0
        %6478 = vmatpush2.bf16.msra.mxu0 %v5401
        %6479 = vmatprep.subr.bf16.mxu0 0
        %6480 = vmatpush2.bf16.msra.mxu0 %v5394
        %6481 = vmatprep.subr.bf16.mxu0 0
        %6482 = vmatpush2.bf16.msra.mxu0 %v5387
        %6483 = vmatprep.mubr.bf16.mxu0 %v4297
        %6484 = vmatmul.mubr.bf16.gmra.mxu0 %v4296
        %v6485 = vpop.f32.mrf.mxu0
        %v6486 = vadd.f32 %v4613, %v6485
        %v6487 = vpop.f32.mrf.mxu0
        %v6488 = vpop.f32.mrf.mxu0
        %v6489 = vadd.f32 %v4613, %v6488
        %v6490 = vpop.f32.mrf.mxu0
        %6491 = vmatprep.mubr.bf16.mxu0 %v4301
        %6492 = vmatmul.mubr.bf16.gmra.mxu0 %v4300
        %v6493 = vpop.f32.mrf.mxu0
        %v6494 = vadd.f32 %v4613, %v6493
        %v6495 = vpop.f32.mrf.mxu0
        %v6496 = vpop.f32.mrf.mxu0
        %v6497 = vadd.f32 %v4613, %v6496
        %v6498 = vpop.f32.mrf.mxu0
        %6499 = vmatprep.mubr.bf16.mxu0 %v4305
        %6500 = vmatmul.mubr.bf16.gmra.mxu0 %v4304
        %v6501 = vpop.f32.mrf.mxu0
        %v6502 = vadd.f32 %v4613, %v6501
        %v6503 = vpop.f32.mrf.mxu0
        %v6504 = vpop.f32.mrf.mxu0
        %v6505 = vadd.f32 %v4613, %v6504
        %v6506 = vpop.f32.mrf.mxu0
        %6507 = vmatprep.mubr.bf16.mxu0 %v4309
        %6508 = vmatmul.mubr.bf16.gmra.mxu0 %v4308
        %v6509 = vpop.f32.mrf.mxu0
        %v6510 = vadd.f32 %v4613, %v6509
        %v6511 = vpop.f32.mrf.mxu0
        %v6512 = vpop.f32.mrf.mxu0
        %v6513 = vadd.f32 %v4613, %v6512
        %v6514 = vpop.f32.mrf.mxu0
        %6515 = vmatprep.mubr.bf16.mxu0 %v4313
        %6516 = vmatmul.mubr.bf16.gmra.mxu0 %v4312
        %v6517 = vpop.f32.mrf.mxu0
        %v6518 = vadd.f32 %v4613, %v6517
        %v6519 = vpop.f32.mrf.mxu0
        %v6520 = vpop.f32.mrf.mxu0
        %v6521 = vadd.f32 %v4613, %v6520
        %v6522 = vpop.f32.mrf.mxu0
        %6523 = vmatprep.mubr.bf16.mxu0 %v4317
        %6524 = vmatmul.mubr.bf16.gmra.mxu0 %v4316
        %v6525 = vpop.f32.mrf.mxu0
        %v6526 = vadd.f32 %v4613, %v6525
        %v6527 = vpop.f32.mrf.mxu0
        %v6528 = vpop.f32.mrf.mxu0
        %v6529 = vadd.f32 %v4613, %v6528
        %v6530 = vpop.f32.mrf.mxu0
        %6531 = vmatprep.mubr.bf16.mxu0 %v4321
        %6532 = vmatmul.mubr.bf16.gmra.mxu0 %v4320
        %v6533 = vpop.f32.mrf.mxu0
        %v6534 = vadd.f32 %v4613, %v6533
        %v6535 = vpop.f32.mrf.mxu0
        %v6536 = vpop.f32.mrf.mxu0
        %v6537 = vadd.f32 %v4613, %v6536
        %v6538 = vpop.f32.mrf.mxu0
        %6539 = vmatprep.mubr.bf16.mxu0 %v4325
        %6540 = vmatmul.mubr.bf16.gmra.mxu0 %v4324
        %v6541 = vpop.f32.mrf.mxu0
        %v6542 = vadd.f32 %v4613, %v6541
        %v6543 = vpop.f32.mrf.mxu0
        %v6544 = vpop.f32.mrf.mxu0
        %v6545 = vadd.f32 %v4613, %v6544
        %v6546 = vpop.f32.mrf.mxu0
        %6547 = vdwg.mxu0
        %6548 = vmatprep.subr.bf16.mxu0 0
        %6549 = vmatpush1.bf16.msra.mxu0 %v5492
        %6550 = vmatprep.subr.bf16.mxu0 0
        %6551 = vmatpush1.bf16.msra.mxu0 %v5485
        %6552 = vmatprep.subr.bf16.mxu0 0
        %6553 = vmatpush1.bf16.msra.mxu0 %v5478
        %6554 = vmatprep.subr.bf16.mxu0 0
        %6555 = vmatpush1.bf16.msra.mxu0 %v5471
        %6556 = vmatprep.subr.bf16.mxu0 0
        %6557 = vmatpush1.bf16.msra.mxu0 %v5464
        %6558 = vmatprep.subr.bf16.mxu0 0
        %6559 = vmatpush1.bf16.msra.mxu0 %v5457
        %6560 = vmatprep.subr.bf16.mxu0 0
        %6561 = vmatpush1.bf16.msra.mxu0 %v5450
        %6562 = vmatprep.subr.bf16.mxu0 0
        %6563 = vmatpush1.bf16.msra.mxu0 %v5443
        %6564 = vmatprep.subr.bf16.mxu0 0
        %6565 = vmatpush2.bf16.msra.mxu0 %v5548
        %6566 = vmatprep.subr.bf16.mxu0 0
        %6567 = vmatpush2.bf16.msra.mxu0 %v5541
        %6568 = vmatprep.subr.bf16.mxu0 0
        %6569 = vmatpush2.bf16.msra.mxu0 %v5534
        %6570 = vmatprep.subr.bf16.mxu0 0
        %6571 = vmatpush2.bf16.msra.mxu0 %v5527
        %6572 = vmatprep.subr.bf16.mxu0 0
        %6573 = vmatpush2.bf16.msra.mxu0 %v5520
        %6574 = vmatprep.subr.bf16.mxu0 0
        %6575 = vmatpush2.bf16.msra.mxu0 %v5513
        %6576 = vmatprep.subr.bf16.mxu0 0
        %6577 = vmatpush2.bf16.msra.mxu0 %v5506
        %6578 = vmatprep.subr.bf16.mxu0 0
        %6579 = vmatpush2.bf16.msra.mxu0 %v5499
        %6580 = vmatprep.mubr.bf16.mxu0 %v4299
        %6581 = vmatmul.mubr.bf16.gmra.mxu0 %v4298
        %v6582 = vpop.f32.mrf.mxu0
        %v6583 = vadd.f32 %v6486, %v6582
        %v6584 = vpop.f32.mrf.mxu0
        %v6585 = vpop.f32.mrf.mxu0
        %v6586 = vadd.f32 %v6489, %v6585
        %v6587 = vpop.f32.mrf.mxu0
        %6588 = vmatprep.mubr.bf16.mxu0 %v4303
        %6589 = vmatmul.mubr.bf16.gmra.mxu0 %v4302
        %v6590 = vpop.f32.mrf.mxu0
        %v6591 = vadd.f32 %v6494, %v6590
        %v6592 = vpop.f32.mrf.mxu0
        %v6593 = vpop.f32.mrf.mxu0
        %v6594 = vadd.f32 %v6497, %v6593
        %v6595 = vpop.f32.mrf.mxu0
        %6596 = vmatprep.mubr.bf16.mxu0 %v4307
        %6597 = vmatmul.mubr.bf16.gmra.mxu0 %v4306
        %v6598 = vpop.f32.mrf.mxu0
        %v6599 = vadd.f32 %v6502, %v6598
        %v6600 = vpop.f32.mrf.mxu0
        %v6601 = vpop.f32.mrf.mxu0
        %v6602 = vadd.f32 %v6505, %v6601
        %v6603 = vpop.f32.mrf.mxu0
        %6604 = vmatprep.mubr.bf16.mxu0 %v4311
        %6605 = vmatmul.mubr.bf16.gmra.mxu0 %v4310
        %v6606 = vpop.f32.mrf.mxu0
        %v6607 = vadd.f32 %v6510, %v6606
        %v6608 = vpop.f32.mrf.mxu0
        %v6609 = vpop.f32.mrf.mxu0
        %v6610 = vadd.f32 %v6513, %v6609
        %v6611 = vpop.f32.mrf.mxu0
        %6612 = vmatprep.mubr.bf16.mxu0 %v4315
        %6613 = vmatmul.mubr.bf16.gmra.mxu0 %v4314
        %v6614 = vpop.f32.mrf.mxu0
        %v6615 = vadd.f32 %v6518, %v6614
        %v6616 = vpop.f32.mrf.mxu0
        %v6617 = vpop.f32.mrf.mxu0
        %v6618 = vadd.f32 %v6521, %v6617
        %v6619 = vpop.f32.mrf.mxu0
        %6620 = vmatprep.mubr.bf16.mxu0 %v4319
        %6621 = vmatmul.mubr.bf16.gmra.mxu0 %v4318
        %v6622 = vpop.f32.mrf.mxu0
        %v6623 = vadd.f32 %v6526, %v6622
        %v6624 = vpop.f32.mrf.mxu0
        %v6625 = vpop.f32.mrf.mxu0
        %v6626 = vadd.f32 %v6529, %v6625
        %v6627 = vpop.f32.mrf.mxu0
        %6628 = vmatprep.mubr.bf16.mxu0 %v4323
        %6629 = vmatmul.mubr.bf16.gmra.mxu0 %v4322
        %v6630 = vpop.f32.mrf.mxu0
        %v6631 = vadd.f32 %v6534, %v6630
        %v6632 = vpop.f32.mrf.mxu0
        %v6633 = vpop.f32.mrf.mxu0
        %v6634 = vadd.f32 %v6537, %v6633
        %v6635 = vpop.f32.mrf.mxu0
        %6636 = vmatprep.mubr.bf16.mxu0 %v4327
        %6637 = vmatmul.mubr.bf16.gmra.mxu0 %v4326
        %v6638 = vpop.f32.mrf.mxu0
        %v6639 = vadd.f32 %v6542, %v6638
        %v6640 = vpop.f32.mrf.mxu0
        %v6641 = vpop.f32.mrf.mxu0
        %v6642 = vadd.f32 %v6545, %v6641
        %v6643 = vpop.f32.mrf.mxu0
        %6644 = vdwg.mxu0
        %v6645 = vxor.u32 %v5921, 2147483648
        %v6646 = vxor.u32 %v5923, 2147483648
        %v6647 = vxor.u32 %v6147, 2147483648
        %v6648 = vxor.u32 %v6149, 2147483648
        %v6649 = vxor.u32 %v6373, 2147483648
        %v6650 = vxor.u32 %v6375, 2147483648
        %v6651 = vxor.u32 %v6583, 2147483648
        %v6652 = vxor.u32 %v5925, 2147483648
        %v6653 = vxor.u32 %v5927, 2147483648
        %v6654 = vxor.u32 %v6151, 2147483648
        %v6655 = vxor.u32 %v6153, 2147483648
        %v6656 = vxor.u32 %v6377, 2147483648
        %v6657 = vxor.u32 %v6379, 2147483648
        %v6658 = vxor.u32 %v6586, 2147483648
        %v6659 = vxor.u32 %v5931, 2147483648
        %v6660 = vxor.u32 %v5933, 2147483648
        %v6661 = vxor.u32 %v6157, 2147483648
        %v6662 = vxor.u32 %v6159, 2147483648
        %v6663 = vxor.u32 %v6383, 2147483648
        %v6664 = vxor.u32 %v6385, 2147483648
        %v6665 = vxor.u32 %v6591, 2147483648
        %v6666 = vxor.u32 %v5935, 2147483648
        %v6667 = vxor.u32 %v5937, 2147483648
        %v6668 = vxor.u32 %v6161, 2147483648
        %v6669 = vxor.u32 %v6163, 2147483648
        %v6670 = vxor.u32 %v6387, 2147483648
        %v6671 = vxor.u32 %v6389, 2147483648
        %v6672 = vxor.u32 %v6594, 2147483648
        %v6673 = vxor.u32 %v5941, 2147483648
        %v6674 = vxor.u32 %v5943, 2147483648
        %v6675 = vxor.u32 %v6167, 2147483648
        %v6676 = vxor.u32 %v6169, 2147483648
        %v6677 = vxor.u32 %v6393, 2147483648
        %v6678 = vxor.u32 %v6395, 2147483648
        %v6679 = vxor.u32 %v6599, 2147483648
        %v6680 = vxor.u32 %v5945, 2147483648
        %v6681 = vxor.u32 %v5947, 2147483648
        %v6682 = vxor.u32 %v6171, 2147483648
        %v6683 = vxor.u32 %v6173, 2147483648
        %v6684 = vxor.u32 %v6397, 2147483648
        %v6685 = vxor.u32 %v6399, 2147483648
        %v6686 = vxor.u32 %v6602, 2147483648
        %v6687 = vxor.u32 %v5951, 2147483648
        %v6688 = vxor.u32 %v5953, 2147483648
        %v6689 = vxor.u32 %v6177, 2147483648
        %v6690 = vxor.u32 %v6179, 2147483648
        %v6691 = vxor.u32 %v6403, 2147483648
        %v6692 = vxor.u32 %v6405, 2147483648
        %v6693 = vxor.u32 %v6607, 2147483648
        %v6694 = vxor.u32 %v5955, 2147483648
        %v6695 = vxor.u32 %v5957, 2147483648
        %v6696 = vxor.u32 %v6181, 2147483648
        %v6697 = vxor.u32 %v6183, 2147483648
        %v6698 = vxor.u32 %v6407, 2147483648
        %v6699 = vxor.u32 %v6409, 2147483648
        %v6700 = vxor.u32 %v6610, 2147483648
        %v6701 = vxor.u32 %v5961, 2147483648
        %v6702 = vxor.u32 %v5963, 2147483648
        %v6703 = vxor.u32 %v6187, 2147483648
        %v6704 = vxor.u32 %v6189, 2147483648
        %v6705 = vxor.u32 %v6413, 2147483648
        %v6706 = vxor.u32 %v6415, 2147483648
        %v6707 = vxor.u32 %v6615, 2147483648
        %v6708 = vxor.u32 %v5965, 2147483648
        %v6709 = vxor.u32 %v5967, 2147483648
        %v6710 = vxor.u32 %v6191, 2147483648
        %v6711 = vxor.u32 %v6193, 2147483648
        %v6712 = vxor.u32 %v6417, 2147483648
        %v6713 = vxor.u32 %v6419, 2147483648
        %v6714 = vxor.u32 %v6618, 2147483648
        %v6715 = vxor.u32 %v5971, 2147483648
        %v6716 = vxor.u32 %v5973, 2147483648
        %v6717 = vxor.u32 %v6197, 2147483648
        %v6718 = vxor.u32 %v6199, 2147483648
        %v6719 = vxor.u32 %v6423, 2147483648
        %v6720 = vxor.u32 %v6425, 2147483648
        %v6721 = vxor.u32 %v6623, 2147483648
        %v6722 = vxor.u32 %v5975, 2147483648
        %v6723 = vxor.u32 %v5977, 2147483648
        %v6724 = vxor.u32 %v6201, 2147483648
        %v6725 = vxor.u32 %v6203, 2147483648
        %v6726 = vxor.u32 %v6427, 2147483648
        %v6727 = vxor.u32 %v6429, 2147483648
        %v6728 = vxor.u32 %v6626, 2147483648
        %v6729 = vxor.u32 %v5981, 2147483648
        %v6730 = vxor.u32 %v5983, 2147483648
        %v6731 = vxor.u32 %v6207, 2147483648
        %v6732 = vxor.u32 %v6209, 2147483648
        %v6733 = vxor.u32 %v6433, 2147483648
        %v6734 = vxor.u32 %v6435, 2147483648
        %v6735 = vxor.u32 %v6631, 2147483648
        %v6736 = vxor.u32 %v5985, 2147483648
        %v6737 = vxor.u32 %v5987, 2147483648
        %v6738 = vxor.u32 %v6211, 2147483648
        %v6739 = vxor.u32 %v6213, 2147483648
        %v6740 = vxor.u32 %v6437, 2147483648
        %v6741 = vxor.u32 %v6439, 2147483648
        %v6742 = vxor.u32 %v6634, 2147483648
        %v6743 = vxor.u32 %v5991, 2147483648
        %v6744 = vxor.u32 %v5993, 2147483648
        %v6745 = vxor.u32 %v6217, 2147483648
        %v6746 = vxor.u32 %v6219, 2147483648
        %v6747 = vxor.u32 %v6443, 2147483648
        %v6748 = vxor.u32 %v6445, 2147483648
        %v6749 = vxor.u32 %v6639, 2147483648
        %v6750 = vxor.u32 %v5995, 2147483648
        %v6751 = vxor.u32 %v5997, 2147483648
        %v6752 = vxor.u32 %v6221, 2147483648
        %v6753 = vxor.u32 %v6223, 2147483648
        %v6754 = vxor.u32 %v6447, 2147483648
        %v6755 = vxor.u32 %v6449, 2147483648
        %v6756 = vxor.u32 %v6642, 2147483648
        %v6757 = vmul.f32 %v6645, 1.442695
        %v6758 = vpow.pop %v6757
        %v6759 = vmul.f32 %v6646, 1.442695
        %v6760 = vpow.pop %v6759
        %v6761 = vmul.f32 %v6647, 1.442695
        %v6762 = vpow.pop %v6761
        %v6763 = vmul.f32 %v6648, 1.442695
        %v6764 = vpow.pop %v6763
        %v6765 = vmul.f32 %v6649, 1.442695
        %v6766 = vpow.pop %v6765
        %v6767 = vmul.f32 %v6650, 1.442695
        %v6768 = vpow.pop %v6767
        %v6769 = vmul.f32 %v6651, 1.442695
        %v6770 = vpow.pop %v6769
        %v6771 = vmul.f32 %v6652, 1.442695
        %v6772 = vpow.pop %v6771
        %v6773 = vmul.f32 %v6653, 1.442695
        %v6774 = vpow.pop %v6773
        %v6775 = vmul.f32 %v6654, 1.442695
        %v6776 = vpow.pop %v6775
        %v6777 = vmul.f32 %v6655, 1.442695
        %v6778 = vpow.pop %v6777
        %v6779 = vmul.f32 %v6656, 1.442695
        %v6780 = vpow.pop %v6779
        %v6781 = vmul.f32 %v6657, 1.442695
        %v6782 = vpow.pop %v6781
        %v6783 = vmul.f32 %v6658, 1.442695
        %v6784 = vpow.pop %v6783
        %v6785 = vmul.f32 %v6659, 1.442695
        %v6786 = vpow.pop %v6785
        %v6787 = vmul.f32 %v6660, 1.442695
        %v6788 = vpow.pop %v6787
        %v6789 = vmul.f32 %v6661, 1.442695
        %v6790 = vpow.pop %v6789
        %v6791 = vmul.f32 %v6662, 1.442695
        %v6792 = vpow.pop %v6791
        %v6793 = vmul.f32 %v6663, 1.442695
        %v6794 = vpow.pop %v6793
        %v6795 = vmul.f32 %v6664, 1.442695
        %v6796 = vpow.pop %v6795
        %v6797 = vmul.f32 %v6665, 1.442695
        %v6798 = vpow.pop %v6797
        %v6799 = vmul.f32 %v6666, 1.442695
        %v6800 = vpow.pop %v6799
        %v6801 = vmul.f32 %v6667, 1.442695
        %v6802 = vpow.pop %v6801
        %v6803 = vmul.f32 %v6668, 1.442695
        %v6804 = vpow.pop %v6803
        %v6805 = vmul.f32 %v6669, 1.442695
        %v6806 = vpow.pop %v6805
        %v6807 = vmul.f32 %v6670, 1.442695
        %v6808 = vpow.pop %v6807
        %v6809 = vmul.f32 %v6671, 1.442695
        %v6810 = vpow.pop %v6809
        %v6811 = vmul.f32 %v6672, 1.442695
        %v6812 = vpow.pop %v6811
        %v6813 = vmul.f32 %v6673, 1.442695
        %v6814 = vpow.pop %v6813
        %v6815 = vmul.f32 %v6674, 1.442695
        %v6816 = vpow.pop %v6815
        %v6817 = vmul.f32 %v6675, 1.442695
        %v6818 = vpow.pop %v6817
        %v6819 = vmul.f32 %v6676, 1.442695
        %v6820 = vpow.pop %v6819
        %v6821 = vmul.f32 %v6677, 1.442695
        %v6822 = vpow.pop %v6821
        %v6823 = vmul.f32 %v6678, 1.442695
        %v6824 = vpow.pop %v6823
        %v6825 = vmul.f32 %v6679, 1.442695
        %v6826 = vpow.pop %v6825
        %v6827 = vmul.f32 %v6680, 1.442695
        %v6828 = vpow.pop %v6827
        %v6829 = vmul.f32 %v6681, 1.442695
        %v6830 = vpow.pop %v6829
        %v6831 = vmul.f32 %v6682, 1.442695
        %v6832 = vpow.pop %v6831
        %v6833 = vmul.f32 %v6683, 1.442695
        %v6834 = vpow.pop %v6833
        %v6835 = vmul.f32 %v6684, 1.442695
        %v6836 = vpow.pop %v6835
        %v6837 = vmul.f32 %v6685, 1.442695
        %v6838 = vpow.pop %v6837
        %v6839 = vmul.f32 %v6686, 1.442695
        %v6840 = vpow.pop %v6839
        %v6841 = vmul.f32 %v6687, 1.442695
        %v6842 = vpow.pop %v6841
        %v6843 = vmul.f32 %v6688, 1.442695
        %v6844 = vpow.pop %v6843
        %v6845 = vmul.f32 %v6689, 1.442695
        %v6846 = vpow.pop %v6845
        %v6847 = vmul.f32 %v6690, 1.442695
        %v6848 = vpow.pop %v6847
        %v6849 = vmul.f32 %v6691, 1.442695
        %v6850 = vpow.pop %v6849
        %v6851 = vmul.f32 %v6692, 1.442695
        %v6852 = vpow.pop %v6851
        %v6853 = vmul.f32 %v6693, 1.442695
        %v6854 = vpow.pop %v6853
        %v6855 = vmul.f32 %v6694, 1.442695
        %v6856 = vpow.pop %v6855
        %v6857 = vmul.f32 %v6695, 1.442695
        %v6858 = vpow.pop %v6857
        %v6859 = vmul.f32 %v6696, 1.442695
        %v6860 = vpow.pop %v6859
        %v6861 = vmul.f32 %v6697, 1.442695
        %v6862 = vpow.pop %v6861
        %v6863 = vmul.f32 %v6698, 1.442695
        %v6864 = vpow.pop %v6863
        %v6865 = vmul.f32 %v6699, 1.442695
        %v6866 = vpow.pop %v6865
        %v6867 = vmul.f32 %v6700, 1.442695
        %v6868 = vpow.pop %v6867
        %v6869 = vmul.f32 %v6701, 1.442695
        %v6870 = vpow.pop %v6869
        %v6871 = vmul.f32 %v6702, 1.442695
        %v6872 = vpow.pop %v6871
        %v6873 = vmul.f32 %v6703, 1.442695
        %v6874 = vpow.pop %v6873
        %v6875 = vmul.f32 %v6704, 1.442695
        %v6876 = vpow.pop %v6875
        %v6877 = vmul.f32 %v6705, 1.442695
        %v6878 = vpow.pop %v6877
        %v6879 = vmul.f32 %v6706, 1.442695
        %v6880 = vpow.pop %v6879
        %v6881 = vmul.f32 %v6707, 1.442695
        %v6882 = vpow.pop %v6881
        %v6883 = vmul.f32 %v6708, 1.442695
        %v6884 = vpow.pop %v6883
        %v6885 = vmul.f32 %v6709, 1.442695
        %v6886 = vpow.pop %v6885
        %v6887 = vmul.f32 %v6710, 1.442695
        %v6888 = vpow.pop %v6887
        %v6889 = vmul.f32 %v6711, 1.442695
        %v6890 = vpow.pop %v6889
        %v6891 = vmul.f32 %v6712, 1.442695
        %v6892 = vpow.pop %v6891
        %v6893 = vmul.f32 %v6713, 1.442695
        %v6894 = vpow.pop %v6893
        %v6895 = vmul.f32 %v6714, 1.442695
        %v6896 = vpow.pop %v6895
        %v6897 = vmul.f32 %v6715, 1.442695
        %v6898 = vpow.pop %v6897
        %v6899 = vmul.f32 %v6716, 1.442695
        %v6900 = vpow.pop %v6899
        %v6901 = vmul.f32 %v6717, 1.442695
        %v6902 = vpow.pop %v6901
        %v6903 = vmul.f32 %v6718, 1.442695
        %v6904 = vpow.pop %v6903
        %v6905 = vmul.f32 %v6719, 1.442695
        %v6906 = vpow.pop %v6905
        %v6907 = vmul.f32 %v6720, 1.442695
        %v6908 = vpow.pop %v6907
        %v6909 = vmul.f32 %v6721, 1.442695
        %v6910 = vpow.pop %v6909
        %v6911 = vmul.f32 %v6722, 1.442695
        %v6912 = vpow.pop %v6911
        %v6913 = vmul.f32 %v6723, 1.442695
        %v6914 = vpow.pop %v6913
        %v6915 = vmul.f32 %v6724, 1.442695
        %v6916 = vpow.pop %v6915
        %v6917 = vmul.f32 %v6725, 1.442695
        %v6918 = vpow.pop %v6917
        %v6919 = vmul.f32 %v6726, 1.442695
        %v6920 = vpow.pop %v6919
        %v6921 = vmul.f32 %v6727, 1.442695
        %v6922 = vpow.pop %v6921
        %v6923 = vmul.f32 %v6728, 1.442695
        %v6924 = vpow.pop %v6923
        %v6925 = vmul.f32 %v6729, 1.442695
        %v6926 = vpow.pop %v6925
        %v6927 = vmul.f32 %v6730, 1.442695
        %v6928 = vpow.pop %v6927
        %v6929 = vmul.f32 %v6731, 1.442695
        %v6930 = vpow.pop %v6929
        %v6931 = vmul.f32 %v6732, 1.442695
        %v6932 = vpow.pop %v6931
        %v6933 = vmul.f32 %v6733, 1.442695
        %v6934 = vpow.pop %v6933
        %v6935 = vmul.f32 %v6734, 1.442695
        %v6936 = vpow.pop %v6935
        %v6937 = vmul.f32 %v6735, 1.442695
        %v6938 = vpow.pop %v6937
        %v6939 = vmul.f32 %v6736, 1.442695
        %v6940 = vpow.pop %v6939
        %v6941 = vmul.f32 %v6737, 1.442695
        %v6942 = vpow.pop %v6941
        %v6943 = vmul.f32 %v6738, 1.442695
        %v6944 = vpow.pop %v6943
        %v6945 = vmul.f32 %v6739, 1.442695
        %v6946 = vpow.pop %v6945
        %v6947 = vmul.f32 %v6740, 1.442695
        %v6948 = vpow.pop %v6947
        %v6949 = vmul.f32 %v6741, 1.442695
        %v6950 = vpow.pop %v6949
        %v6951 = vmul.f32 %v6742, 1.442695
        %v6952 = vpow.pop %v6951
        %v6953 = vmul.f32 %v6743, 1.442695
        %v6954 = vpow.pop %v6953
        %v6955 = vmul.f32 %v6744, 1.442695
        %v6956 = vpow.pop %v6955
        %v6957 = vmul.f32 %v6745, 1.442695
        %v6958 = vpow.pop %v6957
        %v6959 = vmul.f32 %v6746, 1.442695
        %v6960 = vpow.pop %v6959
        %v6961 = vmul.f32 %v6747, 1.442695
        %v6962 = vpow.pop %v6961
        %v6963 = vmul.f32 %v6748, 1.442695
        %v6964 = vpow.pop %v6963
        %v6965 = vmul.f32 %v6749, 1.442695
        %v6966 = vpow.pop %v6965
        %v6967 = vmul.f32 %v6750, 1.442695
        %v6968 = vpow.pop %v6967
        %v6969 = vmul.f32 %v6751, 1.442695
        %v6970 = vpow.pop %v6969
        %v6971 = vmul.f32 %v6752, 1.442695
        %v6972 = vpow.pop %v6971
        %v6973 = vmul.f32 %v6753, 1.442695
        %v6974 = vpow.pop %v6973
        %v6975 = vmul.f32 %v6754, 1.442695
        %v6976 = vpow.pop %v6975
        %v6977 = vmul.f32 %v6755, 1.442695
        %v6978 = vpow.pop %v6977
        %v6979 = vmul.f32 %v6756, 1.442695
        %v6980 = vpow.pop %v6979
        %v6981 = vadd.f32 %v6758, 1.0
        %v6982 = vadd.f32 %v6760, 1.0
        %v6983 = vadd.f32 %v6762, 1.0
        %v6984 = vadd.f32 %v6764, 1.0
        %v6985 = vadd.f32 %v6766, 1.0
        %v6986 = vadd.f32 %v6768, 1.0
        %v6987 = vadd.f32 %v6770, 1.0
        %v6988 = vadd.f32 %v6772, 1.0
        %v6989 = vadd.f32 %v6774, 1.0
        %v6990 = vadd.f32 %v6776, 1.0
        %v6991 = vadd.f32 %v6778, 1.0
        %v6992 = vadd.f32 %v6780, 1.0
        %v6993 = vadd.f32 %v6782, 1.0
        %v6994 = vadd.f32 %v6784, 1.0
        %v6995 = vadd.f32 %v6786, 1.0
        %v6996 = vadd.f32 %v6788, 1.0
        %v6997 = vadd.f32 %v6790, 1.0
        %v6998 = vadd.f32 %v6792, 1.0
        %v6999 = vadd.f32 %v6794, 1.0
        %v7000 = vadd.f32 %v6796, 1.0
        %v7001 = vadd.f32 %v6798, 1.0
        %v7002 = vadd.f32 %v6800, 1.0
        %v7003 = vadd.f32 %v6802, 1.0
        %v7004 = vadd.f32 %v6804, 1.0
        %v7005 = vadd.f32 %v6806, 1.0
        %v7006 = vadd.f32 %v6808, 1.0
        %v7007 = vadd.f32 %v6810, 1.0
        %v7008 = vadd.f32 %v6812, 1.0
        %v7009 = vadd.f32 %v6814, 1.0
        %v7010 = vadd.f32 %v6816, 1.0
        %v7011 = vadd.f32 %v6818, 1.0
        %v7012 = vadd.f32 %v6820, 1.0
        %v7013 = vadd.f32 %v6822, 1.0
        %v7014 = vadd.f32 %v6824, 1.0
        %v7015 = vadd.f32 %v6826, 1.0
        %v7016 = vadd.f32 %v6828, 1.0
        %v7017 = vadd.f32 %v6830, 1.0
        %v7018 = vadd.f32 %v6832, 1.0
        %v7019 = vadd.f32 %v6834, 1.0
        %v7020 = vadd.f32 %v6836, 1.0
        %v7021 = vadd.f32 %v6838, 1.0
        %v7022 = vadd.f32 %v6840, 1.0
        %v7023 = vadd.f32 %v6842, 1.0
        %v7024 = vadd.f32 %v6844, 1.0
        %v7025 = vadd.f32 %v6846, 1.0
        %v7026 = vadd.f32 %v6848, 1.0
        %v7027 = vadd.f32 %v6850, 1.0
        %v7028 = vadd.f32 %v6852, 1.0
        %v7029 = vadd.f32 %v6854, 1.0
        %v7030 = vadd.f32 %v6856, 1.0
        %v7031 = vadd.f32 %v6858, 1.0
        %v7032 = vadd.f32 %v6860, 1.0
        %v7033 = vadd.f32 %v6862, 1.0
        %v7034 = vadd.f32 %v6864, 1.0
        %v7035 = vadd.f32 %v6866, 1.0
        %v7036 = vadd.f32 %v6868, 1.0
        %v7037 = vadd.f32 %v6870, 1.0
        %v7038 = vadd.f32 %v6872, 1.0
        %v7039 = vadd.f32 %v6874, 1.0
        %v7040 = vadd.f32 %v6876, 1.0
        %v7041 = vadd.f32 %v6878, 1.0
        %v7042 = vadd.f32 %v6880, 1.0
        %v7043 = vadd.f32 %v6882, 1.0
        %v7044 = vadd.f32 %v6884, 1.0
        %v7045 = vadd.f32 %v6886, 1.0
        %v7046 = vadd.f32 %v6888, 1.0
        %v7047 = vadd.f32 %v6890, 1.0
        %v7048 = vadd.f32 %v6892, 1.0
        %v7049 = vadd.f32 %v6894, 1.0
        %v7050 = vadd.f32 %v6896, 1.0
        %v7051 = vadd.f32 %v6898, 1.0
        %v7052 = vadd.f32 %v6900, 1.0
        %v7053 = vadd.f32 %v6902, 1.0
        %v7054 = vadd.f32 %v6904, 1.0
        %v7055 = vadd.f32 %v6906, 1.0
        %v7056 = vadd.f32 %v6908, 1.0
        %v7057 = vadd.f32 %v6910, 1.0
        %v7058 = vadd.f32 %v6912, 1.0
        %v7059 = vadd.f32 %v6914, 1.0
        %v7060 = vadd.f32 %v6916, 1.0
        %v7061 = vadd.f32 %v6918, 1.0
        %v7062 = vadd.f32 %v6920, 1.0
        %v7063 = vadd.f32 %v6922, 1.0
        %v7064 = vadd.f32 %v6924, 1.0
        %v7065 = vadd.f32 %v6926, 1.0
        %v7066 = vadd.f32 %v6928, 1.0
        %v7067 = vadd.f32 %v6930, 1.0
        %v7068 = vadd.f32 %v6932, 1.0
        %v7069 = vadd.f32 %v6934, 1.0
        %v7070 = vadd.f32 %v6936, 1.0
        %v7071 = vadd.f32 %v6938, 1.0
        %v7072 = vadd.f32 %v6940, 1.0
        %v7073 = vadd.f32 %v6942, 1.0
        %v7074 = vadd.f32 %v6944, 1.0
        %v7075 = vadd.f32 %v6946, 1.0
        %v7076 = vadd.f32 %v6948, 1.0
        %v7077 = vadd.f32 %v6950, 1.0
        %v7078 = vadd.f32 %v6952, 1.0
        %v7079 = vadd.f32 %v6954, 1.0
        %v7080 = vadd.f32 %v6956, 1.0
        %v7081 = vadd.f32 %v6958, 1.0
        %v7082 = vadd.f32 %v6960, 1.0
        %v7083 = vadd.f32 %v6962, 1.0
        %v7084 = vadd.f32 %v6964, 1.0
        %v7085 = vadd.f32 %v6966, 1.0
        %v7086 = vadd.f32 %v6968, 1.0
        %v7087 = vadd.f32 %v6970, 1.0
        %v7088 = vadd.f32 %v6972, 1.0
        %v7089 = vadd.f32 %v6974, 1.0
        %v7090 = vadd.f32 %v6976, 1.0
        %v7091 = vadd.f32 %v6978, 1.0
        %v7092 = vadd.f32 %v6980, 1.0
        %v7093 = vrcp.pop %v6981
        %v7094 = vmul.f32 1.0, %v7093
        %v7095 = vrcp.pop %v6982
        %v7096 = vmul.f32 1.0, %v7095
        %v7097 = vrcp.pop %v6983
        %v7098 = vmul.f32 1.0, %v7097
        %v7099 = vrcp.pop %v6984
        %v7100 = vmul.f32 1.0, %v7099
        %v7101 = vrcp.pop %v6985
        %v7102 = vmul.f32 1.0, %v7101
        %v7103 = vrcp.pop %v6986
        %v7104 = vmul.f32 1.0, %v7103
        %v7105 = vrcp.pop %v6987
        %v7106 = vmul.f32 1.0, %v7105
        %v7107 = vrcp.pop %v6988
        %v7108 = vmul.f32 1.0, %v7107
        %v7109 = vrcp.pop %v6989
        %v7110 = vmul.f32 1.0, %v7109
        %v7111 = vrcp.pop %v6990
        %v7112 = vmul.f32 1.0, %v7111
        %v7113 = vrcp.pop %v6991
        %v7114 = vmul.f32 1.0, %v7113
        %v7115 = vrcp.pop %v6992
        %v7116 = vmul.f32 1.0, %v7115
        %v7117 = vrcp.pop %v6993
        %v7118 = vmul.f32 1.0, %v7117
        %v7119 = vrcp.pop %v6994
        %v7120 = vmul.f32 1.0, %v7119
        %v7121 = vrcp.pop %v6995
        %v7122 = vmul.f32 1.0, %v7121
        %v7123 = vrcp.pop %v6996
        %v7124 = vmul.f32 1.0, %v7123
        %v7125 = vrcp.pop %v6997
        %v7126 = vmul.f32 1.0, %v7125
        %v7127 = vrcp.pop %v6998
        %v7128 = vmul.f32 1.0, %v7127
        %v7129 = vrcp.pop %v6999
        %v7130 = vmul.f32 1.0, %v7129
        %v7131 = vrcp.pop %v7000
        %v7132 = vmul.f32 1.0, %v7131
        %v7133 = vrcp.pop %v7001
        %v7134 = vmul.f32 1.0, %v7133
        %v7135 = vrcp.pop %v7002
        %v7136 = vmul.f32 1.0, %v7135
        %v7137 = vrcp.pop %v7003
        %v7138 = vmul.f32 1.0, %v7137
        %v7139 = vrcp.pop %v7004
        %v7140 = vmul.f32 1.0, %v7139
        %v7141 = vrcp.pop %v7005
        %v7142 = vmul.f32 1.0, %v7141
        %v7143 = vrcp.pop %v7006
        %v7144 = vmul.f32 1.0, %v7143
        %v7145 = vrcp.pop %v7007
        %v7146 = vmul.f32 1.0, %v7145
        %v7147 = vrcp.pop %v7008
        %v7148 = vmul.f32 1.0, %v7147
        %v7149 = vrcp.pop %v7009
        %v7150 = vmul.f32 1.0, %v7149
        %v7151 = vrcp.pop %v7010
        %v7152 = vmul.f32 1.0, %v7151
        %v7153 = vrcp.pop %v7011
        %v7154 = vmul.f32 1.0, %v7153
        %v7155 = vrcp.pop %v7012
        %v7156 = vmul.f32 1.0, %v7155
        %v7157 = vrcp.pop %v7013
        %v7158 = vmul.f32 1.0, %v7157
        %v7159 = vrcp.pop %v7014
        %v7160 = vmul.f32 1.0, %v7159
        %v7161 = vrcp.pop %v7015
        %v7162 = vmul.f32 1.0, %v7161
        %v7163 = vrcp.pop %v7016
        %v7164 = vmul.f32 1.0, %v7163
        %v7165 = vrcp.pop %v7017
        %v7166 = vmul.f32 1.0, %v7165
        %v7167 = vrcp.pop %v7018
        %v7168 = vmul.f32 1.0, %v7167
        %v7169 = vrcp.pop %v7019
        %v7170 = vmul.f32 1.0, %v7169
        %v7171 = vrcp.pop %v7020
        %v7172 = vmul.f32 1.0, %v7171
        %v7173 = vrcp.pop %v7021
        %v7174 = vmul.f32 1.0, %v7173
        %v7175 = vrcp.pop %v7022
        %v7176 = vmul.f32 1.0, %v7175
        %v7177 = vrcp.pop %v7023
        %v7178 = vmul.f32 1.0, %v7177
        %v7179 = vrcp.pop %v7024
        %v7180 = vmul.f32 1.0, %v7179
        %v7181 = vrcp.pop %v7025
        %v7182 = vmul.f32 1.0, %v7181
        %v7183 = vrcp.pop %v7026
        %v7184 = vmul.f32 1.0, %v7183
        %v7185 = vrcp.pop %v7027
        %v7186 = vmul.f32 1.0, %v7185
        %v7187 = vrcp.pop %v7028
        %v7188 = vmul.f32 1.0, %v7187
        %v7189 = vrcp.pop %v7029
        %v7190 = vmul.f32 1.0, %v7189
        %v7191 = vrcp.pop %v7030
        %v7192 = vmul.f32 1.0, %v7191
        %v7193 = vrcp.pop %v7031
        %v7194 = vmul.f32 1.0, %v7193
        %v7195 = vrcp.pop %v7032
        %v7196 = vmul.f32 1.0, %v7195
        %v7197 = vrcp.pop %v7033
        %v7198 = vmul.f32 1.0, %v7197
        %v7199 = vrcp.pop %v7034
        %v7200 = vmul.f32 1.0, %v7199
        %v7201 = vrcp.pop %v7035
        %v7202 = vmul.f32 1.0, %v7201
        %v7203 = vrcp.pop %v7036
        %v7204 = vmul.f32 1.0, %v7203
        %v7205 = vrcp.pop %v7037
        %v7206 = vmul.f32 1.0, %v7205
        %v7207 = vrcp.pop %v7038
        %v7208 = vmul.f32 1.0, %v7207
        %v7209 = vrcp.pop %v7039
        %v7210 = vmul.f32 1.0, %v7209
        %v7211 = vrcp.pop %v7040
        %v7212 = vmul.f32 1.0, %v7211
        %v7213 = vrcp.pop %v7041
        %v7214 = vmul.f32 1.0, %v7213
        %v7215 = vrcp.pop %v7042
        %v7216 = vmul.f32 1.0, %v7215
        %v7217 = vrcp.pop %v7043
        %v7218 = vmul.f32 1.0, %v7217
        %v7219 = vrcp.pop %v7044
        %v7220 = vmul.f32 1.0, %v7219
        %v7221 = vrcp.pop %v7045
        %v7222 = vmul.f32 1.0, %v7221
        %v7223 = vrcp.pop %v7046
        %v7224 = vmul.f32 1.0, %v7223
        %v7225 = vrcp.pop %v7047
        %v7226 = vmul.f32 1.0, %v7225
        %v7227 = vrcp.pop %v7048
        %v7228 = vmul.f32 1.0, %v7227
        %v7229 = vrcp.pop %v7049
        %v7230 = vmul.f32 1.0, %v7229
        %v7231 = vrcp.pop %v7050
        %v7232 = vmul.f32 1.0, %v7231
        %v7233 = vrcp.pop %v7051
        %v7234 = vmul.f32 1.0, %v7233
        %v7235 = vrcp.pop %v7052
        %v7236 = vmul.f32 1.0, %v7235
        %v7237 = vrcp.pop %v7053
        %v7238 = vmul.f32 1.0, %v7237
        %v7239 = vrcp.pop %v7054
        %v7240 = vmul.f32 1.0, %v7239
        %v7241 = vrcp.pop %v7055
        %v7242 = vmul.f32 1.0, %v7241
        %v7243 = vrcp.pop %v7056
        %v7244 = vmul.f32 1.0, %v7243
        %v7245 = vrcp.pop %v7057
        %v7246 = vmul.f32 1.0, %v7245
        %v7247 = vrcp.pop %v7058
        %v7248 = vmul.f32 1.0, %v7247
        %v7249 = vrcp.pop %v7059
        %v7250 = vmul.f32 1.0, %v7249
        %v7251 = vrcp.pop %v7060
        %v7252 = vmul.f32 1.0, %v7251
        %v7253 = vrcp.pop %v7061
        %v7254 = vmul.f32 1.0, %v7253
        %v7255 = vrcp.pop %v7062
        %v7256 = vmul.f32 1.0, %v7255
        %v7257 = vrcp.pop %v7063
        %v7258 = vmul.f32 1.0, %v7257
        %v7259 = vrcp.pop %v7064
        %v7260 = vmul.f32 1.0, %v7259
        %v7261 = vrcp.pop %v7065
        %v7262 = vmul.f32 1.0, %v7261
        %v7263 = vrcp.pop %v7066
        %v7264 = vmul.f32 1.0, %v7263
        %v7265 = vrcp.pop %v7067
        %v7266 = vmul.f32 1.0, %v7265
        %v7267 = vrcp.pop %v7068
        %v7268 = vmul.f32 1.0, %v7267
        %v7269 = vrcp.pop %v7069
        %v7270 = vmul.f32 1.0, %v7269
        %v7271 = vrcp.pop %v7070
        %v7272 = vmul.f32 1.0, %v7271
        %v7273 = vrcp.pop %v7071
        %v7274 = vmul.f32 1.0, %v7273
        %v7275 = vrcp.pop %v7072
        %v7276 = vmul.f32 1.0, %v7275
        %v7277 = vrcp.pop %v7073
        %v7278 = vmul.f32 1.0, %v7277
        %v7279 = vrcp.pop %v7074
        %v7280 = vmul.f32 1.0, %v7279
        %v7281 = vrcp.pop %v7075
        %v7282 = vmul.f32 1.0, %v7281
        %v7283 = vrcp.pop %v7076
        %v7284 = vmul.f32 1.0, %v7283
        %v7285 = vrcp.pop %v7077
        %v7286 = vmul.f32 1.0, %v7285
        %v7287 = vrcp.pop %v7078
        %v7288 = vmul.f32 1.0, %v7287
        %v7289 = vrcp.pop %v7079
        %v7290 = vmul.f32 1.0, %v7289
        %v7291 = vrcp.pop %v7080
        %v7292 = vmul.f32 1.0, %v7291
        %v7293 = vrcp.pop %v7081
        %v7294 = vmul.f32 1.0, %v7293
        %v7295 = vrcp.pop %v7082
        %v7296 = vmul.f32 1.0, %v7295
        %v7297 = vrcp.pop %v7083
        %v7298 = vmul.f32 1.0, %v7297
        %v7299 = vrcp.pop %v7084
        %v7300 = vmul.f32 1.0, %v7299
        %v7301 = vrcp.pop %v7085
        %v7302 = vmul.f32 1.0, %v7301
        %v7303 = vrcp.pop %v7086
        %v7304 = vmul.f32 1.0, %v7303
        %v7305 = vrcp.pop %v7087
        %v7306 = vmul.f32 1.0, %v7305
        %v7307 = vrcp.pop %v7088
        %v7308 = vmul.f32 1.0, %v7307
        %v7309 = vrcp.pop %v7089
        %v7310 = vmul.f32 1.0, %v7309
        %v7311 = vrcp.pop %v7090
        %v7312 = vmul.f32 1.0, %v7311
        %v7313 = vrcp.pop %v7091
        %v7314 = vmul.f32 1.0, %v7313
        %v7315 = vrcp.pop %v7092
        %v7316 = vmul.f32 1.0, %v7315
        %7317 = vst [vmem:[%s526] sm:$0xff] %v7094
        %7318 = vst [vmem:[%s526 + $0x8] sm:$0xff] %v7096
        %7319 = vst [vmem:[%s526 + $0x10] sm:$0xff] %v7098
        %7320 = vst [vmem:[%s526 + $0x18] sm:$0xff] %v7100
        %7321 = vst [vmem:[%s526 + $0x20] sm:$0xff] %v7102
        %7322 = vst [vmem:[%s526 + $0x28] sm:$0xff] %v7104
        %7323 = vst [vmem:[%s526 + $0x30] sm:$0xff] %v7106
        %7324 = vst [vmem:[%s526 + $0x38] sm:$0xff] %v7108
        %7325 = vst [vmem:[%s526 + $0x40] sm:$0xff] %v7110
        %7326 = vst [vmem:[%s526 + $0x48] sm:$0xff] %v7112
        %7327 = vst [vmem:[%s526 + $0x50] sm:$0xff] %v7114
        %7328 = vst [vmem:[%s526 + $0x58] sm:$0xff] %v7116
        %7329 = vst [vmem:[%s526 + $0x60] sm:$0xff] %v7118
        %7330 = vst [vmem:[%s526 + $0x68] sm:$0xff] %v7120
        %7331 = vst [vmem:[%s526 + $0x70] sm:$0xff] %v7122
        %7332 = vst [vmem:[%s526 + $0x78] sm:$0xff] %v7124
        %7333 = vst [vmem:[%s526 + $0x80] sm:$0xff] %v7126
        %7334 = vst [vmem:[%s526 + $0x88] sm:$0xff] %v7128
        %7335 = vst [vmem:[%s526 + $0x90] sm:$0xff] %v7130
        %7336 = vst [vmem:[%s526 + $0x98] sm:$0xff] %v7132
        %7337 = vst [vmem:[%s526 + $0xa0] sm:$0xff] %v7134
        %7338 = vst [vmem:[%s526 + $0xa8] sm:$0xff] %v7136
        %7339 = vst [vmem:[%s526 + $0xb0] sm:$0xff] %v7138
        %7340 = vst [vmem:[%s526 + $0xb8] sm:$0xff] %v7140
        %7341 = vst [vmem:[%s526 + $0xc0] sm:$0xff] %v7142
        %7342 = vst [vmem:[%s526 + $0xc8] sm:$0xff] %v7144
        %7343 = vst [vmem:[%s526 + $0xd0] sm:$0xff] %v7146
        %7344 = vst [vmem:[%s526 + $0xd8] sm:$0xff] %v7148
        %7345 = vst [vmem:[%s526 + $0xe0] sm:$0xff] %v7150
        %7346 = vst [vmem:[%s526 + $0xe8] sm:$0xff] %v7152
        %7347 = vst [vmem:[%s526 + $0xf0] sm:$0xff] %v7154
        %7348 = vst [vmem:[%s526 + $0xf8] sm:$0xff] %v7156
        %7349 = vst [vmem:[%s526 + $0x100] sm:$0xff] %v7158
        %7350 = vst [vmem:[%s526 + $0x108] sm:$0xff] %v7160
        %7351 = vst [vmem:[%s526 + $0x110] sm:$0xff] %v7162
        %7352 = vst [vmem:[%s526 + $0x118] sm:$0xff] %v7164
        %7353 = vst [vmem:[%s526 + $0x120] sm:$0xff] %v7166
        %7354 = vst [vmem:[%s526 + $0x128] sm:$0xff] %v7168
        %7355 = vst [vmem:[%s526 + $0x130] sm:$0xff] %v7170
        %7356 = vst [vmem:[%s526 + $0x138] sm:$0xff] %v7172
        %7357 = vst [vmem:[%s526 + $0x140] sm:$0xff] %v7174
        %7358 = vst [vmem:[%s526 + $0x148] sm:$0xff] %v7176
        %7359 = vst [vmem:[%s526 + $0x150] sm:$0xff] %v7178
        %7360 = vst [vmem:[%s526 + $0x158] sm:$0xff] %v7180
        %7361 = vst [vmem:[%s526 + $0x160] sm:$0xff] %v7182
        %7362 = vst [vmem:[%s526 + $0x168] sm:$0xff] %v7184
        %7363 = vst [vmem:[%s526 + $0x170] sm:$0xff] %v7186
        %7364 = vst [vmem:[%s526 + $0x178] sm:$0xff] %v7188
        %7365 = vst [vmem:[%s526 + $0x180] sm:$0xff] %v7190
        %7366 = vst [vmem:[%s526 + $0x188] sm:$0xff] %v7192
        %7367 = vst [vmem:[%s526 + $0x190] sm:$0xff] %v7194
        %7368 = vst [vmem:[%s526 + $0x198] sm:$0xff] %v7196
        %7369 = vst [vmem:[%s526 + $0x1a0] sm:$0xff] %v7198
        %7370 = vst [vmem:[%s526 + $0x1a8] sm:$0xff] %v7200
        %7371 = vst [vmem:[%s526 + $0x1b0] sm:$0xff] %v7202
        %7372 = vst [vmem:[%s526 + $0x1b8] sm:$0xff] %v7204
        %7373 = vst [vmem:[%s526 + $0x1c0] sm:$0xff] %v7206
        %7374 = vst [vmem:[%s526 + $0x1c8] sm:$0xff] %v7208
        %7375 = vst [vmem:[%s526 + $0x1d0] sm:$0xff] %v7210
        %7376 = vst [vmem:[%s526 + $0x1d8] sm:$0xff] %v7212
        %7377 = vst [vmem:[%s526 + $0x1e0] sm:$0xff] %v7214
        %7378 = vst [vmem:[%s526 + $0x1e8] sm:$0xff] %v7216
        %7379 = vst [vmem:[%s526 + $0x1f0] sm:$0xff] %v7218
        %7380 = vst [vmem:[%s526 + $0x1f8] sm:$0xff] %v7220
        %7381 = vst [vmem:[%s526 + $0x200] sm:$0xff] %v7222
        %7382 = vst [vmem:[%s526 + $0x208] sm:$0xff] %v7224
        %7383 = vst [vmem:[%s526 + $0x210] sm:$0xff] %v7226
        %7384 = vst [vmem:[%s526 + $0x218] sm:$0xff] %v7228
        %7385 = vst [vmem:[%s526 + $0x220] sm:$0xff] %v7230
        %7386 = vst [vmem:[%s526 + $0x228] sm:$0xff] %v7232
        %7387 = vst [vmem:[%s526 + $0x230] sm:$0xff] %v7234
        %7388 = vst [vmem:[%s526 + $0x238] sm:$0xff] %v7236
        %7389 = vst [vmem:[%s526 + $0x240] sm:$0xff] %v7238
        %7390 = vst [vmem:[%s526 + $0x248] sm:$0xff] %v7240
        %7391 = vst [vmem:[%s526 + $0x250] sm:$0xff] %v7242
        %7392 = vst [vmem:[%s526 + $0x258] sm:$0xff] %v7244
        %7393 = vst [vmem:[%s526 + $0x260] sm:$0xff] %v7246
        %7394 = vst [vmem:[%s526 + $0x268] sm:$0xff] %v7248
        %7395 = vst [vmem:[%s526 + $0x270] sm:$0xff] %v7250
        %7396 = vst [vmem:[%s526 + $0x278] sm:$0xff] %v7252
        %7397 = vst [vmem:[%s526 + $0x280] sm:$0xff] %v7254
        %7398 = vst [vmem:[%s526 + $0x288] sm:$0xff] %v7256
        %7399 = vst [vmem:[%s526 + $0x290] sm:$0xff] %v7258
        %7400 = vst [vmem:[%s526 + $0x298] sm:$0xff] %v7260
        %7401 = vst [vmem:[%s526 + $0x2a0] sm:$0xff] %v7262
        %7402 = vst [vmem:[%s526 + $0x2a8] sm:$0xff] %v7264
        %7403 = vst [vmem:[%s526 + $0x2b0] sm:$0xff] %v7266
        %7404 = vst [vmem:[%s526 + $0x2b8] sm:$0xff] %v7268
        %7405 = vst [vmem:[%s526 + $0x2c0] sm:$0xff] %v7270
        %7406 = vst [vmem:[%s526 + $0x2c8] sm:$0xff] %v7272
        %7407 = vst [vmem:[%s526 + $0x2d0] sm:$0xff] %v7274
        %7408 = vst [vmem:[%s526 + $0x2d8] sm:$0xff] %v7276
        %7409 = vst [vmem:[%s526 + $0x2e0] sm:$0xff] %v7278
        %7410 = vst [vmem:[%s526 + $0x2e8] sm:$0xff] %v7280
        %7411 = vst [vmem:[%s526 + $0x2f0] sm:$0xff] %v7282
        %7412 = vst [vmem:[%s526 + $0x2f8] sm:$0xff] %v7284
        %7413 = vst [vmem:[%s526 + $0x300] sm:$0xff] %v7286
        %7414 = vst [vmem:[%s526 + $0x308] sm:$0xff] %v7288
        %7415 = vst [vmem:[%s526 + $0x310] sm:$0xff] %v7290
        %7416 = vst [vmem:[%s526 + $0x318] sm:$0xff] %v7292
        %7417 = vst [vmem:[%s526 + $0x320] sm:$0xff] %v7294
        %7418 = vst [vmem:[%s526 + $0x328] sm:$0xff] %v7296
        %7419 = vst [vmem:[%s526 + $0x330] sm:$0xff] %v7298
        %7420 = vst [vmem:[%s526 + $0x338] sm:$0xff] %v7300
        %7421 = vst [vmem:[%s526 + $0x340] sm:$0xff] %v7302
        %7422 = vst [vmem:[%s526 + $0x348] sm:$0xff] %v7304
        %7423 = vst [vmem:[%s526 + $0x350] sm:$0xff] %v7306
        %7424 = vst [vmem:[%s526 + $0x358] sm:$0xff] %v7308
        %7425 = vst [vmem:[%s526 + $0x360] sm:$0xff] %v7310
        %7426 = vst [vmem:[%s526 + $0x368] sm:$0xff] %v7312
        %7427 = vst [vmem:[%s526 + $0x370] sm:$0xff] %v7314
        %7428 = vst [vmem:[%s526 + $0x378] sm:$0xff] %v7316
        %7429 = vst [vmem:[%s519] sm:$0xff] %v3610
        %7430 = vst [vmem:[%s519 + $0x8] sm:$0xff] %v3612
        %7431 = vst [vmem:[%s519 + $0x10] sm:$0xff] %v3614
        %7432 = vst [vmem:[%s519 + $0x18] sm:$0xff] %v3616
        %7433 = vst [vmem:[%s519 + $0x20] sm:$0xff] %v3620
        %7434 = vst [vmem:[%s519 + $0x28] sm:$0xff] %v3622
        %7435 = vst [vmem:[%s519 + $0x30] sm:$0xff] %v3624
        %7436 = vst [vmem:[%s519 + $0x38] sm:$0xff] %v3626
        %7437 = vst [vmem:[%s519 + $0x40] sm:$0xff] %v3630
        %7438 = vst [vmem:[%s519 + $0x48] sm:$0xff] %v3632
        %7439 = vst [vmem:[%s519 + $0x50] sm:$0xff] %v3634
        %7440 = vst [vmem:[%s519 + $0x58] sm:$0xff] %v3636
        %7441 = vst [vmem:[%s519 + $0x60] sm:$0xff] %v3640
        %7442 = vst [vmem:[%s519 + $0x68] sm:$0xff] %v3642
        %7443 = vst [vmem:[%s519 + $0x70] sm:$0xff] %v3644
        %7444 = vst [vmem:[%s519 + $0x78] sm:$0xff] %v3646
        %7445 = vst [vmem:[%s519 + $0x80] sm:$0xff] %v3650
        %7446 = vst [vmem:[%s519 + $0x88] sm:$0xff] %v3652
        %7447 = vst [vmem:[%s519 + $0x90] sm:$0xff] %v3654
        %7448 = vst [vmem:[%s519 + $0x98] sm:$0xff] %v3656
        %7449 = vst [vmem:[%s519 + $0xa0] sm:$0xff] %v3660
        %7450 = vst [vmem:[%s519 + $0xa8] sm:$0xff] %v3662
        %7451 = vst [vmem:[%s519 + $0xb0] sm:$0xff] %v3664
        %7452 = vst [vmem:[%s519 + $0xb8] sm:$0xff] %v3666
        %7453 = vst [vmem:[%s519 + $0xc0] sm:$0xff] %v3670
        %7454 = vst [vmem:[%s519 + $0xc8] sm:$0xff] %v3672
        %7455 = vst [vmem:[%s519 + $0xd0] sm:$0xff] %v3674
        %7456 = vst [vmem:[%s519 + $0xd8] sm:$0xff] %v3676
        %7457 = vst [vmem:[%s519 + $0xe0] sm:$0xff] %v3680
        %7458 = vst [vmem:[%s519 + $0xe8] sm:$0xff] %v3682
        %7459 = vst [vmem:[%s519 + $0xf0] sm:$0xff] %v3684
        %7460 = vst [vmem:[%s519 + $0xf8] sm:$0xff] %v3686
        %s7461 = sand.u32 %s265, 1
        %s7462 = scalar_lea.sflag [#allocation4], %s7461
        %s7463 = sand.u32 %s265, 1
        %s7464 = smul.addr %s7463, 256
        %s7465 = scalar_lea.vmem [#allocation14], %s7464
        %s7466 = sand.u32 %s291, 1
        %s7467 = scalar_lea.sflag [#allocation16], %s7466
        %s7468 = sand.u32 %s291, 1
        %s7469 = smul.addr %s7468, 896
        %s7470 = scalar_lea.vmem [#allocation15], %s7469
        // Predicated region
        $region89: #{tpu_custom_call.1} parent=59 // pred_check
          %p7471 = pneg %p275
        $region90: #{tpu_custom_call.1} parent=59 // pred_check_branch
          %7473 = sbr.rel (%p7471) target = $region92
        $region91: #{tpu_custom_call.1} parent=59 // pred_region
          %s7474 = smul.u32 16, %s37
          %s7476 = ssub.s32 4096, 4096
          %7477 = vsyncadd %s7462, %s7476
          %s7478 = smul.addr %s7474, 2
          %s7479 = smul.addr %s7478, 128
          %s7480 = scalar_lea.hbm %s10, %s7479
          %s7481 = sshll.u32 %s7465, 4
          %s7482 = int_to_ptr.vmem [resolvable:$true] %s7481
          %7487 = dma.vmem_to_hbm [thread:$0]  %s7482, 4096, %s7480, %s7462, 256, 256, 16
        $region92: #{tpu_custom_call.1} parent=59 // pred_fallthru
          _
        // Predicated region
        $region93: #{tpu_custom_call.1} parent=59 // pred_check
          %p7488 = pneg %p301
        $region94: #{tpu_custom_call.1} parent=59 // pred_check_branch
          %7490 = sbr.rel (%p7488) target = $region96
        $region95: #{tpu_custom_call.1} parent=59 // pred_region
          %s7491 = smul.u32 16, %s37
          %s7493 = ssub.s32 14336, 14336
          %7494 = vsyncadd %s7467, %s7493
          %s7495 = smul.addr %s7491, 7
          %s7496 = smul.addr %s7495, 128
          %s7497 = scalar_lea.hbm %s11, %s7496
          %s7498 = sshll.u32 %s7470, 4
          %s7499 = int_to_ptr.vmem [resolvable:$true] %s7498
          %7504 = dma.vmem_to_hbm [thread:$0]  %s7499, 14336, %s7497, %s7467, 896, 896, 56
        $region96: #{tpu_custom_call.1} parent=59 // pred_fallthru
          _
      $region60: #{tpu_custom_call.1} parent=5 // pred_fallthru
        _
      %p7505 = scmp.le.s32.totalorder 2, %s32
      // Predicated region
      $region97: #{tpu_custom_call.1} parent=5 // pred_check
        %p7506 = pneg %p7505
      $region98: #{tpu_custom_call.1} parent=5 // pred_check_branch
        %7508 = sbr.rel (%p7506) target = $region100
      $region99: #{tpu_custom_call.1} parent=5 // pred_region
        %s7509 = ssub.s32 %s32, 2
        // Predicated region
        $region101: #{tpu_custom_call.1} parent=99 // pred_check
          %p7510 = pneg %p281
        $region102: #{tpu_custom_call.1} parent=99 // pred_check_branch
          %7512 = sbr.rel (%p7510) target = $region104
        $region103: #{tpu_custom_call.1} parent=99 // pred_region
          %s7513 = sand.u32 %s266, 1
          %s7514 = scalar_lea.sflag [#allocation4], %s7513
          %s7515 = sand.u32 %s266, 1
          %s7516 = smul.addr %s7515, 256
          %s7517 = scalar_lea.vmem [#allocation14], %s7516
          %7518 = dma.done %s7514, 4096
        $region104: #{tpu_custom_call.1} parent=99 // pred_fallthru
          _
        // Predicated region
        $region105: #{tpu_custom_call.1} parent=99 // pred_check
          %p7519 = pneg %p307
        $region106: #{tpu_custom_call.1} parent=99 // pred_check_branch
          %7521 = sbr.rel (%p7519) target = $region108
        $region107: #{tpu_custom_call.1} parent=99 // pred_region
          %s7522 = sand.u32 %s292, 1
          %s7523 = scalar_lea.sflag [#allocation16], %s7522
          %s7524 = sand.u32 %s292, 1
          %s7525 = smul.addr %s7524, 896
          %s7526 = scalar_lea.vmem [#allocation15], %s7525
          %7527 = dma.done %s7523, 14336
        $region108: #{tpu_custom_call.1} parent=99 // pred_fallthru
          _
      $region100: #{tpu_custom_call.1} parent=5 // pred_fallthru
        _
    $region6: #{tpu_custom_call.1} parent=1 // loop_footer
      %s36 = sadd.s32 1, %s32
    $region7: #{tpu_custom_call.1} parent=1 // loop_footer_branch
      %31 = sbr.rel target = $region3
    $region8: #{tpu_custom_call.1} parent=1 // loop_exit
      _
    %7528 = vsyncpa [#allocation3], 1
    %s7529 = scalar_lea.sflag [#allocation3], 1
    %7530 = vsyncpa %s7529, 1
    %7531 = vsyncpa [#allocation6], 1
    %s7532 = scalar_lea.sflag [#allocation6], 1
    %7533 = vsyncpa %s7532, 1
    %7534 = vsyncpa [#allocation9], 1
    %7535 = vsyncpa [#allocation12], 1
    %7536 = vsyncpa [#allocation4], 1
    %s7537 = scalar_lea.sflag [#allocation4], 1
    %7538 = vsyncpa %s7537, 1
    %7539 = vsyncpa [#allocation16], 1
    %s7540 = scalar_lea.sflag [#allocation16], 1
    %7541 = vsyncpa %s7540, 1

</llo_original>
